<compile_context>
chip_gen: v5e
topology: v5e:2x2
jax: 0.10.0
libtpu: 0.0.40
codegen_flags: <defaults>
</compile_context>

<pallas_src>
import functools

import jax
import jax.numpy as jnp
from jax.experimental import pallas as pl
from jax.experimental.pallas import tpu as pltpu

LANE = 128     # output-channel (lane) padding target
EPS = 1e-5     # BatchNorm2d default eps


def _round_up(x, m):
    return (x + m - 1) // m * m


# ------------------------------------------------------------------ kernels --

def _conv_s2_kernel(x00_ref, x01_ref, x10_ref, x11_ref, w_ref,
                    y_ref, s_ref, q_ref, *, Ho, Wo, out_relu):
    """4x4 stride-2 pad-1 conv for one image (one grid step).

    x{p}{q}_ref : (1, Ho+1, Wo+1, Cp) spatial-parity views of the zero-padded
                  NHWC input (p = row parity, q = col parity).
    w_ref       : (16*Cp, Coutp) weight, K ordered (kh, kw, cin).
    y_ref       : (1, Ho, Wo, Coutp) conv output (ReLU'd iff out_relu).
    s_ref/q_ref : (1, 1, Coutp) per-sample channel sum / sum-of-squares of y.
    """
    xs = (x00_ref, x01_ref, x10_ref, x11_ref)
    coutp = y_ref.shape[-1]

    def row_body(oh, carry):
        acc_s, acc_q = carry
        taps = []
        for di in range(4):
            for dj in range(4):
                src = xs[(di % 2) * 2 + (dj % 2)]
                # padded coords (2*oh+di, 2*ow+dj) == parity view (oh+di//2, ow+dj//2)
                taps.append(src[0, oh + di // 2, pl.ds(dj // 2, Wo), :])
        patch = jnp.concatenate(taps, axis=-1)                       # (Wo, 16*Cp)
        y = jnp.dot(patch, w_ref[...], preferred_element_type=jnp.float32)
        if out_relu:
            y = jnp.maximum(y, 0.0)
        y_ref[0, oh] = y
        acc_s = acc_s + jnp.sum(y, axis=0, keepdims=True)
        acc_q = acc_q + jnp.sum(y * y, axis=0, keepdims=True)
        return acc_s, acc_q

    init = (jnp.zeros((1, coutp), jnp.float32),
            jnp.zeros((1, coutp), jnp.float32))
    acc_s, acc_q = jax.lax.fori_loop(0, Ho, row_body, init)
    s_ref[0] = acc_s
    q_ref[0] = acc_q


def _conv_s1_kernel(xp_ref, w_ref, y_ref, s_ref, q_ref, *, Ho, Wo, out_relu):
    """4x4 stride-1 pad-1 conv for one image.  xp_ref: (1, H+2, W+2, Cp)."""
    coutp = y_ref.shape[-1]

    def row_body(oh, carry):
        acc_s, acc_q = carry
        taps = []
        for di in range(4):
            for dj in range(4):
                taps.append(xp_ref[0, oh + di, pl.ds(dj, Wo), :])
        patch = jnp.concatenate(taps, axis=-1)                       # (Wo, 16*Cp)
        y = jnp.dot(patch, w_ref[...], preferred_element_type=jnp.float32)
        if out_relu:
            y = jnp.maximum(y, 0.0)
        y_ref[0, oh] = y
        return (acc_s + jnp.sum(y, axis=0, keepdims=True),
                acc_q + jnp.sum(y * y, axis=0, keepdims=True))

    init = (jnp.zeros((1, coutp), jnp.float32),
            jnp.zeros((1, coutp), jnp.float32))
    acc_s, acc_q = jax.lax.fori_loop(0, Ho, row_body, init)
    s_ref[0] = acc_s
    q_ref[0] = acc_q


# ------------------------------------------------------------- pallas calls --

def _pack_weight(w, cin_pad):
    """PyTorch OIHW (Cout, Cin, 4, 4) -> (16*cin_pad, Coutp), K order (kh, kw, cin)."""
    cout, cin, kh, kw = w.shape
    coutp = _round_up(cout, LANE)
    w = jnp.pad(w, ((0, coutp - cout), (0, cin_pad - cin), (0, 0), (0, 0)))
    w = jnp.transpose(w, (2, 3, 1, 0)).reshape(kh * kw * cin_pad, coutp)
    return w


def _conv_pallas(kernel, inputs, w_mat, n, ho, wo):
    coutp = w_mat.shape[1]
    in_specs = [pl.BlockSpec((1,) + x.shape[1:], lambda i: (i, 0, 0, 0))
                for x in inputs]
    in_specs.append(pl.BlockSpec(w_mat.shape, lambda i: (0, 0)))      # grid-resident
    flops = 2 * n * ho * wo * int(w_mat.shape[0]) * coutp
    bytes_acc = 4 * (sum(int(x.size) for x in inputs) + int(w_mat.size)
                     + n * ho * wo * coutp)
    return pl.pallas_call(
        kernel,
        grid=(n,),
        in_specs=in_specs,
        out_specs=(
            pl.BlockSpec((1, ho, wo, coutp), lambda i: (i, 0, 0, 0)),
            pl.BlockSpec((1, 1, coutp), lambda i: (i, 0, 0)),
            pl.BlockSpec((1, 1, coutp), lambda i: (i, 0, 0)),
        ),
        out_shape=(
            jax.ShapeDtypeStruct((n, ho, wo, coutp), jnp.float32),
            jax.ShapeDtypeStruct((n, 1, coutp), jnp.float32),
            jax.ShapeDtypeStruct((n, 1, coutp), jnp.float32),
        ),
        compiler_params=pltpu.CompilerParams(
            dimension_semantics=("parallel",),          # samples split over TCs
            vmem_limit_bytes=64 * 1024 * 1024,
        ),
        cost_estimate=pl.CostEstimate(flops=flops, transcendentals=0,
                                      bytes_accessed=bytes_acc),
    )(*inputs, w_mat)


def conv_s2(x, w, *, out_relu, in_affine=None):
    """x: (N,H,W,Cp) NHWC; w: (Cout, Cin, 4, 4).  Returns (y, chan_sum, chan_sumsq)."""
    n, h, wd, cp = x.shape
    assert h % 2 == 0 and wd % 2 == 0
    if in_affine is not None:
        scale, shift = in_affine
        # Previous layer's BN affine + ReLU; XLA fuses this into the pad/parity
        # split below -> no extra full HBM pass.
        x = jnp.maximum(x * scale + shift, 0.0)
    ho, wo = h // 2, wd // 2
    xp = jnp.pad(x, ((0, 0), (1, 1), (1, 1), (0, 0)))
    parts = [xp[:, pr::2, pc::2, :] for pr in (0, 1) for pc in (0, 1)]
    w_mat = _pack_weight(w, cp)
    kern = functools.partial(_conv_s2_kernel, Ho=ho, Wo=wo, out_relu=out_relu)
    return _conv_pallas(kern, parts, w_mat, n, ho, wo)


def conv_s1(x, w, *, out_relu, in_affine=None):
    n, h, wd, cp = x.shape
    if in_affine is not None:
        scale, shift = in_affine
        x = jnp.maximum(x * scale + shift, 0.0)
    ho, wo = h - 1, wd - 1                       # k=4, s=1, p=1
    xp = jnp.pad(x, ((0, 0), (1, 1), (1, 1), (0, 0)))
    w_mat = _pack_weight(w, cp)
    kern = functools.partial(_conv_s1_kernel, Ho=ho, Wo=wo, out_relu=out_relu)
    return _conv_pallas(kern, [xp], w_mat, n, ho, wo)


# ------------------------------------------------------------------ glue ----

def _bn_from_stats(s, q, count, gamma, beta, coutp):
    """Per-channel scale/shift from kernel-emitted partial sums (training-mode BN)."""
    g = jnp.pad(gamma, (0, coutp - gamma.shape[0]))
    b = jnp.pad(beta, (0, coutp - beta.shape[0]))
    mean = jnp.sum(s, axis=(0, 1)) / count
    var = jnp.maximum(jnp.sum(q, axis=(0, 1)) / count - mean * mean, 0.0)
    scale = g * jax.lax.rsqrt(var + EPS)
    shift = b - mean * scale
    return scale, shift


def discriminator_forward(x_nchw, p):
    x = jnp.transpose(x_nchw, (0, 2, 3, 1))          # NCHW -> NHWC once
    n = x.shape[0]

    y1, _, _ = conv_s2(x, p["w1"], out_relu=True)                     # conv1+ReLU
    y2, s2, q2 = conv_s2(y1, p["w2"], out_relu=False)                 # conv2 (pre-BN)
    a2 = _bn_from_stats(s2, q2, n * y2.shape[1] * y2.shape[2], p["g2"], p["b2"], y2.shape[3])
    y3, s3, q3 = conv_s2(y2, p["w3"], out_relu=False, in_affine=a2)   # conv3 (pre-BN)
    a3 = _bn_from_stats(s3, q3, n * y3.shape[1] * y3.shape[2], p["g3"], p["b3"], y3.shape[3])
    y4, s4, q4 = conv_s2(y3, p["w4"], out_relu=False, in_affine=a3)   # conv4 (pre-BN)
    a4 = _bn_from_stats(s4, q4, n * y4.shape[1] * y4.shape[2], p["g4"], p["b4"], y4.shape[3])
    y5, _, _ = conv_s1(y4, p["w5"], out_relu=False, in_affine=a4)     # conv5

    out = y5[..., :1]                                 # drop lane padding (Cout=1)
    return jnp.transpose(out, (0, 3, 1, 2))           # back to NCHW


# ------------------------------------------------------------- reference ----

def reference_forward(x, p):
    def conv2d(x, w, stride):
        return jax.lax.conv_general_dilated(
            x, w, (stride, stride), [(1, 1), (1, 1)],
            dimension_numbers=("NCHW", "OIHW", "NCHW"),
            precision=jax.lax.Precision.HIGHEST)

    out = jax.nn.relu(conv2d(x, p["w1"], 2))
    for i in (2, 3, 4):
        y = conv2d(out, p[f"w{i}"], 2)
        mean = jnp.mean(y, axis=(0, 2, 3), keepdims=True)
        var = jnp.var(y, axis=(0, 2, 3), keepdims=True)
        y = (y - mean) / jnp.sqrt(var + EPS)
        y = y * p[f"g{i}"].reshape(1, -1, 1, 1) + p[f"b{i}"].reshape(1, -1, 1, 1)
        out = jax.nn.relu(y)
    return conv2d(out, p["w5"], 1)


# ----------------------------------------------------------------- params ---

def init_params(key, conv_dim=8):
    ks = jax.random.split(key, 11)

    def w(k, cout, cin):
        fan_in = cin * 4 * 4
        return (jax.random.normal(k, (cout, cin, 4, 4), jnp.float32)
                / jnp.sqrt(jnp.float32(fan_in)))

    return {
        "w1": w(ks[0], conv_dim, 3),
        "w2": w(ks[1], conv_dim * 2, conv_dim),
        "w3": w(ks[2], conv_dim * 4, conv_dim * 2),
        "w4": w(ks[3], conv_dim * 8, conv_dim * 4),
        "w5": w(ks[4], 1, conv_dim * 8),
        "g2": 1.0 + 0.1 * jax.random.normal(ks[5], (conv_dim * 2,), jnp.float32),
        "b2": 0.1 * jax.random.normal(ks[6], (conv_dim * 2,), jnp.float32),
        "g3": 1.0 + 0.1 * jax.random.normal(ks[7], (conv_dim * 4,), jnp.float32),
        "b3": 0.1 * jax.random.normal(ks[8], (conv_dim * 4,), jnp.float32),
        "g4": 1.0 + 0.1 * jax.random.normal(ks[9], (conv_dim * 8,), jnp.float32),
        "b4": 0.1 * jax.random.normal(ks[10], (conv_dim * 8,), jnp.float32),
    }


# ------------------------------------------------------------------- main ---

if __name__ == "__main__":
    key = jax.random.PRNGKey(0)
    kx, kp = jax.random.split(key)

    conv_dim = 8                                           # module default is 64
    x = jax.random.normal(kx, (2, 3, 32, 32), jnp.float32)  # NCHW, like PyTorch
    params = init_params(kp, conv_dim)

    fwd = jax.jit(discriminator_forward)
    out = jax.block_until_ready(fwd(x, params))
    assert out.shape == (2, 1, 1, 1), out.shape

    ref = jax.block_until_ready(reference_forward(x, params))
    assert jnp.allclose(out, ref, atol=1e-3, rtol=1e-3), (out, ref)

    print("KERNEL_OK")
</pallas_src>

<mosaic_0001>
module attributes {stable_mosaic.version = 11 : i64} {
  func.func @_conv_s2_kernel(%arg0: i32, %arg1: memref<1x17x17x3xf32, #tpu.memory_space<vmem>>, %arg2: memref<1x17x17x3xf32, #tpu.memory_space<vmem>>, %arg3: memref<1x17x17x3xf32, #tpu.memory_space<vmem>>, %arg4: memref<1x17x17x3xf32, #tpu.memory_space<vmem>>, %arg5: memref<48x128xf32, #tpu.memory_space<vmem>>, %arg6: memref<1x16x16x128xf32, #tpu.memory_space<vmem>>, %arg7: memref<1x1x128xf32, #tpu.memory_space<vmem>>, %arg8: memref<1x1x128xf32, #tpu.memory_space<vmem>>) attributes {dimension_semantics = [#tpu.dimension_semantics<parallel>], iteration_bounds = array<i64: 2>, scalar_prefetch = 0 : i64, scratch_operands = 0 : i64, tpu.core_type = #tpu.core_type<tc>, window_params = [{transform_indices = @transform_0, window_bounds = array<i64: 1, 17, 17, 3>}, {transform_indices = @transform_1, window_bounds = array<i64: 1, 17, 17, 3>}, {transform_indices = @transform_2, window_bounds = array<i64: 1, 17, 17, 3>}, {transform_indices = @transform_3, window_bounds = array<i64: 1, 17, 17, 3>}, {pipeline_mode = #tpu.pipeline_mode<synchronous>, transform_indices = @transform_4, window_bounds = array<i64: 48, 128>}, {transform_indices = @transform_5, window_bounds = array<i64: 1, 16, 16, 128>}, {transform_indices = @transform_6, window_bounds = array<i64: 1, 1, 128>}, {transform_indices = @transform_7, window_bounds = array<i64: 1, 1, 128>}]} {
    %cst = arith.constant 0.000000e+00 : f32
    %0 = vector.broadcast %cst : f32 to vector<1x128xf32>
    %cst_0 = arith.constant 0.000000e+00 : f32
    %1 = vector.broadcast %cst_0 : f32 to vector<1x128xf32>
    %c0_i32 = arith.constant 0 : i32
    %c16_i32 = arith.constant 16 : i32
    %2 = arith.addi %c0_i32, %c16_i32 : i32
    %c1_i32 = arith.constant 1 : i32
    %3:2 = scf.for %arg9 = %c0_i32 to %2 step %c1_i32 iter_args(%arg10 = %0, %arg11 = %1) -> (vector<1x128xf32>, vector<1x128xf32>)  : i32 {
      %c0_i32_7 = arith.constant 0 : i32
      %10 = arith.addi %arg9, %c0_i32_7 : i32
      %c0_8 = arith.constant 0 : index
      %11 = arith.index_cast %10 : i32 to index
      %c0_9 = arith.constant 0 : index
      %c0_10 = arith.constant 0 : index
      %12 = vector.load %arg1[%c0_8, %11, %c0_9, %c0_10] : memref<1x17x17x3xf32, #tpu.memory_space<vmem>>, vector<1x1x16x3xf32>
      %13 = vector.shape_cast %12 : vector<1x1x16x3xf32> to vector<16x3xf32>
      %c0_i32_11 = arith.constant 0 : i32
      %14 = arith.addi %arg9, %c0_i32_11 : i32
      %c0_12 = arith.constant 0 : index
      %15 = arith.index_cast %14 : i32 to index
      %c0_13 = arith.constant 0 : index
      %c0_14 = arith.constant 0 : index
      %16 = vector.load %arg2[%c0_12, %15, %c0_13, %c0_14] : memref<1x17x17x3xf32, #tpu.memory_space<vmem>>, vector<1x1x16x3xf32>
      %17 = vector.shape_cast %16 : vector<1x1x16x3xf32> to vector<16x3xf32>
      %c0_i32_15 = arith.constant 0 : i32
      %18 = arith.addi %arg9, %c0_i32_15 : i32
      %c0_16 = arith.constant 0 : index
      %19 = arith.index_cast %18 : i32 to index
      %c1 = arith.constant 1 : index
      %c0_17 = arith.constant 0 : index
      %20 = vector.load %arg1[%c0_16, %19, %c1, %c0_17] : memref<1x17x17x3xf32, #tpu.memory_space<vmem>>, vector<1x1x16x3xf32>
      %21 = vector.shape_cast %20 : vector<1x1x16x3xf32> to vector<16x3xf32>
      %c0_i32_18 = arith.constant 0 : i32
      %22 = arith.addi %arg9, %c0_i32_18 : i32
      %c0_19 = arith.constant 0 : index
      %23 = arith.index_cast %22 : i32 to index
      %c1_20 = arith.constant 1 : index
      %c0_21 = arith.constant 0 : index
      %24 = vector.load %arg2[%c0_19, %23, %c1_20, %c0_21] : memref<1x17x17x3xf32, #tpu.memory_space<vmem>>, vector<1x1x16x3xf32>
      %25 = vector.shape_cast %24 : vector<1x1x16x3xf32> to vector<16x3xf32>
      %c0_i32_22 = arith.constant 0 : i32
      %26 = arith.addi %arg9, %c0_i32_22 : i32
      %c0_23 = arith.constant 0 : index
      %27 = arith.index_cast %26 : i32 to index
      %c0_24 = arith.constant 0 : index
      %c0_25 = arith.constant 0 : index
      %28 = vector.load %arg3[%c0_23, %27, %c0_24, %c0_25] : memref<1x17x17x3xf32, #tpu.memory_space<vmem>>, vector<1x1x16x3xf32>
      %29 = vector.shape_cast %28 : vector<1x1x16x3xf32> to vector<16x3xf32>
      %c0_i32_26 = arith.constant 0 : i32
      %30 = arith.addi %arg9, %c0_i32_26 : i32
      %c0_27 = arith.constant 0 : index
      %31 = arith.index_cast %30 : i32 to index
      %c0_28 = arith.constant 0 : index
      %c0_29 = arith.constant 0 : index
      %32 = vector.load %arg4[%c0_27, %31, %c0_28, %c0_29] : memref<1x17x17x3xf32, #tpu.memory_space<vmem>>, vector<1x1x16x3xf32>
      %33 = vector.shape_cast %32 : vector<1x1x16x3xf32> to vector<16x3xf32>
      %c0_i32_30 = arith.constant 0 : i32
      %34 = arith.addi %arg9, %c0_i32_30 : i32
      %c0_31 = arith.constant 0 : index
      %35 = arith.index_cast %34 : i32 to index
      %c1_32 = arith.constant 1 : index
      %c0_33 = arith.constant 0 : index
      %36 = vector.load %arg3[%c0_31, %35, %c1_32, %c0_33] : memref<1x17x17x3xf32, #tpu.memory_space<vmem>>, vector<1x1x16x3xf32>
      %37 = vector.shape_cast %36 : vector<1x1x16x3xf32> to vector<16x3xf32>
      %c0_i32_34 = arith.constant 0 : i32
      %38 = arith.addi %arg9, %c0_i32_34 : i32
      %c0_35 = arith.constant 0 : index
      %39 = arith.index_cast %38 : i32 to index
      %c1_36 = arith.constant 1 : index
      %c0_37 = arith.constant 0 : index
      %40 = vector.load %arg4[%c0_35, %39, %c1_36, %c0_37] : memref<1x17x17x3xf32, #tpu.memory_space<vmem>>, vector<1x1x16x3xf32>
      %41 = vector.shape_cast %40 : vector<1x1x16x3xf32> to vector<16x3xf32>
      %c1_i32_38 = arith.constant 1 : i32
      %42 = arith.addi %arg9, %c1_i32_38 : i32
      %c0_39 = arith.constant 0 : index
      %43 = arith.index_cast %42 : i32 to index
      %c0_40 = arith.constant 0 : index
      %c0_41 = arith.constant 0 : index
      %44 = vector.load %arg1[%c0_39, %43, %c0_40, %c0_41] : memref<1x17x17x3xf32, #tpu.memory_space<vmem>>, vector<1x1x16x3xf32>
      %45 = vector.shape_cast %44 : vector<1x1x16x3xf32> to vector<16x3xf32>
      %c1_i32_42 = arith.constant 1 : i32
      %46 = arith.addi %arg9, %c1_i32_42 : i32
      %c0_43 = arith.constant 0 : index
      %47 = arith.index_cast %46 : i32 to index
      %c0_44 = arith.constant 0 : index
      %c0_45 = arith.constant 0 : index
      %48 = vector.load %arg2[%c0_43, %47, %c0_44, %c0_45] : memref<1x17x17x3xf32, #tpu.memory_space<vmem>>, vector<1x1x16x3xf32>
      %49 = vector.shape_cast %48 : vector<1x1x16x3xf32> to vector<16x3xf32>
      %c1_i32_46 = arith.constant 1 : i32
      %50 = arith.addi %arg9, %c1_i32_46 : i32
      %c0_47 = arith.constant 0 : index
      %51 = arith.index_cast %50 : i32 to index
      %c1_48 = arith.constant 1 : index
      %c0_49 = arith.constant 0 : index
      %52 = vector.load %arg1[%c0_47, %51, %c1_48, %c0_49] : memref<1x17x17x3xf32, #tpu.memory_space<vmem>>, vector<1x1x16x3xf32>
      %53 = vector.shape_cast %52 : vector<1x1x16x3xf32> to vector<16x3xf32>
      %c1_i32_50 = arith.constant 1 : i32
      %54 = arith.addi %arg9, %c1_i32_50 : i32
      %c0_51 = arith.constant 0 : index
      %55 = arith.index_cast %54 : i32 to index
      %c1_52 = arith.constant 1 : index
      %c0_53 = arith.constant 0 : index
      %56 = vector.load %arg2[%c0_51, %55, %c1_52, %c0_53] : memref<1x17x17x3xf32, #tpu.memory_space<vmem>>, vector<1x1x16x3xf32>
      %57 = vector.shape_cast %56 : vector<1x1x16x3xf32> to vector<16x3xf32>
      %c1_i32_54 = arith.constant 1 : i32
      %58 = arith.addi %arg9, %c1_i32_54 : i32
      %c0_55 = arith.constant 0 : index
      %59 = arith.index_cast %58 : i32 to index
      %c0_56 = arith.constant 0 : index
      %c0_57 = arith.constant 0 : index
      %60 = vector.load %arg3[%c0_55, %59, %c0_56, %c0_57] : memref<1x17x17x3xf32, #tpu.memory_space<vmem>>, vector<1x1x16x3xf32>
      %61 = vector.shape_cast %60 : vector<1x1x16x3xf32> to vector<16x3xf32>
      %c1_i32_58 = arith.constant 1 : i32
      %62 = arith.addi %arg9, %c1_i32_58 : i32
      %c0_59 = arith.constant 0 : index
      %63 = arith.index_cast %62 : i32 to index
      %c0_60 = arith.constant 0 : index
      %c0_61 = arith.constant 0 : index
      %64 = vector.load %arg4[%c0_59, %63, %c0_60, %c0_61] : memref<1x17x17x3xf32, #tpu.memory_space<vmem>>, vector<1x1x16x3xf32>
      %65 = vector.shape_cast %64 : vector<1x1x16x3xf32> to vector<16x3xf32>
      %c1_i32_62 = arith.constant 1 : i32
      %66 = arith.addi %arg9, %c1_i32_62 : i32
      %c0_63 = arith.constant 0 : index
      %67 = arith.index_cast %66 : i32 to index
      %c1_64 = arith.constant 1 : index
      %c0_65 = arith.constant 0 : index
      %68 = vector.load %arg3[%c0_63, %67, %c1_64, %c0_65] : memref<1x17x17x3xf32, #tpu.memory_space<vmem>>, vector<1x1x16x3xf32>
      %69 = vector.shape_cast %68 : vector<1x1x16x3xf32> to vector<16x3xf32>
      %c1_i32_66 = arith.constant 1 : i32
      %70 = arith.addi %arg9, %c1_i32_66 : i32
      %c0_67 = arith.constant 0 : index
      %71 = arith.index_cast %70 : i32 to index
      %c1_68 = arith.constant 1 : index
      %c0_69 = arith.constant 0 : index
      %72 = vector.load %arg4[%c0_67, %71, %c1_68, %c0_69] : memref<1x17x17x3xf32, #tpu.memory_space<vmem>>, vector<1x1x16x3xf32>
      %73 = vector.shape_cast %72 : vector<1x1x16x3xf32> to vector<16x3xf32>
      %74 = tpu.concatenate %13, %17, %21, %25, %29, %33, %37, %41, %45, %49, %53, %57, %61, %65, %69, %73 in 1 : vector<16x3xf32>, vector<16x3xf32>, vector<16x3xf32>, vector<16x3xf32>, vector<16x3xf32>, vector<16x3xf32>, vector<16x3xf32>, vector<16x3xf32>, vector<16x3xf32>, vector<16x3xf32>, vector<16x3xf32>, vector<16x3xf32>, vector<16x3xf32>, vector<16x3xf32>, vector<16x3xf32>, vector<16x3xf32> -> vector<16x48xf32>
      %c0_70 = arith.constant 0 : index
      %c0_71 = arith.constant 0 : index
      %75 = vector.load %arg5[%c0_70, %c0_71] : memref<48x128xf32, #tpu.memory_space<vmem>>, vector<48x128xf32>
      %cst_72 = arith.constant dense<0.000000e+00> : vector<16x128xf32>
      %76 = tpu.matmul %74, %75, %cst_72 {dimension_numbers = #tpu.dot_dimension_numbers<[1], [0], [0], [1], [0, 0, 1, 1], [], []>} : vector<16x48xf32>, vector<48x128xf32>, vector<16x128xf32> -> vector<16x128xf32>
      %cst_73 = arith.constant 0.000000e+00 : f32
      %77 = vector.broadcast %cst_73 : f32 to vector<16x128xf32>
      %78 = arith.maximumf %76, %77 : vector<16x128xf32>
      %c0_74 = arith.constant 0 : index
      %79 = arith.index_cast %arg9 : i32 to index
      %c0_75 = arith.constant 0 : index
      %c0_76 = arith.constant 0 : index
      %80 = vector.load %arg6[%c0_74, %79, %c0_75, %c0_76] : memref<1x16x16x128xf32, #tpu.memory_space<vmem>>, vector<1x1x16x128xf32>
      %81 = vector.shape_cast %80 : vector<1x1x16x128xf32> to vector<16x128xf32>
      %82 = vector.shape_cast %78 : vector<16x128xf32> to vector<1x1x16x128xf32>
      tpu.vector_store %arg6[%c0_74, %79, %c0_75, %c0_76], %82 {strides = array<i32>} : memref<1x16x16x128xf32, #tpu.memory_space<vmem>>, vector<1x1x16x128xf32>,
      %cst_77 = arith.constant dense<0.000000e+00> : vector<128xf32>
      %83 = vector.multi_reduction <add>, %78, %cst_77 [0] : vector<16x128xf32> to vector<128xf32>
      %84 = vector.shape_cast %83 : vector<128xf32> to vector<1x128xf32>
      %85 = arith.addf %arg10, %84 : vector<1x128xf32>
      %86 = arith.mulf %78, %78 : vector<16x128xf32>
      %cst_78 = arith.constant dense<0.000000e+00> : vector<128xf32>
      %87 = vector.multi_reduction <add>, %86, %cst_78 [0] : vector<16x128xf32> to vector<128xf32>
      %88 = vector.shape_cast %87 : vector<128xf32> to vector<1x128xf32>
      %89 = arith.addf %arg11, %88 : vector<1x128xf32>
      scf.yield %85, %89 : vector<1x128xf32>, vector<1x128xf32>
    }
    %c16_i32_1 = arith.constant 16 : i32
    %c0 = arith.constant 0 : index
    %c0_2 = arith.constant 0 : index
    %c0_3 = arith.constant 0 : index
    %4 = vector.load %arg7[%c0, %c0_2, %c0_3] : memref<1x1x128xf32, #tpu.memory_space<vmem>>, vector<1x1x128xf32>
    %5 = vector.shape_cast %4 : vector<1x1x128xf32> to vector<1x128xf32>
    %6 = vector.shape_cast %3#0 : vector<1x128xf32> to vector<1x1x128xf32>
    tpu.vector_store %arg7[%c0, %c0_2, %c0_3], %6 {strides = array<i32>} : memref<1x1x128xf32, #tpu.memory_space<vmem>>, vector<1x1x128xf32>,
    %c0_4 = arith.constant 0 : index
    %c0_5 = arith.constant 0 : index
    %c0_6 = arith.constant 0 : index
    %7 = vector.load %arg8[%c0_4, %c0_5, %c0_6] : memref<1x1x128xf32, #tpu.memory_space<vmem>>, vector<1x1x128xf32>
    %8 = vector.shape_cast %7 : vector<1x1x128xf32> to vector<1x128xf32>
    %9 = vector.shape_cast %3#1 : vector<1x128xf32> to vector<1x1x128xf32>
    tpu.vector_store %arg8[%c0_4, %c0_5, %c0_6], %9 {strides = array<i32>} : memref<1x1x128xf32, #tpu.memory_space<vmem>>, vector<1x1x128xf32>,
    return
  }
  func.func @transform_0(%arg0: i32) -> (i32, i32, i32, i32) {
    %c0_i32 = arith.constant 0 : i32
    %c0_i32_0 = arith.constant 0 : i32
    %c0_i32_1 = arith.constant 0 : i32
    %c0_i32_2 = arith.constant 0 : i32
    return %arg0, %c0_i32, %c0_i32_0, %c0_i32_1 : i32, i32, i32, i32
  }
  func.func @transform_1(%arg0: i32) -> (i32, i32, i32, i32) {
    %c0_i32 = arith.constant 0 : i32
    %c0_i32_0 = arith.constant 0 : i32
    %c0_i32_1 = arith.constant 0 : i32
    %c0_i32_2 = arith.constant 0 : i32
    return %arg0, %c0_i32, %c0_i32_0, %c0_i32_1 : i32, i32, i32, i32
  }
  func.func @transform_2(%arg0: i32) -> (i32, i32, i32, i32) {
    %c0_i32 = arith.constant 0 : i32
    %c0_i32_0 = arith.constant 0 : i32
    %c0_i32_1 = arith.constant 0 : i32
    %c0_i32_2 = arith.constant 0 : i32
    return %arg0, %c0_i32, %c0_i32_0, %c0_i32_1 : i32, i32, i32, i32
  }
  func.func @transform_3(%arg0: i32) -> (i32, i32, i32, i32) {
    %c0_i32 = arith.constant 0 : i32
    %c0_i32_0 = arith.constant 0 : i32
    %c0_i32_1 = arith.constant 0 : i32
    %c0_i32_2 = arith.constant 0 : i32
    return %arg0, %c0_i32, %c0_i32_0, %c0_i32_1 : i32, i32, i32, i32
  }
  func.func @transform_4(%arg0: i32) -> (i32, i32) {
    %c0_i32 = arith.constant 0 : i32
    %c0_i32_0 = arith.constant 0 : i32
    %c0_i32_1 = arith.constant 0 : i32
    return %c0_i32, %c0_i32_0 : i32, i32
  }
  func.func @transform_5(%arg0: i32) -> (i32, i32, i32, i32) {
    %c0_i32 = arith.constant 0 : i32
    %c0_i32_0 = arith.constant 0 : i32
    %c0_i32_1 = arith.constant 0 : i32
    %c0_i32_2 = arith.constant 0 : i32
    return %arg0, %c0_i32, %c0_i32_0, %c0_i32_1 : i32, i32, i32, i32
  }
  func.func @transform_6(%arg0: i32) -> (i32, i32, i32) {
    %c0_i32 = arith.constant 0 : i32
    %c0_i32_0 = arith.constant 0 : i32
    %c0_i32_1 = arith.constant 0 : i32
    return %arg0, %c0_i32, %c0_i32_0 : i32, i32, i32
  }
  func.func @transform_7(%arg0: i32) -> (i32, i32, i32) {
    %c0_i32 = arith.constant 0 : i32
    %c0_i32_0 = arith.constant 0 : i32
    %c0_i32_1 = arith.constant 0 : i32
    return %arg0, %c0_i32, %c0_i32_0 : i32, i32, i32
  }
}

module attributes {stable_mosaic.version = 11 : i64} {
  func.func @_conv_s2_kernel(%arg0: i32, %arg1: memref<1x9x9x128xf32, #tpu.memory_space<vmem>>, %arg2: memref<1x9x9x128xf32, #tpu.memory_space<vmem>>, %arg3: memref<1x9x9x128xf32, #tpu.memory_space<vmem>>, %arg4: memref<1x9x9x128xf32, #tpu.memory_space<vmem>>, %arg5: memref<2048x128xf32, #tpu.memory_space<vmem>>, %arg6: memref<1x8x8x128xf32, #tpu.memory_space<vmem>>, %arg7: memref<1x1x128xf32, #tpu.memory_space<vmem>>, %arg8: memref<1x1x128xf32, #tpu.memory_space<vmem>>) attributes {dimension_semantics = [#tpu.dimension_semantics<parallel>], iteration_bounds = array<i64: 2>, scalar_prefetch = 0 : i64, scratch_operands = 0 : i64, tpu.core_type = #tpu.core_type<tc>, window_params = [{transform_indices = @transform_0, window_bounds = array<i64: 1, 9, 9, 128>}, {transform_indices = @transform_1, window_bounds = array<i64: 1, 9, 9, 128>}, {transform_indices = @transform_2, window_bounds = array<i64: 1, 9, 9, 128>}, {transform_indices = @transform_3, window_bounds = array<i64: 1, 9, 9, 128>}, {pipeline_mode = #tpu.pipeline_mode<synchronous>, transform_indices = @transform_4, window_bounds = array<i64: 2048, 128>}, {transform_indices = @transform_5, window_bounds = array<i64: 1, 8, 8, 128>}, {transform_indices = @transform_6, window_bounds = array<i64: 1, 1, 128>}, {transform_indices = @transform_7, window_bounds = array<i64: 1, 1, 128>}]} {
    %cst = arith.constant 0.000000e+00 : f32
    %0 = vector.broadcast %cst : f32 to vector<1x128xf32>
    %cst_0 = arith.constant 0.000000e+00 : f32
    %1 = vector.broadcast %cst_0 : f32 to vector<1x128xf32>
    %c0_i32 = arith.constant 0 : i32
    %c8_i32 = arith.constant 8 : i32
    %2 = arith.addi %c0_i32, %c8_i32 : i32
    %c1_i32 = arith.constant 1 : i32
    %3:2 = scf.for %arg9 = %c0_i32 to %2 step %c1_i32 iter_args(%arg10 = %0, %arg11 = %1) -> (vector<1x128xf32>, vector<1x128xf32>)  : i32 {
      %c0_i32_7 = arith.constant 0 : i32
      %10 = arith.addi %arg9, %c0_i32_7 : i32
      %c0_8 = arith.constant 0 : index
      %11 = arith.index_cast %10 : i32 to index
      %c0_9 = arith.constant 0 : index
      %c0_10 = arith.constant 0 : index
      %12 = vector.load %arg1[%c0_8, %11, %c0_9, %c0_10] : memref<1x9x9x128xf32, #tpu.memory_space<vmem>>, vector<1x1x8x128xf32>
      %13 = vector.shape_cast %12 : vector<1x1x8x128xf32> to vector<8x128xf32>
      %c0_i32_11 = arith.constant 0 : i32
      %14 = arith.addi %arg9, %c0_i32_11 : i32
      %c0_12 = arith.constant 0 : index
      %15 = arith.index_cast %14 : i32 to index
      %c0_13 = arith.constant 0 : index
      %c0_14 = arith.constant 0 : index
      %16 = vector.load %arg2[%c0_12, %15, %c0_13, %c0_14] : memref<1x9x9x128xf32, #tpu.memory_space<vmem>>, vector<1x1x8x128xf32>
      %17 = vector.shape_cast %16 : vector<1x1x8x128xf32> to vector<8x128xf32>
      %c0_i32_15 = arith.constant 0 : i32
      %18 = arith.addi %arg9, %c0_i32_15 : i32
      %c0_16 = arith.constant 0 : index
      %19 = arith.index_cast %18 : i32 to index
      %c1 = arith.constant 1 : index
      %c0_17 = arith.constant 0 : index
      %20 = vector.load %arg1[%c0_16, %19, %c1, %c0_17] : memref<1x9x9x128xf32, #tpu.memory_space<vmem>>, vector<1x1x8x128xf32>
      %21 = vector.shape_cast %20 : vector<1x1x8x128xf32> to vector<8x128xf32>
      %c0_i32_18 = arith.constant 0 : i32
      %22 = arith.addi %arg9, %c0_i32_18 : i32
      %c0_19 = arith.constant 0 : index
      %23 = arith.index_cast %22 : i32 to index
      %c1_20 = arith.constant 1 : index
      %c0_21 = arith.constant 0 : index
      %24 = vector.load %arg2[%c0_19, %23, %c1_20, %c0_21] : memref<1x9x9x128xf32, #tpu.memory_space<vmem>>, vector<1x1x8x128xf32>
      %25 = vector.shape_cast %24 : vector<1x1x8x128xf32> to vector<8x128xf32>
      %c0_i32_22 = arith.constant 0 : i32
      %26 = arith.addi %arg9, %c0_i32_22 : i32
      %c0_23 = arith.constant 0 : index
      %27 = arith.index_cast %26 : i32 to index
      %c0_24 = arith.constant 0 : index
      %c0_25 = arith.constant 0 : index
      %28 = vector.load %arg3[%c0_23, %27, %c0_24, %c0_25] : memref<1x9x9x128xf32, #tpu.memory_space<vmem>>, vector<1x1x8x128xf32>
      %29 = vector.shape_cast %28 : vector<1x1x8x128xf32> to vector<8x128xf32>
      %c0_i32_26 = arith.constant 0 : i32
      %30 = arith.addi %arg9, %c0_i32_26 : i32
      %c0_27 = arith.constant 0 : index
      %31 = arith.index_cast %30 : i32 to index
      %c0_28 = arith.constant 0 : index
      %c0_29 = arith.constant 0 : index
      %32 = vector.load %arg4[%c0_27, %31, %c0_28, %c0_29] : memref<1x9x9x128xf32, #tpu.memory_space<vmem>>, vector<1x1x8x128xf32>
      %33 = vector.shape_cast %32 : vector<1x1x8x128xf32> to vector<8x128xf32>
      %c0_i32_30 = arith.constant 0 : i32
      %34 = arith.addi %arg9, %c0_i32_30 : i32
      %c0_31 = arith.constant 0 : index
      %35 = arith.index_cast %34 : i32 to index
      %c1_32 = arith.constant 1 : index
      %c0_33 = arith.constant 0 : index
      %36 = vector.load %arg3[%c0_31, %35, %c1_32, %c0_33] : memref<1x9x9x128xf32, #tpu.memory_space<vmem>>, vector<1x1x8x128xf32>
      %37 = vector.shape_cast %36 : vector<1x1x8x128xf32> to vector<8x128xf32>
      %c0_i32_34 = arith.constant 0 : i32
      %38 = arith.addi %arg9, %c0_i32_34 : i32
      %c0_35 = arith.constant 0 : index
      %39 = arith.index_cast %38 : i32 to index
      %c1_36 = arith.constant 1 : index
      %c0_37 = arith.constant 0 : index
      %40 = vector.load %arg4[%c0_35, %39, %c1_36, %c0_37] : memref<1x9x9x128xf32, #tpu.memory_space<vmem>>, vector<1x1x8x128xf32>
      %41 = vector.shape_cast %40 : vector<1x1x8x128xf32> to vector<8x128xf32>
      %c1_i32_38 = arith.constant 1 : i32
      %42 = arith.addi %arg9, %c1_i32_38 : i32
      %c0_39 = arith.constant 0 : index
      %43 = arith.index_cast %42 : i32 to index
      %c0_40 = arith.constant 0 : index
      %c0_41 = arith.constant 0 : index
      %44 = vector.load %arg1[%c0_39, %43, %c0_40, %c0_41] : memref<1x9x9x128xf32, #tpu.memory_space<vmem>>, vector<1x1x8x128xf32>
      %45 = vector.shape_cast %44 : vector<1x1x8x128xf32> to vector<8x128xf32>
      %c1_i32_42 = arith.constant 1 : i32
      %46 = arith.addi %arg9, %c1_i32_42 : i32
      %c0_43 = arith.constant 0 : index
      %47 = arith.index_cast %46 : i32 to index
      %c0_44 = arith.constant 0 : index
      %c0_45 = arith.constant 0 : index
      %48 = vector.load %arg2[%c0_43, %47, %c0_44, %c0_45] : memref<1x9x9x128xf32, #tpu.memory_space<vmem>>, vector<1x1x8x128xf32>
      %49 = vector.shape_cast %48 : vector<1x1x8x128xf32> to vector<8x128xf32>
      %c1_i32_46 = arith.constant 1 : i32
      %50 = arith.addi %arg9, %c1_i32_46 : i32
      %c0_47 = arith.constant 0 : index
      %51 = arith.index_cast %50 : i32 to index
      %c1_48 = arith.constant 1 : index
      %c0_49 = arith.constant 0 : index
      %52 = vector.load %arg1[%c0_47, %51, %c1_48, %c0_49] : memref<1x9x9x128xf32, #tpu.memory_space<vmem>>, vector<1x1x8x128xf32>
      %53 = vector.shape_cast %52 : vector<1x1x8x128xf32> to vector<8x128xf32>
      %c1_i32_50 = arith.constant 1 : i32
      %54 = arith.addi %arg9, %c1_i32_50 : i32
      %c0_51 = arith.constant 0 : index
      %55 = arith.index_cast %54 : i32 to index
      %c1_52 = arith.constant 1 : index
      %c0_53 = arith.constant 0 : index
      %56 = vector.load %arg2[%c0_51, %55, %c1_52, %c0_53] : memref<1x9x9x128xf32, #tpu.memory_space<vmem>>, vector<1x1x8x128xf32>
      %57 = vector.shape_cast %56 : vector<1x1x8x128xf32> to vector<8x128xf32>
      %c1_i32_54 = arith.constant 1 : i32
      %58 = arith.addi %arg9, %c1_i32_54 : i32
      %c0_55 = arith.constant 0 : index
      %59 = arith.index_cast %58 : i32 to index
      %c0_56 = arith.constant 0 : index
      %c0_57 = arith.constant 0 : index
      %60 = vector.load %arg3[%c0_55, %59, %c0_56, %c0_57] : memref<1x9x9x128xf32, #tpu.memory_space<vmem>>, vector<1x1x8x128xf32>
      %61 = vector.shape_cast %60 : vector<1x1x8x128xf32> to vector<8x128xf32>
      %c1_i32_58 = arith.constant 1 : i32
      %62 = arith.addi %arg9, %c1_i32_58 : i32
      %c0_59 = arith.constant 0 : index
      %63 = arith.index_cast %62 : i32 to index
      %c0_60 = arith.constant 0 : index
      %c0_61 = arith.constant 0 : index
      %64 = vector.load %arg4[%c0_59, %63, %c0_60, %c0_61] : memref<1x9x9x128xf32, #tpu.memory_space<vmem>>, vector<1x1x8x128xf32>
      %65 = vector.shape_cast %64 : vector<1x1x8x128xf32> to vector<8x128xf32>
      %c1_i32_62 = arith.constant 1 : i32
      %66 = arith.addi %arg9, %c1_i32_62 : i32
      %c0_63 = arith.constant 0 : index
      %67 = arith.index_cast %66 : i32 to index
      %c1_64 = arith.constant 1 : index
      %c0_65 = arith.constant 0 : index
      %68 = vector.load %arg3[%c0_63, %67, %c1_64, %c0_65] : memref<1x9x9x128xf32, #tpu.memory_space<vmem>>, vector<1x1x8x128xf32>
      %69 = vector.shape_cast %68 : vector<1x1x8x128xf32> to vector<8x128xf32>
      %c1_i32_66 = arith.constant 1 : i32
      %70 = arith.addi %arg9, %c1_i32_66 : i32
      %c0_67 = arith.constant 0 : index
      %71 = arith.index_cast %70 : i32 to index
      %c1_68 = arith.constant 1 : index
      %c0_69 = arith.constant 0 : index
      %72 = vector.load %arg4[%c0_67, %71, %c1_68, %c0_69] : memref<1x9x9x128xf32, #tpu.memory_space<vmem>>, vector<1x1x8x128xf32>
      %73 = vector.shape_cast %72 : vector<1x1x8x128xf32> to vector<8x128xf32>
      %74 = tpu.concatenate %13, %17, %21, %25, %29, %33, %37, %41, %45, %49, %53, %57, %61, %65, %69, %73 in 1 : vector<8x128xf32>, vector<8x128xf32>, vector<8x128xf32>, vector<8x128xf32>, vector<8x128xf32>, vector<8x128xf32>, vector<8x128xf32>, vector<8x128xf32>, vector<8x128xf32>, vector<8x128xf32>, vector<8x128xf32>, vector<8x128xf32>, vector<8x128xf32>, vector<8x128xf32>, vector<8x128xf32>, vector<8x128xf32> -> vector<8x2048xf32>
      %c0_70 = arith.constant 0 : index
      %c0_71 = arith.constant 0 : index
      %75 = vector.load %arg5[%c0_70, %c0_71] : memref<2048x128xf32, #tpu.memory_space<vmem>>, vector<2048x128xf32>
      %cst_72 = arith.constant dense<0.000000e+00> : vector<8x128xf32>
      %76 = tpu.matmul %74, %75, %cst_72 {dimension_numbers = #tpu.dot_dimension_numbers<[1], [0], [0], [1], [0, 0, 1, 1], [], []>} : vector<8x2048xf32>, vector<2048x128xf32>, vector<8x128xf32> -> vector<8x128xf32>
      %c0_73 = arith.constant 0 : index
      %77 = arith.index_cast %arg9 : i32 to index
      %c0_74 = arith.constant 0 : index
      %c0_75 = arith.constant 0 : index
      %78 = vector.load %arg6[%c0_73, %77, %c0_74, %c0_75] : memref<1x8x8x128xf32, #tpu.memory_space<vmem>>, vector<1x1x8x128xf32>
      %79 = vector.shape_cast %78 : vector<1x1x8x128xf32> to vector<8x128xf32>
      %80 = vector.shape_cast %76 : vector<8x128xf32> to vector<1x1x8x128xf32>
      tpu.vector_store %arg6[%c0_73, %77, %c0_74, %c0_75], %80 {strides = array<i32>} : memref<1x8x8x128xf32, #tpu.memory_space<vmem>>, vector<1x1x8x128xf32>,
      %cst_76 = arith.constant dense<0.000000e+00> : vector<128xf32>
      %81 = vector.multi_reduction <add>, %76, %cst_76 [0] : vector<8x128xf32> to vector<128xf32>
      %82 = vector.shape_cast %81 : vector<128xf32> to vector<1x128xf32>
      %83 = arith.addf %arg10, %82 : vector<1x128xf32>
      %84 = arith.mulf %76, %76 : vector<8x128xf32>
      %cst_77 = arith.constant dense<0.000000e+00> : vector<128xf32>
      %85 = vector.multi_reduction <add>, %84, %cst_77 [0] : vector<8x128xf32> to vector<128xf32>
      %86 = vector.shape_cast %85 : vector<128xf32> to vector<1x128xf32>
      %87 = arith.addf %arg11, %86 : vector<1x128xf32>
      scf.yield %83, %87 : vector<1x128xf32>, vector<1x128xf32>
    }
    %c8_i32_1 = arith.constant 8 : i32
    %c0 = arith.constant 0 : index
    %c0_2 = arith.constant 0 : index
    %c0_3 = arith.constant 0 : index
    %4 = vector.load %arg7[%c0, %c0_2, %c0_3] : memref<1x1x128xf32, #tpu.memory_space<vmem>>, vector<1x1x128xf32>
    %5 = vector.shape_cast %4 : vector<1x1x128xf32> to vector<1x128xf32>
    %6 = vector.shape_cast %3#0 : vector<1x128xf32> to vector<1x1x128xf32>
    tpu.vector_store %arg7[%c0, %c0_2, %c0_3], %6 {strides = array<i32>} : memref<1x1x128xf32, #tpu.memory_space<vmem>>, vector<1x1x128xf32>,
    %c0_4 = arith.constant 0 : index
    %c0_5 = arith.constant 0 : index
    %c0_6 = arith.constant 0 : index
    %7 = vector.load %arg8[%c0_4, %c0_5, %c0_6] : memref<1x1x128xf32, #tpu.memory_space<vmem>>, vector<1x1x128xf32>
    %8 = vector.shape_cast %7 : vector<1x1x128xf32> to vector<1x128xf32>
    %9 = vector.shape_cast %3#1 : vector<1x128xf32> to vector<1x1x128xf32>
    tpu.vector_store %arg8[%c0_4, %c0_5, %c0_6], %9 {strides = array<i32>} : memref<1x1x128xf32, #tpu.memory_space<vmem>>, vector<1x1x128xf32>,
    return
  }
  func.func @transform_0(%arg0: i32) -> (i32, i32, i32, i32) {
    %c0_i32 = arith.constant 0 : i32
    %c0_i32_0 = arith.constant 0 : i32
    %c0_i32_1 = arith.constant 0 : i32
    %c0_i32_2 = arith.constant 0 : i32
    return %arg0, %c0_i32, %c0_i32_0, %c0_i32_1 : i32, i32, i32, i32
  }
  func.func @transform_1(%arg0: i32) -> (i32, i32, i32, i32) {
    %c0_i32 = arith.constant 0 : i32
    %c0_i32_0 = arith.constant 0 : i32
    %c0_i32_1 = arith.constant 0 : i32
    %c0_i32_2 = arith.constant 0 : i32
    return %arg0, %c0_i32, %c0_i32_0, %c0_i32_1 : i32, i32, i32, i32
  }
  func.func @transform_2(%arg0: i32) -> (i32, i32, i32, i32) {
    %c0_i32 = arith.constant 0 : i32
    %c0_i32_0 = arith.constant 0 : i32
    %c0_i32_1 = arith.constant 0 : i32
    %c0_i32_2 = arith.constant 0 : i32
    return %arg0, %c0_i32, %c0_i32_0, %c0_i32_1 : i32, i32, i32, i32
  }
  func.func @transform_3(%arg0: i32) -> (i32, i32, i32, i32) {
    %c0_i32 = arith.constant 0 : i32
    %c0_i32_0 = arith.constant 0 : i32
    %c0_i32_1 = arith.constant 0 : i32
    %c0_i32_2 = arith.constant 0 : i32
    return %arg0, %c0_i32, %c0_i32_0, %c0_i32_1 : i32, i32, i32, i32
  }
  func.func @transform_4(%arg0: i32) -> (i32, i32) {
    %c0_i32 = arith.constant 0 : i32
    %c0_i32_0 = arith.constant 0 : i32
    %c0_i32_1 = arith.constant 0 : i32
    return %c0_i32, %c0_i32_0 : i32, i32
  }
  func.func @transform_5(%arg0: i32) -> (i32, i32, i32, i32) {
    %c0_i32 = arith.constant 0 : i32
    %c0_i32_0 = arith.constant 0 : i32
    %c0_i32_1 = arith.constant 0 : i32
    %c0_i32_2 = arith.constant 0 : i32
    return %arg0, %c0_i32, %c0_i32_0, %c0_i32_1 : i32, i32, i32, i32
  }
  func.func @transform_6(%arg0: i32) -> (i32, i32, i32) {
    %c0_i32 = arith.constant 0 : i32
    %c0_i32_0 = arith.constant 0 : i32
    %c0_i32_1 = arith.constant 0 : i32
    return %arg0, %c0_i32, %c0_i32_0 : i32, i32, i32
  }
  func.func @transform_7(%arg0: i32) -> (i32, i32, i32) {
    %c0_i32 = arith.constant 0 : i32
    %c0_i32_0 = arith.constant 0 : i32
    %c0_i32_1 = arith.constant 0 : i32
    return %arg0, %c0_i32, %c0_i32_0 : i32, i32, i32
  }
}

module attributes {stable_mosaic.version = 11 : i64} {
  func.func @_conv_s2_kernel(%arg0: i32, %arg1: memref<1x5x5x128xf32, #tpu.memory_space<vmem>>, %arg2: memref<1x5x5x128xf32, #tpu.memory_space<vmem>>, %arg3: memref<1x5x5x128xf32, #tpu.memory_space<vmem>>, %arg4: memref<1x5x5x128xf32, #tpu.memory_space<vmem>>, %arg5: memref<2048x128xf32, #tpu.memory_space<vmem>>, %arg6: memref<1x4x4x128xf32, #tpu.memory_space<vmem>>, %arg7: memref<1x1x128xf32, #tpu.memory_space<vmem>>, %arg8: memref<1x1x128xf32, #tpu.memory_space<vmem>>) attributes {dimension_semantics = [#tpu.dimension_semantics<parallel>], iteration_bounds = array<i64: 2>, scalar_prefetch = 0 : i64, scratch_operands = 0 : i64, tpu.core_type = #tpu.core_type<tc>, window_params = [{transform_indices = @transform_0, window_bounds = array<i64: 1, 5, 5, 128>}, {transform_indices = @transform_1, window_bounds = array<i64: 1, 5, 5, 128>}, {transform_indices = @transform_2, window_bounds = array<i64: 1, 5, 5, 128>}, {transform_indices = @transform_3, window_bounds = array<i64: 1, 5, 5, 128>}, {pipeline_mode = #tpu.pipeline_mode<synchronous>, transform_indices = @transform_4, window_bounds = array<i64: 2048, 128>}, {transform_indices = @transform_5, window_bounds = array<i64: 1, 4, 4, 128>}, {transform_indices = @transform_6, window_bounds = array<i64: 1, 1, 128>}, {transform_indices = @transform_7, window_bounds = array<i64: 1, 1, 128>}]} {
    %cst = arith.constant 0.000000e+00 : f32
    %0 = vector.broadcast %cst : f32 to vector<1x128xf32>
    %cst_0 = arith.constant 0.000000e+00 : f32
    %1 = vector.broadcast %cst_0 : f32 to vector<1x128xf32>
    %c0_i32 = arith.constant 0 : i32
    %c4_i32 = arith.constant 4 : i32
    %2 = arith.addi %c0_i32, %c4_i32 : i32
    %c1_i32 = arith.constant 1 : i32
    %3:2 = scf.for %arg9 = %c0_i32 to %2 step %c1_i32 iter_args(%arg10 = %0, %arg11 = %1) -> (vector<1x128xf32>, vector<1x128xf32>)  : i32 {
      %c0_i32_7 = arith.constant 0 : i32
      %10 = arith.addi %arg9, %c0_i32_7 : i32
      %c0_8 = arith.constant 0 : index
      %11 = arith.index_cast %10 : i32 to index
      %c0_9 = arith.constant 0 : index
      %c0_10 = arith.constant 0 : index
      %12 = vector.load %arg1[%c0_8, %11, %c0_9, %c0_10] : memref<1x5x5x128xf32, #tpu.memory_space<vmem>>, vector<1x1x4x128xf32>
      %13 = vector.shape_cast %12 : vector<1x1x4x128xf32> to vector<4x128xf32>
      %c0_i32_11 = arith.constant 0 : i32
      %14 = arith.addi %arg9, %c0_i32_11 : i32
      %c0_12 = arith.constant 0 : index
      %15 = arith.index_cast %14 : i32 to index
      %c0_13 = arith.constant 0 : index
      %c0_14 = arith.constant 0 : index
      %16 = vector.load %arg2[%c0_12, %15, %c0_13, %c0_14] : memref<1x5x5x128xf32, #tpu.memory_space<vmem>>, vector<1x1x4x128xf32>
      %17 = vector.shape_cast %16 : vector<1x1x4x128xf32> to vector<4x128xf32>
      %c0_i32_15 = arith.constant 0 : i32
      %18 = arith.addi %arg9, %c0_i32_15 : i32
      %c0_16 = arith.constant 0 : index
      %19 = arith.index_cast %18 : i32 to index
      %c1 = arith.constant 1 : index
      %c0_17 = arith.constant 0 : index
      %20 = vector.load %arg1[%c0_16, %19, %c1, %c0_17] : memref<1x5x5x128xf32, #tpu.memory_space<vmem>>, vector<1x1x4x128xf32>
      %21 = vector.shape_cast %20 : vector<1x1x4x128xf32> to vector<4x128xf32>
      %c0_i32_18 = arith.constant 0 : i32
      %22 = arith.addi %arg9, %c0_i32_18 : i32
      %c0_19 = arith.constant 0 : index
      %23 = arith.index_cast %22 : i32 to index
      %c1_20 = arith.constant 1 : index
      %c0_21 = arith.constant 0 : index
      %24 = vector.load %arg2[%c0_19, %23, %c1_20, %c0_21] : memref<1x5x5x128xf32, #tpu.memory_space<vmem>>, vector<1x1x4x128xf32>
      %25 = vector.shape_cast %24 : vector<1x1x4x128xf32> to vector<4x128xf32>
      %c0_i32_22 = arith.constant 0 : i32
      %26 = arith.addi %arg9, %c0_i32_22 : i32
      %c0_23 = arith.constant 0 : index
      %27 = arith.index_cast %26 : i32 to index
      %c0_24 = arith.constant 0 : index
      %c0_25 = arith.constant 0 : index
      %28 = vector.load %arg3[%c0_23, %27, %c0_24, %c0_25] : memref<1x5x5x128xf32, #tpu.memory_space<vmem>>, vector<1x1x4x128xf32>
      %29 = vector.shape_cast %28 : vector<1x1x4x128xf32> to vector<4x128xf32>
      %c0_i32_26 = arith.constant 0 : i32
      %30 = arith.addi %arg9, %c0_i32_26 : i32
      %c0_27 = arith.constant 0 : index
      %31 = arith.index_cast %30 : i32 to index
      %c0_28 = arith.constant 0 : index
      %c0_29 = arith.constant 0 : index
      %32 = vector.load %arg4[%c0_27, %31, %c0_28, %c0_29] : memref<1x5x5x128xf32, #tpu.memory_space<vmem>>, vector<1x1x4x128xf32>
      %33 = vector.shape_cast %32 : vector<1x1x4x128xf32> to vector<4x128xf32>
      %c0_i32_30 = arith.constant 0 : i32
      %34 = arith.addi %arg9, %c0_i32_30 : i32
      %c0_31 = arith.constant 0 : index
      %35 = arith.index_cast %34 : i32 to index
      %c1_32 = arith.constant 1 : index
      %c0_33 = arith.constant 0 : index
      %36 = vector.load %arg3[%c0_31, %35, %c1_32, %c0_33] : memref<1x5x5x128xf32, #tpu.memory_space<vmem>>, vector<1x1x4x128xf32>
      %37 = vector.shape_cast %36 : vector<1x1x4x128xf32> to vector<4x128xf32>
      %c0_i32_34 = arith.constant 0 : i32
      %38 = arith.addi %arg9, %c0_i32_34 : i32
      %c0_35 = arith.constant 0 : index
      %39 = arith.index_cast %38 : i32 to index
      %c1_36 = arith.constant 1 : index
      %c0_37 = arith.constant 0 : index
      %40 = vector.load %arg4[%c0_35, %39, %c1_36, %c0_37] : memref<1x5x5x128xf32, #tpu.memory_space<vmem>>, vector<1x1x4x128xf32>
      %41 = vector.shape_cast %40 : vector<1x1x4x128xf32> to vector<4x128xf32>
      %c1_i32_38 = arith.constant 1 : i32
      %42 = arith.addi %arg9, %c1_i32_38 : i32
      %c0_39 = arith.constant 0 : index
      %43 = arith.index_cast %42 : i32 to index
      %c0_40 = arith.constant 0 : index
      %c0_41 = arith.constant 0 : index
      %44 = vector.load %arg1[%c0_39, %43, %c0_40, %c0_41] : memref<1x5x5x128xf32, #tpu.memory_space<vmem>>, vector<1x1x4x128xf32>
      %45 = vector.shape_cast %44 : vector<1x1x4x128xf32> to vector<4x128xf32>
      %c1_i32_42 = arith.constant 1 : i32
      %46 = arith.addi %arg9, %c1_i32_42 : i32
      %c0_43 = arith.constant 0 : index
      %47 = arith.index_cast %46 : i32 to index
      %c0_44 = arith.constant 0 : index
      %c0_45 = arith.constant 0 : index
      %48 = vector.load %arg2[%c0_43, %47, %c0_44, %c0_45] : memref<1x5x5x128xf32, #tpu.memory_space<vmem>>, vector<1x1x4x128xf32>
      %49 = vector.shape_cast %48 : vector<1x1x4x128xf32> to vector<4x128xf32>
      %c1_i32_46 = arith.constant 1 : i32
      %50 = arith.addi %arg9, %c1_i32_46 : i32
      %c0_47 = arith.constant 0 : index
      %51 = arith.index_cast %50 : i32 to index
      %c1_48 = arith.constant 1 : index
      %c0_49 = arith.constant 0 : index
      %52 = vector.load %arg1[%c0_47, %51, %c1_48, %c0_49] : memref<1x5x5x128xf32, #tpu.memory_space<vmem>>, vector<1x1x4x128xf32>
      %53 = vector.shape_cast %52 : vector<1x1x4x128xf32> to vector<4x128xf32>
      %c1_i32_50 = arith.constant 1 : i32
      %54 = arith.addi %arg9, %c1_i32_50 : i32
      %c0_51 = arith.constant 0 : index
      %55 = arith.index_cast %54 : i32 to index
      %c1_52 = arith.constant 1 : index
      %c0_53 = arith.constant 0 : index
      %56 = vector.load %arg2[%c0_51, %55, %c1_52, %c0_53] : memref<1x5x5x128xf32, #tpu.memory_space<vmem>>, vector<1x1x4x128xf32>
      %57 = vector.shape_cast %56 : vector<1x1x4x128xf32> to vector<4x128xf32>
      %c1_i32_54 = arith.constant 1 : i32
      %58 = arith.addi %arg9, %c1_i32_54 : i32
      %c0_55 = arith.constant 0 : index
      %59 = arith.index_cast %58 : i32 to index
      %c0_56 = arith.constant 0 : index
      %c0_57 = arith.constant 0 : index
      %60 = vector.load %arg3[%c0_55, %59, %c0_56, %c0_57] : memref<1x5x5x128xf32, #tpu.memory_space<vmem>>, vector<1x1x4x128xf32>
      %61 = vector.shape_cast %60 : vector<1x1x4x128xf32> to vector<4x128xf32>
      %c1_i32_58 = arith.constant 1 : i32
      %62 = arith.addi %arg9, %c1_i32_58 : i32
      %c0_59 = arith.constant 0 : index
      %63 = arith.index_cast %62 : i32 to index
      %c0_60 = arith.constant 0 : index
      %c0_61 = arith.constant 0 : index
      %64 = vector.load %arg4[%c0_59, %63, %c0_60, %c0_61] : memref<1x5x5x128xf32, #tpu.memory_space<vmem>>, vector<1x1x4x128xf32>
      %65 = vector.shape_cast %64 : vector<1x1x4x128xf32> to vector<4x128xf32>
      %c1_i32_62 = arith.constant 1 : i32
      %66 = arith.addi %arg9, %c1_i32_62 : i32
      %c0_63 = arith.constant 0 : index
      %67 = arith.index_cast %66 : i32 to index
      %c1_64 = arith.constant 1 : index
      %c0_65 = arith.constant 0 : index
      %68 = vector.load %arg3[%c0_63, %67, %c1_64, %c0_65] : memref<1x5x5x128xf32, #tpu.memory_space<vmem>>, vector<1x1x4x128xf32>
      %69 = vector.shape_cast %68 : vector<1x1x4x128xf32> to vector<4x128xf32>
      %c1_i32_66 = arith.constant 1 : i32
      %70 = arith.addi %arg9, %c1_i32_66 : i32
      %c0_67 = arith.constant 0 : index
      %71 = arith.index_cast %70 : i32 to index
      %c1_68 = arith.constant 1 : index
      %c0_69 = arith.constant 0 : index
      %72 = vector.load %arg4[%c0_67, %71, %c1_68, %c0_69] : memref<1x5x5x128xf32, #tpu.memory_space<vmem>>, vector<1x1x4x128xf32>
      %73 = vector.shape_cast %72 : vector<1x1x4x128xf32> to vector<4x128xf32>
      %74 = tpu.concatenate %13, %17, %21, %25, %29, %33, %37, %41, %45, %49, %53, %57, %61, %65, %69, %73 in 1 : vector<4x128xf32>, vector<4x128xf32>, vector<4x128xf32>, vector<4x128xf32>, vector<4x128xf32>, vector<4x128xf32>, vector<4x128xf32>, vector<4x128xf32>, vector<4x128xf32>, vector<4x128xf32>, vector<4x128xf32>, vector<4x128xf32>, vector<4x128xf32>, vector<4x128xf32>, vector<4x128xf32>, vector<4x128xf32> -> vector<4x2048xf32>
      %c0_70 = arith.constant 0 : index
      %c0_71 = arith.constant 0 : index
      %75 = vector.load %arg5[%c0_70, %c0_71] : memref<2048x128xf32, #tpu.memory_space<vmem>>, vector<2048x128xf32>
      %cst_72 = arith.constant dense<0.000000e+00> : vector<4x128xf32>
      %76 = tpu.matmul %74, %75, %cst_72 {dimension_numbers = #tpu.dot_dimension_numbers<[1], [0], [0], [1], [0, 0, 1, 1], [], []>} : vector<4x2048xf32>, vector<2048x128xf32>, vector<4x128xf32> -> vector<4x128xf32>
      %c0_73 = arith.constant 0 : index
      %77 = arith.index_cast %arg9 : i32 to index
      %c0_74 = arith.constant 0 : index
      %c0_75 = arith.constant 0 : index
      %78 = vector.load %arg6[%c0_73, %77, %c0_74, %c0_75] : memref<1x4x4x128xf32, #tpu.memory_space<vmem>>, vector<1x1x4x128xf32>
      %79 = vector.shape_cast %78 : vector<1x1x4x128xf32> to vector<4x128xf32>
      %80 = vector.shape_cast %76 : vector<4x128xf32> to vector<1x1x4x128xf32>
      tpu.vector_store %arg6[%c0_73, %77, %c0_74, %c0_75], %80 {strides = array<i32>} : memref<1x4x4x128xf32, #tpu.memory_space<vmem>>, vector<1x1x4x128xf32>,
      %cst_76 = arith.constant dense<0.000000e+00> : vector<128xf32>
      %81 = vector.multi_reduction <add>, %76, %cst_76 [0] : vector<4x128xf32> to vector<128xf32>
      %82 = vector.shape_cast %81 : vector<128xf32> to vector<1x128xf32>
      %83 = arith.addf %arg10, %82 : vector<1x128xf32>
      %84 = arith.mulf %76, %76 : vector<4x128xf32>
      %cst_77 = arith.constant dense<0.000000e+00> : vector<128xf32>
      %85 = vector.multi_reduction <add>, %84, %cst_77 [0] : vector<4x128xf32> to vector<128xf32>
      %86 = vector.shape_cast %85 : vector<128xf32> to vector<1x128xf32>
      %87 = arith.addf %arg11, %86 : vector<1x128xf32>
      scf.yield %83, %87 : vector<1x128xf32>, vector<1x128xf32>
    }
    %c4_i32_1 = arith.constant 4 : i32
    %c0 = arith.constant 0 : index
    %c0_2 = arith.constant 0 : index
    %c0_3 = arith.constant 0 : index
    %4 = vector.load %arg7[%c0, %c0_2, %c0_3] : memref<1x1x128xf32, #tpu.memory_space<vmem>>, vector<1x1x128xf32>
    %5 = vector.shape_cast %4 : vector<1x1x128xf32> to vector<1x128xf32>
    %6 = vector.shape_cast %3#0 : vector<1x128xf32> to vector<1x1x128xf32>
    tpu.vector_store %arg7[%c0, %c0_2, %c0_3], %6 {strides = array<i32>} : memref<1x1x128xf32, #tpu.memory_space<vmem>>, vector<1x1x128xf32>,
    %c0_4 = arith.constant 0 : index
    %c0_5 = arith.constant 0 : index
    %c0_6 = arith.constant 0 : index
    %7 = vector.load %arg8[%c0_4, %c0_5, %c0_6] : memref<1x1x128xf32, #tpu.memory_space<vmem>>, vector<1x1x128xf32>
    %8 = vector.shape_cast %7 : vector<1x1x128xf32> to vector<1x128xf32>
    %9 = vector.shape_cast %3#1 : vector<1x128xf32> to vector<1x1x128xf32>
    tpu.vector_store %arg8[%c0_4, %c0_5, %c0_6], %9 {strides = array<i32>} : memref<1x1x128xf32, #tpu.memory_space<vmem>>, vector<1x1x128xf32>,
    return
  }
  func.func @transform_0(%arg0: i32) -> (i32, i32, i32, i32) {
    %c0_i32 = arith.constant 0 : i32
    %c0_i32_0 = arith.constant 0 : i32
    %c0_i32_1 = arith.constant 0 : i32
    %c0_i32_2 = arith.constant 0 : i32
    return %arg0, %c0_i32, %c0_i32_0, %c0_i32_1 : i32, i32, i32, i32
  }
  func.func @transform_1(%arg0: i32) -> (i32, i32, i32, i32) {
    %c0_i32 = arith.constant 0 : i32
    %c0_i32_0 = arith.constant 0 : i32
    %c0_i32_1 = arith.constant 0 : i32
    %c0_i32_2 = arith.constant 0 : i32
    return %arg0, %c0_i32, %c0_i32_0, %c0_i32_1 : i32, i32, i32, i32
  }
  func.func @transform_2(%arg0: i32) -> (i32, i32, i32, i32) {
    %c0_i32 = arith.constant 0 : i32
    %c0_i32_0 = arith.constant 0 : i32
    %c0_i32_1 = arith.constant 0 : i32
    %c0_i32_2 = arith.constant 0 : i32
    return %arg0, %c0_i32, %c0_i32_0, %c0_i32_1 : i32, i32, i32, i32
  }
  func.func @transform_3(%arg0: i32) -> (i32, i32, i32, i32) {
    %c0_i32 = arith.constant 0 : i32
    %c0_i32_0 = arith.constant 0 : i32
    %c0_i32_1 = arith.constant 0 : i32
    %c0_i32_2 = arith.constant 0 : i32
    return %arg0, %c0_i32, %c0_i32_0, %c0_i32_1 : i32, i32, i32, i32
  }
  func.func @transform_4(%arg0: i32) -> (i32, i32) {
    %c0_i32 = arith.constant 0 : i32
    %c0_i32_0 = arith.constant 0 : i32
    %c0_i32_1 = arith.constant 0 : i32
    return %c0_i32, %c0_i32_0 : i32, i32
  }
  func.func @transform_5(%arg0: i32) -> (i32, i32, i32, i32) {
    %c0_i32 = arith.constant 0 : i32
    %c0_i32_0 = arith.constant 0 : i32
    %c0_i32_1 = arith.constant 0 : i32
    %c0_i32_2 = arith.constant 0 : i32
    return %arg0, %c0_i32, %c0_i32_0, %c0_i32_1 : i32, i32, i32, i32
  }
  func.func @transform_6(%arg0: i32) -> (i32, i32, i32) {
    %c0_i32 = arith.constant 0 : i32
    %c0_i32_0 = arith.constant 0 : i32
    %c0_i32_1 = arith.constant 0 : i32
    return %arg0, %c0_i32, %c0_i32_0 : i32, i32, i32
  }
  func.func @transform_7(%arg0: i32) -> (i32, i32, i32) {
    %c0_i32 = arith.constant 0 : i32
    %c0_i32_0 = arith.constant 0 : i32
    %c0_i32_1 = arith.constant 0 : i32
    return %arg0, %c0_i32, %c0_i32_0 : i32, i32, i32
  }
}

module attributes {stable_mosaic.version = 11 : i64} {
  func.func @_conv_s2_kernel(%arg0: i32, %arg1: memref<1x3x3x128xf32, #tpu.memory_space<vmem>>, %arg2: memref<1x3x3x128xf32, #tpu.memory_space<vmem>>, %arg3: memref<1x3x3x128xf32, #tpu.memory_space<vmem>>, %arg4: memref<1x3x3x128xf32, #tpu.memory_space<vmem>>, %arg5: memref<2048x128xf32, #tpu.memory_space<vmem>>, %arg6: memref<1x2x2x128xf32, #tpu.memory_space<vmem>>, %arg7: memref<1x1x128xf32, #tpu.memory_space<vmem>>, %arg8: memref<1x1x128xf32, #tpu.memory_space<vmem>>) attributes {dimension_semantics = [#tpu.dimension_semantics<parallel>], iteration_bounds = array<i64: 2>, scalar_prefetch = 0 : i64, scratch_operands = 0 : i64, tpu.core_type = #tpu.core_type<tc>, window_params = [{transform_indices = @transform_0, window_bounds = array<i64: 1, 3, 3, 128>}, {transform_indices = @transform_1, window_bounds = array<i64: 1, 3, 3, 128>}, {transform_indices = @transform_2, window_bounds = array<i64: 1, 3, 3, 128>}, {transform_indices = @transform_3, window_bounds = array<i64: 1, 3, 3, 128>}, {pipeline_mode = #tpu.pipeline_mode<synchronous>, transform_indices = @transform_4, window_bounds = array<i64: 2048, 128>}, {transform_indices = @transform_5, window_bounds = array<i64: 1, 2, 2, 128>}, {transform_indices = @transform_6, window_bounds = array<i64: 1, 1, 128>}, {transform_indices = @transform_7, window_bounds = array<i64: 1, 1, 128>}]} {
    %cst = arith.constant 0.000000e+00 : f32
    %0 = vector.broadcast %cst : f32 to vector<1x128xf32>
    %cst_0 = arith.constant 0.000000e+00 : f32
    %1 = vector.broadcast %cst_0 : f32 to vector<1x128xf32>
    %c0_i32 = arith.constant 0 : i32
    %c2_i32 = arith.constant 2 : i32
    %2 = arith.addi %c0_i32, %c2_i32 : i32
    %c1_i32 = arith.constant 1 : i32
    %3:2 = scf.for %arg9 = %c0_i32 to %2 step %c1_i32 iter_args(%arg10 = %0, %arg11 = %1) -> (vector<1x128xf32>, vector<1x128xf32>)  : i32 {
      %c0_i32_7 = arith.constant 0 : i32
      %10 = arith.addi %arg9, %c0_i32_7 : i32
      %c0_8 = arith.constant 0 : index
      %11 = arith.index_cast %10 : i32 to index
      %c0_9 = arith.constant 0 : index
      %c0_10 = arith.constant 0 : index
      %12 = vector.load %arg1[%c0_8, %11, %c0_9, %c0_10] : memref<1x3x3x128xf32, #tpu.memory_space<vmem>>, vector<1x1x2x128xf32>
      %13 = vector.shape_cast %12 : vector<1x1x2x128xf32> to vector<2x128xf32>
      %c0_i32_11 = arith.constant 0 : i32
      %14 = arith.addi %arg9, %c0_i32_11 : i32
      %c0_12 = arith.constant 0 : index
      %15 = arith.index_cast %14 : i32 to index
      %c0_13 = arith.constant 0 : index
      %c0_14 = arith.constant 0 : index
      %16 = vector.load %arg2[%c0_12, %15, %c0_13, %c0_14] : memref<1x3x3x128xf32, #tpu.memory_space<vmem>>, vector<1x1x2x128xf32>
      %17 = vector.shape_cast %16 : vector<1x1x2x128xf32> to vector<2x128xf32>
      %c0_i32_15 = arith.constant 0 : i32
      %18 = arith.addi %arg9, %c0_i32_15 : i32
      %c0_16 = arith.constant 0 : index
      %19 = arith.index_cast %18 : i32 to index
      %c1 = arith.constant 1 : index
      %c0_17 = arith.constant 0 : index
      %20 = vector.load %arg1[%c0_16, %19, %c1, %c0_17] : memref<1x3x3x128xf32, #tpu.memory_space<vmem>>, vector<1x1x2x128xf32>
      %21 = vector.shape_cast %20 : vector<1x1x2x128xf32> to vector<2x128xf32>
      %c0_i32_18 = arith.constant 0 : i32
      %22 = arith.addi %arg9, %c0_i32_18 : i32
      %c0_19 = arith.constant 0 : index
      %23 = arith.index_cast %22 : i32 to index
      %c1_20 = arith.constant 1 : index
      %c0_21 = arith.constant 0 : index
      %24 = vector.load %arg2[%c0_19, %23, %c1_20, %c0_21] : memref<1x3x3x128xf32, #tpu.memory_space<vmem>>, vector<1x1x2x128xf32>
      %25 = vector.shape_cast %24 : vector<1x1x2x128xf32> to vector<2x128xf32>
      %c0_i32_22 = arith.constant 0 : i32
      %26 = arith.addi %arg9, %c0_i32_22 : i32
      %c0_23 = arith.constant 0 : index
      %27 = arith.index_cast %26 : i32 to index
      %c0_24 = arith.constant 0 : index
      %c0_25 = arith.constant 0 : index
      %28 = vector.load %arg3[%c0_23, %27, %c0_24, %c0_25] : memref<1x3x3x128xf32, #tpu.memory_space<vmem>>, vector<1x1x2x128xf32>
      %29 = vector.shape_cast %28 : vector<1x1x2x128xf32> to vector<2x128xf32>
      %c0_i32_26 = arith.constant 0 : i32
      %30 = arith.addi %arg9, %c0_i32_26 : i32
      %c0_27 = arith.constant 0 : index
      %31 = arith.index_cast %30 : i32 to index
      %c0_28 = arith.constant 0 : index
      %c0_29 = arith.constant 0 : index
      %32 = vector.load %arg4[%c0_27, %31, %c0_28, %c0_29] : memref<1x3x3x128xf32, #tpu.memory_space<vmem>>, vector<1x1x2x128xf32>
      %33 = vector.shape_cast %32 : vector<1x1x2x128xf32> to vector<2x128xf32>
      %c0_i32_30 = arith.constant 0 : i32
      %34 = arith.addi %arg9, %c0_i32_30 : i32
      %c0_31 = arith.constant 0 : index
      %35 = arith.index_cast %34 : i32 to index
      %c1_32 = arith.constant 1 : index
      %c0_33 = arith.constant 0 : index
      %36 = vector.load %arg3[%c0_31, %35, %c1_32, %c0_33] : memref<1x3x3x128xf32, #tpu.memory_space<vmem>>, vector<1x1x2x128xf32>
      %37 = vector.shape_cast %36 : vector<1x1x2x128xf32> to vector<2x128xf32>
      %c0_i32_34 = arith.constant 0 : i32
      %38 = arith.addi %arg9, %c0_i32_34 : i32
      %c0_35 = arith.constant 0 : index
      %39 = arith.index_cast %38 : i32 to index
      %c1_36 = arith.constant 1 : index
      %c0_37 = arith.constant 0 : index
      %40 = vector.load %arg4[%c0_35, %39, %c1_36, %c0_37] : memref<1x3x3x128xf32, #tpu.memory_space<vmem>>, vector<1x1x2x128xf32>
      %41 = vector.shape_cast %40 : vector<1x1x2x128xf32> to vector<2x128xf32>
      %c1_i32_38 = arith.constant 1 : i32
      %42 = arith.addi %arg9, %c1_i32_38 : i32
      %c0_39 = arith.constant 0 : index
      %43 = arith.index_cast %42 : i32 to index
      %c0_40 = arith.constant 0 : index
      %c0_41 = arith.constant 0 : index
      %44 = vector.load %arg1[%c0_39, %43, %c0_40, %c0_41] : memref<1x3x3x128xf32, #tpu.memory_space<vmem>>, vector<1x1x2x128xf32>
      %45 = vector.shape_cast %44 : vector<1x1x2x128xf32> to vector<2x128xf32>
      %c1_i32_42 = arith.constant 1 : i32
      %46 = arith.addi %arg9, %c1_i32_42 : i32
      %c0_43 = arith.constant 0 : index
      %47 = arith.index_cast %46 : i32 to index
      %c0_44 = arith.constant 0 : index
      %c0_45 = arith.constant 0 : index
      %48 = vector.load %arg2[%c0_43, %47, %c0_44, %c0_45] : memref<1x3x3x128xf32, #tpu.memory_space<vmem>>, vector<1x1x2x128xf32>
      %49 = vector.shape_cast %48 : vector<1x1x2x128xf32> to vector<2x128xf32>
      %c1_i32_46 = arith.constant 1 : i32
      %50 = arith.addi %arg9, %c1_i32_46 : i32
      %c0_47 = arith.constant 0 : index
      %51 = arith.index_cast %50 : i32 to index
      %c1_48 = arith.constant 1 : index
      %c0_49 = arith.constant 0 : index
      %52 = vector.load %arg1[%c0_47, %51, %c1_48, %c0_49] : memref<1x3x3x128xf32, #tpu.memory_space<vmem>>, vector<1x1x2x128xf32>
      %53 = vector.shape_cast %52 : vector<1x1x2x128xf32> to vector<2x128xf32>
      %c1_i32_50 = arith.constant 1 : i32
      %54 = arith.addi %arg9, %c1_i32_50 : i32
      %c0_51 = arith.constant 0 : index
      %55 = arith.index_cast %54 : i32 to index
      %c1_52 = arith.constant 1 : index
      %c0_53 = arith.constant 0 : index
      %56 = vector.load %arg2[%c0_51, %55, %c1_52, %c0_53] : memref<1x3x3x128xf32, #tpu.memory_space<vmem>>, vector<1x1x2x128xf32>
      %57 = vector.shape_cast %56 : vector<1x1x2x128xf32> to vector<2x128xf32>
      %c1_i32_54 = arith.constant 1 : i32
      %58 = arith.addi %arg9, %c1_i32_54 : i32
      %c0_55 = arith.constant 0 : index
      %59 = arith.index_cast %58 : i32 to index
      %c0_56 = arith.constant 0 : index
      %c0_57 = arith.constant 0 : index
      %60 = vector.load %arg3[%c0_55, %59, %c0_56, %c0_57] : memref<1x3x3x128xf32, #tpu.memory_space<vmem>>, vector<1x1x2x128xf32>
      %61 = vector.shape_cast %60 : vector<1x1x2x128xf32> to vector<2x128xf32>
      %c1_i32_58 = arith.constant 1 : i32
      %62 = arith.addi %arg9, %c1_i32_58 : i32
      %c0_59 = arith.constant 0 : index
      %63 = arith.index_cast %62 : i32 to index
      %c0_60 = arith.constant 0 : index
      %c0_61 = arith.constant 0 : index
      %64 = vector.load %arg4[%c0_59, %63, %c0_60, %c0_61] : memref<1x3x3x128xf32, #tpu.memory_space<vmem>>, vector<1x1x2x128xf32>
      %65 = vector.shape_cast %64 : vector<1x1x2x128xf32> to vector<2x128xf32>
      %c1_i32_62 = arith.constant 1 : i32
      %66 = arith.addi %arg9, %c1_i32_62 : i32
      %c0_63 = arith.constant 0 : index
      %67 = arith.index_cast %66 : i32 to index
      %c1_64 = arith.constant 1 : index
      %c0_65 = arith.constant 0 : index
      %68 = vector.load %arg3[%c0_63, %67, %c1_64, %c0_65] : memref<1x3x3x128xf32, #tpu.memory_space<vmem>>, vector<1x1x2x128xf32>
      %69 = vector.shape_cast %68 : vector<1x1x2x128xf32> to vector<2x128xf32>
      %c1_i32_66 = arith.constant 1 : i32
      %70 = arith.addi %arg9, %c1_i32_66 : i32
      %c0_67 = arith.constant 0 : index
      %71 = arith.index_cast %70 : i32 to index
      %c1_68 = arith.constant 1 : index
      %c0_69 = arith.constant 0 : index
      %72 = vector.load %arg4[%c0_67, %71, %c1_68, %c0_69] : memref<1x3x3x128xf32, #tpu.memory_space<vmem>>, vector<1x1x2x128xf32>
      %73 = vector.shape_cast %72 : vector<1x1x2x128xf32> to vector<2x128xf32>
      %74 = tpu.concatenate %13, %17, %21, %25, %29, %33, %37, %41, %45, %49, %53, %57, %61, %65, %69, %73 in 1 : vector<2x128xf32>, vector<2x128xf32>, vector<2x128xf32>, vector<2x128xf32>, vector<2x128xf32>, vector<2x128xf32>, vector<2x128xf32>, vector<2x128xf32>, vector<2x128xf32>, vector<2x128xf32>, vector<2x128xf32>, vector<2x128xf32>, vector<2x128xf32>, vector<2x128xf32>, vector<2x128xf32>, vector<2x128xf32> -> vector<2x2048xf32>
      %c0_70 = arith.constant 0 : index
      %c0_71 = arith.constant 0 : index
      %75 = vector.load %arg5[%c0_70, %c0_71] : memref<2048x128xf32, #tpu.memory_space<vmem>>, vector<2048x128xf32>
      %cst_72 = arith.constant dense<0.000000e+00> : vector<2x128xf32>
      %76 = tpu.matmul %74, %75, %cst_72 {dimension_numbers = #tpu.dot_dimension_numbers<[1], [0], [0], [1], [0, 0, 1, 1], [], []>} : vector<2x2048xf32>, vector<2048x128xf32>, vector<2x128xf32> -> vector<2x128xf32>
      %c0_73 = arith.constant 0 : index
      %77 = arith.index_cast %arg9 : i32 to index
      %c0_74 = arith.constant 0 : index
      %c0_75 = arith.constant 0 : index
      %78 = vector.load %arg6[%c0_73, %77, %c0_74, %c0_75] : memref<1x2x2x128xf32, #tpu.memory_space<vmem>>, vector<1x1x2x128xf32>
      %79 = vector.shape_cast %78 : vector<1x1x2x128xf32> to vector<2x128xf32>
      %80 = vector.shape_cast %76 : vector<2x128xf32> to vector<1x1x2x128xf32>
      tpu.vector_store %arg6[%c0_73, %77, %c0_74, %c0_75], %80 {strides = array<i32>} : memref<1x2x2x128xf32, #tpu.memory_space<vmem>>, vector<1x1x2x128xf32>,
      %cst_76 = arith.constant dense<0.000000e+00> : vector<128xf32>
      %81 = vector.multi_reduction <add>, %76, %cst_76 [0] : vector<2x128xf32> to vector<128xf32>
      %82 = vector.shape_cast %81 : vector<128xf32> to vector<1x128xf32>
      %83 = arith.addf %arg10, %82 : vector<1x128xf32>
      %84 = arith.mulf %76, %76 : vector<2x128xf32>
      %cst_77 = arith.constant dense<0.000000e+00> : vector<128xf32>
      %85 = vector.multi_reduction <add>, %84, %cst_77 [0] : vector<2x128xf32> to vector<128xf32>
      %86 = vector.shape_cast %85 : vector<128xf32> to vector<1x128xf32>
      %87 = arith.addf %arg11, %86 : vector<1x128xf32>
      scf.yield %83, %87 : vector<1x128xf32>, vector<1x128xf32>
    }
    %c2_i32_1 = arith.constant 2 : i32
    %c0 = arith.constant 0 : index
    %c0_2 = arith.constant 0 : index
    %c0_3 = arith.constant 0 : index
    %4 = vector.load %arg7[%c0, %c0_2, %c0_3] : memref<1x1x128xf32, #tpu.memory_space<vmem>>, vector<1x1x128xf32>
    %5 = vector.shape_cast %4 : vector<1x1x128xf32> to vector<1x128xf32>
    %6 = vector.shape_cast %3#0 : vector<1x128xf32> to vector<1x1x128xf32>
    tpu.vector_store %arg7[%c0, %c0_2, %c0_3], %6 {strides = array<i32>} : memref<1x1x128xf32, #tpu.memory_space<vmem>>, vector<1x1x128xf32>,
    %c0_4 = arith.constant 0 : index
    %c0_5 = arith.constant 0 : index
    %c0_6 = arith.constant 0 : index
    %7 = vector.load %arg8[%c0_4, %c0_5, %c0_6] : memref<1x1x128xf32, #tpu.memory_space<vmem>>, vector<1x1x128xf32>
    %8 = vector.shape_cast %7 : vector<1x1x128xf32> to vector<1x128xf32>
    %9 = vector.shape_cast %3#1 : vector<1x128xf32> to vector<1x1x128xf32>
    tpu.vector_store %arg8[%c0_4, %c0_5, %c0_6], %9 {strides = array<i32>} : memref<1x1x128xf32, #tpu.memory_space<vmem>>, vector<1x1x128xf32>,
    return
  }
  func.func @transform_0(%arg0: i32) -> (i32, i32, i32, i32) {
    %c0_i32 = arith.constant 0 : i32
    %c0_i32_0 = arith.constant 0 : i32
    %c0_i32_1 = arith.constant 0 : i32
    %c0_i32_2 = arith.constant 0 : i32
    return %arg0, %c0_i32, %c0_i32_0, %c0_i32_1 : i32, i32, i32, i32
  }
  func.func @transform_1(%arg0: i32) -> (i32, i32, i32, i32) {
    %c0_i32 = arith.constant 0 : i32
    %c0_i32_0 = arith.constant 0 : i32
    %c0_i32_1 = arith.constant 0 : i32
    %c0_i32_2 = arith.constant 0 : i32
    return %arg0, %c0_i32, %c0_i32_0, %c0_i32_1 : i32, i32, i32, i32
  }
  func.func @transform_2(%arg0: i32) -> (i32, i32, i32, i32) {
    %c0_i32 = arith.constant 0 : i32
    %c0_i32_0 = arith.constant 0 : i32
    %c0_i32_1 = arith.constant 0 : i32
    %c0_i32_2 = arith.constant 0 : i32
    return %arg0, %c0_i32, %c0_i32_0, %c0_i32_1 : i32, i32, i32, i32
  }
  func.func @transform_3(%arg0: i32) -> (i32, i32, i32, i32) {
    %c0_i32 = arith.constant 0 : i32
    %c0_i32_0 = arith.constant 0 : i32
    %c0_i32_1 = arith.constant 0 : i32
    %c0_i32_2 = arith.constant 0 : i32
    return %arg0, %c0_i32, %c0_i32_0, %c0_i32_1 : i32, i32, i32, i32
  }
  func.func @transform_4(%arg0: i32) -> (i32, i32) {
    %c0_i32 = arith.constant 0 : i32
    %c0_i32_0 = arith.constant 0 : i32
    %c0_i32_1 = arith.constant 0 : i32
    return %c0_i32, %c0_i32_0 : i32, i32
  }
  func.func @transform_5(%arg0: i32) -> (i32, i32, i32, i32) {
    %c0_i32 = arith.constant 0 : i32
    %c0_i32_0 = arith.constant 0 : i32
    %c0_i32_1 = arith.constant 0 : i32
    %c0_i32_2 = arith.constant 0 : i32
    return %arg0, %c0_i32, %c0_i32_0, %c0_i32_1 : i32, i32, i32, i32
  }
  func.func @transform_6(%arg0: i32) -> (i32, i32, i32) {
    %c0_i32 = arith.constant 0 : i32
    %c0_i32_0 = arith.constant 0 : i32
    %c0_i32_1 = arith.constant 0 : i32
    return %arg0, %c0_i32, %c0_i32_0 : i32, i32, i32
  }
  func.func @transform_7(%arg0: i32) -> (i32, i32, i32) {
    %c0_i32 = arith.constant 0 : i32
    %c0_i32_0 = arith.constant 0 : i32
    %c0_i32_1 = arith.constant 0 : i32
    return %arg0, %c0_i32, %c0_i32_0 : i32, i32, i32
  }
}

module attributes {stable_mosaic.version = 11 : i64} {
  func.func @_conv_s1_kernel(%arg0: i32, %arg1: memref<1x4x4x128xf32, #tpu.memory_space<vmem>>, %arg2: memref<2048x128xf32, #tpu.memory_space<vmem>>, %arg3: memref<1x1x1x128xf32, #tpu.memory_space<vmem>>, %arg4: memref<1x1x128xf32, #tpu.memory_space<vmem>>, %arg5: memref<1x1x128xf32, #tpu.memory_space<vmem>>) attributes {dimension_semantics = [#tpu.dimension_semantics<parallel>], iteration_bounds = array<i64: 2>, scalar_prefetch = 0 : i64, scratch_operands = 0 : i64, tpu.core_type = #tpu.core_type<tc>, window_params = [{transform_indices = @transform_0, window_bounds = array<i64: 1, 4, 4, 128>}, {pipeline_mode = #tpu.pipeline_mode<synchronous>, transform_indices = @transform_1, window_bounds = array<i64: 2048, 128>}, {transform_indices = @transform_2, window_bounds = array<i64: 1, 1, 1, 128>}, {transform_indices = @transform_3, window_bounds = array<i64: 1, 1, 128>}, {transform_indices = @transform_4, window_bounds = array<i64: 1, 1, 128>}]} {
    %cst = arith.constant 0.000000e+00 : f32
    %0 = vector.broadcast %cst : f32 to vector<1x128xf32>
    %cst_0 = arith.constant 0.000000e+00 : f32
    %1 = vector.broadcast %cst_0 : f32 to vector<1x128xf32>
    %c0_i32 = arith.constant 0 : i32
    %c0_i32_1 = arith.constant 0 : i32
    %2 = arith.addi %c0_i32, %c0_i32_1 : i32
    %c0 = arith.constant 0 : index
    %3 = arith.index_cast %2 : i32 to index
    %c0_2 = arith.constant 0 : index
    %c0_3 = arith.constant 0 : index
    %4 = vector.load %arg1[%c0, %3, %c0_2, %c0_3] : memref<1x4x4x128xf32, #tpu.memory_space<vmem>>, vector<1x1x1x128xf32>
    %5 = vector.shape_cast %4 : vector<1x1x1x128xf32> to vector<1x128xf32>
    %c0_i32_4 = arith.constant 0 : i32
    %6 = arith.addi %c0_i32, %c0_i32_4 : i32
    %c0_5 = arith.constant 0 : index
    %7 = arith.index_cast %6 : i32 to index
    %c1 = arith.constant 1 : index
    %c0_6 = arith.constant 0 : index
    %8 = vector.load %arg1[%c0_5, %7, %c1, %c0_6] : memref<1x4x4x128xf32, #tpu.memory_space<vmem>>, vector<1x1x1x128xf32>
    %9 = vector.shape_cast %8 : vector<1x1x1x128xf32> to vector<1x128xf32>
    %c0_i32_7 = arith.constant 0 : i32
    %10 = arith.addi %c0_i32, %c0_i32_7 : i32
    %c0_8 = arith.constant 0 : index
    %11 = arith.index_cast %10 : i32 to index
    %c2 = arith.constant 2 : index
    %c0_9 = arith.constant 0 : index
    %12 = vector.load %arg1[%c0_8, %11, %c2, %c0_9] : memref<1x4x4x128xf32, #tpu.memory_space<vmem>>, vector<1x1x1x128xf32>
    %13 = vector.shape_cast %12 : vector<1x1x1x128xf32> to vector<1x128xf32>
    %c0_i32_10 = arith.constant 0 : i32
    %14 = arith.addi %c0_i32, %c0_i32_10 : i32
    %c0_11 = arith.constant 0 : index
    %15 = arith.index_cast %14 : i32 to index
    %c3 = arith.constant 3 : index
    %c0_12 = arith.constant 0 : index
    %16 = vector.load %arg1[%c0_11, %15, %c3, %c0_12] : memref<1x4x4x128xf32, #tpu.memory_space<vmem>>, vector<1x1x1x128xf32>
    %17 = vector.shape_cast %16 : vector<1x1x1x128xf32> to vector<1x128xf32>
    %c1_i32 = arith.constant 1 : i32
    %18 = arith.addi %c0_i32, %c1_i32 : i32
    %c0_13 = arith.constant 0 : index
    %19 = arith.index_cast %18 : i32 to index
    %c0_14 = arith.constant 0 : index
    %c0_15 = arith.constant 0 : index
    %20 = vector.load %arg1[%c0_13, %19, %c0_14, %c0_15] : memref<1x4x4x128xf32, #tpu.memory_space<vmem>>, vector<1x1x1x128xf32>
    %21 = vector.shape_cast %20 : vector<1x1x1x128xf32> to vector<1x128xf32>
    %c1_i32_16 = arith.constant 1 : i32
    %22 = arith.addi %c0_i32, %c1_i32_16 : i32
    %c0_17 = arith.constant 0 : index
    %23 = arith.index_cast %22 : i32 to index
    %c1_18 = arith.constant 1 : index
    %c0_19 = arith.constant 0 : index
    %24 = vector.load %arg1[%c0_17, %23, %c1_18, %c0_19] : memref<1x4x4x128xf32, #tpu.memory_space<vmem>>, vector<1x1x1x128xf32>
    %25 = vector.shape_cast %24 : vector<1x1x1x128xf32> to vector<1x128xf32>
    %c1_i32_20 = arith.constant 1 : i32
    %26 = arith.addi %c0_i32, %c1_i32_20 : i32
    %c0_21 = arith.constant 0 : index
    %27 = arith.index_cast %26 : i32 to index
    %c2_22 = arith.constant 2 : index
    %c0_23 = arith.constant 0 : index
    %28 = vector.load %arg1[%c0_21, %27, %c2_22, %c0_23] : memref<1x4x4x128xf32, #tpu.memory_space<vmem>>, vector<1x1x1x128xf32>
    %29 = vector.shape_cast %28 : vector<1x1x1x128xf32> to vector<1x128xf32>
    %c1_i32_24 = arith.constant 1 : i32
    %30 = arith.addi %c0_i32, %c1_i32_24 : i32
    %c0_25 = arith.constant 0 : index
    %31 = arith.index_cast %30 : i32 to index
    %c3_26 = arith.constant 3 : index
    %c0_27 = arith.constant 0 : index
    %32 = vector.load %arg1[%c0_25, %31, %c3_26, %c0_27] : memref<1x4x4x128xf32, #tpu.memory_space<vmem>>, vector<1x1x1x128xf32>
    %33 = vector.shape_cast %32 : vector<1x1x1x128xf32> to vector<1x128xf32>
    %c2_i32 = arith.constant 2 : i32
    %34 = arith.addi %c0_i32, %c2_i32 : i32
    %c0_28 = arith.constant 0 : index
    %35 = arith.index_cast %34 : i32 to index
    %c0_29 = arith.constant 0 : index
    %c0_30 = arith.constant 0 : index
    %36 = vector.load %arg1[%c0_28, %35, %c0_29, %c0_30] : memref<1x4x4x128xf32, #tpu.memory_space<vmem>>, vector<1x1x1x128xf32>
    %37 = vector.shape_cast %36 : vector<1x1x1x128xf32> to vector<1x128xf32>
    %c2_i32_31 = arith.constant 2 : i32
    %38 = arith.addi %c0_i32, %c2_i32_31 : i32
    %c0_32 = arith.constant 0 : index
    %39 = arith.index_cast %38 : i32 to index
    %c1_33 = arith.constant 1 : index
    %c0_34 = arith.constant 0 : index
    %40 = vector.load %arg1[%c0_32, %39, %c1_33, %c0_34] : memref<1x4x4x128xf32, #tpu.memory_space<vmem>>, vector<1x1x1x128xf32>
    %41 = vector.shape_cast %40 : vector<1x1x1x128xf32> to vector<1x128xf32>
    %c2_i32_35 = arith.constant 2 : i32
    %42 = arith.addi %c0_i32, %c2_i32_35 : i32
    %c0_36 = arith.constant 0 : index
    %43 = arith.index_cast %42 : i32 to index
    %c2_37 = arith.constant 2 : index
    %c0_38 = arith.constant 0 : index
    %44 = vector.load %arg1[%c0_36, %43, %c2_37, %c0_38] : memref<1x4x4x128xf32, #tpu.memory_space<vmem>>, vector<1x1x1x128xf32>
    %45 = vector.shape_cast %44 : vector<1x1x1x128xf32> to vector<1x128xf32>
    %c2_i32_39 = arith.constant 2 : i32
    %46 = arith.addi %c0_i32, %c2_i32_39 : i32
    %c0_40 = arith.constant 0 : index
    %47 = arith.index_cast %46 : i32 to index
    %c3_41 = arith.constant 3 : index
    %c0_42 = arith.constant 0 : index
    %48 = vector.load %arg1[%c0_40, %47, %c3_41, %c0_42] : memref<1x4x4x128xf32, #tpu.memory_space<vmem>>, vector<1x1x1x128xf32>
    %49 = vector.shape_cast %48 : vector<1x1x1x128xf32> to vector<1x128xf32>
    %c3_i32 = arith.constant 3 : i32
    %50 = arith.addi %c0_i32, %c3_i32 : i32
    %c0_43 = arith.constant 0 : index
    %51 = arith.index_cast %50 : i32 to index
    %c0_44 = arith.constant 0 : index
    %c0_45 = arith.constant 0 : index
    %52 = vector.load %arg1[%c0_43, %51, %c0_44, %c0_45] : memref<1x4x4x128xf32, #tpu.memory_space<vmem>>, vector<1x1x1x128xf32>
    %53 = vector.shape_cast %52 : vector<1x1x1x128xf32> to vector<1x128xf32>
    %c3_i32_46 = arith.constant 3 : i32
    %54 = arith.addi %c0_i32, %c3_i32_46 : i32
    %c0_47 = arith.constant 0 : index
    %55 = arith.index_cast %54 : i32 to index
    %c1_48 = arith.constant 1 : index
    %c0_49 = arith.constant 0 : index
    %56 = vector.load %arg1[%c0_47, %55, %c1_48, %c0_49] : memref<1x4x4x128xf32, #tpu.memory_space<vmem>>, vector<1x1x1x128xf32>
    %57 = vector.shape_cast %56 : vector<1x1x1x128xf32> to vector<1x128xf32>
    %c3_i32_50 = arith.constant 3 : i32
    %58 = arith.addi %c0_i32, %c3_i32_50 : i32
    %c0_51 = arith.constant 0 : index
    %59 = arith.index_cast %58 : i32 to index
    %c2_52 = arith.constant 2 : index
    %c0_53 = arith.constant 0 : index
    %60 = vector.load %arg1[%c0_51, %59, %c2_52, %c0_53] : memref<1x4x4x128xf32, #tpu.memory_space<vmem>>, vector<1x1x1x128xf32>
    %61 = vector.shape_cast %60 : vector<1x1x1x128xf32> to vector<1x128xf32>
    %c3_i32_54 = arith.constant 3 : i32
    %62 = arith.addi %c0_i32, %c3_i32_54 : i32
    %c0_55 = arith.constant 0 : index
    %63 = arith.index_cast %62 : i32 to index
    %c3_56 = arith.constant 3 : index
    %c0_57 = arith.constant 0 : index
    %64 = vector.load %arg1[%c0_55, %63, %c3_56, %c0_57] : memref<1x4x4x128xf32, #tpu.memory_space<vmem>>, vector<1x1x1x128xf32>
    %65 = vector.shape_cast %64 : vector<1x1x1x128xf32> to vector<1x128xf32>
    %66 = tpu.concatenate %5, %9, %13, %17, %21, %25, %29, %33, %37, %41, %45, %49, %53, %57, %61, %65 in 1 : vector<1x128xf32>, vector<1x128xf32>, vector<1x128xf32>, vector<1x128xf32>, vector<1x128xf32>, vector<1x128xf32>, vector<1x128xf32>, vector<1x128xf32>, vector<1x128xf32>, vector<1x128xf32>, vector<1x128xf32>, vector<1x128xf32>, vector<1x128xf32>, vector<1x128xf32>, vector<1x128xf32>, vector<1x128xf32> -> vector<1x2048xf32>
    %c0_58 = arith.constant 0 : index
    %c0_59 = arith.constant 0 : index
    %67 = vector.load %arg2[%c0_58, %c0_59] : memref<2048x128xf32, #tpu.memory_space<vmem>>, vector<2048x128xf32>
    %cst_60 = arith.constant dense<0.000000e+00> : vector<1x128xf32>
    %68 = tpu.matmul %66, %67, %cst_60 {dimension_numbers = #tpu.dot_dimension_numbers<[1], [0], [0], [1], [0, 0, 1, 1], [], []>} : vector<1x2048xf32>, vector<2048x128xf32>, vector<1x128xf32> -> vector<1x128xf32>
    %c0_61 = arith.constant 0 : index
    %69 = arith.index_cast %c0_i32 : i32 to index
    %c0_62 = arith.constant 0 : index
    %c0_63 = arith.constant 0 : index
    %70 = vector.load %arg3[%c0_61, %69, %c0_62, %c0_63] : memref<1x1x1x128xf32, #tpu.memory_space<vmem>>, vector<1x1x1x128xf32>
    %71 = vector.shape_cast %70 : vector<1x1x1x128xf32> to vector<1x128xf32>
    %72 = vector.shape_cast %68 : vector<1x128xf32> to vector<1x1x1x128xf32>
    tpu.vector_store %arg3[%c0_61, %69, %c0_62, %c0_63], %72 {strides = array<i32>} : memref<1x1x1x128xf32, #tpu.memory_space<vmem>>, vector<1x1x1x128xf32>,
    %cst_64 = arith.constant dense<0.000000e+00> : vector<128xf32>
    %73 = vector.multi_reduction <add>, %68, %cst_64 [0] : vector<1x128xf32> to vector<128xf32>
    %74 = vector.shape_cast %73 : vector<128xf32> to vector<1x128xf32>
    %75 = arith.addf %0, %74 : vector<1x128xf32>
    %76 = arith.mulf %68, %68 : vector<1x128xf32>
    %cst_65 = arith.constant dense<0.000000e+00> : vector<128xf32>
    %77 = vector.multi_reduction <add>, %76, %cst_65 [0] : vector<1x128xf32> to vector<128xf32>
    %78 = vector.shape_cast %77 : vector<128xf32> to vector<1x128xf32>
    %79 = arith.addf %1, %78 : vector<1x128xf32>
    %c1_i32_66 = arith.constant 1 : i32
    %c0_67 = arith.constant 0 : index
    %c0_68 = arith.constant 0 : index
    %c0_69 = arith.constant 0 : index
    %80 = vector.load %arg4[%c0_67, %c0_68, %c0_69] : memref<1x1x128xf32, #tpu.memory_space<vmem>>, vector<1x1x128xf32>
    %81 = vector.shape_cast %80 : vector<1x1x128xf32> to vector<1x128xf32>
    %82 = vector.shape_cast %75 : vector<1x128xf32> to vector<1x1x128xf32>
    tpu.vector_store %arg4[%c0_67, %c0_68, %c0_69], %82 {strides = array<i32>} : memref<1x1x128xf32, #tpu.memory_space<vmem>>, vector<1x1x128xf32>,
    %c0_70 = arith.constant 0 : index
    %c0_71 = arith.constant 0 : index
    %c0_72 = arith.constant 0 : index
    %83 = vector.load %arg5[%c0_70, %c0_71, %c0_72] : memref<1x1x128xf32, #tpu.memory_space<vmem>>, vector<1x1x128xf32>
    %84 = vector.shape_cast %83 : vector<1x1x128xf32> to vector<1x128xf32>
    %85 = vector.shape_cast %79 : vector<1x128xf32> to vector<1x1x128xf32>
    tpu.vector_store %arg5[%c0_70, %c0_71, %c0_72], %85 {strides = array<i32>} : memref<1x1x128xf32, #tpu.memory_space<vmem>>, vector<1x1x128xf32>,
    return
  }
  func.func @transform_0(%arg0: i32) -> (i32, i32, i32, i32) {
    %c0_i32 = arith.constant 0 : i32
    %c0_i32_0 = arith.constant 0 : i32
    %c0_i32_1 = arith.constant 0 : i32
    %c0_i32_2 = arith.constant 0 : i32
    return %arg0, %c0_i32, %c0_i32_0, %c0_i32_1 : i32, i32, i32, i32
  }
  func.func @transform_1(%arg0: i32) -> (i32, i32) {
    %c0_i32 = arith.constant 0 : i32
    %c0_i32_0 = arith.constant 0 : i32
    %c0_i32_1 = arith.constant 0 : i32
    return %c0_i32, %c0_i32_0 : i32, i32
  }
  func.func @transform_2(%arg0: i32) -> (i32, i32, i32, i32) {
    %c0_i32 = arith.constant 0 : i32
    %c0_i32_0 = arith.constant 0 : i32
    %c0_i32_1 = arith.constant 0 : i32
    %c0_i32_2 = arith.constant 0 : i32
    return %arg0, %c0_i32, %c0_i32_0, %c0_i32_1 : i32, i32, i32, i32
  }
  func.func @transform_3(%arg0: i32) -> (i32, i32, i32) {
    %c0_i32 = arith.constant 0 : i32
    %c0_i32_0 = arith.constant 0 : i32
    %c0_i32_1 = arith.constant 0 : i32
    return %arg0, %c0_i32, %c0_i32_0 : i32, i32, i32
  }
  func.func @transform_4(%arg0: i32) -> (i32, i32, i32) {
    %c0_i32 = arith.constant 0 : i32
    %c0_i32_0 = arith.constant 0 : i32
    %c0_i32_1 = arith.constant 0 : i32
    return %arg0, %c0_i32, %c0_i32_0 : i32, i32, i32
  }
}

</mosaic_0001>

<llo_original>
// kernel: discriminator_forward.5
$region0: #{discriminator_forward.5}
  #allocation0 [shape = 'u32[]', space=smem, size = 0x4, offset = 0x4, fixed_abs, tag = 'smem constant byte address 0x4 - core index']
  #allocation1 [shape = 'u32[72,128]{1,0:T(1,128)}', space=vmem, size = 0x9000, scoped, tag = 'internal scratch']
  %s0 = inlined_call_operand.vmem [shape: f32[2,17,17,3], index: 0, kind: input, shape index: {}]
  %s1 = inlined_call_operand.vmem [shape: f32[2,17,17,3], index: 1, kind: input, shape index: {}]
  %s2 = inlined_call_operand.vmem [shape: f32[2,17,17,3], index: 2, kind: input, shape index: {}]
  %s3 = inlined_call_operand.vmem [shape: f32[2,17,17,3], index: 3, kind: input, shape index: {}]
  %s4 = inlined_call_operand.vmem [shape: f32[48,128], index: 4, kind: input, shape index: {}]
  %s5 = inlined_call_operand.vmem [shape: f32[2,16,16,128], index: 5, kind: output, shape index: {0}]
  %s6 = inlined_call_operand.hbm [shape: f32[2,1,128], index: 6, kind: output, shape index: {1}]
  %s7 = inlined_call_operand.hbm [shape: f32[2,1,128], index: 7, kind: output, shape index: {2}]
  %8 = xla_tuple %s5, %s6, %s7
  %s9 = sld [smem:[#allocation0]]
  $region76: #{discriminator_forward.5} parent=0
    _
  %s11 = ssub.s32 1, %s9
  %s12 = scalar_select 0, %s11, %s9
  $region1: #{discriminator_forward.5} parent=0
    #allocation2 [shape = 'u8[1024]{0}', space=vmem, size = 0x400, scoped, tag = 'output window, operand 1']
    #allocation3 [shape = 's32[2]{0}', space=sflag, size = 0x8, scoped, tag = 'scoped memory for discriminator_forward.5']
    #allocation4 [shape = 'u8[1024]{0}', space=vmem, size = 0x400, scoped, tag = 'output window, operand 2']
    #allocation5 [shape = 's32[2]{0}', space=sflag, size = 0x8, scoped, tag = 'scoped memory for discriminator_forward.5']
    %13 = vsyncpa [#allocation3], 0
    %s14 = scalar_lea.sflag [#allocation3], 1
    %15 = vsyncpa %s14, 0
    %16 = vsyncpa [#allocation5], 0
    %s17 = scalar_lea.sflag [#allocation5], 1
    %18 = vsyncpa %s17, 0
    loop: start=0, step=1, limit=4
    $region2: #{discriminator_forward.5} parent=1 // loop_pre_header
      _
    $region3: #{discriminator_forward.5} parent=1 // loop_header
      %s20 = sphi 0, %s24
      %p21 = scmp.ge.s32.totalorder %s20, 4
      %s30 = sphi 0, %s32
      %s33 = sphi 0, %s30
      %s34 = sphi 0, %s33
      %s50 = sphi 0, %s34
      %s56 = sphi 0, %s58
      %s59 = sphi 0, %s56
      %s60 = sphi 0, %s59
      %s76 = sphi 0, %s60
      %s82 = sphi 0, %s84
      %s85 = sphi 0, %s82
      %s86 = sphi 0, %s85
      %s102 = sphi 0, %s86
      %s108 = sphi 0, %s110
      %s111 = sphi 0, %s108
      %s112 = sphi 0, %s111
      %s128 = sphi 0, %s112
      %s132 = sphi 0, %s132
      %s134 = sphi 0, %s132
      %s135 = sphi 0, %s134
      %s149 = sphi 0, %s135
      %s155 = sphi 0, %s157
      %s158 = sphi 0, %s155
      %s159 = sphi 0, %s158
      %s175 = sphi 0, %s159
      %s181 = sphi 0, %s183
      %s184 = sphi 0, %s181
      %s185 = sphi 0, %s184
      %s201 = sphi 0, %s185
      %s207 = sphi 0, %s209
      %s210 = sphi 0, %s207
      %s211 = sphi 0, %s210
      %s227 = sphi 0, %s211
    $region4: #{discriminator_forward.5} parent=1 // loop_header_branch
      %23 = sbr.rel (%p21) target = $region8
    $region5: #{discriminator_forward.5} parent=1 // loop_body
      %s25 = ssub.s32 %s20, 1
      %s26 = ssub.s32 %s20, 2
      %s27 = sadd.s32 %s20, 1
      %s28 = ssub.s32 %s20, %s27
      %p29 = scmp.eq.s32.totalorder %s28, 0
      %s31 = sadd.s32 %s30, 1
      %s32 = scalar_select %p29, %s30, %s31
      %p35 = pneg %p29
      %p36 = scmp.eq.s32.totalorder %s20, 1
      %p37 = por %p35, %p36
      %p38 = scmp.ne.s32.totalorder %s30, %s33
      %p39 = scmp.eq.s32.totalorder %s20, 0
      %p40 = por %p38, %p39
      %p41 = scmp.ne.s32.totalorder %s30, %s33
      %p42 = scmp.eq.s32.totalorder %s25, 1
      %p43 = por %p41, %p42
      %p44 = scmp.ne.s32.totalorder %s33, %s34
      %p45 = scmp.eq.s32.totalorder %s25, 0
      %p46 = por %p44, %p45
      %p47 = scmp.ne.s32.totalorder %s33, %s34
      %p48 = scmp.eq.s32.totalorder %s26, 1
      %p49 = por %p47, %p48
      %p51 = scmp.ne.s32.totalorder %s34, %s50
      %p52 = scmp.eq.s32.totalorder %s26, 0
      %p53 = por %p51, %p52
      %s54 = ssub.s32 %s20, %s27
      %p55 = scmp.eq.s32.totalorder %s54, 0
      %s57 = sadd.s32 %s56, 1
      %s58 = scalar_select %p55, %s56, %s57
      %p61 = pneg %p55
      %p62 = scmp.eq.s32.totalorder %s20, 1
      %p63 = por %p61, %p62
      %p64 = scmp.ne.s32.totalorder %s56, %s59
      %p65 = scmp.eq.s32.totalorder %s20, 0
      %p66 = por %p64, %p65
      %p67 = scmp.ne.s32.totalorder %s56, %s59
      %p68 = scmp.eq.s32.totalorder %s25, 1
      %p69 = por %p67, %p68
      %p70 = scmp.ne.s32.totalorder %s59, %s60
      %p71 = scmp.eq.s32.totalorder %s25, 0
      %p72 = por %p70, %p71
      %p73 = scmp.ne.s32.totalorder %s59, %s60
      %p74 = scmp.eq.s32.totalorder %s26, 1
      %p75 = por %p73, %p74
      %p77 = scmp.ne.s32.totalorder %s60, %s76
      %p78 = scmp.eq.s32.totalorder %s26, 0
      %p79 = por %p77, %p78
      %s80 = ssub.s32 %s20, %s27
      %p81 = scmp.eq.s32.totalorder %s80, 0
      %s83 = sadd.s32 %s82, 1
      %s84 = scalar_select %p81, %s82, %s83
      %p87 = pneg %p81
      %p88 = scmp.eq.s32.totalorder %s20, 1
      %p89 = por %p87, %p88
      %p90 = scmp.ne.s32.totalorder %s82, %s85
      %p91 = scmp.eq.s32.totalorder %s20, 0
      %p92 = por %p90, %p91
      %p93 = scmp.ne.s32.totalorder %s82, %s85
      %p94 = scmp.eq.s32.totalorder %s25, 1
      %p95 = por %p93, %p94
      %p96 = scmp.ne.s32.totalorder %s85, %s86
      %p97 = scmp.eq.s32.totalorder %s25, 0
      %p98 = por %p96, %p97
      %p99 = scmp.ne.s32.totalorder %s85, %s86
      %p100 = scmp.eq.s32.totalorder %s26, 1
      %p101 = por %p99, %p100
      %p103 = scmp.ne.s32.totalorder %s86, %s102
      %p104 = scmp.eq.s32.totalorder %s26, 0
      %p105 = por %p103, %p104
      %s106 = ssub.s32 %s20, %s27
      %p107 = scmp.eq.s32.totalorder %s106, 0
      %s109 = sadd.s32 %s108, 1
      %s110 = scalar_select %p107, %s108, %s109
      %p113 = pneg %p107
      %p114 = scmp.eq.s32.totalorder %s20, 1
      %p115 = por %p113, %p114
      %p116 = scmp.ne.s32.totalorder %s108, %s111
      %p117 = scmp.eq.s32.totalorder %s20, 0
      %p118 = por %p116, %p117
      %p119 = scmp.ne.s32.totalorder %s108, %s111
      %p120 = scmp.eq.s32.totalorder %s25, 1
      %p121 = por %p119, %p120
      %p122 = scmp.ne.s32.totalorder %s111, %s112
      %p123 = scmp.eq.s32.totalorder %s25, 0
      %p124 = por %p122, %p123
      %p125 = scmp.ne.s32.totalorder %s111, %s112
      %p126 = scmp.eq.s32.totalorder %s26, 1
      %p127 = por %p125, %p126
      %p129 = scmp.ne.s32.totalorder %s112, %s128
      %p130 = scmp.eq.s32.totalorder %s26, 0
      %p131 = por %p129, %p130
      %s133 = sadd.s32 %s132, 1
      %p136 = scmp.eq.s32.totalorder %s20, 1
      %p137 = scmp.ne.s32.totalorder %s132, %s134
      %p138 = scmp.eq.s32.totalorder %s20, 0
      %p139 = por %p137, %p138
      %p140 = scmp.ne.s32.totalorder %s132, %s134
      %p141 = scmp.eq.s32.totalorder %s25, 1
      %p142 = por %p140, %p141
      %p143 = scmp.ne.s32.totalorder %s134, %s135
      %p144 = scmp.eq.s32.totalorder %s25, 0
      %p145 = por %p143, %p144
      %p146 = scmp.ne.s32.totalorder %s134, %s135
      %p147 = scmp.eq.s32.totalorder %s26, 1
      %p148 = por %p146, %p147
      %p150 = scmp.ne.s32.totalorder %s135, %s149
      %p151 = scmp.eq.s32.totalorder %s26, 0
      %p152 = por %p150, %p151
      %s153 = ssub.s32 %s20, %s27
      %p154 = scmp.eq.s32.totalorder %s153, 0
      %s156 = sadd.s32 %s155, 1
      %s157 = scalar_select %p154, %s155, %s156
      %p160 = pneg %p154
      %p161 = scmp.eq.s32.totalorder %s20, 1
      %p162 = por %p160, %p161
      %p163 = scmp.ne.s32.totalorder %s155, %s158
      %p164 = scmp.eq.s32.totalorder %s20, 0
      %p165 = por %p163, %p164
      %p166 = scmp.ne.s32.totalorder %s155, %s158
      %p167 = scmp.eq.s32.totalorder %s25, 1
      %p168 = por %p166, %p167
      %p169 = scmp.ne.s32.totalorder %s158, %s159
      %p170 = scmp.eq.s32.totalorder %s25, 0
      %p171 = por %p169, %p170
      %p172 = scmp.ne.s32.totalorder %s158, %s159
      %p173 = scmp.eq.s32.totalorder %s26, 1
      %p174 = por %p172, %p173
      %p176 = scmp.ne.s32.totalorder %s159, %s175
      %p177 = scmp.eq.s32.totalorder %s26, 0
      %p178 = por %p176, %p177
      %s179 = ssub.s32 %s20, %s27
      %p180 = scmp.eq.s32.totalorder %s179, 0
      %s182 = sadd.s32 %s181, 1
      %s183 = scalar_select %p180, %s181, %s182
      %p186 = pneg %p180
      %p187 = scmp.eq.s32.totalorder %s20, 1
      %p188 = por %p186, %p187
      %p189 = scmp.ne.s32.totalorder %s181, %s184
      %p190 = scmp.eq.s32.totalorder %s20, 0
      %p191 = por %p189, %p190
      %p192 = scmp.ne.s32.totalorder %s181, %s184
      %p193 = scmp.eq.s32.totalorder %s25, 1
      %p194 = por %p192, %p193
      %p195 = scmp.ne.s32.totalorder %s184, %s185
      %p196 = scmp.eq.s32.totalorder %s25, 0
      %p197 = por %p195, %p196
      %p198 = scmp.ne.s32.totalorder %s184, %s185
      %p199 = scmp.eq.s32.totalorder %s26, 1
      %p200 = por %p198, %p199
      %p202 = scmp.ne.s32.totalorder %s185, %s201
      %p203 = scmp.eq.s32.totalorder %s26, 0
      %p204 = por %p202, %p203
      %s205 = ssub.s32 %s20, %s27
      %p206 = scmp.eq.s32.totalorder %s205, 0
      %s208 = sadd.s32 %s207, 1
      %s209 = scalar_select %p206, %s207, %s208
      %p212 = pneg %p206
      %p213 = scmp.eq.s32.totalorder %s20, 1
      %p214 = por %p212, %p213
      %p215 = scmp.ne.s32.totalorder %s207, %s210
      %p216 = scmp.eq.s32.totalorder %s20, 0
      %p217 = por %p215, %p216
      %p218 = scmp.ne.s32.totalorder %s207, %s210
      %p219 = scmp.eq.s32.totalorder %s25, 1
      %p220 = por %p218, %p219
      %p221 = scmp.ne.s32.totalorder %s210, %s211
      %p222 = scmp.eq.s32.totalorder %s25, 0
      %p223 = por %p221, %p222
      %p224 = scmp.ne.s32.totalorder %s210, %s211
      %p225 = scmp.eq.s32.totalorder %s26, 1
      %p226 = por %p224, %p225
      %p228 = scmp.ne.s32.totalorder %s211, %s227
      %p229 = scmp.eq.s32.totalorder %s26, 0
      %p230 = por %p228, %p229
      %p231 = scmp.le.s32.totalorder 1, %s20
      %p232 = scmp.lt.s32.totalorder %s20, 3
      %p233 = pnand %p231, %p232
      %p234 = pneg %p233
      // Predicated region
      $region9: #{discriminator_forward.5} parent=5 // pred_check
        _
      $region10: #{discriminator_forward.5} parent=5 // pred_check_branch
        %236 = sbr.rel (%p233) target = $region12
      $region11: #{discriminator_forward.5} parent=5 // pred_region
        %s237 = ssub.s32 %s20, 1
        // Predicated region
        $region13: #{discriminator_forward.5} parent=11 // pred_check
          %p238 = pneg %p145
        $region14: #{discriminator_forward.5} parent=11 // pred_check_branch
          %240 = sbr.rel (%p238) target = $region16
        $region15: #{discriminator_forward.5} parent=11 // pred_region
          _
        $region16: #{discriminator_forward.5} parent=11 // pred_fallthru
          _
      $region12: #{discriminator_forward.5} parent=5 // pred_fallthru
        _
      %p241 = scmp.lt.s32.totalorder %s20, 2
      // Predicated region
      $region17: #{discriminator_forward.5} parent=5 // pred_check
        %p242 = pneg %p241
      $region18: #{discriminator_forward.5} parent=5 // pred_check_branch
        %244 = sbr.rel (%p242) target = $region20
      $region19: #{discriminator_forward.5} parent=5 // pred_region
        // Predicated region
        $region21: #{discriminator_forward.5} parent=19 // pred_check
          %p245 = pneg %p40
        $region22: #{discriminator_forward.5} parent=19 // pred_check_branch
          %247 = sbr.rel (%p245) target = $region24
        $region23: #{discriminator_forward.5} parent=19 // pred_region
          %p248 = scmp.lt.s32.totalorder %s20, 1
          %s249 = scalar_select %p248, %s20, 1
          %s250 = smul.addr %s249, 51
          %s251 = smul.addr %s250, 8
          %s252 = scalar_lea.vmem %s0, %s251
        $region24: #{discriminator_forward.5} parent=19 // pred_fallthru
          _
        // Predicated region
        $region25: #{discriminator_forward.5} parent=19 // pred_check
          %p253 = pneg %p66
        $region26: #{discriminator_forward.5} parent=19 // pred_check_branch
          %255 = sbr.rel (%p253) target = $region28
        $region27: #{discriminator_forward.5} parent=19 // pred_region
          %p256 = scmp.lt.s32.totalorder %s20, 1
          %s257 = scalar_select %p256, %s20, 1
          %s258 = smul.addr %s257, 51
          %s259 = smul.addr %s258, 8
          %s260 = scalar_lea.vmem %s1, %s259
        $region28: #{discriminator_forward.5} parent=19 // pred_fallthru
          _
        // Predicated region
        $region29: #{discriminator_forward.5} parent=19 // pred_check
          %p261 = pneg %p92
        $region30: #{discriminator_forward.5} parent=19 // pred_check_branch
          %263 = sbr.rel (%p261) target = $region32
        $region31: #{discriminator_forward.5} parent=19 // pred_region
          %p264 = scmp.lt.s32.totalorder %s20, 1
          %s265 = scalar_select %p264, %s20, 1
          %s266 = smul.addr %s265, 51
          %s267 = smul.addr %s266, 8
          %s268 = scalar_lea.vmem %s2, %s267
        $region32: #{discriminator_forward.5} parent=19 // pred_fallthru
          _
        // Predicated region
        $region33: #{discriminator_forward.5} parent=19 // pred_check
          %p269 = pneg %p118
        $region34: #{discriminator_forward.5} parent=19 // pred_check_branch
          %271 = sbr.rel (%p269) target = $region36
        $region35: #{discriminator_forward.5} parent=19 // pred_region
          %p272 = scmp.lt.s32.totalorder %s20, 1
          %s273 = scalar_select %p272, %s20, 1
          %s274 = smul.addr %s273, 51
          %s275 = smul.addr %s274, 8
          %s276 = scalar_lea.vmem %s3, %s275
        $region36: #{discriminator_forward.5} parent=19 // pred_fallthru
          _
      $region20: #{discriminator_forward.5} parent=5 // pred_fallthru
        _
      %p277 = scmp.le.s32.totalorder 1, %s20
      %p278 = scmp.lt.s32.totalorder %s20, 3
      %p279 = pnand %p277, %p278
      %p280 = pneg %p279
      // Predicated region
      $region37: #{discriminator_forward.5} parent=5 // pred_check
        _
      $region38: #{discriminator_forward.5} parent=5 // pred_check_branch
        %282 = sbr.rel (%p279) target = $region40
      $region39: #{discriminator_forward.5} parent=5 // pred_region
        %s283 = ssub.s32 %s20, 1
        %p284 = scmp.lt.s32.totalorder %s25, 1
        %s285 = scalar_select %p284, %s25, 1
        %s286 = smul.addr %s285, 51
        %s287 = smul.addr %s286, 8
        %s288 = scalar_lea.vmem %s0, %s287
        %p289 = pneg %p46
        %p290 = pneg %p43
        %p291 = scmp.lt.s32.totalorder %s25, 1
        %s292 = scalar_select %p291, %s25, 1
        %s293 = smul.addr %s292, 51
        %s294 = smul.addr %s293, 8
        %s295 = scalar_lea.vmem %s1, %s294
        %p296 = pneg %p72
        %p297 = pneg %p69
        %p298 = scmp.lt.s32.totalorder %s25, 1
        %s299 = scalar_select %p298, %s25, 1
        %s300 = smul.addr %s299, 51
        %s301 = smul.addr %s300, 8
        %s302 = scalar_lea.vmem %s2, %s301
        %p303 = pneg %p98
        %p304 = pneg %p95
        %p305 = scmp.lt.s32.totalorder %s25, 1
        %s306 = scalar_select %p305, %s25, 1
        %s307 = smul.addr %s306, 51
        %s308 = smul.addr %s307, 8
        %s309 = scalar_lea.vmem %s3, %s308
        %p310 = pneg %p124
        %p311 = pneg %p121
        %p312 = pneg %p145
        %p313 = pneg %p142
        %p314 = pneg %p171
        %p315 = pneg %p168
        %p316 = scmp.lt.s32.totalorder %s25, 1
        %s317 = scalar_select %p316, %s25, 1
        %s318 = smul.addr %s317, 32
        %s319 = smul.addr %s318, 8
        %s320 = scalar_lea.vmem %s5, %s319
        %p321 = pneg %p197
        %p322 = pneg %p194
        %s323 = sand.u32 %s184, 1
        %s324 = scalar_lea.sflag [#allocation3], %s323
        %s325 = sand.u32 %s184, 1
        %s326 = scalar_lea.vmem [#allocation2], %s325
        %p327 = pneg %p223
        %p328 = pneg %p220
        %s329 = sand.u32 %s210, 1
        %s330 = scalar_lea.sflag [#allocation5], %s329
        %s331 = sand.u32 %s210, 1
        %s332 = scalar_lea.vmem [#allocation4], %s331
        %p333 = scmp.lt.s32.totalorder %s25, 1
        %s334 = scalar_select %p333, %s25, 1
        %s335 = smul.addr %s334, 51
        %s336 = smul.addr %s335, 8
        %s337 = scalar_lea.vmem %s0, %s336
        %p338 = scmp.lt.s32.totalorder %s25, 1
        %s339 = scalar_select %p338, %s25, 1
        %s340 = smul.addr %s339, 51
        %s341 = smul.addr %s340, 8
        %s342 = scalar_lea.vmem %s1, %s341
        %p343 = scmp.lt.s32.totalorder %s25, 1
        %s344 = scalar_select %p343, %s25, 1
        %s345 = smul.addr %s344, 51
        %s346 = smul.addr %s345, 8
        %s347 = scalar_lea.vmem %s2, %s346
        %p348 = scmp.lt.s32.totalorder %s25, 1
        %s349 = scalar_select %p348, %s25, 1
        %s350 = smul.addr %s349, 51
        %s351 = smul.addr %s350, 8
        %s352 = scalar_lea.vmem %s3, %s351
        %p353 = scmp.lt.s32.totalorder %s25, 1
        %s354 = scalar_select %p353, %s25, 1
        %s355 = smul.addr %s354, 32
        %s356 = smul.addr %s355, 8
        %s357 = scalar_lea.vmem %s5, %s356
        loop: start=0, step=1, limit=16
        $region41: #{discriminator_forward.5} parent=39 // loop_pre_header
          _
        $region42: #{discriminator_forward.5} parent=39 // loop_header
          %s359 = sphi 0, %s363
          %p360 = scmp.ge.s32.totalorder %s359, 16
          %v364 = vphi 0.0, %v623
          %v365 = vphi 0.0, %v633
        $region43: #{discriminator_forward.5} parent=39 // loop_header_branch
          %362 = sbr.rel (%p360) target = $region47
        $region44: #{discriminator_forward.5} parent=39 // loop_body
          %s366 = smul.u32 %s359, 24
          %s367 = scalar_lea.vmem %s337, %s366
          %v368 = vld [vmem:[%s367] sm:$0xff]
          %v369 = vld [vmem:[%s367 + $0x8] sm:$0xff]
          %s370 = scalar_lea.vmem %s342, %s366
          %v371 = vld [vmem:[%s370] sm:$0xff]
          %v372 = vld [vmem:[%s370 + $0x8] sm:$0xff]
          %v373 = vld [vmem:[%s367 + $0x1] sm:$0xff]
          %v374 = vld [vmem:[%s367 + $0x9] sm:$0xff]
          %v375 = vld [vmem:[%s370 + $0x1] sm:$0xff]
          %v376 = vld [vmem:[%s370 + $0x9] sm:$0xff]
          %s377 = scalar_lea.vmem %s347, %s366
          %v378 = vld [vmem:[%s377] sm:$0xff]
          %v379 = vld [vmem:[%s377 + $0x8] sm:$0xff]
          %s380 = scalar_lea.vmem %s352, %s366
          %v381 = vld [vmem:[%s380] sm:$0xff]
          %v382 = vld [vmem:[%s380 + $0x8] sm:$0xff]
          %v383 = vld [vmem:[%s377 + $0x1] sm:$0xff]
          %v384 = vld [vmem:[%s377 + $0x9] sm:$0xff]
          %v385 = vld [vmem:[%s380 + $0x1] sm:$0xff]
          %v386 = vld [vmem:[%s380 + $0x9] sm:$0xff]
          %s387 = sadd.s32 %s359, 1
          %s388 = smul.u32 %s387, 24
          %s389 = scalar_lea.vmem %s337, %s388
          %v390 = vld [vmem:[%s389] sm:$0xff]
          %v391 = vld [vmem:[%s389 + $0x8] sm:$0xff]
          %s392 = scalar_lea.vmem %s342, %s388
          %v393 = vld [vmem:[%s392] sm:$0xff]
          %v394 = vld [vmem:[%s392 + $0x8] sm:$0xff]
          %v395 = vld [vmem:[%s389 + $0x1] sm:$0xff]
          %v396 = vld [vmem:[%s389 + $0x9] sm:$0xff]
          %v397 = vld [vmem:[%s392 + $0x1] sm:$0xff]
          %v398 = vld [vmem:[%s392 + $0x9] sm:$0xff]
          %s399 = scalar_lea.vmem %s347, %s388
          %v400 = vld [vmem:[%s399] sm:$0xff]
          %v401 = vld [vmem:[%s399 + $0x8] sm:$0xff]
          %s402 = scalar_lea.vmem %s352, %s388
          %v403 = vld [vmem:[%s402] sm:$0xff]
          %v404 = vld [vmem:[%s402 + $0x8] sm:$0xff]
          %v405 = vld [vmem:[%s399 + $0x1] sm:$0xff]
          %v406 = vld [vmem:[%s399 + $0x9] sm:$0xff]
          %v407 = vld [vmem:[%s402 + $0x1] sm:$0xff]
          %v408 = vld [vmem:[%s402 + $0x9] sm:$0xff]
          %411 = vrot.lane.b32.xlu0 %v371, 3
          %v412 = vpop.permute.xlu0 %411
          %413 = vrot.lane.b32.xlu0 %v372, 3
          %v414 = vpop.permute.xlu0 %413
          %419 = vrot.lane.b32.xlu0 %v373, 6
          %v420 = vpop.permute.xlu0 %419
          %421 = vrot.lane.b32.xlu0 %v374, 6
          %v422 = vpop.permute.xlu0 %421
          %427 = vrot.lane.b32.xlu0 %v375, 9
          %v428 = vpop.permute.xlu0 %427
          %429 = vrot.lane.b32.xlu0 %v376, 9
          %v430 = vpop.permute.xlu0 %429
          %435 = vrot.lane.b32.xlu0 %v378, 12
          %v436 = vpop.permute.xlu0 %435
          %437 = vrot.lane.b32.xlu0 %v379, 12
          %v438 = vpop.permute.xlu0 %437
          %443 = vrot.lane.b32.xlu0 %v381, 15
          %v444 = vpop.permute.xlu0 %443
          %445 = vrot.lane.b32.xlu0 %v382, 15
          %v446 = vpop.permute.xlu0 %445
          %451 = vrot.lane.b32.xlu0 %v383, 18
          %v452 = vpop.permute.xlu0 %451
          %453 = vrot.lane.b32.xlu0 %v384, 18
          %v454 = vpop.permute.xlu0 %453
          %459 = vrot.lane.b32.xlu0 %v385, 21
          %v460 = vpop.permute.xlu0 %459
          %461 = vrot.lane.b32.xlu0 %v386, 21
          %v462 = vpop.permute.xlu0 %461
          %467 = vrot.lane.b32.xlu0 %v390, 24
          %v468 = vpop.permute.xlu0 %467
          %469 = vrot.lane.b32.xlu0 %v391, 24
          %v470 = vpop.permute.xlu0 %469
          %475 = vrot.lane.b32.xlu0 %v393, 27
          %v476 = vpop.permute.xlu0 %475
          %477 = vrot.lane.b32.xlu0 %v394, 27
          %v478 = vpop.permute.xlu0 %477
          %483 = vrot.lane.b32.xlu0 %v395, 30
          %v484 = vpop.permute.xlu0 %483
          %485 = vrot.lane.b32.xlu0 %v396, 30
          %v486 = vpop.permute.xlu0 %485
          %491 = vrot.lane.b32.xlu0 %v397, 33
          %v492 = vpop.permute.xlu0 %491
          %493 = vrot.lane.b32.xlu0 %v398, 33
          %v494 = vpop.permute.xlu0 %493
          %499 = vrot.lane.b32.xlu0 %v400, 36
          %v500 = vpop.permute.xlu0 %499
          %501 = vrot.lane.b32.xlu0 %v401, 36
          %v502 = vpop.permute.xlu0 %501
          %507 = vrot.lane.b32.xlu0 %v403, 39
          %v508 = vpop.permute.xlu0 %507
          %509 = vrot.lane.b32.xlu0 %v404, 39
          %v510 = vpop.permute.xlu0 %509
          %515 = vrot.lane.b32.xlu0 %v405, 42
          %v516 = vpop.permute.xlu0 %515
          %517 = vrot.lane.b32.xlu0 %v406, 42
          %v518 = vpop.permute.xlu0 %517
          %523 = vrot.lane.b32.xlu0 %v407, 45
          %v524 = vpop.permute.xlu0 %523
          %525 = vrot.lane.b32.xlu0 %v408, 45
          %v526 = vpop.permute.xlu0 %525
          %vm529 = vcmask 23552
          %v530 = vsel %vm529, %v368, %v412
          %v531 = vsel %vm529, %v369, %v414
          %vm532 = vcmask 48128
          %v533 = vsel %vm532, %v530, %v420
          %v534 = vsel %vm532, %v531, %v422
          %vm535 = vcmask 72704
          %v536 = vsel %vm535, %v533, %v428
          %v537 = vsel %vm535, %v534, %v430
          %vm538 = vcmask 97280
          %v539 = vsel %vm538, %v536, %v436
          %v540 = vsel %vm538, %v537, %v438
          %vm541 = vcmask 121856
          %v542 = vsel %vm541, %v539, %v444
          %v543 = vsel %vm541, %v540, %v446
          %vm544 = vcmask 146432
          %v545 = vsel %vm544, %v542, %v452
          %v546 = vsel %vm544, %v543, %v454
          %vm547 = vcmask 171008
          %v548 = vsel %vm547, %v545, %v460
          %v549 = vsel %vm547, %v546, %v462
          %vm550 = vcmask 195584
          %v551 = vsel %vm550, %v548, %v468
          %v552 = vsel %vm550, %v549, %v470
          %vm553 = vcmask 220160
          %v554 = vsel %vm553, %v551, %v476
          %v555 = vsel %vm553, %v552, %v478
          %vm556 = vcmask 244736
          %v557 = vsel %vm556, %v554, %v484
          %v558 = vsel %vm556, %v555, %v486
          %vm559 = vcmask 269312
          %v560 = vsel %vm559, %v557, %v492
          %v561 = vsel %vm559, %v558, %v494
          %vm562 = vcmask 293888
          %v563 = vsel %vm562, %v560, %v500
          %v564 = vsel %vm562, %v561, %v502
          %vm565 = vcmask 318464
          %v566 = vsel %vm565, %v563, %v508
          %v567 = vsel %vm565, %v564, %v510
          %vm568 = vcmask 343040
          %v569 = vsel %vm568, %v566, %v516
          %v570 = vsel %vm568, %v567, %v518
          %vm571 = vcmask 367616
          %v572 = vsel %vm571, %v569, %v524
          %v573 = vsel %vm571, %v570, %v526
          %v574 = vld [vmem:[%s4] sm:$0xff]
          %v575 = vld [vmem:[%s4 + $0x8] sm:$0xff]
          %v576 = vld [vmem:[%s4 + $0x10] sm:$0xff]
          %v577 = vld [vmem:[%s4 + $0x18] sm:$0xff]
          %v578 = vld [vmem:[%s4 + $0x20] sm:$0xff]
          %v579 = vld [vmem:[%s4 + $0x28] sm:$0xff]
          %vm580 = vcmask 392192
          %v582 = vsel %vm580, %v572, 0
          %v585 = vsel %vm580, %v573, 0
          %587 = vmatpush.msra.mxu0 0.0
          %588 = vmatpush.msra.mxu0 0.0
          %589 = vmatpush.msra.mxu0 0.0
          %590 = vmatpush.msra.mxu0 0.0
          %591 = vmatpush.msra.mxu0 0.0
          %592 = vmatpush.msra.mxu0 0.0
          %593 = vmatpush.msra.mxu0 0.0
          %594 = vmatpush.msra.mxu0 0.0
          %595 = vmatpush.msra.mxu0 0.0
          %596 = vmatpush.msra.mxu0 0.0
          %597 = vmatpush.msra.mxu0 %v579
          %598 = vmatpush.msra.mxu0 %v578
          %599 = vmatpush.msra.mxu0 %v577
          %600 = vmatpush.msra.mxu0 %v576
          %601 = vmatpush.msra.mxu0 %v575
          %602 = vmatpush.msra.mxu0 %v574
          %603 = vmatmul.f32.gmra.mxu0 %v582
          %v604 = vpop.f32.mrf.mxu0
          %v605 = vadd.f32 0.0, %v604
          %606 = vmatmul.f32.gmra.mxu0 %v585
          %v607 = vpop.f32.mrf.mxu0
          %v608 = vadd.f32 0.0, %v607
          %609 = vdwg.mxu0
          %v610 = vmax.f32 %v605, 0.0
          %v611 = vmax.f32 %v608, 0.0
          %s612 = smul.u32 %s359, 16
          %s613 = scalar_lea.vmem %s357, %s612
          %614 = vst [vmem:[%s613] sm:$0xff] %v610
          %615 = vst [vmem:[%s613 + $0x8] sm:$0xff] %v611
          %v616 = vadd.f32 %v610, %v611
          %v617 = vrot.slane %v616, 4
          %v618 = vadd.f32 %v616, %v617
          %v619 = vrot.slane %v618, 2
          %v620 = vadd.f32 %v618, %v619
          %v621 = vrot.slane %v620, 1
          %v622 = vadd.f32 %v620, %v621
          %v623 = vadd.f32 %v364, %v622
          %v624 = vmul.f32 %v610, %v610
          %v625 = vmul.f32 %v611, %v611
          %v626 = vadd.f32 %v624, %v625
          %v627 = vrot.slane %v626, 4
          %v628 = vadd.f32 %v626, %v627
          %v629 = vrot.slane %v628, 2
          %v630 = vadd.f32 %v628, %v629
          %v631 = vrot.slane %v630, 1
          %v632 = vadd.f32 %v630, %v631
          %v633 = vadd.f32 %v365, %v632
        $region45: #{discriminator_forward.5} parent=39 // loop_footer
          %s363 = sadd.s32 1, %s359
        $region46: #{discriminator_forward.5} parent=39 // loop_footer_branch
          %358 = sbr.rel target = $region42
        $region47: #{discriminator_forward.5} parent=39 // loop_exit
          _
        %634 = vst [vmem:[%s326] sm:$0x1] %v364
        %635 = vst [vmem:[%s332] sm:$0x1] %v365
        %p636 = scmp.lt.s32.totalorder %s25, 1
        %s637 = scalar_select %p636, %s25, 1
        %s638 = smul.addr %s637, 32
        %s639 = smul.addr %s638, 8
        %s640 = scalar_lea.vmem %s5, %s639
        %s641 = sand.u32 %s184, 1
        %s642 = scalar_lea.sflag [#allocation3], %s641
        %s643 = sand.u32 %s184, 1
        %s644 = scalar_lea.vmem [#allocation2], %s643
        %s645 = sand.u32 %s210, 1
        %s646 = scalar_lea.sflag [#allocation5], %s645
        %s647 = sand.u32 %s210, 1
        %s648 = scalar_lea.vmem [#allocation4], %s647
        // Predicated region
        $region48: #{discriminator_forward.5} parent=39 // pred_check
          %p649 = pneg %p168
        $region49: #{discriminator_forward.5} parent=39 // pred_check_branch
          %651 = sbr.rel (%p649) target = $region51
        $region50: #{discriminator_forward.5} parent=39 // pred_region
          _
        $region51: #{discriminator_forward.5} parent=39 // pred_fallthru
          _
        // Predicated region
        $region52: #{discriminator_forward.5} parent=39 // pred_check
          %p652 = pneg %p194
        $region53: #{discriminator_forward.5} parent=39 // pred_check_branch
          %654 = sbr.rel (%p652) target = $region55
        $region54: #{discriminator_forward.5} parent=39 // pred_region
          %656 = vsyncadd %s642, 0
          %s657 = scalar_lea.hbm %s6, %s25
          %s659 = sshll.u32 %s644, 4
          %s660 = int_to_ptr.vmem [resolvable:$true] %s659
          %s661 = sshll.u32 %s657, 4
          %s662 = int_to_ptr.hbm [resolvable:$true] %s661
          %664 = dma.vmem_to_hbm [thread:$0]  %s660, 16, %s662, %s642
        $region55: #{discriminator_forward.5} parent=39 // pred_fallthru
          _
        // Predicated region
        $region56: #{discriminator_forward.5} parent=39 // pred_check
          %p665 = pneg %p220
        $region57: #{discriminator_forward.5} parent=39 // pred_check_branch
          %667 = sbr.rel (%p665) target = $region59
        $region58: #{discriminator_forward.5} parent=39 // pred_region
          %669 = vsyncadd %s646, 0
          %s670 = scalar_lea.hbm %s7, %s25
          %s672 = sshll.u32 %s648, 4
          %s673 = int_to_ptr.vmem [resolvable:$true] %s672
          %s674 = sshll.u32 %s670, 4
          %s675 = int_to_ptr.hbm [resolvable:$true] %s674
          %677 = dma.vmem_to_hbm [thread:$0]  %s673, 16, %s675, %s646
        $region59: #{discriminator_forward.5} parent=39 // pred_fallthru
          _
      $region40: #{discriminator_forward.5} parent=5 // pred_fallthru
        _
      %p678 = scmp.le.s32.totalorder 2, %s20
      // Predicated region
      $region60: #{discriminator_forward.5} parent=5 // pred_check
        %p679 = pneg %p678
      $region61: #{discriminator_forward.5} parent=5 // pred_check_branch
        %681 = sbr.rel (%p679) target = $region63
      $region62: #{discriminator_forward.5} parent=5 // pred_region
        %s682 = ssub.s32 %s20, 2
        // Predicated region
        $region64: #{discriminator_forward.5} parent=62 // pred_check
          %p683 = pneg %p174
        $region65: #{discriminator_forward.5} parent=62 // pred_check_branch
          %685 = sbr.rel (%p683) target = $region67
        $region66: #{discriminator_forward.5} parent=62 // pred_region
          %p686 = scmp.lt.s32.totalorder %s26, 1
          %s687 = scalar_select %p686, %s26, 1
          %s688 = smul.addr %s687, 32
          %s689 = smul.addr %s688, 8
          %s690 = scalar_lea.vmem %s5, %s689
        $region67: #{discriminator_forward.5} parent=62 // pred_fallthru
          _
        // Predicated region
        $region68: #{discriminator_forward.5} parent=62 // pred_check
          %p691 = pneg %p200
        $region69: #{discriminator_forward.5} parent=62 // pred_check_branch
          %693 = sbr.rel (%p691) target = $region71
        $region70: #{discriminator_forward.5} parent=62 // pred_region
          %s694 = sand.u32 %s185, 1
          %s695 = scalar_lea.sflag [#allocation3], %s694
          %s696 = sand.u32 %s185, 1
          %s697 = scalar_lea.vmem [#allocation2], %s696
          %699 = dma.done %s695, 16
        $region71: #{discriminator_forward.5} parent=62 // pred_fallthru
          _
        // Predicated region
        $region72: #{discriminator_forward.5} parent=62 // pred_check
          %p700 = pneg %p226
        $region73: #{discriminator_forward.5} parent=62 // pred_check_branch
          %702 = sbr.rel (%p700) target = $region75
        $region74: #{discriminator_forward.5} parent=62 // pred_region
          %s703 = sand.u32 %s211, 1
          %s704 = scalar_lea.sflag [#allocation5], %s703
          %s705 = sand.u32 %s211, 1
          %s706 = scalar_lea.vmem [#allocation4], %s705
          %708 = dma.done %s704, 16
        $region75: #{discriminator_forward.5} parent=62 // pred_fallthru
          _
      $region63: #{discriminator_forward.5} parent=5 // pred_fallthru
        _
    $region6: #{discriminator_forward.5} parent=1 // loop_footer
      %s24 = sadd.s32 1, %s20
    $region7: #{discriminator_forward.5} parent=1 // loop_footer_branch
      %19 = sbr.rel target = $region3
    $region8: #{discriminator_forward.5} parent=1 // loop_exit
      _
    %709 = vsyncpa [#allocation3], 1
    %s710 = scalar_lea.sflag [#allocation3], 1
    %711 = vsyncpa %s710, 1
    %712 = vsyncpa [#allocation5], 1
    %s713 = scalar_lea.sflag [#allocation5], 1
    %714 = vsyncpa %s713, 1

// kernel: discriminator_forward.6
$region0: #{discriminator_forward.6}
  #allocation0 [shape = 'u32[]', space=smem, size = 0x4, offset = 0x4, fixed_abs, tag = 'smem constant byte address 0x4 - core index']
  #allocation1 [shape = 'u32[72,128]{1,0:T(1,128)}', space=vmem, size = 0x9000, scoped, tag = 'internal scratch']
  %s0 = inlined_call_operand.vmem [shape: f32[2,9,9,128], index: 0, kind: input, shape index: {}]
  %s1 = inlined_call_operand.vmem [shape: f32[2,9,9,128], index: 1, kind: input, shape index: {}]
  %s2 = inlined_call_operand.vmem [shape: f32[2,9,9,128], index: 2, kind: input, shape index: {}]
  %s3 = inlined_call_operand.vmem [shape: f32[2,9,9,128], index: 3, kind: input, shape index: {}]
  %s4 = inlined_call_operand.vmem [shape: f32[2048,128], index: 4, kind: input, shape index: {}]
  %s5 = inlined_call_operand.vmem [shape: f32[2,8,8,128], index: 5, kind: output, shape index: {0}]
  %s6 = inlined_call_operand.vmem [shape: f32[2,1,128], index: 6, kind: output, shape index: {1}]
  %s7 = inlined_call_operand.vmem [shape: f32[2,1,128], index: 7, kind: output, shape index: {2}]
  %8 = xla_tuple %s5, %s6, %s7
  %s9 = sld [smem:[#allocation0]]
  $region76: #{discriminator_forward.6} parent=0
    _
  %s11 = ssub.s32 1, %s9
  %s12 = scalar_select 0, %s11, %s9
  loop: start=0, step=1, limit=4
  $region2: #{discriminator_forward.6} parent=0 // loop_pre_header
    _
  $region3: #{discriminator_forward.6} parent=0 // loop_header
    %s14 = sphi 0, %s18
    %p15 = scmp.ge.s32.totalorder %s14, 4
    %s24 = sphi 0, %s26
    %s27 = sphi 0, %s24
    %s28 = sphi 0, %s27
    %s44 = sphi 0, %s28
    %s50 = sphi 0, %s52
    %s53 = sphi 0, %s50
    %s54 = sphi 0, %s53
    %s70 = sphi 0, %s54
    %s76 = sphi 0, %s78
    %s79 = sphi 0, %s76
    %s80 = sphi 0, %s79
    %s96 = sphi 0, %s80
    %s102 = sphi 0, %s104
    %s105 = sphi 0, %s102
    %s106 = sphi 0, %s105
    %s122 = sphi 0, %s106
    %s126 = sphi 0, %s126
    %s128 = sphi 0, %s126
    %s129 = sphi 0, %s128
    %s143 = sphi 0, %s129
    %s149 = sphi 0, %s151
    %s152 = sphi 0, %s149
    %s153 = sphi 0, %s152
    %s169 = sphi 0, %s153
    %s175 = sphi 0, %s177
    %s178 = sphi 0, %s175
    %s179 = sphi 0, %s178
    %s195 = sphi 0, %s179
    %s201 = sphi 0, %s203
    %s204 = sphi 0, %s201
    %s205 = sphi 0, %s204
    %s221 = sphi 0, %s205
  $region4: #{discriminator_forward.6} parent=0 // loop_header_branch
    %17 = sbr.rel (%p15) target = $region8
  $region5: #{discriminator_forward.6} parent=0 // loop_body
    %s19 = ssub.s32 %s14, 1
    %s20 = ssub.s32 %s14, 2
    %s21 = sadd.s32 %s14, 1
    %s22 = ssub.s32 %s14, %s21
    %p23 = scmp.eq.s32.totalorder %s22, 0
    %s25 = sadd.s32 %s24, 1
    %s26 = scalar_select %p23, %s24, %s25
    %p29 = pneg %p23
    %p30 = scmp.eq.s32.totalorder %s14, 1
    %p31 = por %p29, %p30
    %p32 = scmp.ne.s32.totalorder %s24, %s27
    %p33 = scmp.eq.s32.totalorder %s14, 0
    %p34 = por %p32, %p33
    %p35 = scmp.ne.s32.totalorder %s24, %s27
    %p36 = scmp.eq.s32.totalorder %s19, 1
    %p37 = por %p35, %p36
    %p38 = scmp.ne.s32.totalorder %s27, %s28
    %p39 = scmp.eq.s32.totalorder %s19, 0
    %p40 = por %p38, %p39
    %p41 = scmp.ne.s32.totalorder %s27, %s28
    %p42 = scmp.eq.s32.totalorder %s20, 1
    %p43 = por %p41, %p42
    %p45 = scmp.ne.s32.totalorder %s28, %s44
    %p46 = scmp.eq.s32.totalorder %s20, 0
    %p47 = por %p45, %p46
    %s48 = ssub.s32 %s14, %s21
    %p49 = scmp.eq.s32.totalorder %s48, 0
    %s51 = sadd.s32 %s50, 1
    %s52 = scalar_select %p49, %s50, %s51
    %p55 = pneg %p49
    %p56 = scmp.eq.s32.totalorder %s14, 1
    %p57 = por %p55, %p56
    %p58 = scmp.ne.s32.totalorder %s50, %s53
    %p59 = scmp.eq.s32.totalorder %s14, 0
    %p60 = por %p58, %p59
    %p61 = scmp.ne.s32.totalorder %s50, %s53
    %p62 = scmp.eq.s32.totalorder %s19, 1
    %p63 = por %p61, %p62
    %p64 = scmp.ne.s32.totalorder %s53, %s54
    %p65 = scmp.eq.s32.totalorder %s19, 0
    %p66 = por %p64, %p65
    %p67 = scmp.ne.s32.totalorder %s53, %s54
    %p68 = scmp.eq.s32.totalorder %s20, 1
    %p69 = por %p67, %p68
    %p71 = scmp.ne.s32.totalorder %s54, %s70
    %p72 = scmp.eq.s32.totalorder %s20, 0
    %p73 = por %p71, %p72
    %s74 = ssub.s32 %s14, %s21
    %p75 = scmp.eq.s32.totalorder %s74, 0
    %s77 = sadd.s32 %s76, 1
    %s78 = scalar_select %p75, %s76, %s77
    %p81 = pneg %p75
    %p82 = scmp.eq.s32.totalorder %s14, 1
    %p83 = por %p81, %p82
    %p84 = scmp.ne.s32.totalorder %s76, %s79
    %p85 = scmp.eq.s32.totalorder %s14, 0
    %p86 = por %p84, %p85
    %p87 = scmp.ne.s32.totalorder %s76, %s79
    %p88 = scmp.eq.s32.totalorder %s19, 1
    %p89 = por %p87, %p88
    %p90 = scmp.ne.s32.totalorder %s79, %s80
    %p91 = scmp.eq.s32.totalorder %s19, 0
    %p92 = por %p90, %p91
    %p93 = scmp.ne.s32.totalorder %s79, %s80
    %p94 = scmp.eq.s32.totalorder %s20, 1
    %p95 = por %p93, %p94
    %p97 = scmp.ne.s32.totalorder %s80, %s96
    %p98 = scmp.eq.s32.totalorder %s20, 0
    %p99 = por %p97, %p98
    %s100 = ssub.s32 %s14, %s21
    %p101 = scmp.eq.s32.totalorder %s100, 0
    %s103 = sadd.s32 %s102, 1
    %s104 = scalar_select %p101, %s102, %s103
    %p107 = pneg %p101
    %p108 = scmp.eq.s32.totalorder %s14, 1
    %p109 = por %p107, %p108
    %p110 = scmp.ne.s32.totalorder %s102, %s105
    %p111 = scmp.eq.s32.totalorder %s14, 0
    %p112 = por %p110, %p111
    %p113 = scmp.ne.s32.totalorder %s102, %s105
    %p114 = scmp.eq.s32.totalorder %s19, 1
    %p115 = por %p113, %p114
    %p116 = scmp.ne.s32.totalorder %s105, %s106
    %p117 = scmp.eq.s32.totalorder %s19, 0
    %p118 = por %p116, %p117
    %p119 = scmp.ne.s32.totalorder %s105, %s106
    %p120 = scmp.eq.s32.totalorder %s20, 1
    %p121 = por %p119, %p120
    %p123 = scmp.ne.s32.totalorder %s106, %s122
    %p124 = scmp.eq.s32.totalorder %s20, 0
    %p125 = por %p123, %p124
    %s127 = sadd.s32 %s126, 1
    %p130 = scmp.eq.s32.totalorder %s14, 1
    %p131 = scmp.ne.s32.totalorder %s126, %s128
    %p132 = scmp.eq.s32.totalorder %s14, 0
    %p133 = por %p131, %p132
    %p134 = scmp.ne.s32.totalorder %s126, %s128
    %p135 = scmp.eq.s32.totalorder %s19, 1
    %p136 = por %p134, %p135
    %p137 = scmp.ne.s32.totalorder %s128, %s129
    %p138 = scmp.eq.s32.totalorder %s19, 0
    %p139 = por %p137, %p138
    %p140 = scmp.ne.s32.totalorder %s128, %s129
    %p141 = scmp.eq.s32.totalorder %s20, 1
    %p142 = por %p140, %p141
    %p144 = scmp.ne.s32.totalorder %s129, %s143
    %p145 = scmp.eq.s32.totalorder %s20, 0
    %p146 = por %p144, %p145
    %s147 = ssub.s32 %s14, %s21
    %p148 = scmp.eq.s32.totalorder %s147, 0
    %s150 = sadd.s32 %s149, 1
    %s151 = scalar_select %p148, %s149, %s150
    %p154 = pneg %p148
    %p155 = scmp.eq.s32.totalorder %s14, 1
    %p156 = por %p154, %p155
    %p157 = scmp.ne.s32.totalorder %s149, %s152
    %p158 = scmp.eq.s32.totalorder %s14, 0
    %p159 = por %p157, %p158
    %p160 = scmp.ne.s32.totalorder %s149, %s152
    %p161 = scmp.eq.s32.totalorder %s19, 1
    %p162 = por %p160, %p161
    %p163 = scmp.ne.s32.totalorder %s152, %s153
    %p164 = scmp.eq.s32.totalorder %s19, 0
    %p165 = por %p163, %p164
    %p166 = scmp.ne.s32.totalorder %s152, %s153
    %p167 = scmp.eq.s32.totalorder %s20, 1
    %p168 = por %p166, %p167
    %p170 = scmp.ne.s32.totalorder %s153, %s169
    %p171 = scmp.eq.s32.totalorder %s20, 0
    %p172 = por %p170, %p171
    %s173 = ssub.s32 %s14, %s21
    %p174 = scmp.eq.s32.totalorder %s173, 0
    %s176 = sadd.s32 %s175, 1
    %s177 = scalar_select %p174, %s175, %s176
    %p180 = pneg %p174
    %p181 = scmp.eq.s32.totalorder %s14, 1
    %p182 = por %p180, %p181
    %p183 = scmp.ne.s32.totalorder %s175, %s178
    %p184 = scmp.eq.s32.totalorder %s14, 0
    %p185 = por %p183, %p184
    %p186 = scmp.ne.s32.totalorder %s175, %s178
    %p187 = scmp.eq.s32.totalorder %s19, 1
    %p188 = por %p186, %p187
    %p189 = scmp.ne.s32.totalorder %s178, %s179
    %p190 = scmp.eq.s32.totalorder %s19, 0
    %p191 = por %p189, %p190
    %p192 = scmp.ne.s32.totalorder %s178, %s179
    %p193 = scmp.eq.s32.totalorder %s20, 1
    %p194 = por %p192, %p193
    %p196 = scmp.ne.s32.totalorder %s179, %s195
    %p197 = scmp.eq.s32.totalorder %s20, 0
    %p198 = por %p196, %p197
    %s199 = ssub.s32 %s14, %s21
    %p200 = scmp.eq.s32.totalorder %s199, 0
    %s202 = sadd.s32 %s201, 1
    %s203 = scalar_select %p200, %s201, %s202
    %p206 = pneg %p200
    %p207 = scmp.eq.s32.totalorder %s14, 1
    %p208 = por %p206, %p207
    %p209 = scmp.ne.s32.totalorder %s201, %s204
    %p210 = scmp.eq.s32.totalorder %s14, 0
    %p211 = por %p209, %p210
    %p212 = scmp.ne.s32.totalorder %s201, %s204
    %p213 = scmp.eq.s32.totalorder %s19, 1
    %p214 = por %p212, %p213
    %p215 = scmp.ne.s32.totalorder %s204, %s205
    %p216 = scmp.eq.s32.totalorder %s19, 0
    %p217 = por %p215, %p216
    %p218 = scmp.ne.s32.totalorder %s204, %s205
    %p219 = scmp.eq.s32.totalorder %s20, 1
    %p220 = por %p218, %p219
    %p222 = scmp.ne.s32.totalorder %s205, %s221
    %p223 = scmp.eq.s32.totalorder %s20, 0
    %p224 = por %p222, %p223
    %p225 = scmp.le.s32.totalorder 1, %s14
    %p226 = scmp.lt.s32.totalorder %s14, 3
    %p227 = pnand %p225, %p226
    %p228 = pneg %p227
    // Predicated region
    $region9: #{discriminator_forward.6} parent=5 // pred_check
      _
    $region10: #{discriminator_forward.6} parent=5 // pred_check_branch
      %230 = sbr.rel (%p227) target = $region12
    $region11: #{discriminator_forward.6} parent=5 // pred_region
      %s231 = ssub.s32 %s14, 1
      // Predicated region
      $region13: #{discriminator_forward.6} parent=11 // pred_check
        %p232 = pneg %p139
      $region14: #{discriminator_forward.6} parent=11 // pred_check_branch
        %234 = sbr.rel (%p232) target = $region16
      $region15: #{discriminator_forward.6} parent=11 // pred_region
        _
      $region16: #{discriminator_forward.6} parent=11 // pred_fallthru
        _
    $region12: #{discriminator_forward.6} parent=5 // pred_fallthru
      _
    %p235 = scmp.lt.s32.totalorder %s14, 2
    // Predicated region
    $region17: #{discriminator_forward.6} parent=5 // pred_check
      %p236 = pneg %p235
    $region18: #{discriminator_forward.6} parent=5 // pred_check_branch
      %238 = sbr.rel (%p236) target = $region20
    $region19: #{discriminator_forward.6} parent=5 // pred_region
      // Predicated region
      $region21: #{discriminator_forward.6} parent=19 // pred_check
        %p239 = pneg %p34
      $region22: #{discriminator_forward.6} parent=19 // pred_check_branch
        %241 = sbr.rel (%p239) target = $region24
      $region23: #{discriminator_forward.6} parent=19 // pred_region
        %p242 = scmp.lt.s32.totalorder %s14, 1
        %s243 = scalar_select %p242, %s14, 1
        %s244 = smul.addr %s243, 18
        %s245 = smul.addr %s244, 8
        %s246 = scalar_lea.vmem %s0, %s245
      $region24: #{discriminator_forward.6} parent=19 // pred_fallthru
        _
      // Predicated region
      $region25: #{discriminator_forward.6} parent=19 // pred_check
        %p247 = pneg %p60
      $region26: #{discriminator_forward.6} parent=19 // pred_check_branch
        %249 = sbr.rel (%p247) target = $region28
      $region27: #{discriminator_forward.6} parent=19 // pred_region
        %p250 = scmp.lt.s32.totalorder %s14, 1
        %s251 = scalar_select %p250, %s14, 1
        %s252 = smul.addr %s251, 18
        %s253 = smul.addr %s252, 8
        %s254 = scalar_lea.vmem %s1, %s253
      $region28: #{discriminator_forward.6} parent=19 // pred_fallthru
        _
      // Predicated region
      $region29: #{discriminator_forward.6} parent=19 // pred_check
        %p255 = pneg %p86
      $region30: #{discriminator_forward.6} parent=19 // pred_check_branch
        %257 = sbr.rel (%p255) target = $region32
      $region31: #{discriminator_forward.6} parent=19 // pred_region
        %p258 = scmp.lt.s32.totalorder %s14, 1
        %s259 = scalar_select %p258, %s14, 1
        %s260 = smul.addr %s259, 18
        %s261 = smul.addr %s260, 8
        %s262 = scalar_lea.vmem %s2, %s261
      $region32: #{discriminator_forward.6} parent=19 // pred_fallthru
        _
      // Predicated region
      $region33: #{discriminator_forward.6} parent=19 // pred_check
        %p263 = pneg %p112
      $region34: #{discriminator_forward.6} parent=19 // pred_check_branch
        %265 = sbr.rel (%p263) target = $region36
      $region35: #{discriminator_forward.6} parent=19 // pred_region
        %p266 = scmp.lt.s32.totalorder %s14, 1
        %s267 = scalar_select %p266, %s14, 1
        %s268 = smul.addr %s267, 18
        %s269 = smul.addr %s268, 8
        %s270 = scalar_lea.vmem %s3, %s269
      $region36: #{discriminator_forward.6} parent=19 // pred_fallthru
        _
    $region20: #{discriminator_forward.6} parent=5 // pred_fallthru
      _
    %p271 = scmp.le.s32.totalorder 1, %s14
    %p272 = scmp.lt.s32.totalorder %s14, 3
    %p273 = pnand %p271, %p272
    %p274 = pneg %p273
    // Predicated region
    $region37: #{discriminator_forward.6} parent=5 // pred_check
      _
    $region38: #{discriminator_forward.6} parent=5 // pred_check_branch
      %276 = sbr.rel (%p273) target = $region40
    $region39: #{discriminator_forward.6} parent=5 // pred_region
      %s277 = ssub.s32 %s14, 1
      %p278 = scmp.lt.s32.totalorder %s19, 1
      %s279 = scalar_select %p278, %s19, 1
      %s280 = smul.addr %s279, 18
      %s281 = smul.addr %s280, 8
      %s282 = scalar_lea.vmem %s0, %s281
      %p283 = pneg %p40
      %p284 = pneg %p37
      %p285 = scmp.lt.s32.totalorder %s19, 1
      %s286 = scalar_select %p285, %s19, 1
      %s287 = smul.addr %s286, 18
      %s288 = smul.addr %s287, 8
      %s289 = scalar_lea.vmem %s1, %s288
      %p290 = pneg %p66
      %p291 = pneg %p63
      %p292 = scmp.lt.s32.totalorder %s19, 1
      %s293 = scalar_select %p292, %s19, 1
      %s294 = smul.addr %s293, 18
      %s295 = smul.addr %s294, 8
      %s296 = scalar_lea.vmem %s2, %s295
      %p297 = pneg %p92
      %p298 = pneg %p89
      %p299 = scmp.lt.s32.totalorder %s19, 1
      %s300 = scalar_select %p299, %s19, 1
      %s301 = smul.addr %s300, 18
      %s302 = smul.addr %s301, 8
      %s303 = scalar_lea.vmem %s3, %s302
      %p304 = pneg %p118
      %p305 = pneg %p115
      %p306 = pneg %p139
      %p307 = pneg %p136
      %p308 = pneg %p165
      %p309 = pneg %p162
      %p310 = scmp.lt.s32.totalorder %s19, 1
      %s311 = scalar_select %p310, %s19, 1
      %s312 = smul.addr %s311, 8
      %s313 = smul.addr %s312, 8
      %s314 = scalar_lea.vmem %s5, %s313
      %p315 = pneg %p191
      %p316 = pneg %p188
      %p317 = scmp.lt.s32.totalorder %s19, 1
      %s318 = scalar_select %p317, %s19, 1
      %s319 = scalar_lea.vmem %s6, %s318
      %p320 = pneg %p217
      %p321 = pneg %p214
      %p322 = scmp.lt.s32.totalorder %s19, 1
      %s323 = scalar_select %p322, %s19, 1
      %s324 = scalar_lea.vmem %s7, %s323
      %p325 = scmp.lt.s32.totalorder %s19, 1
      %s326 = scalar_select %p325, %s19, 1
      %s327 = smul.addr %s326, 18
      %s328 = smul.addr %s327, 8
      %s329 = scalar_lea.vmem %s0, %s328
      %p330 = scmp.lt.s32.totalorder %s19, 1
      %s331 = scalar_select %p330, %s19, 1
      %s332 = smul.addr %s331, 18
      %s333 = smul.addr %s332, 8
      %s334 = scalar_lea.vmem %s1, %s333
      %p335 = scmp.lt.s32.totalorder %s19, 1
      %s336 = scalar_select %p335, %s19, 1
      %s337 = smul.addr %s336, 18
      %s338 = smul.addr %s337, 8
      %s339 = scalar_lea.vmem %s2, %s338
      %p340 = scmp.lt.s32.totalorder %s19, 1
      %s341 = scalar_select %p340, %s19, 1
      %s342 = smul.addr %s341, 18
      %s343 = smul.addr %s342, 8
      %s344 = scalar_lea.vmem %s3, %s343
      %p345 = scmp.lt.s32.totalorder %s19, 1
      %s346 = scalar_select %p345, %s19, 1
      %s347 = smul.addr %s346, 8
      %s348 = smul.addr %s347, 8
      %s349 = scalar_lea.vmem %s5, %s348
      %p350 = scmp.lt.s32.totalorder %s19, 1
      %s351 = scalar_select %p350, %s19, 1
      %s352 = scalar_lea.vmem %s6, %s351
      %p353 = scmp.lt.s32.totalorder %s19, 1
      %s354 = scalar_select %p353, %s19, 1
      %s355 = scalar_lea.vmem %s7, %s354
      loop: start=0, step=1, limit=8
      $region41: #{discriminator_forward.6} parent=39 // loop_pre_header
        _
      $region42: #{discriminator_forward.6} parent=39 // loop_header
        %s357 = sphi 0, %s361
        %p358 = scmp.ge.s32.totalorder %s357, 8
        %v362 = vphi 0.0, %v976
        %v363 = vphi 0.0, %v984
      $region43: #{discriminator_forward.6} parent=39 // loop_header_branch
        %360 = sbr.rel (%p358) target = $region47
      $region44: #{discriminator_forward.6} parent=39 // loop_body
        %s364 = smul.u32 %s357, 16
        %s365 = scalar_lea.vmem %s329, %s364
        %v366 = vld [vmem:[%s365] sm:$0xff]
        %s367 = scalar_lea.vmem %s334, %s364
        %v368 = vld [vmem:[%s367] sm:$0xff]
        %v369 = vld [vmem:[%s365 + $0x1] sm:$0xff]
        %v370 = vld [vmem:[%s367 + $0x1] sm:$0xff]
        %s371 = scalar_lea.vmem %s339, %s364
        %v372 = vld [vmem:[%s371] sm:$0xff]
        %s373 = scalar_lea.vmem %s344, %s364
        %v374 = vld [vmem:[%s373] sm:$0xff]
        %v375 = vld [vmem:[%s371 + $0x1] sm:$0xff]
        %v376 = vld [vmem:[%s373 + $0x1] sm:$0xff]
        %s377 = sadd.s32 %s357, 1
        %s378 = smul.u32 %s377, 16
        %s379 = scalar_lea.vmem %s329, %s378
        %v380 = vld [vmem:[%s379] sm:$0xff]
        %s381 = scalar_lea.vmem %s334, %s378
        %v382 = vld [vmem:[%s381] sm:$0xff]
        %v383 = vld [vmem:[%s379 + $0x1] sm:$0xff]
        %v384 = vld [vmem:[%s381 + $0x1] sm:$0xff]
        %s385 = scalar_lea.vmem %s339, %s378
        %v386 = vld [vmem:[%s385] sm:$0xff]
        %s387 = scalar_lea.vmem %s344, %s378
        %v388 = vld [vmem:[%s387] sm:$0xff]
        %v389 = vld [vmem:[%s385 + $0x1] sm:$0xff]
        %v390 = vld [vmem:[%s387 + $0x1] sm:$0xff]
        %v391 = vld [vmem:[%s4] sm:$0xff]
        %v392 = vld [vmem:[%s4 + $0x8] sm:$0xff]
        %v393 = vld [vmem:[%s4 + $0x10] sm:$0xff]
        %v394 = vld [vmem:[%s4 + $0x18] sm:$0xff]
        %v395 = vld [vmem:[%s4 + $0x20] sm:$0xff]
        %v396 = vld [vmem:[%s4 + $0x28] sm:$0xff]
        %v397 = vld [vmem:[%s4 + $0x30] sm:$0xff]
        %v398 = vld [vmem:[%s4 + $0x38] sm:$0xff]
        %v399 = vld [vmem:[%s4 + $0x40] sm:$0xff]
        %v400 = vld [vmem:[%s4 + $0x48] sm:$0xff]
        %v401 = vld [vmem:[%s4 + $0x50] sm:$0xff]
        %v402 = vld [vmem:[%s4 + $0x58] sm:$0xff]
        %v403 = vld [vmem:[%s4 + $0x60] sm:$0xff]
        %v404 = vld [vmem:[%s4 + $0x68] sm:$0xff]
        %v405 = vld [vmem:[%s4 + $0x70] sm:$0xff]
        %v406 = vld [vmem:[%s4 + $0x78] sm:$0xff]
        %v407 = vld [vmem:[%s4 + $0x80] sm:$0xff]
        %v408 = vld [vmem:[%s4 + $0x88] sm:$0xff]
        %v409 = vld [vmem:[%s4 + $0x90] sm:$0xff]
        %v410 = vld [vmem:[%s4 + $0x98] sm:$0xff]
        %v411 = vld [vmem:[%s4 + $0xa0] sm:$0xff]
        %v412 = vld [vmem:[%s4 + $0xa8] sm:$0xff]
        %v413 = vld [vmem:[%s4 + $0xb0] sm:$0xff]
        %v414 = vld [vmem:[%s4 + $0xb8] sm:$0xff]
        %v415 = vld [vmem:[%s4 + $0xc0] sm:$0xff]
        %v416 = vld [vmem:[%s4 + $0xc8] sm:$0xff]
        %v417 = vld [vmem:[%s4 + $0xd0] sm:$0xff]
        %v418 = vld [vmem:[%s4 + $0xd8] sm:$0xff]
        %v419 = vld [vmem:[%s4 + $0xe0] sm:$0xff]
        %v420 = vld [vmem:[%s4 + $0xe8] sm:$0xff]
        %v421 = vld [vmem:[%s4 + $0xf0] sm:$0xff]
        %v422 = vld [vmem:[%s4 + $0xf8] sm:$0xff]
        %v423 = vld [vmem:[%s4 + $0x100] sm:$0xff]
        %v424 = vld [vmem:[%s4 + $0x108] sm:$0xff]
        %v425 = vld [vmem:[%s4 + $0x110] sm:$0xff]
        %v426 = vld [vmem:[%s4 + $0x118] sm:$0xff]
        %v427 = vld [vmem:[%s4 + $0x120] sm:$0xff]
        %v428 = vld [vmem:[%s4 + $0x128] sm:$0xff]
        %v429 = vld [vmem:[%s4 + $0x130] sm:$0xff]
        %v430 = vld [vmem:[%s4 + $0x138] sm:$0xff]
        %v431 = vld [vmem:[%s4 + $0x140] sm:$0xff]
        %v432 = vld [vmem:[%s4 + $0x148] sm:$0xff]
        %v433 = vld [vmem:[%s4 + $0x150] sm:$0xff]
        %v434 = vld [vmem:[%s4 + $0x158] sm:$0xff]
        %v435 = vld [vmem:[%s4 + $0x160] sm:$0xff]
        %v436 = vld [vmem:[%s4 + $0x168] sm:$0xff]
        %v437 = vld [vmem:[%s4 + $0x170] sm:$0xff]
        %v438 = vld [vmem:[%s4 + $0x178] sm:$0xff]
        %v439 = vld [vmem:[%s4 + $0x180] sm:$0xff]
        %v440 = vld [vmem:[%s4 + $0x188] sm:$0xff]
        %v441 = vld [vmem:[%s4 + $0x190] sm:$0xff]
        %v442 = vld [vmem:[%s4 + $0x198] sm:$0xff]
        %v443 = vld [vmem:[%s4 + $0x1a0] sm:$0xff]
        %v444 = vld [vmem:[%s4 + $0x1a8] sm:$0xff]
        %v445 = vld [vmem:[%s4 + $0x1b0] sm:$0xff]
        %v446 = vld [vmem:[%s4 + $0x1b8] sm:$0xff]
        %v447 = vld [vmem:[%s4 + $0x1c0] sm:$0xff]
        %v448 = vld [vmem:[%s4 + $0x1c8] sm:$0xff]
        %v449 = vld [vmem:[%s4 + $0x1d0] sm:$0xff]
        %v450 = vld [vmem:[%s4 + $0x1d8] sm:$0xff]
        %v451 = vld [vmem:[%s4 + $0x1e0] sm:$0xff]
        %v452 = vld [vmem:[%s4 + $0x1e8] sm:$0xff]
        %v453 = vld [vmem:[%s4 + $0x1f0] sm:$0xff]
        %v454 = vld [vmem:[%s4 + $0x1f8] sm:$0xff]
        %v455 = vld [vmem:[%s4 + $0x200] sm:$0xff]
        %v456 = vld [vmem:[%s4 + $0x208] sm:$0xff]
        %v457 = vld [vmem:[%s4 + $0x210] sm:$0xff]
        %v458 = vld [vmem:[%s4 + $0x218] sm:$0xff]
        %v459 = vld [vmem:[%s4 + $0x220] sm:$0xff]
        %v460 = vld [vmem:[%s4 + $0x228] sm:$0xff]
        %v461 = vld [vmem:[%s4 + $0x230] sm:$0xff]
        %v462 = vld [vmem:[%s4 + $0x238] sm:$0xff]
        %v463 = vld [vmem:[%s4 + $0x240] sm:$0xff]
        %v464 = vld [vmem:[%s4 + $0x248] sm:$0xff]
        %v465 = vld [vmem:[%s4 + $0x250] sm:$0xff]
        %v466 = vld [vmem:[%s4 + $0x258] sm:$0xff]
        %v467 = vld [vmem:[%s4 + $0x260] sm:$0xff]
        %v468 = vld [vmem:[%s4 + $0x268] sm:$0xff]
        %v469 = vld [vmem:[%s4 + $0x270] sm:$0xff]
        %v470 = vld [vmem:[%s4 + $0x278] sm:$0xff]
        %v471 = vld [vmem:[%s4 + $0x280] sm:$0xff]
        %v472 = vld [vmem:[%s4 + $0x288] sm:$0xff]
        %v473 = vld [vmem:[%s4 + $0x290] sm:$0xff]
        %v474 = vld [vmem:[%s4 + $0x298] sm:$0xff]
        %v475 = vld [vmem:[%s4 + $0x2a0] sm:$0xff]
        %v476 = vld [vmem:[%s4 + $0x2a8] sm:$0xff]
        %v477 = vld [vmem:[%s4 + $0x2b0] sm:$0xff]
        %v478 = vld [vmem:[%s4 + $0x2b8] sm:$0xff]
        %v479 = vld [vmem:[%s4 + $0x2c0] sm:$0xff]
        %v480 = vld [vmem:[%s4 + $0x2c8] sm:$0xff]
        %v481 = vld [vmem:[%s4 + $0x2d0] sm:$0xff]
        %v482 = vld [vmem:[%s4 + $0x2d8] sm:$0xff]
        %v483 = vld [vmem:[%s4 + $0x2e0] sm:$0xff]
        %v484 = vld [vmem:[%s4 + $0x2e8] sm:$0xff]
        %v485 = vld [vmem:[%s4 + $0x2f0] sm:$0xff]
        %v486 = vld [vmem:[%s4 + $0x2f8] sm:$0xff]
        %v487 = vld [vmem:[%s4 + $0x300] sm:$0xff]
        %v488 = vld [vmem:[%s4 + $0x308] sm:$0xff]
        %v489 = vld [vmem:[%s4 + $0x310] sm:$0xff]
        %v490 = vld [vmem:[%s4 + $0x318] sm:$0xff]
        %v491 = vld [vmem:[%s4 + $0x320] sm:$0xff]
        %v492 = vld [vmem:[%s4 + $0x328] sm:$0xff]
        %v493 = vld [vmem:[%s4 + $0x330] sm:$0xff]
        %v494 = vld [vmem:[%s4 + $0x338] sm:$0xff]
        %v495 = vld [vmem:[%s4 + $0x340] sm:$0xff]
        %v496 = vld [vmem:[%s4 + $0x348] sm:$0xff]
        %v497 = vld [vmem:[%s4 + $0x350] sm:$0xff]
        %v498 = vld [vmem:[%s4 + $0x358] sm:$0xff]
        %v499 = vld [vmem:[%s4 + $0x360] sm:$0xff]
        %v500 = vld [vmem:[%s4 + $0x368] sm:$0xff]
        %v501 = vld [vmem:[%s4 + $0x370] sm:$0xff]
        %v502 = vld [vmem:[%s4 + $0x378] sm:$0xff]
        %v503 = vld [vmem:[%s4 + $0x380] sm:$0xff]
        %v504 = vld [vmem:[%s4 + $0x388] sm:$0xff]
        %v505 = vld [vmem:[%s4 + $0x390] sm:$0xff]
        %v506 = vld [vmem:[%s4 + $0x398] sm:$0xff]
        %v507 = vld [vmem:[%s4 + $0x3a0] sm:$0xff]
        %v508 = vld [vmem:[%s4 + $0x3a8] sm:$0xff]
        %v509 = vld [vmem:[%s4 + $0x3b0] sm:$0xff]
        %v510 = vld [vmem:[%s4 + $0x3b8] sm:$0xff]
        %v511 = vld [vmem:[%s4 + $0x3c0] sm:$0xff]
        %v512 = vld [vmem:[%s4 + $0x3c8] sm:$0xff]
        %v513 = vld [vmem:[%s4 + $0x3d0] sm:$0xff]
        %v514 = vld [vmem:[%s4 + $0x3d8] sm:$0xff]
        %v515 = vld [vmem:[%s4 + $0x3e0] sm:$0xff]
        %v516 = vld [vmem:[%s4 + $0x3e8] sm:$0xff]
        %v517 = vld [vmem:[%s4 + $0x3f0] sm:$0xff]
        %v518 = vld [vmem:[%s4 + $0x3f8] sm:$0xff]
        %v519 = vld [vmem:[%s4 + $0x400] sm:$0xff]
        %v520 = vld [vmem:[%s4 + $0x408] sm:$0xff]
        %v521 = vld [vmem:[%s4 + $0x410] sm:$0xff]
        %v522 = vld [vmem:[%s4 + $0x418] sm:$0xff]
        %v523 = vld [vmem:[%s4 + $0x420] sm:$0xff]
        %v524 = vld [vmem:[%s4 + $0x428] sm:$0xff]
        %v525 = vld [vmem:[%s4 + $0x430] sm:$0xff]
        %v526 = vld [vmem:[%s4 + $0x438] sm:$0xff]
        %v527 = vld [vmem:[%s4 + $0x440] sm:$0xff]
        %v528 = vld [vmem:[%s4 + $0x448] sm:$0xff]
        %v529 = vld [vmem:[%s4 + $0x450] sm:$0xff]
        %v530 = vld [vmem:[%s4 + $0x458] sm:$0xff]
        %v531 = vld [vmem:[%s4 + $0x460] sm:$0xff]
        %v532 = vld [vmem:[%s4 + $0x468] sm:$0xff]
        %v533 = vld [vmem:[%s4 + $0x470] sm:$0xff]
        %v534 = vld [vmem:[%s4 + $0x478] sm:$0xff]
        %v535 = vld [vmem:[%s4 + $0x480] sm:$0xff]
        %v536 = vld [vmem:[%s4 + $0x488] sm:$0xff]
        %v537 = vld [vmem:[%s4 + $0x490] sm:$0xff]
        %v538 = vld [vmem:[%s4 + $0x498] sm:$0xff]
        %v539 = vld [vmem:[%s4 + $0x4a0] sm:$0xff]
        %v540 = vld [vmem:[%s4 + $0x4a8] sm:$0xff]
        %v541 = vld [vmem:[%s4 + $0x4b0] sm:$0xff]
        %v542 = vld [vmem:[%s4 + $0x4b8] sm:$0xff]
        %v543 = vld [vmem:[%s4 + $0x4c0] sm:$0xff]
        %v544 = vld [vmem:[%s4 + $0x4c8] sm:$0xff]
        %v545 = vld [vmem:[%s4 + $0x4d0] sm:$0xff]
        %v546 = vld [vmem:[%s4 + $0x4d8] sm:$0xff]
        %v547 = vld [vmem:[%s4 + $0x4e0] sm:$0xff]
        %v548 = vld [vmem:[%s4 + $0x4e8] sm:$0xff]
        %v549 = vld [vmem:[%s4 + $0x4f0] sm:$0xff]
        %v550 = vld [vmem:[%s4 + $0x4f8] sm:$0xff]
        %v551 = vld [vmem:[%s4 + $0x500] sm:$0xff]
        %v552 = vld [vmem:[%s4 + $0x508] sm:$0xff]
        %v553 = vld [vmem:[%s4 + $0x510] sm:$0xff]
        %v554 = vld [vmem:[%s4 + $0x518] sm:$0xff]
        %v555 = vld [vmem:[%s4 + $0x520] sm:$0xff]
        %v556 = vld [vmem:[%s4 + $0x528] sm:$0xff]
        %v557 = vld [vmem:[%s4 + $0x530] sm:$0xff]
        %v558 = vld [vmem:[%s4 + $0x538] sm:$0xff]
        %v559 = vld [vmem:[%s4 + $0x540] sm:$0xff]
        %v560 = vld [vmem:[%s4 + $0x548] sm:$0xff]
        %v561 = vld [vmem:[%s4 + $0x550] sm:$0xff]
        %v562 = vld [vmem:[%s4 + $0x558] sm:$0xff]
        %v563 = vld [vmem:[%s4 + $0x560] sm:$0xff]
        %v564 = vld [vmem:[%s4 + $0x568] sm:$0xff]
        %v565 = vld [vmem:[%s4 + $0x570] sm:$0xff]
        %v566 = vld [vmem:[%s4 + $0x578] sm:$0xff]
        %v567 = vld [vmem:[%s4 + $0x580] sm:$0xff]
        %v568 = vld [vmem:[%s4 + $0x588] sm:$0xff]
        %v569 = vld [vmem:[%s4 + $0x590] sm:$0xff]
        %v570 = vld [vmem:[%s4 + $0x598] sm:$0xff]
        %v571 = vld [vmem:[%s4 + $0x5a0] sm:$0xff]
        %v572 = vld [vmem:[%s4 + $0x5a8] sm:$0xff]
        %v573 = vld [vmem:[%s4 + $0x5b0] sm:$0xff]
        %v574 = vld [vmem:[%s4 + $0x5b8] sm:$0xff]
        %v575 = vld [vmem:[%s4 + $0x5c0] sm:$0xff]
        %v576 = vld [vmem:[%s4 + $0x5c8] sm:$0xff]
        %v577 = vld [vmem:[%s4 + $0x5d0] sm:$0xff]
        %v578 = vld [vmem:[%s4 + $0x5d8] sm:$0xff]
        %v579 = vld [vmem:[%s4 + $0x5e0] sm:$0xff]
        %v580 = vld [vmem:[%s4 + $0x5e8] sm:$0xff]
        %v581 = vld [vmem:[%s4 + $0x5f0] sm:$0xff]
        %v582 = vld [vmem:[%s4 + $0x5f8] sm:$0xff]
        %v583 = vld [vmem:[%s4 + $0x600] sm:$0xff]
        %v584 = vld [vmem:[%s4 + $0x608] sm:$0xff]
        %v585 = vld [vmem:[%s4 + $0x610] sm:$0xff]
        %v586 = vld [vmem:[%s4 + $0x618] sm:$0xff]
        %v587 = vld [vmem:[%s4 + $0x620] sm:$0xff]
        %v588 = vld [vmem:[%s4 + $0x628] sm:$0xff]
        %v589 = vld [vmem:[%s4 + $0x630] sm:$0xff]
        %v590 = vld [vmem:[%s4 + $0x638] sm:$0xff]
        %v591 = vld [vmem:[%s4 + $0x640] sm:$0xff]
        %v592 = vld [vmem:[%s4 + $0x648] sm:$0xff]
        %v593 = vld [vmem:[%s4 + $0x650] sm:$0xff]
        %v594 = vld [vmem:[%s4 + $0x658] sm:$0xff]
        %v595 = vld [vmem:[%s4 + $0x660] sm:$0xff]
        %v596 = vld [vmem:[%s4 + $0x668] sm:$0xff]
        %v597 = vld [vmem:[%s4 + $0x670] sm:$0xff]
        %v598 = vld [vmem:[%s4 + $0x678] sm:$0xff]
        %v599 = vld [vmem:[%s4 + $0x680] sm:$0xff]
        %v600 = vld [vmem:[%s4 + $0x688] sm:$0xff]
        %v601 = vld [vmem:[%s4 + $0x690] sm:$0xff]
        %v602 = vld [vmem:[%s4 + $0x698] sm:$0xff]
        %v603 = vld [vmem:[%s4 + $0x6a0] sm:$0xff]
        %v604 = vld [vmem:[%s4 + $0x6a8] sm:$0xff]
        %v605 = vld [vmem:[%s4 + $0x6b0] sm:$0xff]
        %v606 = vld [vmem:[%s4 + $0x6b8] sm:$0xff]
        %v607 = vld [vmem:[%s4 + $0x6c0] sm:$0xff]
        %v608 = vld [vmem:[%s4 + $0x6c8] sm:$0xff]
        %v609 = vld [vmem:[%s4 + $0x6d0] sm:$0xff]
        %v610 = vld [vmem:[%s4 + $0x6d8] sm:$0xff]
        %v611 = vld [vmem:[%s4 + $0x6e0] sm:$0xff]
        %v612 = vld [vmem:[%s4 + $0x6e8] sm:$0xff]
        %v613 = vld [vmem:[%s4 + $0x6f0] sm:$0xff]
        %v614 = vld [vmem:[%s4 + $0x6f8] sm:$0xff]
        %v615 = vld [vmem:[%s4 + $0x700] sm:$0xff]
        %v616 = vld [vmem:[%s4 + $0x708] sm:$0xff]
        %v617 = vld [vmem:[%s4 + $0x710] sm:$0xff]
        %v618 = vld [vmem:[%s4 + $0x718] sm:$0xff]
        %v619 = vld [vmem:[%s4 + $0x720] sm:$0xff]
        %v620 = vld [vmem:[%s4 + $0x728] sm:$0xff]
        %v621 = vld [vmem:[%s4 + $0x730] sm:$0xff]
        %v622 = vld [vmem:[%s4 + $0x738] sm:$0xff]
        %v623 = vld [vmem:[%s4 + $0x740] sm:$0xff]
        %v624 = vld [vmem:[%s4 + $0x748] sm:$0xff]
        %v625 = vld [vmem:[%s4 + $0x750] sm:$0xff]
        %v626 = vld [vmem:[%s4 + $0x758] sm:$0xff]
        %v627 = vld [vmem:[%s4 + $0x760] sm:$0xff]
        %v628 = vld [vmem:[%s4 + $0x768] sm:$0xff]
        %v629 = vld [vmem:[%s4 + $0x770] sm:$0xff]
        %v630 = vld [vmem:[%s4 + $0x778] sm:$0xff]
        %v631 = vld [vmem:[%s4 + $0x780] sm:$0xff]
        %v632 = vld [vmem:[%s4 + $0x788] sm:$0xff]
        %v633 = vld [vmem:[%s4 + $0x790] sm:$0xff]
        %v634 = vld [vmem:[%s4 + $0x798] sm:$0xff]
        %v635 = vld [vmem:[%s4 + $0x7a0] sm:$0xff]
        %v636 = vld [vmem:[%s4 + $0x7a8] sm:$0xff]
        %v637 = vld [vmem:[%s4 + $0x7b0] sm:$0xff]
        %v638 = vld [vmem:[%s4 + $0x7b8] sm:$0xff]
        %v639 = vld [vmem:[%s4 + $0x7c0] sm:$0xff]
        %v640 = vld [vmem:[%s4 + $0x7c8] sm:$0xff]
        %v641 = vld [vmem:[%s4 + $0x7d0] sm:$0xff]
        %v642 = vld [vmem:[%s4 + $0x7d8] sm:$0xff]
        %v643 = vld [vmem:[%s4 + $0x7e0] sm:$0xff]
        %v644 = vld [vmem:[%s4 + $0x7e8] sm:$0xff]
        %v645 = vld [vmem:[%s4 + $0x7f0] sm:$0xff]
        %v646 = vld [vmem:[%s4 + $0x7f8] sm:$0xff]
        %647 = vmatpush.msra.mxu0 %v406
        %648 = vmatpush.msra.mxu0 %v405
        %649 = vmatpush.msra.mxu0 %v404
        %650 = vmatpush.msra.mxu0 %v403
        %651 = vmatpush.msra.mxu0 %v402
        %652 = vmatpush.msra.mxu0 %v401
        %653 = vmatpush.msra.mxu0 %v400
        %654 = vmatpush.msra.mxu0 %v399
        %655 = vmatpush.msra.mxu0 %v398
        %656 = vmatpush.msra.mxu0 %v397
        %657 = vmatpush.msra.mxu0 %v396
        %658 = vmatpush.msra.mxu0 %v395
        %659 = vmatpush.msra.mxu0 %v394
        %660 = vmatpush.msra.mxu0 %v393
        %661 = vmatpush.msra.mxu0 %v392
        %662 = vmatpush.msra.mxu0 %v391
        %663 = vmatmul.f32.gmra.mxu0 %v366
        %v664 = vpop.f32.mrf.mxu0
        %v665 = vadd.f32 0.0, %v664
        %666 = vdwg.mxu0
        %667 = vmatpush.msra.mxu0 %v422
        %668 = vmatpush.msra.mxu0 %v421
        %669 = vmatpush.msra.mxu0 %v420
        %670 = vmatpush.msra.mxu0 %v419
        %671 = vmatpush.msra.mxu0 %v418
        %672 = vmatpush.msra.mxu0 %v417
        %673 = vmatpush.msra.mxu0 %v416
        %674 = vmatpush.msra.mxu0 %v415
        %675 = vmatpush.msra.mxu0 %v414
        %676 = vmatpush.msra.mxu0 %v413
        %677 = vmatpush.msra.mxu0 %v412
        %678 = vmatpush.msra.mxu0 %v411
        %679 = vmatpush.msra.mxu0 %v410
        %680 = vmatpush.msra.mxu0 %v409
        %681 = vmatpush.msra.mxu0 %v408
        %682 = vmatpush.msra.mxu0 %v407
        %683 = vmatmul.f32.gmra.mxu0 %v368
        %v684 = vpop.f32.mrf.mxu0
        %v685 = vadd.f32 %v665, %v684
        %686 = vdwg.mxu0
        %687 = vmatpush.msra.mxu0 %v438
        %688 = vmatpush.msra.mxu0 %v437
        %689 = vmatpush.msra.mxu0 %v436
        %690 = vmatpush.msra.mxu0 %v435
        %691 = vmatpush.msra.mxu0 %v434
        %692 = vmatpush.msra.mxu0 %v433
        %693 = vmatpush.msra.mxu0 %v432
        %694 = vmatpush.msra.mxu0 %v431
        %695 = vmatpush.msra.mxu0 %v430
        %696 = vmatpush.msra.mxu0 %v429
        %697 = vmatpush.msra.mxu0 %v428
        %698 = vmatpush.msra.mxu0 %v427
        %699 = vmatpush.msra.mxu0 %v426
        %700 = vmatpush.msra.mxu0 %v425
        %701 = vmatpush.msra.mxu0 %v424
        %702 = vmatpush.msra.mxu0 %v423
        %703 = vmatmul.f32.gmra.mxu0 %v369
        %v704 = vpop.f32.mrf.mxu0
        %v705 = vadd.f32 %v685, %v704
        %706 = vdwg.mxu0
        %707 = vmatpush.msra.mxu0 %v454
        %708 = vmatpush.msra.mxu0 %v453
        %709 = vmatpush.msra.mxu0 %v452
        %710 = vmatpush.msra.mxu0 %v451
        %711 = vmatpush.msra.mxu0 %v450
        %712 = vmatpush.msra.mxu0 %v449
        %713 = vmatpush.msra.mxu0 %v448
        %714 = vmatpush.msra.mxu0 %v447
        %715 = vmatpush.msra.mxu0 %v446
        %716 = vmatpush.msra.mxu0 %v445
        %717 = vmatpush.msra.mxu0 %v444
        %718 = vmatpush.msra.mxu0 %v443
        %719 = vmatpush.msra.mxu0 %v442
        %720 = vmatpush.msra.mxu0 %v441
        %721 = vmatpush.msra.mxu0 %v440
        %722 = vmatpush.msra.mxu0 %v439
        %723 = vmatmul.f32.gmra.mxu0 %v370
        %v724 = vpop.f32.mrf.mxu0
        %v725 = vadd.f32 %v705, %v724
        %726 = vdwg.mxu0
        %727 = vmatpush.msra.mxu0 %v470
        %728 = vmatpush.msra.mxu0 %v469
        %729 = vmatpush.msra.mxu0 %v468
        %730 = vmatpush.msra.mxu0 %v467
        %731 = vmatpush.msra.mxu0 %v466
        %732 = vmatpush.msra.mxu0 %v465
        %733 = vmatpush.msra.mxu0 %v464
        %734 = vmatpush.msra.mxu0 %v463
        %735 = vmatpush.msra.mxu0 %v462
        %736 = vmatpush.msra.mxu0 %v461
        %737 = vmatpush.msra.mxu0 %v460
        %738 = vmatpush.msra.mxu0 %v459
        %739 = vmatpush.msra.mxu0 %v458
        %740 = vmatpush.msra.mxu0 %v457
        %741 = vmatpush.msra.mxu0 %v456
        %742 = vmatpush.msra.mxu0 %v455
        %743 = vmatmul.f32.gmra.mxu0 %v372
        %v744 = vpop.f32.mrf.mxu0
        %v745 = vadd.f32 %v725, %v744
        %746 = vdwg.mxu0
        %747 = vmatpush.msra.mxu0 %v486
        %748 = vmatpush.msra.mxu0 %v485
        %749 = vmatpush.msra.mxu0 %v484
        %750 = vmatpush.msra.mxu0 %v483
        %751 = vmatpush.msra.mxu0 %v482
        %752 = vmatpush.msra.mxu0 %v481
        %753 = vmatpush.msra.mxu0 %v480
        %754 = vmatpush.msra.mxu0 %v479
        %755 = vmatpush.msra.mxu0 %v478
        %756 = vmatpush.msra.mxu0 %v477
        %757 = vmatpush.msra.mxu0 %v476
        %758 = vmatpush.msra.mxu0 %v475
        %759 = vmatpush.msra.mxu0 %v474
        %760 = vmatpush.msra.mxu0 %v473
        %761 = vmatpush.msra.mxu0 %v472
        %762 = vmatpush.msra.mxu0 %v471
        %763 = vmatmul.f32.gmra.mxu0 %v374
        %v764 = vpop.f32.mrf.mxu0
        %v765 = vadd.f32 %v745, %v764
        %766 = vdwg.mxu0
        %767 = vmatpush.msra.mxu0 %v502
        %768 = vmatpush.msra.mxu0 %v501
        %769 = vmatpush.msra.mxu0 %v500
        %770 = vmatpush.msra.mxu0 %v499
        %771 = vmatpush.msra.mxu0 %v498
        %772 = vmatpush.msra.mxu0 %v497
        %773 = vmatpush.msra.mxu0 %v496
        %774 = vmatpush.msra.mxu0 %v495
        %775 = vmatpush.msra.mxu0 %v494
        %776 = vmatpush.msra.mxu0 %v493
        %777 = vmatpush.msra.mxu0 %v492
        %778 = vmatpush.msra.mxu0 %v491
        %779 = vmatpush.msra.mxu0 %v490
        %780 = vmatpush.msra.mxu0 %v489
        %781 = vmatpush.msra.mxu0 %v488
        %782 = vmatpush.msra.mxu0 %v487
        %783 = vmatmul.f32.gmra.mxu0 %v375
        %v784 = vpop.f32.mrf.mxu0
        %v785 = vadd.f32 %v765, %v784
        %786 = vdwg.mxu0
        %787 = vmatpush.msra.mxu0 %v518
        %788 = vmatpush.msra.mxu0 %v517
        %789 = vmatpush.msra.mxu0 %v516
        %790 = vmatpush.msra.mxu0 %v515
        %791 = vmatpush.msra.mxu0 %v514
        %792 = vmatpush.msra.mxu0 %v513
        %793 = vmatpush.msra.mxu0 %v512
        %794 = vmatpush.msra.mxu0 %v511
        %795 = vmatpush.msra.mxu0 %v510
        %796 = vmatpush.msra.mxu0 %v509
        %797 = vmatpush.msra.mxu0 %v508
        %798 = vmatpush.msra.mxu0 %v507
        %799 = vmatpush.msra.mxu0 %v506
        %800 = vmatpush.msra.mxu0 %v505
        %801 = vmatpush.msra.mxu0 %v504
        %802 = vmatpush.msra.mxu0 %v503
        %803 = vmatmul.f32.gmra.mxu0 %v376
        %v804 = vpop.f32.mrf.mxu0
        %v805 = vadd.f32 %v785, %v804
        %806 = vdwg.mxu0
        %807 = vmatpush.msra.mxu0 %v534
        %808 = vmatpush.msra.mxu0 %v533
        %809 = vmatpush.msra.mxu0 %v532
        %810 = vmatpush.msra.mxu0 %v531
        %811 = vmatpush.msra.mxu0 %v530
        %812 = vmatpush.msra.mxu0 %v529
        %813 = vmatpush.msra.mxu0 %v528
        %814 = vmatpush.msra.mxu0 %v527
        %815 = vmatpush.msra.mxu0 %v526
        %816 = vmatpush.msra.mxu0 %v525
        %817 = vmatpush.msra.mxu0 %v524
        %818 = vmatpush.msra.mxu0 %v523
        %819 = vmatpush.msra.mxu0 %v522
        %820 = vmatpush.msra.mxu0 %v521
        %821 = vmatpush.msra.mxu0 %v520
        %822 = vmatpush.msra.mxu0 %v519
        %823 = vmatmul.f32.gmra.mxu0 %v380
        %v824 = vpop.f32.mrf.mxu0
        %v825 = vadd.f32 %v805, %v824
        %826 = vdwg.mxu0
        %827 = vmatpush.msra.mxu0 %v550
        %828 = vmatpush.msra.mxu0 %v549
        %829 = vmatpush.msra.mxu0 %v548
        %830 = vmatpush.msra.mxu0 %v547
        %831 = vmatpush.msra.mxu0 %v546
        %832 = vmatpush.msra.mxu0 %v545
        %833 = vmatpush.msra.mxu0 %v544
        %834 = vmatpush.msra.mxu0 %v543
        %835 = vmatpush.msra.mxu0 %v542
        %836 = vmatpush.msra.mxu0 %v541
        %837 = vmatpush.msra.mxu0 %v540
        %838 = vmatpush.msra.mxu0 %v539
        %839 = vmatpush.msra.mxu0 %v538
        %840 = vmatpush.msra.mxu0 %v537
        %841 = vmatpush.msra.mxu0 %v536
        %842 = vmatpush.msra.mxu0 %v535
        %843 = vmatmul.f32.gmra.mxu0 %v382
        %v844 = vpop.f32.mrf.mxu0
        %v845 = vadd.f32 %v825, %v844
        %846 = vdwg.mxu0
        %847 = vmatpush.msra.mxu0 %v566
        %848 = vmatpush.msra.mxu0 %v565
        %849 = vmatpush.msra.mxu0 %v564
        %850 = vmatpush.msra.mxu0 %v563
        %851 = vmatpush.msra.mxu0 %v562
        %852 = vmatpush.msra.mxu0 %v561
        %853 = vmatpush.msra.mxu0 %v560
        %854 = vmatpush.msra.mxu0 %v559
        %855 = vmatpush.msra.mxu0 %v558
        %856 = vmatpush.msra.mxu0 %v557
        %857 = vmatpush.msra.mxu0 %v556
        %858 = vmatpush.msra.mxu0 %v555
        %859 = vmatpush.msra.mxu0 %v554
        %860 = vmatpush.msra.mxu0 %v553
        %861 = vmatpush.msra.mxu0 %v552
        %862 = vmatpush.msra.mxu0 %v551
        %863 = vmatmul.f32.gmra.mxu0 %v383
        %v864 = vpop.f32.mrf.mxu0
        %v865 = vadd.f32 %v845, %v864
        %866 = vdwg.mxu0
        %867 = vmatpush.msra.mxu0 %v582
        %868 = vmatpush.msra.mxu0 %v581
        %869 = vmatpush.msra.mxu0 %v580
        %870 = vmatpush.msra.mxu0 %v579
        %871 = vmatpush.msra.mxu0 %v578
        %872 = vmatpush.msra.mxu0 %v577
        %873 = vmatpush.msra.mxu0 %v576
        %874 = vmatpush.msra.mxu0 %v575
        %875 = vmatpush.msra.mxu0 %v574
        %876 = vmatpush.msra.mxu0 %v573
        %877 = vmatpush.msra.mxu0 %v572
        %878 = vmatpush.msra.mxu0 %v571
        %879 = vmatpush.msra.mxu0 %v570
        %880 = vmatpush.msra.mxu0 %v569
        %881 = vmatpush.msra.mxu0 %v568
        %882 = vmatpush.msra.mxu0 %v567
        %883 = vmatmul.f32.gmra.mxu0 %v384
        %v884 = vpop.f32.mrf.mxu0
        %v885 = vadd.f32 %v865, %v884
        %886 = vdwg.mxu0
        %887 = vmatpush.msra.mxu0 %v598
        %888 = vmatpush.msra.mxu0 %v597
        %889 = vmatpush.msra.mxu0 %v596
        %890 = vmatpush.msra.mxu0 %v595
        %891 = vmatpush.msra.mxu0 %v594
        %892 = vmatpush.msra.mxu0 %v593
        %893 = vmatpush.msra.mxu0 %v592
        %894 = vmatpush.msra.mxu0 %v591
        %895 = vmatpush.msra.mxu0 %v590
        %896 = vmatpush.msra.mxu0 %v589
        %897 = vmatpush.msra.mxu0 %v588
        %898 = vmatpush.msra.mxu0 %v587
        %899 = vmatpush.msra.mxu0 %v586
        %900 = vmatpush.msra.mxu0 %v585
        %901 = vmatpush.msra.mxu0 %v584
        %902 = vmatpush.msra.mxu0 %v583
        %903 = vmatmul.f32.gmra.mxu0 %v386
        %v904 = vpop.f32.mrf.mxu0
        %v905 = vadd.f32 %v885, %v904
        %906 = vdwg.mxu0
        %907 = vmatpush.msra.mxu0 %v614
        %908 = vmatpush.msra.mxu0 %v613
        %909 = vmatpush.msra.mxu0 %v612
        %910 = vmatpush.msra.mxu0 %v611
        %911 = vmatpush.msra.mxu0 %v610
        %912 = vmatpush.msra.mxu0 %v609
        %913 = vmatpush.msra.mxu0 %v608
        %914 = vmatpush.msra.mxu0 %v607
        %915 = vmatpush.msra.mxu0 %v606
        %916 = vmatpush.msra.mxu0 %v605
        %917 = vmatpush.msra.mxu0 %v604
        %918 = vmatpush.msra.mxu0 %v603
        %919 = vmatpush.msra.mxu0 %v602
        %920 = vmatpush.msra.mxu0 %v601
        %921 = vmatpush.msra.mxu0 %v600
        %922 = vmatpush.msra.mxu0 %v599
        %923 = vmatmul.f32.gmra.mxu0 %v388
        %v924 = vpop.f32.mrf.mxu0
        %v925 = vadd.f32 %v905, %v924
        %926 = vdwg.mxu0
        %927 = vmatpush.msra.mxu0 %v630
        %928 = vmatpush.msra.mxu0 %v629
        %929 = vmatpush.msra.mxu0 %v628
        %930 = vmatpush.msra.mxu0 %v627
        %931 = vmatpush.msra.mxu0 %v626
        %932 = vmatpush.msra.mxu0 %v625
        %933 = vmatpush.msra.mxu0 %v624
        %934 = vmatpush.msra.mxu0 %v623
        %935 = vmatpush.msra.mxu0 %v622
        %936 = vmatpush.msra.mxu0 %v621
        %937 = vmatpush.msra.mxu0 %v620
        %938 = vmatpush.msra.mxu0 %v619
        %939 = vmatpush.msra.mxu0 %v618
        %940 = vmatpush.msra.mxu0 %v617
        %941 = vmatpush.msra.mxu0 %v616
        %942 = vmatpush.msra.mxu0 %v615
        %943 = vmatmul.f32.gmra.mxu0 %v389
        %v944 = vpop.f32.mrf.mxu0
        %v945 = vadd.f32 %v925, %v944
        %946 = vdwg.mxu0
        %947 = vmatpush.msra.mxu0 %v646
        %948 = vmatpush.msra.mxu0 %v645
        %949 = vmatpush.msra.mxu0 %v644
        %950 = vmatpush.msra.mxu0 %v643
        %951 = vmatpush.msra.mxu0 %v642
        %952 = vmatpush.msra.mxu0 %v641
        %953 = vmatpush.msra.mxu0 %v640
        %954 = vmatpush.msra.mxu0 %v639
        %955 = vmatpush.msra.mxu0 %v638
        %956 = vmatpush.msra.mxu0 %v637
        %957 = vmatpush.msra.mxu0 %v636
        %958 = vmatpush.msra.mxu0 %v635
        %959 = vmatpush.msra.mxu0 %v634
        %960 = vmatpush.msra.mxu0 %v633
        %961 = vmatpush.msra.mxu0 %v632
        %962 = vmatpush.msra.mxu0 %v631
        %963 = vmatmul.f32.gmra.mxu0 %v390
        %v964 = vpop.f32.mrf.mxu0
        %v965 = vadd.f32 %v945, %v964
        %966 = vdwg.mxu0
        %s967 = smul.u32 %s357, 8
        %s968 = scalar_lea.vmem %s349, %s967
        %969 = vst [vmem:[%s968] sm:$0xff] %v965
        %v970 = vrot.slane %v965, 4
        %v971 = vadd.f32 %v965, %v970
        %v972 = vrot.slane %v971, 2
        %v973 = vadd.f32 %v971, %v972
        %v974 = vrot.slane %v973, 1
        %v975 = vadd.f32 %v973, %v974
        %v976 = vadd.f32 %v362, %v975
        %v977 = vmul.f32 %v965, %v965
        %v978 = vrot.slane %v977, 4
        %v979 = vadd.f32 %v977, %v978
        %v980 = vrot.slane %v979, 2
        %v981 = vadd.f32 %v979, %v980
        %v982 = vrot.slane %v981, 1
        %v983 = vadd.f32 %v981, %v982
        %v984 = vadd.f32 %v363, %v983
      $region45: #{discriminator_forward.6} parent=39 // loop_footer
        %s361 = sadd.s32 1, %s357
      $region46: #{discriminator_forward.6} parent=39 // loop_footer_branch
        %356 = sbr.rel target = $region42
      $region47: #{discriminator_forward.6} parent=39 // loop_exit
        _
      %985 = vst [vmem:[%s352] sm:$0x1] %v362
      %986 = vst [vmem:[%s355] sm:$0x1] %v363
      %p987 = scmp.lt.s32.totalorder %s19, 1
      %s988 = scalar_select %p987, %s19, 1
      %s989 = smul.addr %s988, 8
      %s990 = smul.addr %s989, 8
      %s991 = scalar_lea.vmem %s5, %s990
      %p992 = scmp.lt.s32.totalorder %s19, 1
      %s993 = scalar_select %p992, %s19, 1
      %s994 = scalar_lea.vmem %s6, %s993
      %p995 = scmp.lt.s32.totalorder %s19, 1
      %s996 = scalar_select %p995, %s19, 1
      %s997 = scalar_lea.vmem %s7, %s996
      // Predicated region
      $region48: #{discriminator_forward.6} parent=39 // pred_check
        %p998 = pneg %p162
      $region49: #{discriminator_forward.6} parent=39 // pred_check_branch
        %1000 = sbr.rel (%p998) target = $region51
      $region50: #{discriminator_forward.6} parent=39 // pred_region
        _
      $region51: #{discriminator_forward.6} parent=39 // pred_fallthru
        _
      // Predicated region
      $region52: #{discriminator_forward.6} parent=39 // pred_check
        %p1001 = pneg %p188
      $region53: #{discriminator_forward.6} parent=39 // pred_check_branch
        %1003 = sbr.rel (%p1001) target = $region55
      $region54: #{discriminator_forward.6} parent=39 // pred_region
        _
      $region55: #{discriminator_forward.6} parent=39 // pred_fallthru
        _
      // Predicated region
      $region56: #{discriminator_forward.6} parent=39 // pred_check
        %p1004 = pneg %p214
      $region57: #{discriminator_forward.6} parent=39 // pred_check_branch
        %1006 = sbr.rel (%p1004) target = $region59
      $region58: #{discriminator_forward.6} parent=39 // pred_region
        _
      $region59: #{discriminator_forward.6} parent=39 // pred_fallthru
        _
    $region40: #{discriminator_forward.6} parent=5 // pred_fallthru
      _
    %p1007 = scmp.le.s32.totalorder 2, %s14
    // Predicated region
    $region60: #{discriminator_forward.6} parent=5 // pred_check
      %p1008 = pneg %p1007
    $region61: #{discriminator_forward.6} parent=5 // pred_check_branch
      %1010 = sbr.rel (%p1008) target = $region63
    $region62: #{discriminator_forward.6} parent=5 // pred_region
      %s1011 = ssub.s32 %s14, 2
      // Predicated region
      $region64: #{discriminator_forward.6} parent=62 // pred_check
        %p1012 = pneg %p168
      $region65: #{discriminator_forward.6} parent=62 // pred_check_branch
        %1014 = sbr.rel (%p1012) target = $region67
      $region66: #{discriminator_forward.6} parent=62 // pred_region
        %p1015 = scmp.lt.s32.totalorder %s20, 1
        %s1016 = scalar_select %p1015, %s20, 1
        %s1017 = smul.addr %s1016, 8
        %s1018 = smul.addr %s1017, 8
        %s1019 = scalar_lea.vmem %s5, %s1018
      $region67: #{discriminator_forward.6} parent=62 // pred_fallthru
        _
      // Predicated region
      $region68: #{discriminator_forward.6} parent=62 // pred_check
        %p1020 = pneg %p194
      $region69: #{discriminator_forward.6} parent=62 // pred_check_branch
        %1022 = sbr.rel (%p1020) target = $region71
      $region70: #{discriminator_forward.6} parent=62 // pred_region
        %p1023 = scmp.lt.s32.totalorder %s20, 1
        %s1024 = scalar_select %p1023, %s20, 1
        %s1025 = scalar_lea.vmem %s6, %s1024
      $region71: #{discriminator_forward.6} parent=62 // pred_fallthru
        _
      // Predicated region
      $region72: #{discriminator_forward.6} parent=62 // pred_check
        %p1026 = pneg %p220
      $region73: #{discriminator_forward.6} parent=62 // pred_check_branch
        %1028 = sbr.rel (%p1026) target = $region75
      $region74: #{discriminator_forward.6} parent=62 // pred_region
        %p1029 = scmp.lt.s32.totalorder %s20, 1
        %s1030 = scalar_select %p1029, %s20, 1
        %s1031 = scalar_lea.vmem %s7, %s1030
      $region75: #{discriminator_forward.6} parent=62 // pred_fallthru
        _
    $region63: #{discriminator_forward.6} parent=5 // pred_fallthru
      _
  $region6: #{discriminator_forward.6} parent=0 // loop_footer
    %s18 = sadd.s32 1, %s14
  $region7: #{discriminator_forward.6} parent=0 // loop_footer_branch
    %13 = sbr.rel target = $region3
  $region8: #{discriminator_forward.6} parent=0 // loop_exit
    _

// kernel: discriminator_forward.7
$region0: #{discriminator_forward.7}
  #allocation0 [shape = 'u32[]', space=smem, size = 0x4, offset = 0x4, fixed_abs, tag = 'smem constant byte address 0x4 - core index']
  #allocation1 [shape = 'u32[72,128]{1,0:T(1,128)}', space=vmem, size = 0x9000, scoped, tag = 'internal scratch']
  %s0 = inlined_call_operand.vmem [shape: f32[2,5,5,128], index: 0, kind: input, shape index: {}]
  %s1 = inlined_call_operand.vmem [shape: f32[2,5,5,128], index: 1, kind: input, shape index: {}]
  %s2 = inlined_call_operand.vmem [shape: f32[2,5,5,128], index: 2, kind: input, shape index: {}]
  %s3 = inlined_call_operand.vmem [shape: f32[2,5,5,128], index: 3, kind: input, shape index: {}]
  %s4 = inlined_call_operand.vmem [shape: f32[2048,128], index: 4, kind: input, shape index: {}]
  %s5 = inlined_call_operand.vmem [shape: f32[2,4,4,128], index: 5, kind: output, shape index: {0}]
  %s6 = inlined_call_operand.vmem [shape: f32[2,1,128], index: 6, kind: output, shape index: {1}]
  %s7 = inlined_call_operand.vmem [shape: f32[2,1,128], index: 7, kind: output, shape index: {2}]
  %8 = xla_tuple %s5, %s6, %s7
  %s9 = sld [smem:[#allocation0]]
  $region76: #{discriminator_forward.7} parent=0
    _
  %s11 = ssub.s32 1, %s9
  %s12 = scalar_select 0, %s11, %s9
  loop: start=0, step=1, limit=4
  $region2: #{discriminator_forward.7} parent=0 // loop_pre_header
    _
  $region3: #{discriminator_forward.7} parent=0 // loop_header
    %s14 = sphi 0, %s18
    %p15 = scmp.ge.s32.totalorder %s14, 4
    %s24 = sphi 0, %s26
    %s27 = sphi 0, %s24
    %s28 = sphi 0, %s27
    %s44 = sphi 0, %s28
    %s50 = sphi 0, %s52
    %s53 = sphi 0, %s50
    %s54 = sphi 0, %s53
    %s70 = sphi 0, %s54
    %s76 = sphi 0, %s78
    %s79 = sphi 0, %s76
    %s80 = sphi 0, %s79
    %s96 = sphi 0, %s80
    %s102 = sphi 0, %s104
    %s105 = sphi 0, %s102
    %s106 = sphi 0, %s105
    %s122 = sphi 0, %s106
    %s126 = sphi 0, %s126
    %s128 = sphi 0, %s126
    %s129 = sphi 0, %s128
    %s143 = sphi 0, %s129
    %s149 = sphi 0, %s151
    %s152 = sphi 0, %s149
    %s153 = sphi 0, %s152
    %s169 = sphi 0, %s153
    %s175 = sphi 0, %s177
    %s178 = sphi 0, %s175
    %s179 = sphi 0, %s178
    %s195 = sphi 0, %s179
    %s201 = sphi 0, %s203
    %s204 = sphi 0, %s201
    %s205 = sphi 0, %s204
    %s221 = sphi 0, %s205
  $region4: #{discriminator_forward.7} parent=0 // loop_header_branch
    %17 = sbr.rel (%p15) target = $region8
  $region5: #{discriminator_forward.7} parent=0 // loop_body
    %s19 = ssub.s32 %s14, 1
    %s20 = ssub.s32 %s14, 2
    %s21 = sadd.s32 %s14, 1
    %s22 = ssub.s32 %s14, %s21
    %p23 = scmp.eq.s32.totalorder %s22, 0
    %s25 = sadd.s32 %s24, 1
    %s26 = scalar_select %p23, %s24, %s25
    %p29 = pneg %p23
    %p30 = scmp.eq.s32.totalorder %s14, 1
    %p31 = por %p29, %p30
    %p32 = scmp.ne.s32.totalorder %s24, %s27
    %p33 = scmp.eq.s32.totalorder %s14, 0
    %p34 = por %p32, %p33
    %p35 = scmp.ne.s32.totalorder %s24, %s27
    %p36 = scmp.eq.s32.totalorder %s19, 1
    %p37 = por %p35, %p36
    %p38 = scmp.ne.s32.totalorder %s27, %s28
    %p39 = scmp.eq.s32.totalorder %s19, 0
    %p40 = por %p38, %p39
    %p41 = scmp.ne.s32.totalorder %s27, %s28
    %p42 = scmp.eq.s32.totalorder %s20, 1
    %p43 = por %p41, %p42
    %p45 = scmp.ne.s32.totalorder %s28, %s44
    %p46 = scmp.eq.s32.totalorder %s20, 0
    %p47 = por %p45, %p46
    %s48 = ssub.s32 %s14, %s21
    %p49 = scmp.eq.s32.totalorder %s48, 0
    %s51 = sadd.s32 %s50, 1
    %s52 = scalar_select %p49, %s50, %s51
    %p55 = pneg %p49
    %p56 = scmp.eq.s32.totalorder %s14, 1
    %p57 = por %p55, %p56
    %p58 = scmp.ne.s32.totalorder %s50, %s53
    %p59 = scmp.eq.s32.totalorder %s14, 0
    %p60 = por %p58, %p59
    %p61 = scmp.ne.s32.totalorder %s50, %s53
    %p62 = scmp.eq.s32.totalorder %s19, 1
    %p63 = por %p61, %p62
    %p64 = scmp.ne.s32.totalorder %s53, %s54
    %p65 = scmp.eq.s32.totalorder %s19, 0
    %p66 = por %p64, %p65
    %p67 = scmp.ne.s32.totalorder %s53, %s54
    %p68 = scmp.eq.s32.totalorder %s20, 1
    %p69 = por %p67, %p68
    %p71 = scmp.ne.s32.totalorder %s54, %s70
    %p72 = scmp.eq.s32.totalorder %s20, 0
    %p73 = por %p71, %p72
    %s74 = ssub.s32 %s14, %s21
    %p75 = scmp.eq.s32.totalorder %s74, 0
    %s77 = sadd.s32 %s76, 1
    %s78 = scalar_select %p75, %s76, %s77
    %p81 = pneg %p75
    %p82 = scmp.eq.s32.totalorder %s14, 1
    %p83 = por %p81, %p82
    %p84 = scmp.ne.s32.totalorder %s76, %s79
    %p85 = scmp.eq.s32.totalorder %s14, 0
    %p86 = por %p84, %p85
    %p87 = scmp.ne.s32.totalorder %s76, %s79
    %p88 = scmp.eq.s32.totalorder %s19, 1
    %p89 = por %p87, %p88
    %p90 = scmp.ne.s32.totalorder %s79, %s80
    %p91 = scmp.eq.s32.totalorder %s19, 0
    %p92 = por %p90, %p91
    %p93 = scmp.ne.s32.totalorder %s79, %s80
    %p94 = scmp.eq.s32.totalorder %s20, 1
    %p95 = por %p93, %p94
    %p97 = scmp.ne.s32.totalorder %s80, %s96
    %p98 = scmp.eq.s32.totalorder %s20, 0
    %p99 = por %p97, %p98
    %s100 = ssub.s32 %s14, %s21
    %p101 = scmp.eq.s32.totalorder %s100, 0
    %s103 = sadd.s32 %s102, 1
    %s104 = scalar_select %p101, %s102, %s103
    %p107 = pneg %p101
    %p108 = scmp.eq.s32.totalorder %s14, 1
    %p109 = por %p107, %p108
    %p110 = scmp.ne.s32.totalorder %s102, %s105
    %p111 = scmp.eq.s32.totalorder %s14, 0
    %p112 = por %p110, %p111
    %p113 = scmp.ne.s32.totalorder %s102, %s105
    %p114 = scmp.eq.s32.totalorder %s19, 1
    %p115 = por %p113, %p114
    %p116 = scmp.ne.s32.totalorder %s105, %s106
    %p117 = scmp.eq.s32.totalorder %s19, 0
    %p118 = por %p116, %p117
    %p119 = scmp.ne.s32.totalorder %s105, %s106
    %p120 = scmp.eq.s32.totalorder %s20, 1
    %p121 = por %p119, %p120
    %p123 = scmp.ne.s32.totalorder %s106, %s122
    %p124 = scmp.eq.s32.totalorder %s20, 0
    %p125 = por %p123, %p124
    %s127 = sadd.s32 %s126, 1
    %p130 = scmp.eq.s32.totalorder %s14, 1
    %p131 = scmp.ne.s32.totalorder %s126, %s128
    %p132 = scmp.eq.s32.totalorder %s14, 0
    %p133 = por %p131, %p132
    %p134 = scmp.ne.s32.totalorder %s126, %s128
    %p135 = scmp.eq.s32.totalorder %s19, 1
    %p136 = por %p134, %p135
    %p137 = scmp.ne.s32.totalorder %s128, %s129
    %p138 = scmp.eq.s32.totalorder %s19, 0
    %p139 = por %p137, %p138
    %p140 = scmp.ne.s32.totalorder %s128, %s129
    %p141 = scmp.eq.s32.totalorder %s20, 1
    %p142 = por %p140, %p141
    %p144 = scmp.ne.s32.totalorder %s129, %s143
    %p145 = scmp.eq.s32.totalorder %s20, 0
    %p146 = por %p144, %p145
    %s147 = ssub.s32 %s14, %s21
    %p148 = scmp.eq.s32.totalorder %s147, 0
    %s150 = sadd.s32 %s149, 1
    %s151 = scalar_select %p148, %s149, %s150
    %p154 = pneg %p148
    %p155 = scmp.eq.s32.totalorder %s14, 1
    %p156 = por %p154, %p155
    %p157 = scmp.ne.s32.totalorder %s149, %s152
    %p158 = scmp.eq.s32.totalorder %s14, 0
    %p159 = por %p157, %p158
    %p160 = scmp.ne.s32.totalorder %s149, %s152
    %p161 = scmp.eq.s32.totalorder %s19, 1
    %p162 = por %p160, %p161
    %p163 = scmp.ne.s32.totalorder %s152, %s153
    %p164 = scmp.eq.s32.totalorder %s19, 0
    %p165 = por %p163, %p164
    %p166 = scmp.ne.s32.totalorder %s152, %s153
    %p167 = scmp.eq.s32.totalorder %s20, 1
    %p168 = por %p166, %p167
    %p170 = scmp.ne.s32.totalorder %s153, %s169
    %p171 = scmp.eq.s32.totalorder %s20, 0
    %p172 = por %p170, %p171
    %s173 = ssub.s32 %s14, %s21
    %p174 = scmp.eq.s32.totalorder %s173, 0
    %s176 = sadd.s32 %s175, 1
    %s177 = scalar_select %p174, %s175, %s176
    %p180 = pneg %p174
    %p181 = scmp.eq.s32.totalorder %s14, 1
    %p182 = por %p180, %p181
    %p183 = scmp.ne.s32.totalorder %s175, %s178
    %p184 = scmp.eq.s32.totalorder %s14, 0
    %p185 = por %p183, %p184
    %p186 = scmp.ne.s32.totalorder %s175, %s178
    %p187 = scmp.eq.s32.totalorder %s19, 1
    %p188 = por %p186, %p187
    %p189 = scmp.ne.s32.totalorder %s178, %s179
    %p190 = scmp.eq.s32.totalorder %s19, 0
    %p191 = por %p189, %p190
    %p192 = scmp.ne.s32.totalorder %s178, %s179
    %p193 = scmp.eq.s32.totalorder %s20, 1
    %p194 = por %p192, %p193
    %p196 = scmp.ne.s32.totalorder %s179, %s195
    %p197 = scmp.eq.s32.totalorder %s20, 0
    %p198 = por %p196, %p197
    %s199 = ssub.s32 %s14, %s21
    %p200 = scmp.eq.s32.totalorder %s199, 0
    %s202 = sadd.s32 %s201, 1
    %s203 = scalar_select %p200, %s201, %s202
    %p206 = pneg %p200
    %p207 = scmp.eq.s32.totalorder %s14, 1
    %p208 = por %p206, %p207
    %p209 = scmp.ne.s32.totalorder %s201, %s204
    %p210 = scmp.eq.s32.totalorder %s14, 0
    %p211 = por %p209, %p210
    %p212 = scmp.ne.s32.totalorder %s201, %s204
    %p213 = scmp.eq.s32.totalorder %s19, 1
    %p214 = por %p212, %p213
    %p215 = scmp.ne.s32.totalorder %s204, %s205
    %p216 = scmp.eq.s32.totalorder %s19, 0
    %p217 = por %p215, %p216
    %p218 = scmp.ne.s32.totalorder %s204, %s205
    %p219 = scmp.eq.s32.totalorder %s20, 1
    %p220 = por %p218, %p219
    %p222 = scmp.ne.s32.totalorder %s205, %s221
    %p223 = scmp.eq.s32.totalorder %s20, 0
    %p224 = por %p222, %p223
    %p225 = scmp.le.s32.totalorder 1, %s14
    %p226 = scmp.lt.s32.totalorder %s14, 3
    %p227 = pnand %p225, %p226
    %p228 = pneg %p227
    // Predicated region
    $region9: #{discriminator_forward.7} parent=5 // pred_check
      _
    $region10: #{discriminator_forward.7} parent=5 // pred_check_branch
      %230 = sbr.rel (%p227) target = $region12
    $region11: #{discriminator_forward.7} parent=5 // pred_region
      %s231 = ssub.s32 %s14, 1
      // Predicated region
      $region13: #{discriminator_forward.7} parent=11 // pred_check
        %p232 = pneg %p139
      $region14: #{discriminator_forward.7} parent=11 // pred_check_branch
        %234 = sbr.rel (%p232) target = $region16
      $region15: #{discriminator_forward.7} parent=11 // pred_region
        _
      $region16: #{discriminator_forward.7} parent=11 // pred_fallthru
        _
    $region12: #{discriminator_forward.7} parent=5 // pred_fallthru
      _
    %p235 = scmp.lt.s32.totalorder %s14, 2
    // Predicated region
    $region17: #{discriminator_forward.7} parent=5 // pred_check
      %p236 = pneg %p235
    $region18: #{discriminator_forward.7} parent=5 // pred_check_branch
      %238 = sbr.rel (%p236) target = $region20
    $region19: #{discriminator_forward.7} parent=5 // pred_region
      // Predicated region
      $region21: #{discriminator_forward.7} parent=19 // pred_check
        %p239 = pneg %p34
      $region22: #{discriminator_forward.7} parent=19 // pred_check_branch
        %241 = sbr.rel (%p239) target = $region24
      $region23: #{discriminator_forward.7} parent=19 // pred_region
        %p242 = scmp.lt.s32.totalorder %s14, 1
        %s243 = scalar_select %p242, %s14, 1
        %s244 = smul.addr %s243, 5
        %s245 = smul.addr %s244, 8
        %s246 = scalar_lea.vmem %s0, %s245
      $region24: #{discriminator_forward.7} parent=19 // pred_fallthru
        _
      // Predicated region
      $region25: #{discriminator_forward.7} parent=19 // pred_check
        %p247 = pneg %p60
      $region26: #{discriminator_forward.7} parent=19 // pred_check_branch
        %249 = sbr.rel (%p247) target = $region28
      $region27: #{discriminator_forward.7} parent=19 // pred_region
        %p250 = scmp.lt.s32.totalorder %s14, 1
        %s251 = scalar_select %p250, %s14, 1
        %s252 = smul.addr %s251, 5
        %s253 = smul.addr %s252, 8
        %s254 = scalar_lea.vmem %s1, %s253
      $region28: #{discriminator_forward.7} parent=19 // pred_fallthru
        _
      // Predicated region
      $region29: #{discriminator_forward.7} parent=19 // pred_check
        %p255 = pneg %p86
      $region30: #{discriminator_forward.7} parent=19 // pred_check_branch
        %257 = sbr.rel (%p255) target = $region32
      $region31: #{discriminator_forward.7} parent=19 // pred_region
        %p258 = scmp.lt.s32.totalorder %s14, 1
        %s259 = scalar_select %p258, %s14, 1
        %s260 = smul.addr %s259, 5
        %s261 = smul.addr %s260, 8
        %s262 = scalar_lea.vmem %s2, %s261
      $region32: #{discriminator_forward.7} parent=19 // pred_fallthru
        _
      // Predicated region
      $region33: #{discriminator_forward.7} parent=19 // pred_check
        %p263 = pneg %p112
      $region34: #{discriminator_forward.7} parent=19 // pred_check_branch
        %265 = sbr.rel (%p263) target = $region36
      $region35: #{discriminator_forward.7} parent=19 // pred_region
        %p266 = scmp.lt.s32.totalorder %s14, 1
        %s267 = scalar_select %p266, %s14, 1
        %s268 = smul.addr %s267, 5
        %s269 = smul.addr %s268, 8
        %s270 = scalar_lea.vmem %s3, %s269
      $region36: #{discriminator_forward.7} parent=19 // pred_fallthru
        _
    $region20: #{discriminator_forward.7} parent=5 // pred_fallthru
      _
    %p271 = scmp.le.s32.totalorder 1, %s14
    %p272 = scmp.lt.s32.totalorder %s14, 3
    %p273 = pnand %p271, %p272
    %p274 = pneg %p273
    // Predicated region
    $region37: #{discriminator_forward.7} parent=5 // pred_check
      _
    $region38: #{discriminator_forward.7} parent=5 // pred_check_branch
      %276 = sbr.rel (%p273) target = $region40
    $region39: #{discriminator_forward.7} parent=5 // pred_region
      %s277 = ssub.s32 %s14, 1
      %p278 = scmp.lt.s32.totalorder %s19, 1
      %s279 = scalar_select %p278, %s19, 1
      %s280 = smul.addr %s279, 5
      %s281 = smul.addr %s280, 8
      %s282 = scalar_lea.vmem %s0, %s281
      %p283 = pneg %p40
      %p284 = pneg %p37
      %p285 = scmp.lt.s32.totalorder %s19, 1
      %s286 = scalar_select %p285, %s19, 1
      %s287 = smul.addr %s286, 5
      %s288 = smul.addr %s287, 8
      %s289 = scalar_lea.vmem %s1, %s288
      %p290 = pneg %p66
      %p291 = pneg %p63
      %p292 = scmp.lt.s32.totalorder %s19, 1
      %s293 = scalar_select %p292, %s19, 1
      %s294 = smul.addr %s293, 5
      %s295 = smul.addr %s294, 8
      %s296 = scalar_lea.vmem %s2, %s295
      %p297 = pneg %p92
      %p298 = pneg %p89
      %p299 = scmp.lt.s32.totalorder %s19, 1
      %s300 = scalar_select %p299, %s19, 1
      %s301 = smul.addr %s300, 5
      %s302 = smul.addr %s301, 8
      %s303 = scalar_lea.vmem %s3, %s302
      %p304 = pneg %p118
      %p305 = pneg %p115
      %p306 = pneg %p139
      %p307 = pneg %p136
      %p308 = pneg %p165
      %p309 = pneg %p162
      %p310 = scmp.lt.s32.totalorder %s19, 1
      %s311 = scalar_select %p310, %s19, 1
      %s312 = smul.addr %s311, 4
      %s313 = smul.addr %s312, 4
      %s314 = scalar_lea.vmem %s5, %s313
      %p315 = pneg %p191
      %p316 = pneg %p188
      %p317 = scmp.lt.s32.totalorder %s19, 1
      %s318 = scalar_select %p317, %s19, 1
      %s319 = scalar_lea.vmem %s6, %s318
      %p320 = pneg %p217
      %p321 = pneg %p214
      %p322 = scmp.lt.s32.totalorder %s19, 1
      %s323 = scalar_select %p322, %s19, 1
      %s324 = scalar_lea.vmem %s7, %s323
      %p325 = scmp.lt.s32.totalorder %s19, 1
      %s326 = scalar_select %p325, %s19, 1
      %s327 = smul.addr %s326, 5
      %s328 = smul.addr %s327, 8
      %s329 = scalar_lea.vmem %s0, %s328
      %p330 = scmp.lt.s32.totalorder %s19, 1
      %s331 = scalar_select %p330, %s19, 1
      %s332 = smul.addr %s331, 5
      %s333 = smul.addr %s332, 8
      %s334 = scalar_lea.vmem %s1, %s333
      %p335 = scmp.lt.s32.totalorder %s19, 1
      %s336 = scalar_select %p335, %s19, 1
      %s337 = smul.addr %s336, 5
      %s338 = smul.addr %s337, 8
      %s339 = scalar_lea.vmem %s2, %s338
      %p340 = scmp.lt.s32.totalorder %s19, 1
      %s341 = scalar_select %p340, %s19, 1
      %s342 = smul.addr %s341, 5
      %s343 = smul.addr %s342, 8
      %s344 = scalar_lea.vmem %s3, %s343
      %p345 = scmp.lt.s32.totalorder %s19, 1
      %s346 = scalar_select %p345, %s19, 1
      %s347 = smul.addr %s346, 4
      %s348 = smul.addr %s347, 4
      %s349 = scalar_lea.vmem %s5, %s348
      %p350 = scmp.lt.s32.totalorder %s19, 1
      %s351 = scalar_select %p350, %s19, 1
      %s352 = scalar_lea.vmem %s6, %s351
      %p353 = scmp.lt.s32.totalorder %s19, 1
      %s354 = scalar_select %p353, %s19, 1
      %s355 = scalar_lea.vmem %s7, %s354
      loop: start=0, step=1, limit=4
      $region41: #{discriminator_forward.7} parent=39 // loop_pre_header
        _
      $region42: #{discriminator_forward.7} parent=39 // loop_header
        %s357 = sphi 0, %s361
        %p358 = scmp.ge.s32.totalorder %s357, 4
        %v362 = vphi 0.0, %v978
        %v363 = vphi 0.0, %v987
      $region43: #{discriminator_forward.7} parent=39 // loop_header_branch
        %360 = sbr.rel (%p358) target = $region47
      $region44: #{discriminator_forward.7} parent=39 // loop_body
        %s364 = smul.u32 %s357, 8
        %s365 = scalar_lea.vmem %s329, %s364
        %v366 = vld [vmem:[%s365] sm:$0xf]
        %s367 = scalar_lea.vmem %s334, %s364
        %v368 = vld [vmem:[%s367] sm:$0xf]
        %v369 = vld [vmem:[%s365 + $0x1] sm:$0xf]
        %v370 = vld [vmem:[%s367 + $0x1] sm:$0xf]
        %s371 = scalar_lea.vmem %s339, %s364
        %v372 = vld [vmem:[%s371] sm:$0xf]
        %s373 = scalar_lea.vmem %s344, %s364
        %v374 = vld [vmem:[%s373] sm:$0xf]
        %v375 = vld [vmem:[%s371 + $0x1] sm:$0xf]
        %v376 = vld [vmem:[%s373 + $0x1] sm:$0xf]
        %s377 = sadd.s32 %s357, 1
        %s378 = smul.u32 %s377, 8
        %s379 = scalar_lea.vmem %s329, %s378
        %v380 = vld [vmem:[%s379] sm:$0xf]
        %s381 = scalar_lea.vmem %s334, %s378
        %v382 = vld [vmem:[%s381] sm:$0xf]
        %v383 = vld [vmem:[%s379 + $0x1] sm:$0xf]
        %v384 = vld [vmem:[%s381 + $0x1] sm:$0xf]
        %s385 = scalar_lea.vmem %s339, %s378
        %v386 = vld [vmem:[%s385] sm:$0xf]
        %s387 = scalar_lea.vmem %s344, %s378
        %v388 = vld [vmem:[%s387] sm:$0xf]
        %v389 = vld [vmem:[%s385 + $0x1] sm:$0xf]
        %v390 = vld [vmem:[%s387 + $0x1] sm:$0xf]
        %v391 = vld [vmem:[%s4] sm:$0xff]
        %v392 = vld [vmem:[%s4 + $0x8] sm:$0xff]
        %v393 = vld [vmem:[%s4 + $0x10] sm:$0xff]
        %v394 = vld [vmem:[%s4 + $0x18] sm:$0xff]
        %v395 = vld [vmem:[%s4 + $0x20] sm:$0xff]
        %v396 = vld [vmem:[%s4 + $0x28] sm:$0xff]
        %v397 = vld [vmem:[%s4 + $0x30] sm:$0xff]
        %v398 = vld [vmem:[%s4 + $0x38] sm:$0xff]
        %v399 = vld [vmem:[%s4 + $0x40] sm:$0xff]
        %v400 = vld [vmem:[%s4 + $0x48] sm:$0xff]
        %v401 = vld [vmem:[%s4 + $0x50] sm:$0xff]
        %v402 = vld [vmem:[%s4 + $0x58] sm:$0xff]
        %v403 = vld [vmem:[%s4 + $0x60] sm:$0xff]
        %v404 = vld [vmem:[%s4 + $0x68] sm:$0xff]
        %v405 = vld [vmem:[%s4 + $0x70] sm:$0xff]
        %v406 = vld [vmem:[%s4 + $0x78] sm:$0xff]
        %v407 = vld [vmem:[%s4 + $0x80] sm:$0xff]
        %v408 = vld [vmem:[%s4 + $0x88] sm:$0xff]
        %v409 = vld [vmem:[%s4 + $0x90] sm:$0xff]
        %v410 = vld [vmem:[%s4 + $0x98] sm:$0xff]
        %v411 = vld [vmem:[%s4 + $0xa0] sm:$0xff]
        %v412 = vld [vmem:[%s4 + $0xa8] sm:$0xff]
        %v413 = vld [vmem:[%s4 + $0xb0] sm:$0xff]
        %v414 = vld [vmem:[%s4 + $0xb8] sm:$0xff]
        %v415 = vld [vmem:[%s4 + $0xc0] sm:$0xff]
        %v416 = vld [vmem:[%s4 + $0xc8] sm:$0xff]
        %v417 = vld [vmem:[%s4 + $0xd0] sm:$0xff]
        %v418 = vld [vmem:[%s4 + $0xd8] sm:$0xff]
        %v419 = vld [vmem:[%s4 + $0xe0] sm:$0xff]
        %v420 = vld [vmem:[%s4 + $0xe8] sm:$0xff]
        %v421 = vld [vmem:[%s4 + $0xf0] sm:$0xff]
        %v422 = vld [vmem:[%s4 + $0xf8] sm:$0xff]
        %v423 = vld [vmem:[%s4 + $0x100] sm:$0xff]
        %v424 = vld [vmem:[%s4 + $0x108] sm:$0xff]
        %v425 = vld [vmem:[%s4 + $0x110] sm:$0xff]
        %v426 = vld [vmem:[%s4 + $0x118] sm:$0xff]
        %v427 = vld [vmem:[%s4 + $0x120] sm:$0xff]
        %v428 = vld [vmem:[%s4 + $0x128] sm:$0xff]
        %v429 = vld [vmem:[%s4 + $0x130] sm:$0xff]
        %v430 = vld [vmem:[%s4 + $0x138] sm:$0xff]
        %v431 = vld [vmem:[%s4 + $0x140] sm:$0xff]
        %v432 = vld [vmem:[%s4 + $0x148] sm:$0xff]
        %v433 = vld [vmem:[%s4 + $0x150] sm:$0xff]
        %v434 = vld [vmem:[%s4 + $0x158] sm:$0xff]
        %v435 = vld [vmem:[%s4 + $0x160] sm:$0xff]
        %v436 = vld [vmem:[%s4 + $0x168] sm:$0xff]
        %v437 = vld [vmem:[%s4 + $0x170] sm:$0xff]
        %v438 = vld [vmem:[%s4 + $0x178] sm:$0xff]
        %v439 = vld [vmem:[%s4 + $0x180] sm:$0xff]
        %v440 = vld [vmem:[%s4 + $0x188] sm:$0xff]
        %v441 = vld [vmem:[%s4 + $0x190] sm:$0xff]
        %v442 = vld [vmem:[%s4 + $0x198] sm:$0xff]
        %v443 = vld [vmem:[%s4 + $0x1a0] sm:$0xff]
        %v444 = vld [vmem:[%s4 + $0x1a8] sm:$0xff]
        %v445 = vld [vmem:[%s4 + $0x1b0] sm:$0xff]
        %v446 = vld [vmem:[%s4 + $0x1b8] sm:$0xff]
        %v447 = vld [vmem:[%s4 + $0x1c0] sm:$0xff]
        %v448 = vld [vmem:[%s4 + $0x1c8] sm:$0xff]
        %v449 = vld [vmem:[%s4 + $0x1d0] sm:$0xff]
        %v450 = vld [vmem:[%s4 + $0x1d8] sm:$0xff]
        %v451 = vld [vmem:[%s4 + $0x1e0] sm:$0xff]
        %v452 = vld [vmem:[%s4 + $0x1e8] sm:$0xff]
        %v453 = vld [vmem:[%s4 + $0x1f0] sm:$0xff]
        %v454 = vld [vmem:[%s4 + $0x1f8] sm:$0xff]
        %v455 = vld [vmem:[%s4 + $0x200] sm:$0xff]
        %v456 = vld [vmem:[%s4 + $0x208] sm:$0xff]
        %v457 = vld [vmem:[%s4 + $0x210] sm:$0xff]
        %v458 = vld [vmem:[%s4 + $0x218] sm:$0xff]
        %v459 = vld [vmem:[%s4 + $0x220] sm:$0xff]
        %v460 = vld [vmem:[%s4 + $0x228] sm:$0xff]
        %v461 = vld [vmem:[%s4 + $0x230] sm:$0xff]
        %v462 = vld [vmem:[%s4 + $0x238] sm:$0xff]
        %v463 = vld [vmem:[%s4 + $0x240] sm:$0xff]
        %v464 = vld [vmem:[%s4 + $0x248] sm:$0xff]
        %v465 = vld [vmem:[%s4 + $0x250] sm:$0xff]
        %v466 = vld [vmem:[%s4 + $0x258] sm:$0xff]
        %v467 = vld [vmem:[%s4 + $0x260] sm:$0xff]
        %v468 = vld [vmem:[%s4 + $0x268] sm:$0xff]
        %v469 = vld [vmem:[%s4 + $0x270] sm:$0xff]
        %v470 = vld [vmem:[%s4 + $0x278] sm:$0xff]
        %v471 = vld [vmem:[%s4 + $0x280] sm:$0xff]
        %v472 = vld [vmem:[%s4 + $0x288] sm:$0xff]
        %v473 = vld [vmem:[%s4 + $0x290] sm:$0xff]
        %v474 = vld [vmem:[%s4 + $0x298] sm:$0xff]
        %v475 = vld [vmem:[%s4 + $0x2a0] sm:$0xff]
        %v476 = vld [vmem:[%s4 + $0x2a8] sm:$0xff]
        %v477 = vld [vmem:[%s4 + $0x2b0] sm:$0xff]
        %v478 = vld [vmem:[%s4 + $0x2b8] sm:$0xff]
        %v479 = vld [vmem:[%s4 + $0x2c0] sm:$0xff]
        %v480 = vld [vmem:[%s4 + $0x2c8] sm:$0xff]
        %v481 = vld [vmem:[%s4 + $0x2d0] sm:$0xff]
        %v482 = vld [vmem:[%s4 + $0x2d8] sm:$0xff]
        %v483 = vld [vmem:[%s4 + $0x2e0] sm:$0xff]
        %v484 = vld [vmem:[%s4 + $0x2e8] sm:$0xff]
        %v485 = vld [vmem:[%s4 + $0x2f0] sm:$0xff]
        %v486 = vld [vmem:[%s4 + $0x2f8] sm:$0xff]
        %v487 = vld [vmem:[%s4 + $0x300] sm:$0xff]
        %v488 = vld [vmem:[%s4 + $0x308] sm:$0xff]
        %v489 = vld [vmem:[%s4 + $0x310] sm:$0xff]
        %v490 = vld [vmem:[%s4 + $0x318] sm:$0xff]
        %v491 = vld [vmem:[%s4 + $0x320] sm:$0xff]
        %v492 = vld [vmem:[%s4 + $0x328] sm:$0xff]
        %v493 = vld [vmem:[%s4 + $0x330] sm:$0xff]
        %v494 = vld [vmem:[%s4 + $0x338] sm:$0xff]
        %v495 = vld [vmem:[%s4 + $0x340] sm:$0xff]
        %v496 = vld [vmem:[%s4 + $0x348] sm:$0xff]
        %v497 = vld [vmem:[%s4 + $0x350] sm:$0xff]
        %v498 = vld [vmem:[%s4 + $0x358] sm:$0xff]
        %v499 = vld [vmem:[%s4 + $0x360] sm:$0xff]
        %v500 = vld [vmem:[%s4 + $0x368] sm:$0xff]
        %v501 = vld [vmem:[%s4 + $0x370] sm:$0xff]
        %v502 = vld [vmem:[%s4 + $0x378] sm:$0xff]
        %v503 = vld [vmem:[%s4 + $0x380] sm:$0xff]
        %v504 = vld [vmem:[%s4 + $0x388] sm:$0xff]
        %v505 = vld [vmem:[%s4 + $0x390] sm:$0xff]
        %v506 = vld [vmem:[%s4 + $0x398] sm:$0xff]
        %v507 = vld [vmem:[%s4 + $0x3a0] sm:$0xff]
        %v508 = vld [vmem:[%s4 + $0x3a8] sm:$0xff]
        %v509 = vld [vmem:[%s4 + $0x3b0] sm:$0xff]
        %v510 = vld [vmem:[%s4 + $0x3b8] sm:$0xff]
        %v511 = vld [vmem:[%s4 + $0x3c0] sm:$0xff]
        %v512 = vld [vmem:[%s4 + $0x3c8] sm:$0xff]
        %v513 = vld [vmem:[%s4 + $0x3d0] sm:$0xff]
        %v514 = vld [vmem:[%s4 + $0x3d8] sm:$0xff]
        %v515 = vld [vmem:[%s4 + $0x3e0] sm:$0xff]
        %v516 = vld [vmem:[%s4 + $0x3e8] sm:$0xff]
        %v517 = vld [vmem:[%s4 + $0x3f0] sm:$0xff]
        %v518 = vld [vmem:[%s4 + $0x3f8] sm:$0xff]
        %v519 = vld [vmem:[%s4 + $0x400] sm:$0xff]
        %v520 = vld [vmem:[%s4 + $0x408] sm:$0xff]
        %v521 = vld [vmem:[%s4 + $0x410] sm:$0xff]
        %v522 = vld [vmem:[%s4 + $0x418] sm:$0xff]
        %v523 = vld [vmem:[%s4 + $0x420] sm:$0xff]
        %v524 = vld [vmem:[%s4 + $0x428] sm:$0xff]
        %v525 = vld [vmem:[%s4 + $0x430] sm:$0xff]
        %v526 = vld [vmem:[%s4 + $0x438] sm:$0xff]
        %v527 = vld [vmem:[%s4 + $0x440] sm:$0xff]
        %v528 = vld [vmem:[%s4 + $0x448] sm:$0xff]
        %v529 = vld [vmem:[%s4 + $0x450] sm:$0xff]
        %v530 = vld [vmem:[%s4 + $0x458] sm:$0xff]
        %v531 = vld [vmem:[%s4 + $0x460] sm:$0xff]
        %v532 = vld [vmem:[%s4 + $0x468] sm:$0xff]
        %v533 = vld [vmem:[%s4 + $0x470] sm:$0xff]
        %v534 = vld [vmem:[%s4 + $0x478] sm:$0xff]
        %v535 = vld [vmem:[%s4 + $0x480] sm:$0xff]
        %v536 = vld [vmem:[%s4 + $0x488] sm:$0xff]
        %v537 = vld [vmem:[%s4 + $0x490] sm:$0xff]
        %v538 = vld [vmem:[%s4 + $0x498] sm:$0xff]
        %v539 = vld [vmem:[%s4 + $0x4a0] sm:$0xff]
        %v540 = vld [vmem:[%s4 + $0x4a8] sm:$0xff]
        %v541 = vld [vmem:[%s4 + $0x4b0] sm:$0xff]
        %v542 = vld [vmem:[%s4 + $0x4b8] sm:$0xff]
        %v543 = vld [vmem:[%s4 + $0x4c0] sm:$0xff]
        %v544 = vld [vmem:[%s4 + $0x4c8] sm:$0xff]
        %v545 = vld [vmem:[%s4 + $0x4d0] sm:$0xff]
        %v546 = vld [vmem:[%s4 + $0x4d8] sm:$0xff]
        %v547 = vld [vmem:[%s4 + $0x4e0] sm:$0xff]
        %v548 = vld [vmem:[%s4 + $0x4e8] sm:$0xff]
        %v549 = vld [vmem:[%s4 + $0x4f0] sm:$0xff]
        %v550 = vld [vmem:[%s4 + $0x4f8] sm:$0xff]
        %v551 = vld [vmem:[%s4 + $0x500] sm:$0xff]
        %v552 = vld [vmem:[%s4 + $0x508] sm:$0xff]
        %v553 = vld [vmem:[%s4 + $0x510] sm:$0xff]
        %v554 = vld [vmem:[%s4 + $0x518] sm:$0xff]
        %v555 = vld [vmem:[%s4 + $0x520] sm:$0xff]
        %v556 = vld [vmem:[%s4 + $0x528] sm:$0xff]
        %v557 = vld [vmem:[%s4 + $0x530] sm:$0xff]
        %v558 = vld [vmem:[%s4 + $0x538] sm:$0xff]
        %v559 = vld [vmem:[%s4 + $0x540] sm:$0xff]
        %v560 = vld [vmem:[%s4 + $0x548] sm:$0xff]
        %v561 = vld [vmem:[%s4 + $0x550] sm:$0xff]
        %v562 = vld [vmem:[%s4 + $0x558] sm:$0xff]
        %v563 = vld [vmem:[%s4 + $0x560] sm:$0xff]
        %v564 = vld [vmem:[%s4 + $0x568] sm:$0xff]
        %v565 = vld [vmem:[%s4 + $0x570] sm:$0xff]
        %v566 = vld [vmem:[%s4 + $0x578] sm:$0xff]
        %v567 = vld [vmem:[%s4 + $0x580] sm:$0xff]
        %v568 = vld [vmem:[%s4 + $0x588] sm:$0xff]
        %v569 = vld [vmem:[%s4 + $0x590] sm:$0xff]
        %v570 = vld [vmem:[%s4 + $0x598] sm:$0xff]
        %v571 = vld [vmem:[%s4 + $0x5a0] sm:$0xff]
        %v572 = vld [vmem:[%s4 + $0x5a8] sm:$0xff]
        %v573 = vld [vmem:[%s4 + $0x5b0] sm:$0xff]
        %v574 = vld [vmem:[%s4 + $0x5b8] sm:$0xff]
        %v575 = vld [vmem:[%s4 + $0x5c0] sm:$0xff]
        %v576 = vld [vmem:[%s4 + $0x5c8] sm:$0xff]
        %v577 = vld [vmem:[%s4 + $0x5d0] sm:$0xff]
        %v578 = vld [vmem:[%s4 + $0x5d8] sm:$0xff]
        %v579 = vld [vmem:[%s4 + $0x5e0] sm:$0xff]
        %v580 = vld [vmem:[%s4 + $0x5e8] sm:$0xff]
        %v581 = vld [vmem:[%s4 + $0x5f0] sm:$0xff]
        %v582 = vld [vmem:[%s4 + $0x5f8] sm:$0xff]
        %v583 = vld [vmem:[%s4 + $0x600] sm:$0xff]
        %v584 = vld [vmem:[%s4 + $0x608] sm:$0xff]
        %v585 = vld [vmem:[%s4 + $0x610] sm:$0xff]
        %v586 = vld [vmem:[%s4 + $0x618] sm:$0xff]
        %v587 = vld [vmem:[%s4 + $0x620] sm:$0xff]
        %v588 = vld [vmem:[%s4 + $0x628] sm:$0xff]
        %v589 = vld [vmem:[%s4 + $0x630] sm:$0xff]
        %v590 = vld [vmem:[%s4 + $0x638] sm:$0xff]
        %v591 = vld [vmem:[%s4 + $0x640] sm:$0xff]
        %v592 = vld [vmem:[%s4 + $0x648] sm:$0xff]
        %v593 = vld [vmem:[%s4 + $0x650] sm:$0xff]
        %v594 = vld [vmem:[%s4 + $0x658] sm:$0xff]
        %v595 = vld [vmem:[%s4 + $0x660] sm:$0xff]
        %v596 = vld [vmem:[%s4 + $0x668] sm:$0xff]
        %v597 = vld [vmem:[%s4 + $0x670] sm:$0xff]
        %v598 = vld [vmem:[%s4 + $0x678] sm:$0xff]
        %v599 = vld [vmem:[%s4 + $0x680] sm:$0xff]
        %v600 = vld [vmem:[%s4 + $0x688] sm:$0xff]
        %v601 = vld [vmem:[%s4 + $0x690] sm:$0xff]
        %v602 = vld [vmem:[%s4 + $0x698] sm:$0xff]
        %v603 = vld [vmem:[%s4 + $0x6a0] sm:$0xff]
        %v604 = vld [vmem:[%s4 + $0x6a8] sm:$0xff]
        %v605 = vld [vmem:[%s4 + $0x6b0] sm:$0xff]
        %v606 = vld [vmem:[%s4 + $0x6b8] sm:$0xff]
        %v607 = vld [vmem:[%s4 + $0x6c0] sm:$0xff]
        %v608 = vld [vmem:[%s4 + $0x6c8] sm:$0xff]
        %v609 = vld [vmem:[%s4 + $0x6d0] sm:$0xff]
        %v610 = vld [vmem:[%s4 + $0x6d8] sm:$0xff]
        %v611 = vld [vmem:[%s4 + $0x6e0] sm:$0xff]
        %v612 = vld [vmem:[%s4 + $0x6e8] sm:$0xff]
        %v613 = vld [vmem:[%s4 + $0x6f0] sm:$0xff]
        %v614 = vld [vmem:[%s4 + $0x6f8] sm:$0xff]
        %v615 = vld [vmem:[%s4 + $0x700] sm:$0xff]
        %v616 = vld [vmem:[%s4 + $0x708] sm:$0xff]
        %v617 = vld [vmem:[%s4 + $0x710] sm:$0xff]
        %v618 = vld [vmem:[%s4 + $0x718] sm:$0xff]
        %v619 = vld [vmem:[%s4 + $0x720] sm:$0xff]
        %v620 = vld [vmem:[%s4 + $0x728] sm:$0xff]
        %v621 = vld [vmem:[%s4 + $0x730] sm:$0xff]
        %v622 = vld [vmem:[%s4 + $0x738] sm:$0xff]
        %v623 = vld [vmem:[%s4 + $0x740] sm:$0xff]
        %v624 = vld [vmem:[%s4 + $0x748] sm:$0xff]
        %v625 = vld [vmem:[%s4 + $0x750] sm:$0xff]
        %v626 = vld [vmem:[%s4 + $0x758] sm:$0xff]
        %v627 = vld [vmem:[%s4 + $0x760] sm:$0xff]
        %v628 = vld [vmem:[%s4 + $0x768] sm:$0xff]
        %v629 = vld [vmem:[%s4 + $0x770] sm:$0xff]
        %v630 = vld [vmem:[%s4 + $0x778] sm:$0xff]
        %v631 = vld [vmem:[%s4 + $0x780] sm:$0xff]
        %v632 = vld [vmem:[%s4 + $0x788] sm:$0xff]
        %v633 = vld [vmem:[%s4 + $0x790] sm:$0xff]
        %v634 = vld [vmem:[%s4 + $0x798] sm:$0xff]
        %v635 = vld [vmem:[%s4 + $0x7a0] sm:$0xff]
        %v636 = vld [vmem:[%s4 + $0x7a8] sm:$0xff]
        %v637 = vld [vmem:[%s4 + $0x7b0] sm:$0xff]
        %v638 = vld [vmem:[%s4 + $0x7b8] sm:$0xff]
        %v639 = vld [vmem:[%s4 + $0x7c0] sm:$0xff]
        %v640 = vld [vmem:[%s4 + $0x7c8] sm:$0xff]
        %v641 = vld [vmem:[%s4 + $0x7d0] sm:$0xff]
        %v642 = vld [vmem:[%s4 + $0x7d8] sm:$0xff]
        %v643 = vld [vmem:[%s4 + $0x7e0] sm:$0xff]
        %v644 = vld [vmem:[%s4 + $0x7e8] sm:$0xff]
        %v645 = vld [vmem:[%s4 + $0x7f0] sm:$0xff]
        %v646 = vld [vmem:[%s4 + $0x7f8] sm:$0xff]
        %647 = vmatpush.msra.mxu0 %v406
        %648 = vmatpush.msra.mxu0 %v405
        %649 = vmatpush.msra.mxu0 %v404
        %650 = vmatpush.msra.mxu0 %v403
        %651 = vmatpush.msra.mxu0 %v402
        %652 = vmatpush.msra.mxu0 %v401
        %653 = vmatpush.msra.mxu0 %v400
        %654 = vmatpush.msra.mxu0 %v399
        %655 = vmatpush.msra.mxu0 %v398
        %656 = vmatpush.msra.mxu0 %v397
        %657 = vmatpush.msra.mxu0 %v396
        %658 = vmatpush.msra.mxu0 %v395
        %659 = vmatpush.msra.mxu0 %v394
        %660 = vmatpush.msra.mxu0 %v393
        %661 = vmatpush.msra.mxu0 %v392
        %662 = vmatpush.msra.mxu0 %v391
        %663 = vmatmul.f32.gmra.mxu0 %v366
        %v664 = vpop.f32.mrf.mxu0
        %v665 = vadd.f32 0.0, %v664
        %666 = vdwg.mxu0
        %667 = vmatpush.msra.mxu0 %v422
        %668 = vmatpush.msra.mxu0 %v421
        %669 = vmatpush.msra.mxu0 %v420
        %670 = vmatpush.msra.mxu0 %v419
        %671 = vmatpush.msra.mxu0 %v418
        %672 = vmatpush.msra.mxu0 %v417
        %673 = vmatpush.msra.mxu0 %v416
        %674 = vmatpush.msra.mxu0 %v415
        %675 = vmatpush.msra.mxu0 %v414
        %676 = vmatpush.msra.mxu0 %v413
        %677 = vmatpush.msra.mxu0 %v412
        %678 = vmatpush.msra.mxu0 %v411
        %679 = vmatpush.msra.mxu0 %v410
        %680 = vmatpush.msra.mxu0 %v409
        %681 = vmatpush.msra.mxu0 %v408
        %682 = vmatpush.msra.mxu0 %v407
        %683 = vmatmul.f32.gmra.mxu0 %v368
        %v684 = vpop.f32.mrf.mxu0
        %v685 = vadd.f32 %v665, %v684
        %686 = vdwg.mxu0
        %687 = vmatpush.msra.mxu0 %v438
        %688 = vmatpush.msra.mxu0 %v437
        %689 = vmatpush.msra.mxu0 %v436
        %690 = vmatpush.msra.mxu0 %v435
        %691 = vmatpush.msra.mxu0 %v434
        %692 = vmatpush.msra.mxu0 %v433
        %693 = vmatpush.msra.mxu0 %v432
        %694 = vmatpush.msra.mxu0 %v431
        %695 = vmatpush.msra.mxu0 %v430
        %696 = vmatpush.msra.mxu0 %v429
        %697 = vmatpush.msra.mxu0 %v428
        %698 = vmatpush.msra.mxu0 %v427
        %699 = vmatpush.msra.mxu0 %v426
        %700 = vmatpush.msra.mxu0 %v425
        %701 = vmatpush.msra.mxu0 %v424
        %702 = vmatpush.msra.mxu0 %v423
        %703 = vmatmul.f32.gmra.mxu0 %v369
        %v704 = vpop.f32.mrf.mxu0
        %v705 = vadd.f32 %v685, %v704
        %706 = vdwg.mxu0
        %707 = vmatpush.msra.mxu0 %v454
        %708 = vmatpush.msra.mxu0 %v453
        %709 = vmatpush.msra.mxu0 %v452
        %710 = vmatpush.msra.mxu0 %v451
        %711 = vmatpush.msra.mxu0 %v450
        %712 = vmatpush.msra.mxu0 %v449
        %713 = vmatpush.msra.mxu0 %v448
        %714 = vmatpush.msra.mxu0 %v447
        %715 = vmatpush.msra.mxu0 %v446
        %716 = vmatpush.msra.mxu0 %v445
        %717 = vmatpush.msra.mxu0 %v444
        %718 = vmatpush.msra.mxu0 %v443
        %719 = vmatpush.msra.mxu0 %v442
        %720 = vmatpush.msra.mxu0 %v441
        %721 = vmatpush.msra.mxu0 %v440
        %722 = vmatpush.msra.mxu0 %v439
        %723 = vmatmul.f32.gmra.mxu0 %v370
        %v724 = vpop.f32.mrf.mxu0
        %v725 = vadd.f32 %v705, %v724
        %726 = vdwg.mxu0
        %727 = vmatpush.msra.mxu0 %v470
        %728 = vmatpush.msra.mxu0 %v469
        %729 = vmatpush.msra.mxu0 %v468
        %730 = vmatpush.msra.mxu0 %v467
        %731 = vmatpush.msra.mxu0 %v466
        %732 = vmatpush.msra.mxu0 %v465
        %733 = vmatpush.msra.mxu0 %v464
        %734 = vmatpush.msra.mxu0 %v463
        %735 = vmatpush.msra.mxu0 %v462
        %736 = vmatpush.msra.mxu0 %v461
        %737 = vmatpush.msra.mxu0 %v460
        %738 = vmatpush.msra.mxu0 %v459
        %739 = vmatpush.msra.mxu0 %v458
        %740 = vmatpush.msra.mxu0 %v457
        %741 = vmatpush.msra.mxu0 %v456
        %742 = vmatpush.msra.mxu0 %v455
        %743 = vmatmul.f32.gmra.mxu0 %v372
        %v744 = vpop.f32.mrf.mxu0
        %v745 = vadd.f32 %v725, %v744
        %746 = vdwg.mxu0
        %747 = vmatpush.msra.mxu0 %v486
        %748 = vmatpush.msra.mxu0 %v485
        %749 = vmatpush.msra.mxu0 %v484
        %750 = vmatpush.msra.mxu0 %v483
        %751 = vmatpush.msra.mxu0 %v482
        %752 = vmatpush.msra.mxu0 %v481
        %753 = vmatpush.msra.mxu0 %v480
        %754 = vmatpush.msra.mxu0 %v479
        %755 = vmatpush.msra.mxu0 %v478
        %756 = vmatpush.msra.mxu0 %v477
        %757 = vmatpush.msra.mxu0 %v476
        %758 = vmatpush.msra.mxu0 %v475
        %759 = vmatpush.msra.mxu0 %v474
        %760 = vmatpush.msra.mxu0 %v473
        %761 = vmatpush.msra.mxu0 %v472
        %762 = vmatpush.msra.mxu0 %v471
        %763 = vmatmul.f32.gmra.mxu0 %v374
        %v764 = vpop.f32.mrf.mxu0
        %v765 = vadd.f32 %v745, %v764
        %766 = vdwg.mxu0
        %767 = vmatpush.msra.mxu0 %v502
        %768 = vmatpush.msra.mxu0 %v501
        %769 = vmatpush.msra.mxu0 %v500
        %770 = vmatpush.msra.mxu0 %v499
        %771 = vmatpush.msra.mxu0 %v498
        %772 = vmatpush.msra.mxu0 %v497
        %773 = vmatpush.msra.mxu0 %v496
        %774 = vmatpush.msra.mxu0 %v495
        %775 = vmatpush.msra.mxu0 %v494
        %776 = vmatpush.msra.mxu0 %v493
        %777 = vmatpush.msra.mxu0 %v492
        %778 = vmatpush.msra.mxu0 %v491
        %779 = vmatpush.msra.mxu0 %v490
        %780 = vmatpush.msra.mxu0 %v489
        %781 = vmatpush.msra.mxu0 %v488
        %782 = vmatpush.msra.mxu0 %v487
        %783 = vmatmul.f32.gmra.mxu0 %v375
        %v784 = vpop.f32.mrf.mxu0
        %v785 = vadd.f32 %v765, %v784
        %786 = vdwg.mxu0
        %787 = vmatpush.msra.mxu0 %v518
        %788 = vmatpush.msra.mxu0 %v517
        %789 = vmatpush.msra.mxu0 %v516
        %790 = vmatpush.msra.mxu0 %v515
        %791 = vmatpush.msra.mxu0 %v514
        %792 = vmatpush.msra.mxu0 %v513
        %793 = vmatpush.msra.mxu0 %v512
        %794 = vmatpush.msra.mxu0 %v511
        %795 = vmatpush.msra.mxu0 %v510
        %796 = vmatpush.msra.mxu0 %v509
        %797 = vmatpush.msra.mxu0 %v508
        %798 = vmatpush.msra.mxu0 %v507
        %799 = vmatpush.msra.mxu0 %v506
        %800 = vmatpush.msra.mxu0 %v505
        %801 = vmatpush.msra.mxu0 %v504
        %802 = vmatpush.msra.mxu0 %v503
        %803 = vmatmul.f32.gmra.mxu0 %v376
        %v804 = vpop.f32.mrf.mxu0
        %v805 = vadd.f32 %v785, %v804
        %806 = vdwg.mxu0
        %807 = vmatpush.msra.mxu0 %v534
        %808 = vmatpush.msra.mxu0 %v533
        %809 = vmatpush.msra.mxu0 %v532
        %810 = vmatpush.msra.mxu0 %v531
        %811 = vmatpush.msra.mxu0 %v530
        %812 = vmatpush.msra.mxu0 %v529
        %813 = vmatpush.msra.mxu0 %v528
        %814 = vmatpush.msra.mxu0 %v527
        %815 = vmatpush.msra.mxu0 %v526
        %816 = vmatpush.msra.mxu0 %v525
        %817 = vmatpush.msra.mxu0 %v524
        %818 = vmatpush.msra.mxu0 %v523
        %819 = vmatpush.msra.mxu0 %v522
        %820 = vmatpush.msra.mxu0 %v521
        %821 = vmatpush.msra.mxu0 %v520
        %822 = vmatpush.msra.mxu0 %v519
        %823 = vmatmul.f32.gmra.mxu0 %v380
        %v824 = vpop.f32.mrf.mxu0
        %v825 = vadd.f32 %v805, %v824
        %826 = vdwg.mxu0
        %827 = vmatpush.msra.mxu0 %v550
        %828 = vmatpush.msra.mxu0 %v549
        %829 = vmatpush.msra.mxu0 %v548
        %830 = vmatpush.msra.mxu0 %v547
        %831 = vmatpush.msra.mxu0 %v546
        %832 = vmatpush.msra.mxu0 %v545
        %833 = vmatpush.msra.mxu0 %v544
        %834 = vmatpush.msra.mxu0 %v543
        %835 = vmatpush.msra.mxu0 %v542
        %836 = vmatpush.msra.mxu0 %v541
        %837 = vmatpush.msra.mxu0 %v540
        %838 = vmatpush.msra.mxu0 %v539
        %839 = vmatpush.msra.mxu0 %v538
        %840 = vmatpush.msra.mxu0 %v537
        %841 = vmatpush.msra.mxu0 %v536
        %842 = vmatpush.msra.mxu0 %v535
        %843 = vmatmul.f32.gmra.mxu0 %v382
        %v844 = vpop.f32.mrf.mxu0
        %v845 = vadd.f32 %v825, %v844
        %846 = vdwg.mxu0
        %847 = vmatpush.msra.mxu0 %v566
        %848 = vmatpush.msra.mxu0 %v565
        %849 = vmatpush.msra.mxu0 %v564
        %850 = vmatpush.msra.mxu0 %v563
        %851 = vmatpush.msra.mxu0 %v562
        %852 = vmatpush.msra.mxu0 %v561
        %853 = vmatpush.msra.mxu0 %v560
        %854 = vmatpush.msra.mxu0 %v559
        %855 = vmatpush.msra.mxu0 %v558
        %856 = vmatpush.msra.mxu0 %v557
        %857 = vmatpush.msra.mxu0 %v556
        %858 = vmatpush.msra.mxu0 %v555
        %859 = vmatpush.msra.mxu0 %v554
        %860 = vmatpush.msra.mxu0 %v553
        %861 = vmatpush.msra.mxu0 %v552
        %862 = vmatpush.msra.mxu0 %v551
        %863 = vmatmul.f32.gmra.mxu0 %v383
        %v864 = vpop.f32.mrf.mxu0
        %v865 = vadd.f32 %v845, %v864
        %866 = vdwg.mxu0
        %867 = vmatpush.msra.mxu0 %v582
        %868 = vmatpush.msra.mxu0 %v581
        %869 = vmatpush.msra.mxu0 %v580
        %870 = vmatpush.msra.mxu0 %v579
        %871 = vmatpush.msra.mxu0 %v578
        %872 = vmatpush.msra.mxu0 %v577
        %873 = vmatpush.msra.mxu0 %v576
        %874 = vmatpush.msra.mxu0 %v575
        %875 = vmatpush.msra.mxu0 %v574
        %876 = vmatpush.msra.mxu0 %v573
        %877 = vmatpush.msra.mxu0 %v572
        %878 = vmatpush.msra.mxu0 %v571
        %879 = vmatpush.msra.mxu0 %v570
        %880 = vmatpush.msra.mxu0 %v569
        %881 = vmatpush.msra.mxu0 %v568
        %882 = vmatpush.msra.mxu0 %v567
        %883 = vmatmul.f32.gmra.mxu0 %v384
        %v884 = vpop.f32.mrf.mxu0
        %v885 = vadd.f32 %v865, %v884
        %886 = vdwg.mxu0
        %887 = vmatpush.msra.mxu0 %v598
        %888 = vmatpush.msra.mxu0 %v597
        %889 = vmatpush.msra.mxu0 %v596
        %890 = vmatpush.msra.mxu0 %v595
        %891 = vmatpush.msra.mxu0 %v594
        %892 = vmatpush.msra.mxu0 %v593
        %893 = vmatpush.msra.mxu0 %v592
        %894 = vmatpush.msra.mxu0 %v591
        %895 = vmatpush.msra.mxu0 %v590
        %896 = vmatpush.msra.mxu0 %v589
        %897 = vmatpush.msra.mxu0 %v588
        %898 = vmatpush.msra.mxu0 %v587
        %899 = vmatpush.msra.mxu0 %v586
        %900 = vmatpush.msra.mxu0 %v585
        %901 = vmatpush.msra.mxu0 %v584
        %902 = vmatpush.msra.mxu0 %v583
        %903 = vmatmul.f32.gmra.mxu0 %v386
        %v904 = vpop.f32.mrf.mxu0
        %v905 = vadd.f32 %v885, %v904
        %906 = vdwg.mxu0
        %907 = vmatpush.msra.mxu0 %v614
        %908 = vmatpush.msra.mxu0 %v613
        %909 = vmatpush.msra.mxu0 %v612
        %910 = vmatpush.msra.mxu0 %v611
        %911 = vmatpush.msra.mxu0 %v610
        %912 = vmatpush.msra.mxu0 %v609
        %913 = vmatpush.msra.mxu0 %v608
        %914 = vmatpush.msra.mxu0 %v607
        %915 = vmatpush.msra.mxu0 %v606
        %916 = vmatpush.msra.mxu0 %v605
        %917 = vmatpush.msra.mxu0 %v604
        %918 = vmatpush.msra.mxu0 %v603
        %919 = vmatpush.msra.mxu0 %v602
        %920 = vmatpush.msra.mxu0 %v601
        %921 = vmatpush.msra.mxu0 %v600
        %922 = vmatpush.msra.mxu0 %v599
        %923 = vmatmul.f32.gmra.mxu0 %v388
        %v924 = vpop.f32.mrf.mxu0
        %v925 = vadd.f32 %v905, %v924
        %926 = vdwg.mxu0
        %927 = vmatpush.msra.mxu0 %v630
        %928 = vmatpush.msra.mxu0 %v629
        %929 = vmatpush.msra.mxu0 %v628
        %930 = vmatpush.msra.mxu0 %v627
        %931 = vmatpush.msra.mxu0 %v626
        %932 = vmatpush.msra.mxu0 %v625
        %933 = vmatpush.msra.mxu0 %v624
        %934 = vmatpush.msra.mxu0 %v623
        %935 = vmatpush.msra.mxu0 %v622
        %936 = vmatpush.msra.mxu0 %v621
        %937 = vmatpush.msra.mxu0 %v620
        %938 = vmatpush.msra.mxu0 %v619
        %939 = vmatpush.msra.mxu0 %v618
        %940 = vmatpush.msra.mxu0 %v617
        %941 = vmatpush.msra.mxu0 %v616
        %942 = vmatpush.msra.mxu0 %v615
        %943 = vmatmul.f32.gmra.mxu0 %v389
        %v944 = vpop.f32.mrf.mxu0
        %v945 = vadd.f32 %v925, %v944
        %946 = vdwg.mxu0
        %947 = vmatpush.msra.mxu0 %v646
        %948 = vmatpush.msra.mxu0 %v645
        %949 = vmatpush.msra.mxu0 %v644
        %950 = vmatpush.msra.mxu0 %v643
        %951 = vmatpush.msra.mxu0 %v642
        %952 = vmatpush.msra.mxu0 %v641
        %953 = vmatpush.msra.mxu0 %v640
        %954 = vmatpush.msra.mxu0 %v639
        %955 = vmatpush.msra.mxu0 %v638
        %956 = vmatpush.msra.mxu0 %v637
        %957 = vmatpush.msra.mxu0 %v636
        %958 = vmatpush.msra.mxu0 %v635
        %959 = vmatpush.msra.mxu0 %v634
        %960 = vmatpush.msra.mxu0 %v633
        %961 = vmatpush.msra.mxu0 %v632
        %962 = vmatpush.msra.mxu0 %v631
        %963 = vmatmul.f32.gmra.mxu0 %v390
        %v964 = vpop.f32.mrf.mxu0
        %v965 = vadd.f32 %v945, %v964
        %966 = vdwg.mxu0
        %s967 = smul.u32 %s357, 4
        %s968 = scalar_lea.vmem %s349, %s967
        %969 = vst [vmem:[%s968] sm:$0xf] %v965
        %vm970 = vcmask 1043456
        %v971 = vsel %vm970, %v965, 0.0
        %v972 = vrot.slane %v971, 4
        %v973 = vadd.f32 %v971, %v972
        %v974 = vrot.slane %v973, 2
        %v975 = vadd.f32 %v973, %v974
        %v976 = vrot.slane %v975, 1
        %v977 = vadd.f32 %v975, %v976
        %v978 = vadd.f32 %v362, %v977
        %v979 = vmul.f32 %v965, %v965
        %v980 = vsel %vm970, %v979, 0.0
        %v981 = vrot.slane %v980, 4
        %v982 = vadd.f32 %v980, %v981
        %v983 = vrot.slane %v982, 2
        %v984 = vadd.f32 %v982, %v983
        %v985 = vrot.slane %v984, 1
        %v986 = vadd.f32 %v984, %v985
        %v987 = vadd.f32 %v363, %v986
      $region45: #{discriminator_forward.7} parent=39 // loop_footer
        %s361 = sadd.s32 1, %s357
      $region46: #{discriminator_forward.7} parent=39 // loop_footer_branch
        %356 = sbr.rel target = $region42
      $region47: #{discriminator_forward.7} parent=39 // loop_exit
        _
      %988 = vst [vmem:[%s352] sm:$0x1] %v362
      %989 = vst [vmem:[%s355] sm:$0x1] %v363
      %p990 = scmp.lt.s32.totalorder %s19, 1
      %s991 = scalar_select %p990, %s19, 1
      %s992 = smul.addr %s991, 4
      %s993 = smul.addr %s992, 4
      %s994 = scalar_lea.vmem %s5, %s993
      %p995 = scmp.lt.s32.totalorder %s19, 1
      %s996 = scalar_select %p995, %s19, 1
      %s997 = scalar_lea.vmem %s6, %s996
      %p998 = scmp.lt.s32.totalorder %s19, 1
      %s999 = scalar_select %p998, %s19, 1
      %s1000 = scalar_lea.vmem %s7, %s999
      // Predicated region
      $region48: #{discriminator_forward.7} parent=39 // pred_check
        %p1001 = pneg %p162
      $region49: #{discriminator_forward.7} parent=39 // pred_check_branch
        %1003 = sbr.rel (%p1001) target = $region51
      $region50: #{discriminator_forward.7} parent=39 // pred_region
        _
      $region51: #{discriminator_forward.7} parent=39 // pred_fallthru
        _
      // Predicated region
      $region52: #{discriminator_forward.7} parent=39 // pred_check
        %p1004 = pneg %p188
      $region53: #{discriminator_forward.7} parent=39 // pred_check_branch
        %1006 = sbr.rel (%p1004) target = $region55
      $region54: #{discriminator_forward.7} parent=39 // pred_region
        _
      $region55: #{discriminator_forward.7} parent=39 // pred_fallthru
        _
      // Predicated region
      $region56: #{discriminator_forward.7} parent=39 // pred_check
        %p1007 = pneg %p214
      $region57: #{discriminator_forward.7} parent=39 // pred_check_branch
        %1009 = sbr.rel (%p1007) target = $region59
      $region58: #{discriminator_forward.7} parent=39 // pred_region
        _
      $region59: #{discriminator_forward.7} parent=39 // pred_fallthru
        _
    $region40: #{discriminator_forward.7} parent=5 // pred_fallthru
      _
    %p1010 = scmp.le.s32.totalorder 2, %s14
    // Predicated region
    $region60: #{discriminator_forward.7} parent=5 // pred_check
      %p1011 = pneg %p1010
    $region61: #{discriminator_forward.7} parent=5 // pred_check_branch
      %1013 = sbr.rel (%p1011) target = $region63
    $region62: #{discriminator_forward.7} parent=5 // pred_region
      %s1014 = ssub.s32 %s14, 2
      // Predicated region
      $region64: #{discriminator_forward.7} parent=62 // pred_check
        %p1015 = pneg %p168
      $region65: #{discriminator_forward.7} parent=62 // pred_check_branch
        %1017 = sbr.rel (%p1015) target = $region67
      $region66: #{discriminator_forward.7} parent=62 // pred_region
        %p1018 = scmp.lt.s32.totalorder %s20, 1
        %s1019 = scalar_select %p1018, %s20, 1
        %s1020 = smul.addr %s1019, 4
        %s1021 = smul.addr %s1020, 4
        %s1022 = scalar_lea.vmem %s5, %s1021
      $region67: #{discriminator_forward.7} parent=62 // pred_fallthru
        _
      // Predicated region
      $region68: #{discriminator_forward.7} parent=62 // pred_check
        %p1023 = pneg %p194
      $region69: #{discriminator_forward.7} parent=62 // pred_check_branch
        %1025 = sbr.rel (%p1023) target = $region71
      $region70: #{discriminator_forward.7} parent=62 // pred_region
        %p1026 = scmp.lt.s32.totalorder %s20, 1
        %s1027 = scalar_select %p1026, %s20, 1
        %s1028 = scalar_lea.vmem %s6, %s1027
      $region71: #{discriminator_forward.7} parent=62 // pred_fallthru
        _
      // Predicated region
      $region72: #{discriminator_forward.7} parent=62 // pred_check
        %p1029 = pneg %p220
      $region73: #{discriminator_forward.7} parent=62 // pred_check_branch
        %1031 = sbr.rel (%p1029) target = $region75
      $region74: #{discriminator_forward.7} parent=62 // pred_region
        %p1032 = scmp.lt.s32.totalorder %s20, 1
        %s1033 = scalar_select %p1032, %s20, 1
        %s1034 = scalar_lea.vmem %s7, %s1033
      $region75: #{discriminator_forward.7} parent=62 // pred_fallthru
        _
    $region63: #{discriminator_forward.7} parent=5 // pred_fallthru
      _
  $region6: #{discriminator_forward.7} parent=0 // loop_footer
    %s18 = sadd.s32 1, %s14
  $region7: #{discriminator_forward.7} parent=0 // loop_footer_branch
    %13 = sbr.rel target = $region3
  $region8: #{discriminator_forward.7} parent=0 // loop_exit
    _

// kernel: discriminator_forward.8
$region0: #{discriminator_forward.8}
  #allocation0 [shape = 'u32[]', space=smem, size = 0x4, offset = 0x4, fixed_abs, tag = 'smem constant byte address 0x4 - core index']
  #allocation1 [shape = 'u32[72,128]{1,0:T(1,128)}', space=vmem, size = 0x9000, scoped, tag = 'internal scratch']
  %s0 = inlined_call_operand.vmem [shape: f32[2,3,3,128], index: 0, kind: input, shape index: {}]
  %s1 = inlined_call_operand.vmem [shape: f32[2,3,3,128], index: 1, kind: input, shape index: {}]
  %s2 = inlined_call_operand.vmem [shape: f32[2,3,3,128], index: 2, kind: input, shape index: {}]
  %s3 = inlined_call_operand.vmem [shape: f32[2,3,3,128], index: 3, kind: input, shape index: {}]
  %s4 = inlined_call_operand.vmem [shape: f32[2048,128], index: 4, kind: input, shape index: {}]
  %s5 = inlined_call_operand.vmem [shape: f32[2,2,2,128], index: 5, kind: output, shape index: {0}]
  %s6 = inlined_call_operand.vmem [shape: f32[2,1,128], index: 6, kind: output, shape index: {1}]
  %s7 = inlined_call_operand.vmem [shape: f32[2,1,128], index: 7, kind: output, shape index: {2}]
  %8 = xla_tuple %s5, %s6, %s7
  %s9 = sld [smem:[#allocation0]]
  $region76: #{discriminator_forward.8} parent=0
    _
  %s11 = ssub.s32 1, %s9
  %s12 = scalar_select 0, %s11, %s9
  loop: start=0, step=1, limit=4
  $region2: #{discriminator_forward.8} parent=0 // loop_pre_header
    _
  $region3: #{discriminator_forward.8} parent=0 // loop_header
    %s14 = sphi 0, %s18
    %p15 = scmp.ge.s32.totalorder %s14, 4
    %s24 = sphi 0, %s26
    %s27 = sphi 0, %s24
    %s28 = sphi 0, %s27
    %s44 = sphi 0, %s28
    %s50 = sphi 0, %s52
    %s53 = sphi 0, %s50
    %s54 = sphi 0, %s53
    %s70 = sphi 0, %s54
    %s76 = sphi 0, %s78
    %s79 = sphi 0, %s76
    %s80 = sphi 0, %s79
    %s96 = sphi 0, %s80
    %s102 = sphi 0, %s104
    %s105 = sphi 0, %s102
    %s106 = sphi 0, %s105
    %s122 = sphi 0, %s106
    %s126 = sphi 0, %s126
    %s128 = sphi 0, %s126
    %s129 = sphi 0, %s128
    %s143 = sphi 0, %s129
    %s149 = sphi 0, %s151
    %s152 = sphi 0, %s149
    %s153 = sphi 0, %s152
    %s169 = sphi 0, %s153
    %s175 = sphi 0, %s177
    %s178 = sphi 0, %s175
    %s179 = sphi 0, %s178
    %s195 = sphi 0, %s179
    %s201 = sphi 0, %s203
    %s204 = sphi 0, %s201
    %s205 = sphi 0, %s204
    %s221 = sphi 0, %s205
  $region4: #{discriminator_forward.8} parent=0 // loop_header_branch
    %17 = sbr.rel (%p15) target = $region8
  $region5: #{discriminator_forward.8} parent=0 // loop_body
    %s19 = ssub.s32 %s14, 1
    %s20 = ssub.s32 %s14, 2
    %s21 = sadd.s32 %s14, 1
    %s22 = ssub.s32 %s14, %s21
    %p23 = scmp.eq.s32.totalorder %s22, 0
    %s25 = sadd.s32 %s24, 1
    %s26 = scalar_select %p23, %s24, %s25
    %p29 = pneg %p23
    %p30 = scmp.eq.s32.totalorder %s14, 1
    %p31 = por %p29, %p30
    %p32 = scmp.ne.s32.totalorder %s24, %s27
    %p33 = scmp.eq.s32.totalorder %s14, 0
    %p34 = por %p32, %p33
    %p35 = scmp.ne.s32.totalorder %s24, %s27
    %p36 = scmp.eq.s32.totalorder %s19, 1
    %p37 = por %p35, %p36
    %p38 = scmp.ne.s32.totalorder %s27, %s28
    %p39 = scmp.eq.s32.totalorder %s19, 0
    %p40 = por %p38, %p39
    %p41 = scmp.ne.s32.totalorder %s27, %s28
    %p42 = scmp.eq.s32.totalorder %s20, 1
    %p43 = por %p41, %p42
    %p45 = scmp.ne.s32.totalorder %s28, %s44
    %p46 = scmp.eq.s32.totalorder %s20, 0
    %p47 = por %p45, %p46
    %s48 = ssub.s32 %s14, %s21
    %p49 = scmp.eq.s32.totalorder %s48, 0
    %s51 = sadd.s32 %s50, 1
    %s52 = scalar_select %p49, %s50, %s51
    %p55 = pneg %p49
    %p56 = scmp.eq.s32.totalorder %s14, 1
    %p57 = por %p55, %p56
    %p58 = scmp.ne.s32.totalorder %s50, %s53
    %p59 = scmp.eq.s32.totalorder %s14, 0
    %p60 = por %p58, %p59
    %p61 = scmp.ne.s32.totalorder %s50, %s53
    %p62 = scmp.eq.s32.totalorder %s19, 1
    %p63 = por %p61, %p62
    %p64 = scmp.ne.s32.totalorder %s53, %s54
    %p65 = scmp.eq.s32.totalorder %s19, 0
    %p66 = por %p64, %p65
    %p67 = scmp.ne.s32.totalorder %s53, %s54
    %p68 = scmp.eq.s32.totalorder %s20, 1
    %p69 = por %p67, %p68
    %p71 = scmp.ne.s32.totalorder %s54, %s70
    %p72 = scmp.eq.s32.totalorder %s20, 0
    %p73 = por %p71, %p72
    %s74 = ssub.s32 %s14, %s21
    %p75 = scmp.eq.s32.totalorder %s74, 0
    %s77 = sadd.s32 %s76, 1
    %s78 = scalar_select %p75, %s76, %s77
    %p81 = pneg %p75
    %p82 = scmp.eq.s32.totalorder %s14, 1
    %p83 = por %p81, %p82
    %p84 = scmp.ne.s32.totalorder %s76, %s79
    %p85 = scmp.eq.s32.totalorder %s14, 0
    %p86 = por %p84, %p85
    %p87 = scmp.ne.s32.totalorder %s76, %s79
    %p88 = scmp.eq.s32.totalorder %s19, 1
    %p89 = por %p87, %p88
    %p90 = scmp.ne.s32.totalorder %s79, %s80
    %p91 = scmp.eq.s32.totalorder %s19, 0
    %p92 = por %p90, %p91
    %p93 = scmp.ne.s32.totalorder %s79, %s80
    %p94 = scmp.eq.s32.totalorder %s20, 1
    %p95 = por %p93, %p94
    %p97 = scmp.ne.s32.totalorder %s80, %s96
    %p98 = scmp.eq.s32.totalorder %s20, 0
    %p99 = por %p97, %p98
    %s100 = ssub.s32 %s14, %s21
    %p101 = scmp.eq.s32.totalorder %s100, 0
    %s103 = sadd.s32 %s102, 1
    %s104 = scalar_select %p101, %s102, %s103
    %p107 = pneg %p101
    %p108 = scmp.eq.s32.totalorder %s14, 1
    %p109 = por %p107, %p108
    %p110 = scmp.ne.s32.totalorder %s102, %s105
    %p111 = scmp.eq.s32.totalorder %s14, 0
    %p112 = por %p110, %p111
    %p113 = scmp.ne.s32.totalorder %s102, %s105
    %p114 = scmp.eq.s32.totalorder %s19, 1
    %p115 = por %p113, %p114
    %p116 = scmp.ne.s32.totalorder %s105, %s106
    %p117 = scmp.eq.s32.totalorder %s19, 0
    %p118 = por %p116, %p117
    %p119 = scmp.ne.s32.totalorder %s105, %s106
    %p120 = scmp.eq.s32.totalorder %s20, 1
    %p121 = por %p119, %p120
    %p123 = scmp.ne.s32.totalorder %s106, %s122
    %p124 = scmp.eq.s32.totalorder %s20, 0
    %p125 = por %p123, %p124
    %s127 = sadd.s32 %s126, 1
    %p130 = scmp.eq.s32.totalorder %s14, 1
    %p131 = scmp.ne.s32.totalorder %s126, %s128
    %p132 = scmp.eq.s32.totalorder %s14, 0
    %p133 = por %p131, %p132
    %p134 = scmp.ne.s32.totalorder %s126, %s128
    %p135 = scmp.eq.s32.totalorder %s19, 1
    %p136 = por %p134, %p135
    %p137 = scmp.ne.s32.totalorder %s128, %s129
    %p138 = scmp.eq.s32.totalorder %s19, 0
    %p139 = por %p137, %p138
    %p140 = scmp.ne.s32.totalorder %s128, %s129
    %p141 = scmp.eq.s32.totalorder %s20, 1
    %p142 = por %p140, %p141
    %p144 = scmp.ne.s32.totalorder %s129, %s143
    %p145 = scmp.eq.s32.totalorder %s20, 0
    %p146 = por %p144, %p145
    %s147 = ssub.s32 %s14, %s21
    %p148 = scmp.eq.s32.totalorder %s147, 0
    %s150 = sadd.s32 %s149, 1
    %s151 = scalar_select %p148, %s149, %s150
    %p154 = pneg %p148
    %p155 = scmp.eq.s32.totalorder %s14, 1
    %p156 = por %p154, %p155
    %p157 = scmp.ne.s32.totalorder %s149, %s152
    %p158 = scmp.eq.s32.totalorder %s14, 0
    %p159 = por %p157, %p158
    %p160 = scmp.ne.s32.totalorder %s149, %s152
    %p161 = scmp.eq.s32.totalorder %s19, 1
    %p162 = por %p160, %p161
    %p163 = scmp.ne.s32.totalorder %s152, %s153
    %p164 = scmp.eq.s32.totalorder %s19, 0
    %p165 = por %p163, %p164
    %p166 = scmp.ne.s32.totalorder %s152, %s153
    %p167 = scmp.eq.s32.totalorder %s20, 1
    %p168 = por %p166, %p167
    %p170 = scmp.ne.s32.totalorder %s153, %s169
    %p171 = scmp.eq.s32.totalorder %s20, 0
    %p172 = por %p170, %p171
    %s173 = ssub.s32 %s14, %s21
    %p174 = scmp.eq.s32.totalorder %s173, 0
    %s176 = sadd.s32 %s175, 1
    %s177 = scalar_select %p174, %s175, %s176
    %p180 = pneg %p174
    %p181 = scmp.eq.s32.totalorder %s14, 1
    %p182 = por %p180, %p181
    %p183 = scmp.ne.s32.totalorder %s175, %s178
    %p184 = scmp.eq.s32.totalorder %s14, 0
    %p185 = por %p183, %p184
    %p186 = scmp.ne.s32.totalorder %s175, %s178
    %p187 = scmp.eq.s32.totalorder %s19, 1
    %p188 = por %p186, %p187
    %p189 = scmp.ne.s32.totalorder %s178, %s179
    %p190 = scmp.eq.s32.totalorder %s19, 0
    %p191 = por %p189, %p190
    %p192 = scmp.ne.s32.totalorder %s178, %s179
    %p193 = scmp.eq.s32.totalorder %s20, 1
    %p194 = por %p192, %p193
    %p196 = scmp.ne.s32.totalorder %s179, %s195
    %p197 = scmp.eq.s32.totalorder %s20, 0
    %p198 = por %p196, %p197
    %s199 = ssub.s32 %s14, %s21
    %p200 = scmp.eq.s32.totalorder %s199, 0
    %s202 = sadd.s32 %s201, 1
    %s203 = scalar_select %p200, %s201, %s202
    %p206 = pneg %p200
    %p207 = scmp.eq.s32.totalorder %s14, 1
    %p208 = por %p206, %p207
    %p209 = scmp.ne.s32.totalorder %s201, %s204
    %p210 = scmp.eq.s32.totalorder %s14, 0
    %p211 = por %p209, %p210
    %p212 = scmp.ne.s32.totalorder %s201, %s204
    %p213 = scmp.eq.s32.totalorder %s19, 1
    %p214 = por %p212, %p213
    %p215 = scmp.ne.s32.totalorder %s204, %s205
    %p216 = scmp.eq.s32.totalorder %s19, 0
    %p217 = por %p215, %p216
    %p218 = scmp.ne.s32.totalorder %s204, %s205
    %p219 = scmp.eq.s32.totalorder %s20, 1
    %p220 = por %p218, %p219
    %p222 = scmp.ne.s32.totalorder %s205, %s221
    %p223 = scmp.eq.s32.totalorder %s20, 0
    %p224 = por %p222, %p223
    %p225 = scmp.le.s32.totalorder 1, %s14
    %p226 = scmp.lt.s32.totalorder %s14, 3
    %p227 = pnand %p225, %p226
    %p228 = pneg %p227
    // Predicated region
    $region9: #{discriminator_forward.8} parent=5 // pred_check
      _
    $region10: #{discriminator_forward.8} parent=5 // pred_check_branch
      %230 = sbr.rel (%p227) target = $region12
    $region11: #{discriminator_forward.8} parent=5 // pred_region
      %s231 = ssub.s32 %s14, 1
      // Predicated region
      $region13: #{discriminator_forward.8} parent=11 // pred_check
        %p232 = pneg %p139
      $region14: #{discriminator_forward.8} parent=11 // pred_check_branch
        %234 = sbr.rel (%p232) target = $region16
      $region15: #{discriminator_forward.8} parent=11 // pred_region
        _
      $region16: #{discriminator_forward.8} parent=11 // pred_fallthru
        _
    $region12: #{discriminator_forward.8} parent=5 // pred_fallthru
      _
    %p235 = scmp.lt.s32.totalorder %s14, 2
    // Predicated region
    $region17: #{discriminator_forward.8} parent=5 // pred_check
      %p236 = pneg %p235
    $region18: #{discriminator_forward.8} parent=5 // pred_check_branch
      %238 = sbr.rel (%p236) target = $region20
    $region19: #{discriminator_forward.8} parent=5 // pred_region
      // Predicated region
      $region21: #{discriminator_forward.8} parent=19 // pred_check
        %p239 = pneg %p34
      $region22: #{discriminator_forward.8} parent=19 // pred_check_branch
        %241 = sbr.rel (%p239) target = $region24
      $region23: #{discriminator_forward.8} parent=19 // pred_region
        %p242 = scmp.lt.s32.totalorder %s14, 1
        %s243 = scalar_select %p242, %s14, 1
        %s244 = smul.addr %s243, 3
        %s245 = smul.addr %s244, 4
        %s246 = scalar_lea.vmem %s0, %s245
      $region24: #{discriminator_forward.8} parent=19 // pred_fallthru
        _
      // Predicated region
      $region25: #{discriminator_forward.8} parent=19 // pred_check
        %p247 = pneg %p60
      $region26: #{discriminator_forward.8} parent=19 // pred_check_branch
        %249 = sbr.rel (%p247) target = $region28
      $region27: #{discriminator_forward.8} parent=19 // pred_region
        %p250 = scmp.lt.s32.totalorder %s14, 1
        %s251 = scalar_select %p250, %s14, 1
        %s252 = smul.addr %s251, 3
        %s253 = smul.addr %s252, 4
        %s254 = scalar_lea.vmem %s1, %s253
      $region28: #{discriminator_forward.8} parent=19 // pred_fallthru
        _
      // Predicated region
      $region29: #{discriminator_forward.8} parent=19 // pred_check
        %p255 = pneg %p86
      $region30: #{discriminator_forward.8} parent=19 // pred_check_branch
        %257 = sbr.rel (%p255) target = $region32
      $region31: #{discriminator_forward.8} parent=19 // pred_region
        %p258 = scmp.lt.s32.totalorder %s14, 1
        %s259 = scalar_select %p258, %s14, 1
        %s260 = smul.addr %s259, 3
        %s261 = smul.addr %s260, 4
        %s262 = scalar_lea.vmem %s2, %s261
      $region32: #{discriminator_forward.8} parent=19 // pred_fallthru
        _
      // Predicated region
      $region33: #{discriminator_forward.8} parent=19 // pred_check
        %p263 = pneg %p112
      $region34: #{discriminator_forward.8} parent=19 // pred_check_branch
        %265 = sbr.rel (%p263) target = $region36
      $region35: #{discriminator_forward.8} parent=19 // pred_region
        %p266 = scmp.lt.s32.totalorder %s14, 1
        %s267 = scalar_select %p266, %s14, 1
        %s268 = smul.addr %s267, 3
        %s269 = smul.addr %s268, 4
        %s270 = scalar_lea.vmem %s3, %s269
      $region36: #{discriminator_forward.8} parent=19 // pred_fallthru
        _
    $region20: #{discriminator_forward.8} parent=5 // pred_fallthru
      _
    %p271 = scmp.le.s32.totalorder 1, %s14
    %p272 = scmp.lt.s32.totalorder %s14, 3
    %p273 = pnand %p271, %p272
    %p274 = pneg %p273
    // Predicated region
    $region37: #{discriminator_forward.8} parent=5 // pred_check
      _
    $region38: #{discriminator_forward.8} parent=5 // pred_check_branch
      %276 = sbr.rel (%p273) target = $region40
    $region39: #{discriminator_forward.8} parent=5 // pred_region
      %s277 = ssub.s32 %s14, 1
      %p278 = scmp.lt.s32.totalorder %s19, 1
      %s279 = scalar_select %p278, %s19, 1
      %s280 = smul.addr %s279, 3
      %s281 = smul.addr %s280, 4
      %s282 = scalar_lea.vmem %s0, %s281
      %p283 = pneg %p40
      %p284 = pneg %p37
      %p285 = scmp.lt.s32.totalorder %s19, 1
      %s286 = scalar_select %p285, %s19, 1
      %s287 = smul.addr %s286, 3
      %s288 = smul.addr %s287, 4
      %s289 = scalar_lea.vmem %s1, %s288
      %p290 = pneg %p66
      %p291 = pneg %p63
      %p292 = scmp.lt.s32.totalorder %s19, 1
      %s293 = scalar_select %p292, %s19, 1
      %s294 = smul.addr %s293, 3
      %s295 = smul.addr %s294, 4
      %s296 = scalar_lea.vmem %s2, %s295
      %p297 = pneg %p92
      %p298 = pneg %p89
      %p299 = scmp.lt.s32.totalorder %s19, 1
      %s300 = scalar_select %p299, %s19, 1
      %s301 = smul.addr %s300, 3
      %s302 = smul.addr %s301, 4
      %s303 = scalar_lea.vmem %s3, %s302
      %p304 = pneg %p118
      %p305 = pneg %p115
      %p306 = pneg %p139
      %p307 = pneg %p136
      %p308 = pneg %p165
      %p309 = pneg %p162
      %p310 = scmp.lt.s32.totalorder %s19, 1
      %s311 = scalar_select %p310, %s19, 1
      %s312 = smul.addr %s311, 2
      %s313 = smul.addr %s312, 2
      %s314 = scalar_lea.vmem %s5, %s313
      %p315 = pneg %p191
      %p316 = pneg %p188
      %p317 = scmp.lt.s32.totalorder %s19, 1
      %s318 = scalar_select %p317, %s19, 1
      %s319 = scalar_lea.vmem %s6, %s318
      %p320 = pneg %p217
      %p321 = pneg %p214
      %p322 = scmp.lt.s32.totalorder %s19, 1
      %s323 = scalar_select %p322, %s19, 1
      %s324 = scalar_lea.vmem %s7, %s323
      %p325 = scmp.lt.s32.totalorder %s19, 1
      %s326 = scalar_select %p325, %s19, 1
      %s327 = smul.addr %s326, 3
      %s328 = smul.addr %s327, 4
      %s329 = scalar_lea.vmem %s0, %s328
      %p330 = scmp.lt.s32.totalorder %s19, 1
      %s331 = scalar_select %p330, %s19, 1
      %s332 = smul.addr %s331, 3
      %s333 = smul.addr %s332, 4
      %s334 = scalar_lea.vmem %s1, %s333
      %p335 = scmp.lt.s32.totalorder %s19, 1
      %s336 = scalar_select %p335, %s19, 1
      %s337 = smul.addr %s336, 3
      %s338 = smul.addr %s337, 4
      %s339 = scalar_lea.vmem %s2, %s338
      %p340 = scmp.lt.s32.totalorder %s19, 1
      %s341 = scalar_select %p340, %s19, 1
      %s342 = smul.addr %s341, 3
      %s343 = smul.addr %s342, 4
      %s344 = scalar_lea.vmem %s3, %s343
      %p345 = scmp.lt.s32.totalorder %s19, 1
      %s346 = scalar_select %p345, %s19, 1
      %s347 = smul.addr %s346, 2
      %s348 = smul.addr %s347, 2
      %s349 = scalar_lea.vmem %s5, %s348
      %p350 = scmp.lt.s32.totalorder %s19, 1
      %s351 = scalar_select %p350, %s19, 1
      %s352 = scalar_lea.vmem %s6, %s351
      %p353 = scmp.lt.s32.totalorder %s19, 1
      %s354 = scalar_select %p353, %s19, 1
      %s355 = scalar_lea.vmem %s7, %s354
      loop: start=0, step=1, limit=2
      $region41: #{discriminator_forward.8} parent=39 // loop_pre_header
        _
      $region42: #{discriminator_forward.8} parent=39 // loop_header
        %s357 = sphi 0, %s361
        %p358 = scmp.ge.s32.totalorder %s357, 2
        %v362 = vphi 0.0, %v978
        %v363 = vphi 0.0, %v987
      $region43: #{discriminator_forward.8} parent=39 // loop_header_branch
        %360 = sbr.rel (%p358) target = $region47
      $region44: #{discriminator_forward.8} parent=39 // loop_body
        %s364 = smul.u32 %s357, 4
        %s365 = scalar_lea.vmem %s329, %s364
        %v366 = vld [vmem:[%s365] sm:$0x3]
        %s367 = scalar_lea.vmem %s334, %s364
        %v368 = vld [vmem:[%s367] sm:$0x3]
        %v369 = vld [vmem:[%s365 + $0x1] sm:$0x3]
        %v370 = vld [vmem:[%s367 + $0x1] sm:$0x3]
        %s371 = scalar_lea.vmem %s339, %s364
        %v372 = vld [vmem:[%s371] sm:$0x3]
        %s373 = scalar_lea.vmem %s344, %s364
        %v374 = vld [vmem:[%s373] sm:$0x3]
        %v375 = vld [vmem:[%s371 + $0x1] sm:$0x3]
        %v376 = vld [vmem:[%s373 + $0x1] sm:$0x3]
        %s377 = sadd.s32 %s357, 1
        %s378 = smul.u32 %s377, 4
        %s379 = scalar_lea.vmem %s329, %s378
        %v380 = vld [vmem:[%s379] sm:$0x3]
        %s381 = scalar_lea.vmem %s334, %s378
        %v382 = vld [vmem:[%s381] sm:$0x3]
        %v383 = vld [vmem:[%s379 + $0x1] sm:$0x3]
        %v384 = vld [vmem:[%s381 + $0x1] sm:$0x3]
        %s385 = scalar_lea.vmem %s339, %s378
        %v386 = vld [vmem:[%s385] sm:$0x3]
        %s387 = scalar_lea.vmem %s344, %s378
        %v388 = vld [vmem:[%s387] sm:$0x3]
        %v389 = vld [vmem:[%s385 + $0x1] sm:$0x3]
        %v390 = vld [vmem:[%s387 + $0x1] sm:$0x3]
        %v391 = vld [vmem:[%s4] sm:$0xff]
        %v392 = vld [vmem:[%s4 + $0x8] sm:$0xff]
        %v393 = vld [vmem:[%s4 + $0x10] sm:$0xff]
        %v394 = vld [vmem:[%s4 + $0x18] sm:$0xff]
        %v395 = vld [vmem:[%s4 + $0x20] sm:$0xff]
        %v396 = vld [vmem:[%s4 + $0x28] sm:$0xff]
        %v397 = vld [vmem:[%s4 + $0x30] sm:$0xff]
        %v398 = vld [vmem:[%s4 + $0x38] sm:$0xff]
        %v399 = vld [vmem:[%s4 + $0x40] sm:$0xff]
        %v400 = vld [vmem:[%s4 + $0x48] sm:$0xff]
        %v401 = vld [vmem:[%s4 + $0x50] sm:$0xff]
        %v402 = vld [vmem:[%s4 + $0x58] sm:$0xff]
        %v403 = vld [vmem:[%s4 + $0x60] sm:$0xff]
        %v404 = vld [vmem:[%s4 + $0x68] sm:$0xff]
        %v405 = vld [vmem:[%s4 + $0x70] sm:$0xff]
        %v406 = vld [vmem:[%s4 + $0x78] sm:$0xff]
        %v407 = vld [vmem:[%s4 + $0x80] sm:$0xff]
        %v408 = vld [vmem:[%s4 + $0x88] sm:$0xff]
        %v409 = vld [vmem:[%s4 + $0x90] sm:$0xff]
        %v410 = vld [vmem:[%s4 + $0x98] sm:$0xff]
        %v411 = vld [vmem:[%s4 + $0xa0] sm:$0xff]
        %v412 = vld [vmem:[%s4 + $0xa8] sm:$0xff]
        %v413 = vld [vmem:[%s4 + $0xb0] sm:$0xff]
        %v414 = vld [vmem:[%s4 + $0xb8] sm:$0xff]
        %v415 = vld [vmem:[%s4 + $0xc0] sm:$0xff]
        %v416 = vld [vmem:[%s4 + $0xc8] sm:$0xff]
        %v417 = vld [vmem:[%s4 + $0xd0] sm:$0xff]
        %v418 = vld [vmem:[%s4 + $0xd8] sm:$0xff]
        %v419 = vld [vmem:[%s4 + $0xe0] sm:$0xff]
        %v420 = vld [vmem:[%s4 + $0xe8] sm:$0xff]
        %v421 = vld [vmem:[%s4 + $0xf0] sm:$0xff]
        %v422 = vld [vmem:[%s4 + $0xf8] sm:$0xff]
        %v423 = vld [vmem:[%s4 + $0x100] sm:$0xff]
        %v424 = vld [vmem:[%s4 + $0x108] sm:$0xff]
        %v425 = vld [vmem:[%s4 + $0x110] sm:$0xff]
        %v426 = vld [vmem:[%s4 + $0x118] sm:$0xff]
        %v427 = vld [vmem:[%s4 + $0x120] sm:$0xff]
        %v428 = vld [vmem:[%s4 + $0x128] sm:$0xff]
        %v429 = vld [vmem:[%s4 + $0x130] sm:$0xff]
        %v430 = vld [vmem:[%s4 + $0x138] sm:$0xff]
        %v431 = vld [vmem:[%s4 + $0x140] sm:$0xff]
        %v432 = vld [vmem:[%s4 + $0x148] sm:$0xff]
        %v433 = vld [vmem:[%s4 + $0x150] sm:$0xff]
        %v434 = vld [vmem:[%s4 + $0x158] sm:$0xff]
        %v435 = vld [vmem:[%s4 + $0x160] sm:$0xff]
        %v436 = vld [vmem:[%s4 + $0x168] sm:$0xff]
        %v437 = vld [vmem:[%s4 + $0x170] sm:$0xff]
        %v438 = vld [vmem:[%s4 + $0x178] sm:$0xff]
        %v439 = vld [vmem:[%s4 + $0x180] sm:$0xff]
        %v440 = vld [vmem:[%s4 + $0x188] sm:$0xff]
        %v441 = vld [vmem:[%s4 + $0x190] sm:$0xff]
        %v442 = vld [vmem:[%s4 + $0x198] sm:$0xff]
        %v443 = vld [vmem:[%s4 + $0x1a0] sm:$0xff]
        %v444 = vld [vmem:[%s4 + $0x1a8] sm:$0xff]
        %v445 = vld [vmem:[%s4 + $0x1b0] sm:$0xff]
        %v446 = vld [vmem:[%s4 + $0x1b8] sm:$0xff]
        %v447 = vld [vmem:[%s4 + $0x1c0] sm:$0xff]
        %v448 = vld [vmem:[%s4 + $0x1c8] sm:$0xff]
        %v449 = vld [vmem:[%s4 + $0x1d0] sm:$0xff]
        %v450 = vld [vmem:[%s4 + $0x1d8] sm:$0xff]
        %v451 = vld [vmem:[%s4 + $0x1e0] sm:$0xff]
        %v452 = vld [vmem:[%s4 + $0x1e8] sm:$0xff]
        %v453 = vld [vmem:[%s4 + $0x1f0] sm:$0xff]
        %v454 = vld [vmem:[%s4 + $0x1f8] sm:$0xff]
        %v455 = vld [vmem:[%s4 + $0x200] sm:$0xff]
        %v456 = vld [vmem:[%s4 + $0x208] sm:$0xff]
        %v457 = vld [vmem:[%s4 + $0x210] sm:$0xff]
        %v458 = vld [vmem:[%s4 + $0x218] sm:$0xff]
        %v459 = vld [vmem:[%s4 + $0x220] sm:$0xff]
        %v460 = vld [vmem:[%s4 + $0x228] sm:$0xff]
        %v461 = vld [vmem:[%s4 + $0x230] sm:$0xff]
        %v462 = vld [vmem:[%s4 + $0x238] sm:$0xff]
        %v463 = vld [vmem:[%s4 + $0x240] sm:$0xff]
        %v464 = vld [vmem:[%s4 + $0x248] sm:$0xff]
        %v465 = vld [vmem:[%s4 + $0x250] sm:$0xff]
        %v466 = vld [vmem:[%s4 + $0x258] sm:$0xff]
        %v467 = vld [vmem:[%s4 + $0x260] sm:$0xff]
        %v468 = vld [vmem:[%s4 + $0x268] sm:$0xff]
        %v469 = vld [vmem:[%s4 + $0x270] sm:$0xff]
        %v470 = vld [vmem:[%s4 + $0x278] sm:$0xff]
        %v471 = vld [vmem:[%s4 + $0x280] sm:$0xff]
        %v472 = vld [vmem:[%s4 + $0x288] sm:$0xff]
        %v473 = vld [vmem:[%s4 + $0x290] sm:$0xff]
        %v474 = vld [vmem:[%s4 + $0x298] sm:$0xff]
        %v475 = vld [vmem:[%s4 + $0x2a0] sm:$0xff]
        %v476 = vld [vmem:[%s4 + $0x2a8] sm:$0xff]
        %v477 = vld [vmem:[%s4 + $0x2b0] sm:$0xff]
        %v478 = vld [vmem:[%s4 + $0x2b8] sm:$0xff]
        %v479 = vld [vmem:[%s4 + $0x2c0] sm:$0xff]
        %v480 = vld [vmem:[%s4 + $0x2c8] sm:$0xff]
        %v481 = vld [vmem:[%s4 + $0x2d0] sm:$0xff]
        %v482 = vld [vmem:[%s4 + $0x2d8] sm:$0xff]
        %v483 = vld [vmem:[%s4 + $0x2e0] sm:$0xff]
        %v484 = vld [vmem:[%s4 + $0x2e8] sm:$0xff]
        %v485 = vld [vmem:[%s4 + $0x2f0] sm:$0xff]
        %v486 = vld [vmem:[%s4 + $0x2f8] sm:$0xff]
        %v487 = vld [vmem:[%s4 + $0x300] sm:$0xff]
        %v488 = vld [vmem:[%s4 + $0x308] sm:$0xff]
        %v489 = vld [vmem:[%s4 + $0x310] sm:$0xff]
        %v490 = vld [vmem:[%s4 + $0x318] sm:$0xff]
        %v491 = vld [vmem:[%s4 + $0x320] sm:$0xff]
        %v492 = vld [vmem:[%s4 + $0x328] sm:$0xff]
        %v493 = vld [vmem:[%s4 + $0x330] sm:$0xff]
        %v494 = vld [vmem:[%s4 + $0x338] sm:$0xff]
        %v495 = vld [vmem:[%s4 + $0x340] sm:$0xff]
        %v496 = vld [vmem:[%s4 + $0x348] sm:$0xff]
        %v497 = vld [vmem:[%s4 + $0x350] sm:$0xff]
        %v498 = vld [vmem:[%s4 + $0x358] sm:$0xff]
        %v499 = vld [vmem:[%s4 + $0x360] sm:$0xff]
        %v500 = vld [vmem:[%s4 + $0x368] sm:$0xff]
        %v501 = vld [vmem:[%s4 + $0x370] sm:$0xff]
        %v502 = vld [vmem:[%s4 + $0x378] sm:$0xff]
        %v503 = vld [vmem:[%s4 + $0x380] sm:$0xff]
        %v504 = vld [vmem:[%s4 + $0x388] sm:$0xff]
        %v505 = vld [vmem:[%s4 + $0x390] sm:$0xff]
        %v506 = vld [vmem:[%s4 + $0x398] sm:$0xff]
        %v507 = vld [vmem:[%s4 + $0x3a0] sm:$0xff]
        %v508 = vld [vmem:[%s4 + $0x3a8] sm:$0xff]
        %v509 = vld [vmem:[%s4 + $0x3b0] sm:$0xff]
        %v510 = vld [vmem:[%s4 + $0x3b8] sm:$0xff]
        %v511 = vld [vmem:[%s4 + $0x3c0] sm:$0xff]
        %v512 = vld [vmem:[%s4 + $0x3c8] sm:$0xff]
        %v513 = vld [vmem:[%s4 + $0x3d0] sm:$0xff]
        %v514 = vld [vmem:[%s4 + $0x3d8] sm:$0xff]
        %v515 = vld [vmem:[%s4 + $0x3e0] sm:$0xff]
        %v516 = vld [vmem:[%s4 + $0x3e8] sm:$0xff]
        %v517 = vld [vmem:[%s4 + $0x3f0] sm:$0xff]
        %v518 = vld [vmem:[%s4 + $0x3f8] sm:$0xff]
        %v519 = vld [vmem:[%s4 + $0x400] sm:$0xff]
        %v520 = vld [vmem:[%s4 + $0x408] sm:$0xff]
        %v521 = vld [vmem:[%s4 + $0x410] sm:$0xff]
        %v522 = vld [vmem:[%s4 + $0x418] sm:$0xff]
        %v523 = vld [vmem:[%s4 + $0x420] sm:$0xff]
        %v524 = vld [vmem:[%s4 + $0x428] sm:$0xff]
        %v525 = vld [vmem:[%s4 + $0x430] sm:$0xff]
        %v526 = vld [vmem:[%s4 + $0x438] sm:$0xff]
        %v527 = vld [vmem:[%s4 + $0x440] sm:$0xff]
        %v528 = vld [vmem:[%s4 + $0x448] sm:$0xff]
        %v529 = vld [vmem:[%s4 + $0x450] sm:$0xff]
        %v530 = vld [vmem:[%s4 + $0x458] sm:$0xff]
        %v531 = vld [vmem:[%s4 + $0x460] sm:$0xff]
        %v532 = vld [vmem:[%s4 + $0x468] sm:$0xff]
        %v533 = vld [vmem:[%s4 + $0x470] sm:$0xff]
        %v534 = vld [vmem:[%s4 + $0x478] sm:$0xff]
        %v535 = vld [vmem:[%s4 + $0x480] sm:$0xff]
        %v536 = vld [vmem:[%s4 + $0x488] sm:$0xff]
        %v537 = vld [vmem:[%s4 + $0x490] sm:$0xff]
        %v538 = vld [vmem:[%s4 + $0x498] sm:$0xff]
        %v539 = vld [vmem:[%s4 + $0x4a0] sm:$0xff]
        %v540 = vld [vmem:[%s4 + $0x4a8] sm:$0xff]
        %v541 = vld [vmem:[%s4 + $0x4b0] sm:$0xff]
        %v542 = vld [vmem:[%s4 + $0x4b8] sm:$0xff]
        %v543 = vld [vmem:[%s4 + $0x4c0] sm:$0xff]
        %v544 = vld [vmem:[%s4 + $0x4c8] sm:$0xff]
        %v545 = vld [vmem:[%s4 + $0x4d0] sm:$0xff]
        %v546 = vld [vmem:[%s4 + $0x4d8] sm:$0xff]
        %v547 = vld [vmem:[%s4 + $0x4e0] sm:$0xff]
        %v548 = vld [vmem:[%s4 + $0x4e8] sm:$0xff]
        %v549 = vld [vmem:[%s4 + $0x4f0] sm:$0xff]
        %v550 = vld [vmem:[%s4 + $0x4f8] sm:$0xff]
        %v551 = vld [vmem:[%s4 + $0x500] sm:$0xff]
        %v552 = vld [vmem:[%s4 + $0x508] sm:$0xff]
        %v553 = vld [vmem:[%s4 + $0x510] sm:$0xff]
        %v554 = vld [vmem:[%s4 + $0x518] sm:$0xff]
        %v555 = vld [vmem:[%s4 + $0x520] sm:$0xff]
        %v556 = vld [vmem:[%s4 + $0x528] sm:$0xff]
        %v557 = vld [vmem:[%s4 + $0x530] sm:$0xff]
        %v558 = vld [vmem:[%s4 + $0x538] sm:$0xff]
        %v559 = vld [vmem:[%s4 + $0x540] sm:$0xff]
        %v560 = vld [vmem:[%s4 + $0x548] sm:$0xff]
        %v561 = vld [vmem:[%s4 + $0x550] sm:$0xff]
        %v562 = vld [vmem:[%s4 + $0x558] sm:$0xff]
        %v563 = vld [vmem:[%s4 + $0x560] sm:$0xff]
        %v564 = vld [vmem:[%s4 + $0x568] sm:$0xff]
        %v565 = vld [vmem:[%s4 + $0x570] sm:$0xff]
        %v566 = vld [vmem:[%s4 + $0x578] sm:$0xff]
        %v567 = vld [vmem:[%s4 + $0x580] sm:$0xff]
        %v568 = vld [vmem:[%s4 + $0x588] sm:$0xff]
        %v569 = vld [vmem:[%s4 + $0x590] sm:$0xff]
        %v570 = vld [vmem:[%s4 + $0x598] sm:$0xff]
        %v571 = vld [vmem:[%s4 + $0x5a0] sm:$0xff]
        %v572 = vld [vmem:[%s4 + $0x5a8] sm:$0xff]
        %v573 = vld [vmem:[%s4 + $0x5b0] sm:$0xff]
        %v574 = vld [vmem:[%s4 + $0x5b8] sm:$0xff]
        %v575 = vld [vmem:[%s4 + $0x5c0] sm:$0xff]
        %v576 = vld [vmem:[%s4 + $0x5c8] sm:$0xff]
        %v577 = vld [vmem:[%s4 + $0x5d0] sm:$0xff]
        %v578 = vld [vmem:[%s4 + $0x5d8] sm:$0xff]
        %v579 = vld [vmem:[%s4 + $0x5e0] sm:$0xff]
        %v580 = vld [vmem:[%s4 + $0x5e8] sm:$0xff]
        %v581 = vld [vmem:[%s4 + $0x5f0] sm:$0xff]
        %v582 = vld [vmem:[%s4 + $0x5f8] sm:$0xff]
        %v583 = vld [vmem:[%s4 + $0x600] sm:$0xff]
        %v584 = vld [vmem:[%s4 + $0x608] sm:$0xff]
        %v585 = vld [vmem:[%s4 + $0x610] sm:$0xff]
        %v586 = vld [vmem:[%s4 + $0x618] sm:$0xff]
        %v587 = vld [vmem:[%s4 + $0x620] sm:$0xff]
        %v588 = vld [vmem:[%s4 + $0x628] sm:$0xff]
        %v589 = vld [vmem:[%s4 + $0x630] sm:$0xff]
        %v590 = vld [vmem:[%s4 + $0x638] sm:$0xff]
        %v591 = vld [vmem:[%s4 + $0x640] sm:$0xff]
        %v592 = vld [vmem:[%s4 + $0x648] sm:$0xff]
        %v593 = vld [vmem:[%s4 + $0x650] sm:$0xff]
        %v594 = vld [vmem:[%s4 + $0x658] sm:$0xff]
        %v595 = vld [vmem:[%s4 + $0x660] sm:$0xff]
        %v596 = vld [vmem:[%s4 + $0x668] sm:$0xff]
        %v597 = vld [vmem:[%s4 + $0x670] sm:$0xff]
        %v598 = vld [vmem:[%s4 + $0x678] sm:$0xff]
        %v599 = vld [vmem:[%s4 + $0x680] sm:$0xff]
        %v600 = vld [vmem:[%s4 + $0x688] sm:$0xff]
        %v601 = vld [vmem:[%s4 + $0x690] sm:$0xff]
        %v602 = vld [vmem:[%s4 + $0x698] sm:$0xff]
        %v603 = vld [vmem:[%s4 + $0x6a0] sm:$0xff]
        %v604 = vld [vmem:[%s4 + $0x6a8] sm:$0xff]
        %v605 = vld [vmem:[%s4 + $0x6b0] sm:$0xff]
        %v606 = vld [vmem:[%s4 + $0x6b8] sm:$0xff]
        %v607 = vld [vmem:[%s4 + $0x6c0] sm:$0xff]
        %v608 = vld [vmem:[%s4 + $0x6c8] sm:$0xff]
        %v609 = vld [vmem:[%s4 + $0x6d0] sm:$0xff]
        %v610 = vld [vmem:[%s4 + $0x6d8] sm:$0xff]
        %v611 = vld [vmem:[%s4 + $0x6e0] sm:$0xff]
        %v612 = vld [vmem:[%s4 + $0x6e8] sm:$0xff]
        %v613 = vld [vmem:[%s4 + $0x6f0] sm:$0xff]
        %v614 = vld [vmem:[%s4 + $0x6f8] sm:$0xff]
        %v615 = vld [vmem:[%s4 + $0x700] sm:$0xff]
        %v616 = vld [vmem:[%s4 + $0x708] sm:$0xff]
        %v617 = vld [vmem:[%s4 + $0x710] sm:$0xff]
        %v618 = vld [vmem:[%s4 + $0x718] sm:$0xff]
        %v619 = vld [vmem:[%s4 + $0x720] sm:$0xff]
        %v620 = vld [vmem:[%s4 + $0x728] sm:$0xff]
        %v621 = vld [vmem:[%s4 + $0x730] sm:$0xff]
        %v622 = vld [vmem:[%s4 + $0x738] sm:$0xff]
        %v623 = vld [vmem:[%s4 + $0x740] sm:$0xff]
        %v624 = vld [vmem:[%s4 + $0x748] sm:$0xff]
        %v625 = vld [vmem:[%s4 + $0x750] sm:$0xff]
        %v626 = vld [vmem:[%s4 + $0x758] sm:$0xff]
        %v627 = vld [vmem:[%s4 + $0x760] sm:$0xff]
        %v628 = vld [vmem:[%s4 + $0x768] sm:$0xff]
        %v629 = vld [vmem:[%s4 + $0x770] sm:$0xff]
        %v630 = vld [vmem:[%s4 + $0x778] sm:$0xff]
        %v631 = vld [vmem:[%s4 + $0x780] sm:$0xff]
        %v632 = vld [vmem:[%s4 + $0x788] sm:$0xff]
        %v633 = vld [vmem:[%s4 + $0x790] sm:$0xff]
        %v634 = vld [vmem:[%s4 + $0x798] sm:$0xff]
        %v635 = vld [vmem:[%s4 + $0x7a0] sm:$0xff]
        %v636 = vld [vmem:[%s4 + $0x7a8] sm:$0xff]
        %v637 = vld [vmem:[%s4 + $0x7b0] sm:$0xff]
        %v638 = vld [vmem:[%s4 + $0x7b8] sm:$0xff]
        %v639 = vld [vmem:[%s4 + $0x7c0] sm:$0xff]
        %v640 = vld [vmem:[%s4 + $0x7c8] sm:$0xff]
        %v641 = vld [vmem:[%s4 + $0x7d0] sm:$0xff]
        %v642 = vld [vmem:[%s4 + $0x7d8] sm:$0xff]
        %v643 = vld [vmem:[%s4 + $0x7e0] sm:$0xff]
        %v644 = vld [vmem:[%s4 + $0x7e8] sm:$0xff]
        %v645 = vld [vmem:[%s4 + $0x7f0] sm:$0xff]
        %v646 = vld [vmem:[%s4 + $0x7f8] sm:$0xff]
        %647 = vmatpush.msra.mxu0 %v406
        %648 = vmatpush.msra.mxu0 %v405
        %649 = vmatpush.msra.mxu0 %v404
        %650 = vmatpush.msra.mxu0 %v403
        %651 = vmatpush.msra.mxu0 %v402
        %652 = vmatpush.msra.mxu0 %v401
        %653 = vmatpush.msra.mxu0 %v400
        %654 = vmatpush.msra.mxu0 %v399
        %655 = vmatpush.msra.mxu0 %v398
        %656 = vmatpush.msra.mxu0 %v397
        %657 = vmatpush.msra.mxu0 %v396
        %658 = vmatpush.msra.mxu0 %v395
        %659 = vmatpush.msra.mxu0 %v394
        %660 = vmatpush.msra.mxu0 %v393
        %661 = vmatpush.msra.mxu0 %v392
        %662 = vmatpush.msra.mxu0 %v391
        %663 = vmatmul.f32.gmra.mxu0 %v366
        %v664 = vpop.f32.mrf.mxu0
        %v665 = vadd.f32 0.0, %v664
        %666 = vdwg.mxu0
        %667 = vmatpush.msra.mxu0 %v422
        %668 = vmatpush.msra.mxu0 %v421
        %669 = vmatpush.msra.mxu0 %v420
        %670 = vmatpush.msra.mxu0 %v419
        %671 = vmatpush.msra.mxu0 %v418
        %672 = vmatpush.msra.mxu0 %v417
        %673 = vmatpush.msra.mxu0 %v416
        %674 = vmatpush.msra.mxu0 %v415
        %675 = vmatpush.msra.mxu0 %v414
        %676 = vmatpush.msra.mxu0 %v413
        %677 = vmatpush.msra.mxu0 %v412
        %678 = vmatpush.msra.mxu0 %v411
        %679 = vmatpush.msra.mxu0 %v410
        %680 = vmatpush.msra.mxu0 %v409
        %681 = vmatpush.msra.mxu0 %v408
        %682 = vmatpush.msra.mxu0 %v407
        %683 = vmatmul.f32.gmra.mxu0 %v368
        %v684 = vpop.f32.mrf.mxu0
        %v685 = vadd.f32 %v665, %v684
        %686 = vdwg.mxu0
        %687 = vmatpush.msra.mxu0 %v438
        %688 = vmatpush.msra.mxu0 %v437
        %689 = vmatpush.msra.mxu0 %v436
        %690 = vmatpush.msra.mxu0 %v435
        %691 = vmatpush.msra.mxu0 %v434
        %692 = vmatpush.msra.mxu0 %v433
        %693 = vmatpush.msra.mxu0 %v432
        %694 = vmatpush.msra.mxu0 %v431
        %695 = vmatpush.msra.mxu0 %v430
        %696 = vmatpush.msra.mxu0 %v429
        %697 = vmatpush.msra.mxu0 %v428
        %698 = vmatpush.msra.mxu0 %v427
        %699 = vmatpush.msra.mxu0 %v426
        %700 = vmatpush.msra.mxu0 %v425
        %701 = vmatpush.msra.mxu0 %v424
        %702 = vmatpush.msra.mxu0 %v423
        %703 = vmatmul.f32.gmra.mxu0 %v369
        %v704 = vpop.f32.mrf.mxu0
        %v705 = vadd.f32 %v685, %v704
        %706 = vdwg.mxu0
        %707 = vmatpush.msra.mxu0 %v454
        %708 = vmatpush.msra.mxu0 %v453
        %709 = vmatpush.msra.mxu0 %v452
        %710 = vmatpush.msra.mxu0 %v451
        %711 = vmatpush.msra.mxu0 %v450
        %712 = vmatpush.msra.mxu0 %v449
        %713 = vmatpush.msra.mxu0 %v448
        %714 = vmatpush.msra.mxu0 %v447
        %715 = vmatpush.msra.mxu0 %v446
        %716 = vmatpush.msra.mxu0 %v445
        %717 = vmatpush.msra.mxu0 %v444
        %718 = vmatpush.msra.mxu0 %v443
        %719 = vmatpush.msra.mxu0 %v442
        %720 = vmatpush.msra.mxu0 %v441
        %721 = vmatpush.msra.mxu0 %v440
        %722 = vmatpush.msra.mxu0 %v439
        %723 = vmatmul.f32.gmra.mxu0 %v370
        %v724 = vpop.f32.mrf.mxu0
        %v725 = vadd.f32 %v705, %v724
        %726 = vdwg.mxu0
        %727 = vmatpush.msra.mxu0 %v470
        %728 = vmatpush.msra.mxu0 %v469
        %729 = vmatpush.msra.mxu0 %v468
        %730 = vmatpush.msra.mxu0 %v467
        %731 = vmatpush.msra.mxu0 %v466
        %732 = vmatpush.msra.mxu0 %v465
        %733 = vmatpush.msra.mxu0 %v464
        %734 = vmatpush.msra.mxu0 %v463
        %735 = vmatpush.msra.mxu0 %v462
        %736 = vmatpush.msra.mxu0 %v461
        %737 = vmatpush.msra.mxu0 %v460
        %738 = vmatpush.msra.mxu0 %v459
        %739 = vmatpush.msra.mxu0 %v458
        %740 = vmatpush.msra.mxu0 %v457
        %741 = vmatpush.msra.mxu0 %v456
        %742 = vmatpush.msra.mxu0 %v455
        %743 = vmatmul.f32.gmra.mxu0 %v372
        %v744 = vpop.f32.mrf.mxu0
        %v745 = vadd.f32 %v725, %v744
        %746 = vdwg.mxu0
        %747 = vmatpush.msra.mxu0 %v486
        %748 = vmatpush.msra.mxu0 %v485
        %749 = vmatpush.msra.mxu0 %v484
        %750 = vmatpush.msra.mxu0 %v483
        %751 = vmatpush.msra.mxu0 %v482
        %752 = vmatpush.msra.mxu0 %v481
        %753 = vmatpush.msra.mxu0 %v480
        %754 = vmatpush.msra.mxu0 %v479
        %755 = vmatpush.msra.mxu0 %v478
        %756 = vmatpush.msra.mxu0 %v477
        %757 = vmatpush.msra.mxu0 %v476
        %758 = vmatpush.msra.mxu0 %v475
        %759 = vmatpush.msra.mxu0 %v474
        %760 = vmatpush.msra.mxu0 %v473
        %761 = vmatpush.msra.mxu0 %v472
        %762 = vmatpush.msra.mxu0 %v471
        %763 = vmatmul.f32.gmra.mxu0 %v374
        %v764 = vpop.f32.mrf.mxu0
        %v765 = vadd.f32 %v745, %v764
        %766 = vdwg.mxu0
        %767 = vmatpush.msra.mxu0 %v502
        %768 = vmatpush.msra.mxu0 %v501
        %769 = vmatpush.msra.mxu0 %v500
        %770 = vmatpush.msra.mxu0 %v499
        %771 = vmatpush.msra.mxu0 %v498
        %772 = vmatpush.msra.mxu0 %v497
        %773 = vmatpush.msra.mxu0 %v496
        %774 = vmatpush.msra.mxu0 %v495
        %775 = vmatpush.msra.mxu0 %v494
        %776 = vmatpush.msra.mxu0 %v493
        %777 = vmatpush.msra.mxu0 %v492
        %778 = vmatpush.msra.mxu0 %v491
        %779 = vmatpush.msra.mxu0 %v490
        %780 = vmatpush.msra.mxu0 %v489
        %781 = vmatpush.msra.mxu0 %v488
        %782 = vmatpush.msra.mxu0 %v487
        %783 = vmatmul.f32.gmra.mxu0 %v375
        %v784 = vpop.f32.mrf.mxu0
        %v785 = vadd.f32 %v765, %v784
        %786 = vdwg.mxu0
        %787 = vmatpush.msra.mxu0 %v518
        %788 = vmatpush.msra.mxu0 %v517
        %789 = vmatpush.msra.mxu0 %v516
        %790 = vmatpush.msra.mxu0 %v515
        %791 = vmatpush.msra.mxu0 %v514
        %792 = vmatpush.msra.mxu0 %v513
        %793 = vmatpush.msra.mxu0 %v512
        %794 = vmatpush.msra.mxu0 %v511
        %795 = vmatpush.msra.mxu0 %v510
        %796 = vmatpush.msra.mxu0 %v509
        %797 = vmatpush.msra.mxu0 %v508
        %798 = vmatpush.msra.mxu0 %v507
        %799 = vmatpush.msra.mxu0 %v506
        %800 = vmatpush.msra.mxu0 %v505
        %801 = vmatpush.msra.mxu0 %v504
        %802 = vmatpush.msra.mxu0 %v503
        %803 = vmatmul.f32.gmra.mxu0 %v376
        %v804 = vpop.f32.mrf.mxu0
        %v805 = vadd.f32 %v785, %v804
        %806 = vdwg.mxu0
        %807 = vmatpush.msra.mxu0 %v534
        %808 = vmatpush.msra.mxu0 %v533
        %809 = vmatpush.msra.mxu0 %v532
        %810 = vmatpush.msra.mxu0 %v531
        %811 = vmatpush.msra.mxu0 %v530
        %812 = vmatpush.msra.mxu0 %v529
        %813 = vmatpush.msra.mxu0 %v528
        %814 = vmatpush.msra.mxu0 %v527
        %815 = vmatpush.msra.mxu0 %v526
        %816 = vmatpush.msra.mxu0 %v525
        %817 = vmatpush.msra.mxu0 %v524
        %818 = vmatpush.msra.mxu0 %v523
        %819 = vmatpush.msra.mxu0 %v522
        %820 = vmatpush.msra.mxu0 %v521
        %821 = vmatpush.msra.mxu0 %v520
        %822 = vmatpush.msra.mxu0 %v519
        %823 = vmatmul.f32.gmra.mxu0 %v380
        %v824 = vpop.f32.mrf.mxu0
        %v825 = vadd.f32 %v805, %v824
        %826 = vdwg.mxu0
        %827 = vmatpush.msra.mxu0 %v550
        %828 = vmatpush.msra.mxu0 %v549
        %829 = vmatpush.msra.mxu0 %v548
        %830 = vmatpush.msra.mxu0 %v547
        %831 = vmatpush.msra.mxu0 %v546
        %832 = vmatpush.msra.mxu0 %v545
        %833 = vmatpush.msra.mxu0 %v544
        %834 = vmatpush.msra.mxu0 %v543
        %835 = vmatpush.msra.mxu0 %v542
        %836 = vmatpush.msra.mxu0 %v541
        %837 = vmatpush.msra.mxu0 %v540
        %838 = vmatpush.msra.mxu0 %v539
        %839 = vmatpush.msra.mxu0 %v538
        %840 = vmatpush.msra.mxu0 %v537
        %841 = vmatpush.msra.mxu0 %v536
        %842 = vmatpush.msra.mxu0 %v535
        %843 = vmatmul.f32.gmra.mxu0 %v382
        %v844 = vpop.f32.mrf.mxu0
        %v845 = vadd.f32 %v825, %v844
        %846 = vdwg.mxu0
        %847 = vmatpush.msra.mxu0 %v566
        %848 = vmatpush.msra.mxu0 %v565
        %849 = vmatpush.msra.mxu0 %v564
        %850 = vmatpush.msra.mxu0 %v563
        %851 = vmatpush.msra.mxu0 %v562
        %852 = vmatpush.msra.mxu0 %v561
        %853 = vmatpush.msra.mxu0 %v560
        %854 = vmatpush.msra.mxu0 %v559
        %855 = vmatpush.msra.mxu0 %v558
        %856 = vmatpush.msra.mxu0 %v557
        %857 = vmatpush.msra.mxu0 %v556
        %858 = vmatpush.msra.mxu0 %v555
        %859 = vmatpush.msra.mxu0 %v554
        %860 = vmatpush.msra.mxu0 %v553
        %861 = vmatpush.msra.mxu0 %v552
        %862 = vmatpush.msra.mxu0 %v551
        %863 = vmatmul.f32.gmra.mxu0 %v383
        %v864 = vpop.f32.mrf.mxu0
        %v865 = vadd.f32 %v845, %v864
        %866 = vdwg.mxu0
        %867 = vmatpush.msra.mxu0 %v582
        %868 = vmatpush.msra.mxu0 %v581
        %869 = vmatpush.msra.mxu0 %v580
        %870 = vmatpush.msra.mxu0 %v579
        %871 = vmatpush.msra.mxu0 %v578
        %872 = vmatpush.msra.mxu0 %v577
        %873 = vmatpush.msra.mxu0 %v576
        %874 = vmatpush.msra.mxu0 %v575
        %875 = vmatpush.msra.mxu0 %v574
        %876 = vmatpush.msra.mxu0 %v573
        %877 = vmatpush.msra.mxu0 %v572
        %878 = vmatpush.msra.mxu0 %v571
        %879 = vmatpush.msra.mxu0 %v570
        %880 = vmatpush.msra.mxu0 %v569
        %881 = vmatpush.msra.mxu0 %v568
        %882 = vmatpush.msra.mxu0 %v567
        %883 = vmatmul.f32.gmra.mxu0 %v384
        %v884 = vpop.f32.mrf.mxu0
        %v885 = vadd.f32 %v865, %v884
        %886 = vdwg.mxu0
        %887 = vmatpush.msra.mxu0 %v598
        %888 = vmatpush.msra.mxu0 %v597
        %889 = vmatpush.msra.mxu0 %v596
        %890 = vmatpush.msra.mxu0 %v595
        %891 = vmatpush.msra.mxu0 %v594
        %892 = vmatpush.msra.mxu0 %v593
        %893 = vmatpush.msra.mxu0 %v592
        %894 = vmatpush.msra.mxu0 %v591
        %895 = vmatpush.msra.mxu0 %v590
        %896 = vmatpush.msra.mxu0 %v589
        %897 = vmatpush.msra.mxu0 %v588
        %898 = vmatpush.msra.mxu0 %v587
        %899 = vmatpush.msra.mxu0 %v586
        %900 = vmatpush.msra.mxu0 %v585
        %901 = vmatpush.msra.mxu0 %v584
        %902 = vmatpush.msra.mxu0 %v583
        %903 = vmatmul.f32.gmra.mxu0 %v386
        %v904 = vpop.f32.mrf.mxu0
        %v905 = vadd.f32 %v885, %v904
        %906 = vdwg.mxu0
        %907 = vmatpush.msra.mxu0 %v614
        %908 = vmatpush.msra.mxu0 %v613
        %909 = vmatpush.msra.mxu0 %v612
        %910 = vmatpush.msra.mxu0 %v611
        %911 = vmatpush.msra.mxu0 %v610
        %912 = vmatpush.msra.mxu0 %v609
        %913 = vmatpush.msra.mxu0 %v608
        %914 = vmatpush.msra.mxu0 %v607
        %915 = vmatpush.msra.mxu0 %v606
        %916 = vmatpush.msra.mxu0 %v605
        %917 = vmatpush.msra.mxu0 %v604
        %918 = vmatpush.msra.mxu0 %v603
        %919 = vmatpush.msra.mxu0 %v602
        %920 = vmatpush.msra.mxu0 %v601
        %921 = vmatpush.msra.mxu0 %v600
        %922 = vmatpush.msra.mxu0 %v599
        %923 = vmatmul.f32.gmra.mxu0 %v388
        %v924 = vpop.f32.mrf.mxu0
        %v925 = vadd.f32 %v905, %v924
        %926 = vdwg.mxu0
        %927 = vmatpush.msra.mxu0 %v630
        %928 = vmatpush.msra.mxu0 %v629
        %929 = vmatpush.msra.mxu0 %v628
        %930 = vmatpush.msra.mxu0 %v627
        %931 = vmatpush.msra.mxu0 %v626
        %932 = vmatpush.msra.mxu0 %v625
        %933 = vmatpush.msra.mxu0 %v624
        %934 = vmatpush.msra.mxu0 %v623
        %935 = vmatpush.msra.mxu0 %v622
        %936 = vmatpush.msra.mxu0 %v621
        %937 = vmatpush.msra.mxu0 %v620
        %938 = vmatpush.msra.mxu0 %v619
        %939 = vmatpush.msra.mxu0 %v618
        %940 = vmatpush.msra.mxu0 %v617
        %941 = vmatpush.msra.mxu0 %v616
        %942 = vmatpush.msra.mxu0 %v615
        %943 = vmatmul.f32.gmra.mxu0 %v389
        %v944 = vpop.f32.mrf.mxu0
        %v945 = vadd.f32 %v925, %v944
        %946 = vdwg.mxu0
        %947 = vmatpush.msra.mxu0 %v646
        %948 = vmatpush.msra.mxu0 %v645
        %949 = vmatpush.msra.mxu0 %v644
        %950 = vmatpush.msra.mxu0 %v643
        %951 = vmatpush.msra.mxu0 %v642
        %952 = vmatpush.msra.mxu0 %v641
        %953 = vmatpush.msra.mxu0 %v640
        %954 = vmatpush.msra.mxu0 %v639
        %955 = vmatpush.msra.mxu0 %v638
        %956 = vmatpush.msra.mxu0 %v637
        %957 = vmatpush.msra.mxu0 %v636
        %958 = vmatpush.msra.mxu0 %v635
        %959 = vmatpush.msra.mxu0 %v634
        %960 = vmatpush.msra.mxu0 %v633
        %961 = vmatpush.msra.mxu0 %v632
        %962 = vmatpush.msra.mxu0 %v631
        %963 = vmatmul.f32.gmra.mxu0 %v390
        %v964 = vpop.f32.mrf.mxu0
        %v965 = vadd.f32 %v945, %v964
        %966 = vdwg.mxu0
        %s967 = smul.u32 %s357, 2
        %s968 = scalar_lea.vmem %s349, %s967
        %969 = vst [vmem:[%s968] sm:$0x3] %v965
        %vm970 = vcmask 1041408
        %v971 = vsel %vm970, %v965, 0.0
        %v972 = vrot.slane %v971, 4
        %v973 = vadd.f32 %v971, %v972
        %v974 = vrot.slane %v973, 2
        %v975 = vadd.f32 %v973, %v974
        %v976 = vrot.slane %v975, 1
        %v977 = vadd.f32 %v975, %v976
        %v978 = vadd.f32 %v362, %v977
        %v979 = vmul.f32 %v965, %v965
        %v980 = vsel %vm970, %v979, 0.0
        %v981 = vrot.slane %v980, 4
        %v982 = vadd.f32 %v980, %v981
        %v983 = vrot.slane %v982, 2
        %v984 = vadd.f32 %v982, %v983
        %v985 = vrot.slane %v984, 1
        %v986 = vadd.f32 %v984, %v985
        %v987 = vadd.f32 %v363, %v986
      $region45: #{discriminator_forward.8} parent=39 // loop_footer
        %s361 = sadd.s32 1, %s357
      $region46: #{discriminator_forward.8} parent=39 // loop_footer_branch
        %356 = sbr.rel target = $region42
      $region47: #{discriminator_forward.8} parent=39 // loop_exit
        _
      %988 = vst [vmem:[%s352] sm:$0x1] %v362
      %989 = vst [vmem:[%s355] sm:$0x1] %v363
      %p990 = scmp.lt.s32.totalorder %s19, 1
      %s991 = scalar_select %p990, %s19, 1
      %s992 = smul.addr %s991, 2
      %s993 = smul.addr %s992, 2
      %s994 = scalar_lea.vmem %s5, %s993
      %p995 = scmp.lt.s32.totalorder %s19, 1
      %s996 = scalar_select %p995, %s19, 1
      %s997 = scalar_lea.vmem %s6, %s996
      %p998 = scmp.lt.s32.totalorder %s19, 1
      %s999 = scalar_select %p998, %s19, 1
      %s1000 = scalar_lea.vmem %s7, %s999
      // Predicated region
      $region48: #{discriminator_forward.8} parent=39 // pred_check
        %p1001 = pneg %p162
      $region49: #{discriminator_forward.8} parent=39 // pred_check_branch
        %1003 = sbr.rel (%p1001) target = $region51
      $region50: #{discriminator_forward.8} parent=39 // pred_region
        _
      $region51: #{discriminator_forward.8} parent=39 // pred_fallthru
        _
      // Predicated region
      $region52: #{discriminator_forward.8} parent=39 // pred_check
        %p1004 = pneg %p188
      $region53: #{discriminator_forward.8} parent=39 // pred_check_branch
        %1006 = sbr.rel (%p1004) target = $region55
      $region54: #{discriminator_forward.8} parent=39 // pred_region
        _
      $region55: #{discriminator_forward.8} parent=39 // pred_fallthru
        _
      // Predicated region
      $region56: #{discriminator_forward.8} parent=39 // pred_check
        %p1007 = pneg %p214
      $region57: #{discriminator_forward.8} parent=39 // pred_check_branch
        %1009 = sbr.rel (%p1007) target = $region59
      $region58: #{discriminator_forward.8} parent=39 // pred_region
        _
      $region59: #{discriminator_forward.8} parent=39 // pred_fallthru
        _
    $region40: #{discriminator_forward.8} parent=5 // pred_fallthru
      _
    %p1010 = scmp.le.s32.totalorder 2, %s14
    // Predicated region
    $region60: #{discriminator_forward.8} parent=5 // pred_check
      %p1011 = pneg %p1010
    $region61: #{discriminator_forward.8} parent=5 // pred_check_branch
      %1013 = sbr.rel (%p1011) target = $region63
    $region62: #{discriminator_forward.8} parent=5 // pred_region
      %s1014 = ssub.s32 %s14, 2
      // Predicated region
      $region64: #{discriminator_forward.8} parent=62 // pred_check
        %p1015 = pneg %p168
      $region65: #{discriminator_forward.8} parent=62 // pred_check_branch
        %1017 = sbr.rel (%p1015) target = $region67
      $region66: #{discriminator_forward.8} parent=62 // pred_region
        %p1018 = scmp.lt.s32.totalorder %s20, 1
        %s1019 = scalar_select %p1018, %s20, 1
        %s1020 = smul.addr %s1019, 2
        %s1021 = smul.addr %s1020, 2
        %s1022 = scalar_lea.vmem %s5, %s1021
      $region67: #{discriminator_forward.8} parent=62 // pred_fallthru
        _
      // Predicated region
      $region68: #{discriminator_forward.8} parent=62 // pred_check
        %p1023 = pneg %p194
      $region69: #{discriminator_forward.8} parent=62 // pred_check_branch
        %1025 = sbr.rel (%p1023) target = $region71
      $region70: #{discriminator_forward.8} parent=62 // pred_region
        %p1026 = scmp.lt.s32.totalorder %s20, 1
        %s1027 = scalar_select %p1026, %s20, 1
        %s1028 = scalar_lea.vmem %s6, %s1027
      $region71: #{discriminator_forward.8} parent=62 // pred_fallthru
        _
      // Predicated region
      $region72: #{discriminator_forward.8} parent=62 // pred_check
        %p1029 = pneg %p220
      $region73: #{discriminator_forward.8} parent=62 // pred_check_branch
        %1031 = sbr.rel (%p1029) target = $region75
      $region74: #{discriminator_forward.8} parent=62 // pred_region
        %p1032 = scmp.lt.s32.totalorder %s20, 1
        %s1033 = scalar_select %p1032, %s20, 1
        %s1034 = scalar_lea.vmem %s7, %s1033
      $region75: #{discriminator_forward.8} parent=62 // pred_fallthru
        _
    $region63: #{discriminator_forward.8} parent=5 // pred_fallthru
      _
  $region6: #{discriminator_forward.8} parent=0 // loop_footer
    %s18 = sadd.s32 1, %s14
  $region7: #{discriminator_forward.8} parent=0 // loop_footer_branch
    %13 = sbr.rel target = $region3
  $region8: #{discriminator_forward.8} parent=0 // loop_exit
    _

// kernel: discriminator_forward.9
$region0: #{discriminator_forward.9}
  #allocation0 [shape = 'u32[]', space=smem, size = 0x4, offset = 0x4, fixed_abs, tag = 'smem constant byte address 0x4 - core index']
  #allocation1 [shape = 'u32[72,128]{1,0:T(1,128)}', space=vmem, size = 0x9000, scoped, tag = 'internal scratch']
  %s0 = inlined_call_operand.vmem [shape: f32[2,4,4,128], index: 0, kind: input, shape index: {}]
  %s1 = inlined_call_operand.vmem [shape: f32[2048,128], index: 1, kind: input, shape index: {}]
  %s2 = inlined_call_operand.vmem [shape: f32[2,1,1,128], index: 2, kind: output, shape index: {0}]
  %s3 = inlined_call_operand.hbm [shape: f32[2,1,128], index: 3, kind: output, shape index: {1}]
  %s4 = inlined_call_operand.hbm [shape: f32[2,1,128], index: 4, kind: output, shape index: {2}]
  %5 = xla_tuple %s2, %s3, %s4
  %s6 = sld [smem:[#allocation0]]
  $region57: #{discriminator_forward.9} parent=0
    _
  %s8 = ssub.s32 1, %s6
  %s9 = scalar_select 0, %s8, %s6
  $region1: #{discriminator_forward.9} parent=0
    #allocation2 [shape = 'u8[1024]{0}', space=vmem, size = 0x400, scoped, tag = 'output window, operand 1']
    #allocation3 [shape = 's32[2]{0}', space=sflag, size = 0x8, scoped, tag = 'scoped memory for discriminator_forward.9']
    #allocation4 [shape = 'u8[1024]{0}', space=vmem, size = 0x400, scoped, tag = 'output window, operand 2']
    #allocation5 [shape = 's32[2]{0}', space=sflag, size = 0x8, scoped, tag = 'scoped memory for discriminator_forward.9']
    %10 = vsyncpa [#allocation3], 0
    %s11 = scalar_lea.sflag [#allocation3], 1
    %12 = vsyncpa %s11, 0
    %13 = vsyncpa [#allocation5], 0
    %s14 = scalar_lea.sflag [#allocation5], 1
    %15 = vsyncpa %s14, 0
    loop: start=0, step=1, limit=4
    $region2: #{discriminator_forward.9} parent=1 // loop_pre_header
      _
    $region3: #{discriminator_forward.9} parent=1 // loop_header
      %s17 = sphi 0, %s21
      %p18 = scmp.ge.s32.totalorder %s17, 4
      %s27 = sphi 0, %s29
      %s30 = sphi 0, %s27
      %s31 = sphi 0, %s30
      %s47 = sphi 0, %s31
      %s51 = sphi 0, %s51
      %s53 = sphi 0, %s51
      %s54 = sphi 0, %s53
      %s68 = sphi 0, %s54
      %s74 = sphi 0, %s76
      %s77 = sphi 0, %s74
      %s78 = sphi 0, %s77
      %s94 = sphi 0, %s78
      %s100 = sphi 0, %s102
      %s103 = sphi 0, %s100
      %s104 = sphi 0, %s103
      %s120 = sphi 0, %s104
      %s126 = sphi 0, %s128
      %s129 = sphi 0, %s126
      %s130 = sphi 0, %s129
      %s146 = sphi 0, %s130
    $region4: #{discriminator_forward.9} parent=1 // loop_header_branch
      %20 = sbr.rel (%p18) target = $region8
    $region5: #{discriminator_forward.9} parent=1 // loop_body
      %s22 = ssub.s32 %s17, 1
      %s23 = ssub.s32 %s17, 2
      %s24 = sadd.s32 %s17, 1
      %s25 = ssub.s32 %s17, %s24
      %p26 = scmp.eq.s32.totalorder %s25, 0
      %s28 = sadd.s32 %s27, 1
      %s29 = scalar_select %p26, %s27, %s28
      %p32 = pneg %p26
      %p33 = scmp.eq.s32.totalorder %s17, 1
      %p34 = por %p32, %p33
      %p35 = scmp.ne.s32.totalorder %s27, %s30
      %p36 = scmp.eq.s32.totalorder %s17, 0
      %p37 = por %p35, %p36
      %p38 = scmp.ne.s32.totalorder %s27, %s30
      %p39 = scmp.eq.s32.totalorder %s22, 1
      %p40 = por %p38, %p39
      %p41 = scmp.ne.s32.totalorder %s30, %s31
      %p42 = scmp.eq.s32.totalorder %s22, 0
      %p43 = por %p41, %p42
      %p44 = scmp.ne.s32.totalorder %s30, %s31
      %p45 = scmp.eq.s32.totalorder %s23, 1
      %p46 = por %p44, %p45
      %p48 = scmp.ne.s32.totalorder %s31, %s47
      %p49 = scmp.eq.s32.totalorder %s23, 0
      %p50 = por %p48, %p49
      %s52 = sadd.s32 %s51, 1
      %p55 = scmp.eq.s32.totalorder %s17, 1
      %p56 = scmp.ne.s32.totalorder %s51, %s53
      %p57 = scmp.eq.s32.totalorder %s17, 0
      %p58 = por %p56, %p57
      %p59 = scmp.ne.s32.totalorder %s51, %s53
      %p60 = scmp.eq.s32.totalorder %s22, 1
      %p61 = por %p59, %p60
      %p62 = scmp.ne.s32.totalorder %s53, %s54
      %p63 = scmp.eq.s32.totalorder %s22, 0
      %p64 = por %p62, %p63
      %p65 = scmp.ne.s32.totalorder %s53, %s54
      %p66 = scmp.eq.s32.totalorder %s23, 1
      %p67 = por %p65, %p66
      %p69 = scmp.ne.s32.totalorder %s54, %s68
      %p70 = scmp.eq.s32.totalorder %s23, 0
      %p71 = por %p69, %p70
      %s72 = ssub.s32 %s17, %s24
      %p73 = scmp.eq.s32.totalorder %s72, 0
      %s75 = sadd.s32 %s74, 1
      %s76 = scalar_select %p73, %s74, %s75
      %p79 = pneg %p73
      %p80 = scmp.eq.s32.totalorder %s17, 1
      %p81 = por %p79, %p80
      %p82 = scmp.ne.s32.totalorder %s74, %s77
      %p83 = scmp.eq.s32.totalorder %s17, 0
      %p84 = por %p82, %p83
      %p85 = scmp.ne.s32.totalorder %s74, %s77
      %p86 = scmp.eq.s32.totalorder %s22, 1
      %p87 = por %p85, %p86
      %p88 = scmp.ne.s32.totalorder %s77, %s78
      %p89 = scmp.eq.s32.totalorder %s22, 0
      %p90 = por %p88, %p89
      %p91 = scmp.ne.s32.totalorder %s77, %s78
      %p92 = scmp.eq.s32.totalorder %s23, 1
      %p93 = por %p91, %p92
      %p95 = scmp.ne.s32.totalorder %s78, %s94
      %p96 = scmp.eq.s32.totalorder %s23, 0
      %p97 = por %p95, %p96
      %s98 = ssub.s32 %s17, %s24
      %p99 = scmp.eq.s32.totalorder %s98, 0
      %s101 = sadd.s32 %s100, 1
      %s102 = scalar_select %p99, %s100, %s101
      %p105 = pneg %p99
      %p106 = scmp.eq.s32.totalorder %s17, 1
      %p107 = por %p105, %p106
      %p108 = scmp.ne.s32.totalorder %s100, %s103
      %p109 = scmp.eq.s32.totalorder %s17, 0
      %p110 = por %p108, %p109
      %p111 = scmp.ne.s32.totalorder %s100, %s103
      %p112 = scmp.eq.s32.totalorder %s22, 1
      %p113 = por %p111, %p112
      %p114 = scmp.ne.s32.totalorder %s103, %s104
      %p115 = scmp.eq.s32.totalorder %s22, 0
      %p116 = por %p114, %p115
      %p117 = scmp.ne.s32.totalorder %s103, %s104
      %p118 = scmp.eq.s32.totalorder %s23, 1
      %p119 = por %p117, %p118
      %p121 = scmp.ne.s32.totalorder %s104, %s120
      %p122 = scmp.eq.s32.totalorder %s23, 0
      %p123 = por %p121, %p122
      %s124 = ssub.s32 %s17, %s24
      %p125 = scmp.eq.s32.totalorder %s124, 0
      %s127 = sadd.s32 %s126, 1
      %s128 = scalar_select %p125, %s126, %s127
      %p131 = pneg %p125
      %p132 = scmp.eq.s32.totalorder %s17, 1
      %p133 = por %p131, %p132
      %p134 = scmp.ne.s32.totalorder %s126, %s129
      %p135 = scmp.eq.s32.totalorder %s17, 0
      %p136 = por %p134, %p135
      %p137 = scmp.ne.s32.totalorder %s126, %s129
      %p138 = scmp.eq.s32.totalorder %s22, 1
      %p139 = por %p137, %p138
      %p140 = scmp.ne.s32.totalorder %s129, %s130
      %p141 = scmp.eq.s32.totalorder %s22, 0
      %p142 = por %p140, %p141
      %p143 = scmp.ne.s32.totalorder %s129, %s130
      %p144 = scmp.eq.s32.totalorder %s23, 1
      %p145 = por %p143, %p144
      %p147 = scmp.ne.s32.totalorder %s130, %s146
      %p148 = scmp.eq.s32.totalorder %s23, 0
      %p149 = por %p147, %p148
      %p150 = scmp.le.s32.totalorder 1, %s17
      %p151 = scmp.lt.s32.totalorder %s17, 3
      %p152 = pnand %p150, %p151
      %p153 = pneg %p152
      // Predicated region
      $region9: #{discriminator_forward.9} parent=5 // pred_check
        _
      $region10: #{discriminator_forward.9} parent=5 // pred_check_branch
        %155 = sbr.rel (%p152) target = $region12
      $region11: #{discriminator_forward.9} parent=5 // pred_region
        %s156 = ssub.s32 %s17, 1
        // Predicated region
        $region13: #{discriminator_forward.9} parent=11 // pred_check
          %p157 = pneg %p64
        $region14: #{discriminator_forward.9} parent=11 // pred_check_branch
          %159 = sbr.rel (%p157) target = $region16
        $region15: #{discriminator_forward.9} parent=11 // pred_region
          _
        $region16: #{discriminator_forward.9} parent=11 // pred_fallthru
          _
      $region12: #{discriminator_forward.9} parent=5 // pred_fallthru
        _
      %p160 = scmp.lt.s32.totalorder %s17, 2
      // Predicated region
      $region17: #{discriminator_forward.9} parent=5 // pred_check
        %p161 = pneg %p160
      $region18: #{discriminator_forward.9} parent=5 // pred_check_branch
        %163 = sbr.rel (%p161) target = $region20
      $region19: #{discriminator_forward.9} parent=5 // pred_region
        // Predicated region
        $region21: #{discriminator_forward.9} parent=19 // pred_check
          %p164 = pneg %p37
        $region22: #{discriminator_forward.9} parent=19 // pred_check_branch
          %166 = sbr.rel (%p164) target = $region24
        $region23: #{discriminator_forward.9} parent=19 // pred_region
          %p167 = scmp.lt.s32.totalorder %s17, 1
          %s168 = scalar_select %p167, %s17, 1
          %s169 = smul.addr %s168, 4
          %s170 = smul.addr %s169, 4
          %s171 = scalar_lea.vmem %s0, %s170
        $region24: #{discriminator_forward.9} parent=19 // pred_fallthru
          _
      $region20: #{discriminator_forward.9} parent=5 // pred_fallthru
        _
      %p172 = scmp.le.s32.totalorder 1, %s17
      %p173 = scmp.lt.s32.totalorder %s17, 3
      %p174 = pnand %p172, %p173
      %p175 = pneg %p174
      // Predicated region
      $region25: #{discriminator_forward.9} parent=5 // pred_check
        _
      $region26: #{discriminator_forward.9} parent=5 // pred_check_branch
        %177 = sbr.rel (%p174) target = $region28
      $region27: #{discriminator_forward.9} parent=5 // pred_region
        %s178 = ssub.s32 %s17, 1
        %p179 = scmp.lt.s32.totalorder %s22, 1
        %s180 = scalar_select %p179, %s22, 1
        %s181 = smul.addr %s180, 4
        %s182 = smul.addr %s181, 4
        %s183 = scalar_lea.vmem %s0, %s182
        %p184 = pneg %p43
        %p185 = pneg %p40
        %p186 = pneg %p64
        %p187 = pneg %p61
        %p188 = pneg %p90
        %p189 = pneg %p87
        %p190 = scmp.lt.s32.totalorder %s22, 1
        %s191 = scalar_select %p190, %s22, 1
        %s192 = scalar_lea.vmem %s2, %s191
        %p193 = pneg %p116
        %p194 = pneg %p113
        %s195 = sand.u32 %s103, 1
        %s196 = scalar_lea.sflag [#allocation3], %s195
        %s197 = sand.u32 %s103, 1
        %s198 = scalar_lea.vmem [#allocation2], %s197
        %p199 = pneg %p142
        %p200 = pneg %p139
        %s201 = sand.u32 %s129, 1
        %s202 = scalar_lea.sflag [#allocation5], %s201
        %s203 = sand.u32 %s129, 1
        %s204 = scalar_lea.vmem [#allocation4], %s203
        %p205 = scmp.lt.s32.totalorder %s22, 1
        %s206 = scalar_select %p205, %s22, 1
        %s207 = smul.addr %s206, 4
        %s208 = smul.addr %s207, 4
        %s209 = scalar_lea.vmem %s0, %s208
        %p210 = scmp.lt.s32.totalorder %s22, 1
        %s211 = scalar_select %p210, %s22, 1
        %s212 = scalar_lea.vmem %s2, %s211
        %v213 = vld [vmem:[%s209] sm:$0x1]
        %v214 = vld [vmem:[%s209 + $0x1] sm:$0x1]
        %v215 = vld [vmem:[%s209 + $0x2] sm:$0x1]
        %v216 = vld [vmem:[%s209 + $0x3] sm:$0x1]
        %s217 = scalar_lea.vmem %s209, 4
        %v218 = vld [vmem:[%s217] sm:$0x1]
        %v219 = vld [vmem:[%s217 + $0x1] sm:$0x1]
        %v220 = vld [vmem:[%s217 + $0x2] sm:$0x1]
        %v221 = vld [vmem:[%s217 + $0x3] sm:$0x1]
        %s222 = scalar_lea.vmem %s209, 8
        %v223 = vld [vmem:[%s222] sm:$0x1]
        %v224 = vld [vmem:[%s222 + $0x1] sm:$0x1]
        %v225 = vld [vmem:[%s222 + $0x2] sm:$0x1]
        %v226 = vld [vmem:[%s222 + $0x3] sm:$0x1]
        %s227 = scalar_lea.vmem %s209, 12
        %v228 = vld [vmem:[%s227] sm:$0x1]
        %v229 = vld [vmem:[%s227 + $0x1] sm:$0x1]
        %v230 = vld [vmem:[%s227 + $0x2] sm:$0x1]
        %v231 = vld [vmem:[%s227 + $0x3] sm:$0x1]
        %v232 = vld [vmem:[%s1] sm:$0xff]
        %v233 = vld [vmem:[%s1 + $0x8] sm:$0xff]
        %v234 = vld [vmem:[%s1 + $0x10] sm:$0xff]
        %v235 = vld [vmem:[%s1 + $0x18] sm:$0xff]
        %v236 = vld [vmem:[%s1 + $0x20] sm:$0xff]
        %v237 = vld [vmem:[%s1 + $0x28] sm:$0xff]
        %v238 = vld [vmem:[%s1 + $0x30] sm:$0xff]
        %v239 = vld [vmem:[%s1 + $0x38] sm:$0xff]
        %v240 = vld [vmem:[%s1 + $0x40] sm:$0xff]
        %v241 = vld [vmem:[%s1 + $0x48] sm:$0xff]
        %v242 = vld [vmem:[%s1 + $0x50] sm:$0xff]
        %v243 = vld [vmem:[%s1 + $0x58] sm:$0xff]
        %v244 = vld [vmem:[%s1 + $0x60] sm:$0xff]
        %v245 = vld [vmem:[%s1 + $0x68] sm:$0xff]
        %v246 = vld [vmem:[%s1 + $0x70] sm:$0xff]
        %v247 = vld [vmem:[%s1 + $0x78] sm:$0xff]
        %v248 = vld [vmem:[%s1 + $0x80] sm:$0xff]
        %v249 = vld [vmem:[%s1 + $0x88] sm:$0xff]
        %v250 = vld [vmem:[%s1 + $0x90] sm:$0xff]
        %v251 = vld [vmem:[%s1 + $0x98] sm:$0xff]
        %v252 = vld [vmem:[%s1 + $0xa0] sm:$0xff]
        %v253 = vld [vmem:[%s1 + $0xa8] sm:$0xff]
        %v254 = vld [vmem:[%s1 + $0xb0] sm:$0xff]
        %v255 = vld [vmem:[%s1 + $0xb8] sm:$0xff]
        %v256 = vld [vmem:[%s1 + $0xc0] sm:$0xff]
        %v257 = vld [vmem:[%s1 + $0xc8] sm:$0xff]
        %v258 = vld [vmem:[%s1 + $0xd0] sm:$0xff]
        %v259 = vld [vmem:[%s1 + $0xd8] sm:$0xff]
        %v260 = vld [vmem:[%s1 + $0xe0] sm:$0xff]
        %v261 = vld [vmem:[%s1 + $0xe8] sm:$0xff]
        %v262 = vld [vmem:[%s1 + $0xf0] sm:$0xff]
        %v263 = vld [vmem:[%s1 + $0xf8] sm:$0xff]
        %v264 = vld [vmem:[%s1 + $0x100] sm:$0xff]
        %v265 = vld [vmem:[%s1 + $0x108] sm:$0xff]
        %v266 = vld [vmem:[%s1 + $0x110] sm:$0xff]
        %v267 = vld [vmem:[%s1 + $0x118] sm:$0xff]
        %v268 = vld [vmem:[%s1 + $0x120] sm:$0xff]
        %v269 = vld [vmem:[%s1 + $0x128] sm:$0xff]
        %v270 = vld [vmem:[%s1 + $0x130] sm:$0xff]
        %v271 = vld [vmem:[%s1 + $0x138] sm:$0xff]
        %v272 = vld [vmem:[%s1 + $0x140] sm:$0xff]
        %v273 = vld [vmem:[%s1 + $0x148] sm:$0xff]
        %v274 = vld [vmem:[%s1 + $0x150] sm:$0xff]
        %v275 = vld [vmem:[%s1 + $0x158] sm:$0xff]
        %v276 = vld [vmem:[%s1 + $0x160] sm:$0xff]
        %v277 = vld [vmem:[%s1 + $0x168] sm:$0xff]
        %v278 = vld [vmem:[%s1 + $0x170] sm:$0xff]
        %v279 = vld [vmem:[%s1 + $0x178] sm:$0xff]
        %v280 = vld [vmem:[%s1 + $0x180] sm:$0xff]
        %v281 = vld [vmem:[%s1 + $0x188] sm:$0xff]
        %v282 = vld [vmem:[%s1 + $0x190] sm:$0xff]
        %v283 = vld [vmem:[%s1 + $0x198] sm:$0xff]
        %v284 = vld [vmem:[%s1 + $0x1a0] sm:$0xff]
        %v285 = vld [vmem:[%s1 + $0x1a8] sm:$0xff]
        %v286 = vld [vmem:[%s1 + $0x1b0] sm:$0xff]
        %v287 = vld [vmem:[%s1 + $0x1b8] sm:$0xff]
        %v288 = vld [vmem:[%s1 + $0x1c0] sm:$0xff]
        %v289 = vld [vmem:[%s1 + $0x1c8] sm:$0xff]
        %v290 = vld [vmem:[%s1 + $0x1d0] sm:$0xff]
        %v291 = vld [vmem:[%s1 + $0x1d8] sm:$0xff]
        %v292 = vld [vmem:[%s1 + $0x1e0] sm:$0xff]
        %v293 = vld [vmem:[%s1 + $0x1e8] sm:$0xff]
        %v294 = vld [vmem:[%s1 + $0x1f0] sm:$0xff]
        %v295 = vld [vmem:[%s1 + $0x1f8] sm:$0xff]
        %v296 = vld [vmem:[%s1 + $0x200] sm:$0xff]
        %v297 = vld [vmem:[%s1 + $0x208] sm:$0xff]
        %v298 = vld [vmem:[%s1 + $0x210] sm:$0xff]
        %v299 = vld [vmem:[%s1 + $0x218] sm:$0xff]
        %v300 = vld [vmem:[%s1 + $0x220] sm:$0xff]
        %v301 = vld [vmem:[%s1 + $0x228] sm:$0xff]
        %v302 = vld [vmem:[%s1 + $0x230] sm:$0xff]
        %v303 = vld [vmem:[%s1 + $0x238] sm:$0xff]
        %v304 = vld [vmem:[%s1 + $0x240] sm:$0xff]
        %v305 = vld [vmem:[%s1 + $0x248] sm:$0xff]
        %v306 = vld [vmem:[%s1 + $0x250] sm:$0xff]
        %v307 = vld [vmem:[%s1 + $0x258] sm:$0xff]
        %v308 = vld [vmem:[%s1 + $0x260] sm:$0xff]
        %v309 = vld [vmem:[%s1 + $0x268] sm:$0xff]
        %v310 = vld [vmem:[%s1 + $0x270] sm:$0xff]
        %v311 = vld [vmem:[%s1 + $0x278] sm:$0xff]
        %v312 = vld [vmem:[%s1 + $0x280] sm:$0xff]
        %v313 = vld [vmem:[%s1 + $0x288] sm:$0xff]
        %v314 = vld [vmem:[%s1 + $0x290] sm:$0xff]
        %v315 = vld [vmem:[%s1 + $0x298] sm:$0xff]
        %v316 = vld [vmem:[%s1 + $0x2a0] sm:$0xff]
        %v317 = vld [vmem:[%s1 + $0x2a8] sm:$0xff]
        %v318 = vld [vmem:[%s1 + $0x2b0] sm:$0xff]
        %v319 = vld [vmem:[%s1 + $0x2b8] sm:$0xff]
        %v320 = vld [vmem:[%s1 + $0x2c0] sm:$0xff]
        %v321 = vld [vmem:[%s1 + $0x2c8] sm:$0xff]
        %v322 = vld [vmem:[%s1 + $0x2d0] sm:$0xff]
        %v323 = vld [vmem:[%s1 + $0x2d8] sm:$0xff]
        %v324 = vld [vmem:[%s1 + $0x2e0] sm:$0xff]
        %v325 = vld [vmem:[%s1 + $0x2e8] sm:$0xff]
        %v326 = vld [vmem:[%s1 + $0x2f0] sm:$0xff]
        %v327 = vld [vmem:[%s1 + $0x2f8] sm:$0xff]
        %v328 = vld [vmem:[%s1 + $0x300] sm:$0xff]
        %v329 = vld [vmem:[%s1 + $0x308] sm:$0xff]
        %v330 = vld [vmem:[%s1 + $0x310] sm:$0xff]
        %v331 = vld [vmem:[%s1 + $0x318] sm:$0xff]
        %v332 = vld [vmem:[%s1 + $0x320] sm:$0xff]
        %v333 = vld [vmem:[%s1 + $0x328] sm:$0xff]
        %v334 = vld [vmem:[%s1 + $0x330] sm:$0xff]
        %v335 = vld [vmem:[%s1 + $0x338] sm:$0xff]
        %v336 = vld [vmem:[%s1 + $0x340] sm:$0xff]
        %v337 = vld [vmem:[%s1 + $0x348] sm:$0xff]
        %v338 = vld [vmem:[%s1 + $0x350] sm:$0xff]
        %v339 = vld [vmem:[%s1 + $0x358] sm:$0xff]
        %v340 = vld [vmem:[%s1 + $0x360] sm:$0xff]
        %v341 = vld [vmem:[%s1 + $0x368] sm:$0xff]
        %v342 = vld [vmem:[%s1 + $0x370] sm:$0xff]
        %v343 = vld [vmem:[%s1 + $0x378] sm:$0xff]
        %v344 = vld [vmem:[%s1 + $0x380] sm:$0xff]
        %v345 = vld [vmem:[%s1 + $0x388] sm:$0xff]
        %v346 = vld [vmem:[%s1 + $0x390] sm:$0xff]
        %v347 = vld [vmem:[%s1 + $0x398] sm:$0xff]
        %v348 = vld [vmem:[%s1 + $0x3a0] sm:$0xff]
        %v349 = vld [vmem:[%s1 + $0x3a8] sm:$0xff]
        %v350 = vld [vmem:[%s1 + $0x3b0] sm:$0xff]
        %v351 = vld [vmem:[%s1 + $0x3b8] sm:$0xff]
        %v352 = vld [vmem:[%s1 + $0x3c0] sm:$0xff]
        %v353 = vld [vmem:[%s1 + $0x3c8] sm:$0xff]
        %v354 = vld [vmem:[%s1 + $0x3d0] sm:$0xff]
        %v355 = vld [vmem:[%s1 + $0x3d8] sm:$0xff]
        %v356 = vld [vmem:[%s1 + $0x3e0] sm:$0xff]
        %v357 = vld [vmem:[%s1 + $0x3e8] sm:$0xff]
        %v358 = vld [vmem:[%s1 + $0x3f0] sm:$0xff]
        %v359 = vld [vmem:[%s1 + $0x3f8] sm:$0xff]
        %v360 = vld [vmem:[%s1 + $0x400] sm:$0xff]
        %v361 = vld [vmem:[%s1 + $0x408] sm:$0xff]
        %v362 = vld [vmem:[%s1 + $0x410] sm:$0xff]
        %v363 = vld [vmem:[%s1 + $0x418] sm:$0xff]
        %v364 = vld [vmem:[%s1 + $0x420] sm:$0xff]
        %v365 = vld [vmem:[%s1 + $0x428] sm:$0xff]
        %v366 = vld [vmem:[%s1 + $0x430] sm:$0xff]
        %v367 = vld [vmem:[%s1 + $0x438] sm:$0xff]
        %v368 = vld [vmem:[%s1 + $0x440] sm:$0xff]
        %v369 = vld [vmem:[%s1 + $0x448] sm:$0xff]
        %v370 = vld [vmem:[%s1 + $0x450] sm:$0xff]
        %v371 = vld [vmem:[%s1 + $0x458] sm:$0xff]
        %v372 = vld [vmem:[%s1 + $0x460] sm:$0xff]
        %v373 = vld [vmem:[%s1 + $0x468] sm:$0xff]
        %v374 = vld [vmem:[%s1 + $0x470] sm:$0xff]
        %v375 = vld [vmem:[%s1 + $0x478] sm:$0xff]
        %v376 = vld [vmem:[%s1 + $0x480] sm:$0xff]
        %v377 = vld [vmem:[%s1 + $0x488] sm:$0xff]
        %v378 = vld [vmem:[%s1 + $0x490] sm:$0xff]
        %v379 = vld [vmem:[%s1 + $0x498] sm:$0xff]
        %v380 = vld [vmem:[%s1 + $0x4a0] sm:$0xff]
        %v381 = vld [vmem:[%s1 + $0x4a8] sm:$0xff]
        %v382 = vld [vmem:[%s1 + $0x4b0] sm:$0xff]
        %v383 = vld [vmem:[%s1 + $0x4b8] sm:$0xff]
        %v384 = vld [vmem:[%s1 + $0x4c0] sm:$0xff]
        %v385 = vld [vmem:[%s1 + $0x4c8] sm:$0xff]
        %v386 = vld [vmem:[%s1 + $0x4d0] sm:$0xff]
        %v387 = vld [vmem:[%s1 + $0x4d8] sm:$0xff]
        %v388 = vld [vmem:[%s1 + $0x4e0] sm:$0xff]
        %v389 = vld [vmem:[%s1 + $0x4e8] sm:$0xff]
        %v390 = vld [vmem:[%s1 + $0x4f0] sm:$0xff]
        %v391 = vld [vmem:[%s1 + $0x4f8] sm:$0xff]
        %v392 = vld [vmem:[%s1 + $0x500] sm:$0xff]
        %v393 = vld [vmem:[%s1 + $0x508] sm:$0xff]
        %v394 = vld [vmem:[%s1 + $0x510] sm:$0xff]
        %v395 = vld [vmem:[%s1 + $0x518] sm:$0xff]
        %v396 = vld [vmem:[%s1 + $0x520] sm:$0xff]
        %v397 = vld [vmem:[%s1 + $0x528] sm:$0xff]
        %v398 = vld [vmem:[%s1 + $0x530] sm:$0xff]
        %v399 = vld [vmem:[%s1 + $0x538] sm:$0xff]
        %v400 = vld [vmem:[%s1 + $0x540] sm:$0xff]
        %v401 = vld [vmem:[%s1 + $0x548] sm:$0xff]
        %v402 = vld [vmem:[%s1 + $0x550] sm:$0xff]
        %v403 = vld [vmem:[%s1 + $0x558] sm:$0xff]
        %v404 = vld [vmem:[%s1 + $0x560] sm:$0xff]
        %v405 = vld [vmem:[%s1 + $0x568] sm:$0xff]
        %v406 = vld [vmem:[%s1 + $0x570] sm:$0xff]
        %v407 = vld [vmem:[%s1 + $0x578] sm:$0xff]
        %v408 = vld [vmem:[%s1 + $0x580] sm:$0xff]
        %v409 = vld [vmem:[%s1 + $0x588] sm:$0xff]
        %v410 = vld [vmem:[%s1 + $0x590] sm:$0xff]
        %v411 = vld [vmem:[%s1 + $0x598] sm:$0xff]
        %v412 = vld [vmem:[%s1 + $0x5a0] sm:$0xff]
        %v413 = vld [vmem:[%s1 + $0x5a8] sm:$0xff]
        %v414 = vld [vmem:[%s1 + $0x5b0] sm:$0xff]
        %v415 = vld [vmem:[%s1 + $0x5b8] sm:$0xff]
        %v416 = vld [vmem:[%s1 + $0x5c0] sm:$0xff]
        %v417 = vld [vmem:[%s1 + $0x5c8] sm:$0xff]
        %v418 = vld [vmem:[%s1 + $0x5d0] sm:$0xff]
        %v419 = vld [vmem:[%s1 + $0x5d8] sm:$0xff]
        %v420 = vld [vmem:[%s1 + $0x5e0] sm:$0xff]
        %v421 = vld [vmem:[%s1 + $0x5e8] sm:$0xff]
        %v422 = vld [vmem:[%s1 + $0x5f0] sm:$0xff]
        %v423 = vld [vmem:[%s1 + $0x5f8] sm:$0xff]
        %v424 = vld [vmem:[%s1 + $0x600] sm:$0xff]
        %v425 = vld [vmem:[%s1 + $0x608] sm:$0xff]
        %v426 = vld [vmem:[%s1 + $0x610] sm:$0xff]
        %v427 = vld [vmem:[%s1 + $0x618] sm:$0xff]
        %v428 = vld [vmem:[%s1 + $0x620] sm:$0xff]
        %v429 = vld [vmem:[%s1 + $0x628] sm:$0xff]
        %v430 = vld [vmem:[%s1 + $0x630] sm:$0xff]
        %v431 = vld [vmem:[%s1 + $0x638] sm:$0xff]
        %v432 = vld [vmem:[%s1 + $0x640] sm:$0xff]
        %v433 = vld [vmem:[%s1 + $0x648] sm:$0xff]
        %v434 = vld [vmem:[%s1 + $0x650] sm:$0xff]
        %v435 = vld [vmem:[%s1 + $0x658] sm:$0xff]
        %v436 = vld [vmem:[%s1 + $0x660] sm:$0xff]
        %v437 = vld [vmem:[%s1 + $0x668] sm:$0xff]
        %v438 = vld [vmem:[%s1 + $0x670] sm:$0xff]
        %v439 = vld [vmem:[%s1 + $0x678] sm:$0xff]
        %v440 = vld [vmem:[%s1 + $0x680] sm:$0xff]
        %v441 = vld [vmem:[%s1 + $0x688] sm:$0xff]
        %v442 = vld [vmem:[%s1 + $0x690] sm:$0xff]
        %v443 = vld [vmem:[%s1 + $0x698] sm:$0xff]
        %v444 = vld [vmem:[%s1 + $0x6a0] sm:$0xff]
        %v445 = vld [vmem:[%s1 + $0x6a8] sm:$0xff]
        %v446 = vld [vmem:[%s1 + $0x6b0] sm:$0xff]
        %v447 = vld [vmem:[%s1 + $0x6b8] sm:$0xff]
        %v448 = vld [vmem:[%s1 + $0x6c0] sm:$0xff]
        %v449 = vld [vmem:[%s1 + $0x6c8] sm:$0xff]
        %v450 = vld [vmem:[%s1 + $0x6d0] sm:$0xff]
        %v451 = vld [vmem:[%s1 + $0x6d8] sm:$0xff]
        %v452 = vld [vmem:[%s1 + $0x6e0] sm:$0xff]
        %v453 = vld [vmem:[%s1 + $0x6e8] sm:$0xff]
        %v454 = vld [vmem:[%s1 + $0x6f0] sm:$0xff]
        %v455 = vld [vmem:[%s1 + $0x6f8] sm:$0xff]
        %v456 = vld [vmem:[%s1 + $0x700] sm:$0xff]
        %v457 = vld [vmem:[%s1 + $0x708] sm:$0xff]
        %v458 = vld [vmem:[%s1 + $0x710] sm:$0xff]
        %v459 = vld [vmem:[%s1 + $0x718] sm:$0xff]
        %v460 = vld [vmem:[%s1 + $0x720] sm:$0xff]
        %v461 = vld [vmem:[%s1 + $0x728] sm:$0xff]
        %v462 = vld [vmem:[%s1 + $0x730] sm:$0xff]
        %v463 = vld [vmem:[%s1 + $0x738] sm:$0xff]
        %v464 = vld [vmem:[%s1 + $0x740] sm:$0xff]
        %v465 = vld [vmem:[%s1 + $0x748] sm:$0xff]
        %v466 = vld [vmem:[%s1 + $0x750] sm:$0xff]
        %v467 = vld [vmem:[%s1 + $0x758] sm:$0xff]
        %v468 = vld [vmem:[%s1 + $0x760] sm:$0xff]
        %v469 = vld [vmem:[%s1 + $0x768] sm:$0xff]
        %v470 = vld [vmem:[%s1 + $0x770] sm:$0xff]
        %v471 = vld [vmem:[%s1 + $0x778] sm:$0xff]
        %v472 = vld [vmem:[%s1 + $0x780] sm:$0xff]
        %v473 = vld [vmem:[%s1 + $0x788] sm:$0xff]
        %v474 = vld [vmem:[%s1 + $0x790] sm:$0xff]
        %v475 = vld [vmem:[%s1 + $0x798] sm:$0xff]
        %v476 = vld [vmem:[%s1 + $0x7a0] sm:$0xff]
        %v477 = vld [vmem:[%s1 + $0x7a8] sm:$0xff]
        %v478 = vld [vmem:[%s1 + $0x7b0] sm:$0xff]
        %v479 = vld [vmem:[%s1 + $0x7b8] sm:$0xff]
        %v480 = vld [vmem:[%s1 + $0x7c0] sm:$0xff]
        %v481 = vld [vmem:[%s1 + $0x7c8] sm:$0xff]
        %v482 = vld [vmem:[%s1 + $0x7d0] sm:$0xff]
        %v483 = vld [vmem:[%s1 + $0x7d8] sm:$0xff]
        %v484 = vld [vmem:[%s1 + $0x7e0] sm:$0xff]
        %v485 = vld [vmem:[%s1 + $0x7e8] sm:$0xff]
        %v486 = vld [vmem:[%s1 + $0x7f0] sm:$0xff]
        %v487 = vld [vmem:[%s1 + $0x7f8] sm:$0xff]
        %488 = vmatpush.msra.mxu0 %v247
        %489 = vmatpush.msra.mxu0 %v246
        %490 = vmatpush.msra.mxu0 %v245
        %491 = vmatpush.msra.mxu0 %v244
        %492 = vmatpush.msra.mxu0 %v243
        %493 = vmatpush.msra.mxu0 %v242
        %494 = vmatpush.msra.mxu0 %v241
        %495 = vmatpush.msra.mxu0 %v240
        %496 = vmatpush.msra.mxu0 %v239
        %497 = vmatpush.msra.mxu0 %v238
        %498 = vmatpush.msra.mxu0 %v237
        %499 = vmatpush.msra.mxu0 %v236
        %500 = vmatpush.msra.mxu0 %v235
        %501 = vmatpush.msra.mxu0 %v234
        %502 = vmatpush.msra.mxu0 %v233
        %503 = vmatpush.msra.mxu0 %v232
        %504 = vmatmul.f32.gmra.mxu0 %v213
        %v505 = vpop.f32.mrf.mxu0
        %v506 = vadd.f32 0.0, %v505
        %507 = vdwg.mxu0
        %508 = vmatpush.msra.mxu0 %v263
        %509 = vmatpush.msra.mxu0 %v262
        %510 = vmatpush.msra.mxu0 %v261
        %511 = vmatpush.msra.mxu0 %v260
        %512 = vmatpush.msra.mxu0 %v259
        %513 = vmatpush.msra.mxu0 %v258
        %514 = vmatpush.msra.mxu0 %v257
        %515 = vmatpush.msra.mxu0 %v256
        %516 = vmatpush.msra.mxu0 %v255
        %517 = vmatpush.msra.mxu0 %v254
        %518 = vmatpush.msra.mxu0 %v253
        %519 = vmatpush.msra.mxu0 %v252
        %520 = vmatpush.msra.mxu0 %v251
        %521 = vmatpush.msra.mxu0 %v250
        %522 = vmatpush.msra.mxu0 %v249
        %523 = vmatpush.msra.mxu0 %v248
        %524 = vmatmul.f32.gmra.mxu0 %v214
        %v525 = vpop.f32.mrf.mxu0
        %v526 = vadd.f32 %v506, %v525
        %527 = vdwg.mxu0
        %528 = vmatpush.msra.mxu0 %v279
        %529 = vmatpush.msra.mxu0 %v278
        %530 = vmatpush.msra.mxu0 %v277
        %531 = vmatpush.msra.mxu0 %v276
        %532 = vmatpush.msra.mxu0 %v275
        %533 = vmatpush.msra.mxu0 %v274
        %534 = vmatpush.msra.mxu0 %v273
        %535 = vmatpush.msra.mxu0 %v272
        %536 = vmatpush.msra.mxu0 %v271
        %537 = vmatpush.msra.mxu0 %v270
        %538 = vmatpush.msra.mxu0 %v269
        %539 = vmatpush.msra.mxu0 %v268
        %540 = vmatpush.msra.mxu0 %v267
        %541 = vmatpush.msra.mxu0 %v266
        %542 = vmatpush.msra.mxu0 %v265
        %543 = vmatpush.msra.mxu0 %v264
        %544 = vmatmul.f32.gmra.mxu0 %v215
        %v545 = vpop.f32.mrf.mxu0
        %v546 = vadd.f32 %v526, %v545
        %547 = vdwg.mxu0
        %548 = vmatpush.msra.mxu0 %v295
        %549 = vmatpush.msra.mxu0 %v294
        %550 = vmatpush.msra.mxu0 %v293
        %551 = vmatpush.msra.mxu0 %v292
        %552 = vmatpush.msra.mxu0 %v291
        %553 = vmatpush.msra.mxu0 %v290
        %554 = vmatpush.msra.mxu0 %v289
        %555 = vmatpush.msra.mxu0 %v288
        %556 = vmatpush.msra.mxu0 %v287
        %557 = vmatpush.msra.mxu0 %v286
        %558 = vmatpush.msra.mxu0 %v285
        %559 = vmatpush.msra.mxu0 %v284
        %560 = vmatpush.msra.mxu0 %v283
        %561 = vmatpush.msra.mxu0 %v282
        %562 = vmatpush.msra.mxu0 %v281
        %563 = vmatpush.msra.mxu0 %v280
        %564 = vmatmul.f32.gmra.mxu0 %v216
        %v565 = vpop.f32.mrf.mxu0
        %v566 = vadd.f32 %v546, %v565
        %567 = vdwg.mxu0
        %568 = vmatpush.msra.mxu0 %v311
        %569 = vmatpush.msra.mxu0 %v310
        %570 = vmatpush.msra.mxu0 %v309
        %571 = vmatpush.msra.mxu0 %v308
        %572 = vmatpush.msra.mxu0 %v307
        %573 = vmatpush.msra.mxu0 %v306
        %574 = vmatpush.msra.mxu0 %v305
        %575 = vmatpush.msra.mxu0 %v304
        %576 = vmatpush.msra.mxu0 %v303
        %577 = vmatpush.msra.mxu0 %v302
        %578 = vmatpush.msra.mxu0 %v301
        %579 = vmatpush.msra.mxu0 %v300
        %580 = vmatpush.msra.mxu0 %v299
        %581 = vmatpush.msra.mxu0 %v298
        %582 = vmatpush.msra.mxu0 %v297
        %583 = vmatpush.msra.mxu0 %v296
        %584 = vmatmul.f32.gmra.mxu0 %v218
        %v585 = vpop.f32.mrf.mxu0
        %v586 = vadd.f32 %v566, %v585
        %587 = vdwg.mxu0
        %588 = vmatpush.msra.mxu0 %v327
        %589 = vmatpush.msra.mxu0 %v326
        %590 = vmatpush.msra.mxu0 %v325
        %591 = vmatpush.msra.mxu0 %v324
        %592 = vmatpush.msra.mxu0 %v323
        %593 = vmatpush.msra.mxu0 %v322
        %594 = vmatpush.msra.mxu0 %v321
        %595 = vmatpush.msra.mxu0 %v320
        %596 = vmatpush.msra.mxu0 %v319
        %597 = vmatpush.msra.mxu0 %v318
        %598 = vmatpush.msra.mxu0 %v317
        %599 = vmatpush.msra.mxu0 %v316
        %600 = vmatpush.msra.mxu0 %v315
        %601 = vmatpush.msra.mxu0 %v314
        %602 = vmatpush.msra.mxu0 %v313
        %603 = vmatpush.msra.mxu0 %v312
        %604 = vmatmul.f32.gmra.mxu0 %v219
        %v605 = vpop.f32.mrf.mxu0
        %v606 = vadd.f32 %v586, %v605
        %607 = vdwg.mxu0
        %608 = vmatpush.msra.mxu0 %v343
        %609 = vmatpush.msra.mxu0 %v342
        %610 = vmatpush.msra.mxu0 %v341
        %611 = vmatpush.msra.mxu0 %v340
        %612 = vmatpush.msra.mxu0 %v339
        %613 = vmatpush.msra.mxu0 %v338
        %614 = vmatpush.msra.mxu0 %v337
        %615 = vmatpush.msra.mxu0 %v336
        %616 = vmatpush.msra.mxu0 %v335
        %617 = vmatpush.msra.mxu0 %v334
        %618 = vmatpush.msra.mxu0 %v333
        %619 = vmatpush.msra.mxu0 %v332
        %620 = vmatpush.msra.mxu0 %v331
        %621 = vmatpush.msra.mxu0 %v330
        %622 = vmatpush.msra.mxu0 %v329
        %623 = vmatpush.msra.mxu0 %v328
        %624 = vmatmul.f32.gmra.mxu0 %v220
        %v625 = vpop.f32.mrf.mxu0
        %v626 = vadd.f32 %v606, %v625
        %627 = vdwg.mxu0
        %628 = vmatpush.msra.mxu0 %v359
        %629 = vmatpush.msra.mxu0 %v358
        %630 = vmatpush.msra.mxu0 %v357
        %631 = vmatpush.msra.mxu0 %v356
        %632 = vmatpush.msra.mxu0 %v355
        %633 = vmatpush.msra.mxu0 %v354
        %634 = vmatpush.msra.mxu0 %v353
        %635 = vmatpush.msra.mxu0 %v352
        %636 = vmatpush.msra.mxu0 %v351
        %637 = vmatpush.msra.mxu0 %v350
        %638 = vmatpush.msra.mxu0 %v349
        %639 = vmatpush.msra.mxu0 %v348
        %640 = vmatpush.msra.mxu0 %v347
        %641 = vmatpush.msra.mxu0 %v346
        %642 = vmatpush.msra.mxu0 %v345
        %643 = vmatpush.msra.mxu0 %v344
        %644 = vmatmul.f32.gmra.mxu0 %v221
        %v645 = vpop.f32.mrf.mxu0
        %v646 = vadd.f32 %v626, %v645
        %647 = vdwg.mxu0
        %648 = vmatpush.msra.mxu0 %v375
        %649 = vmatpush.msra.mxu0 %v374
        %650 = vmatpush.msra.mxu0 %v373
        %651 = vmatpush.msra.mxu0 %v372
        %652 = vmatpush.msra.mxu0 %v371
        %653 = vmatpush.msra.mxu0 %v370
        %654 = vmatpush.msra.mxu0 %v369
        %655 = vmatpush.msra.mxu0 %v368
        %656 = vmatpush.msra.mxu0 %v367
        %657 = vmatpush.msra.mxu0 %v366
        %658 = vmatpush.msra.mxu0 %v365
        %659 = vmatpush.msra.mxu0 %v364
        %660 = vmatpush.msra.mxu0 %v363
        %661 = vmatpush.msra.mxu0 %v362
        %662 = vmatpush.msra.mxu0 %v361
        %663 = vmatpush.msra.mxu0 %v360
        %664 = vmatmul.f32.gmra.mxu0 %v223
        %v665 = vpop.f32.mrf.mxu0
        %v666 = vadd.f32 %v646, %v665
        %667 = vdwg.mxu0
        %668 = vmatpush.msra.mxu0 %v391
        %669 = vmatpush.msra.mxu0 %v390
        %670 = vmatpush.msra.mxu0 %v389
        %671 = vmatpush.msra.mxu0 %v388
        %672 = vmatpush.msra.mxu0 %v387
        %673 = vmatpush.msra.mxu0 %v386
        %674 = vmatpush.msra.mxu0 %v385
        %675 = vmatpush.msra.mxu0 %v384
        %676 = vmatpush.msra.mxu0 %v383
        %677 = vmatpush.msra.mxu0 %v382
        %678 = vmatpush.msra.mxu0 %v381
        %679 = vmatpush.msra.mxu0 %v380
        %680 = vmatpush.msra.mxu0 %v379
        %681 = vmatpush.msra.mxu0 %v378
        %682 = vmatpush.msra.mxu0 %v377
        %683 = vmatpush.msra.mxu0 %v376
        %684 = vmatmul.f32.gmra.mxu0 %v224
        %v685 = vpop.f32.mrf.mxu0
        %v686 = vadd.f32 %v666, %v685
        %687 = vdwg.mxu0
        %688 = vmatpush.msra.mxu0 %v407
        %689 = vmatpush.msra.mxu0 %v406
        %690 = vmatpush.msra.mxu0 %v405
        %691 = vmatpush.msra.mxu0 %v404
        %692 = vmatpush.msra.mxu0 %v403
        %693 = vmatpush.msra.mxu0 %v402
        %694 = vmatpush.msra.mxu0 %v401
        %695 = vmatpush.msra.mxu0 %v400
        %696 = vmatpush.msra.mxu0 %v399
        %697 = vmatpush.msra.mxu0 %v398
        %698 = vmatpush.msra.mxu0 %v397
        %699 = vmatpush.msra.mxu0 %v396
        %700 = vmatpush.msra.mxu0 %v395
        %701 = vmatpush.msra.mxu0 %v394
        %702 = vmatpush.msra.mxu0 %v393
        %703 = vmatpush.msra.mxu0 %v392
        %704 = vmatmul.f32.gmra.mxu0 %v225
        %v705 = vpop.f32.mrf.mxu0
        %v706 = vadd.f32 %v686, %v705
        %707 = vdwg.mxu0
        %708 = vmatpush.msra.mxu0 %v423
        %709 = vmatpush.msra.mxu0 %v422
        %710 = vmatpush.msra.mxu0 %v421
        %711 = vmatpush.msra.mxu0 %v420
        %712 = vmatpush.msra.mxu0 %v419
        %713 = vmatpush.msra.mxu0 %v418
        %714 = vmatpush.msra.mxu0 %v417
        %715 = vmatpush.msra.mxu0 %v416
        %716 = vmatpush.msra.mxu0 %v415
        %717 = vmatpush.msra.mxu0 %v414
        %718 = vmatpush.msra.mxu0 %v413
        %719 = vmatpush.msra.mxu0 %v412
        %720 = vmatpush.msra.mxu0 %v411
        %721 = vmatpush.msra.mxu0 %v410
        %722 = vmatpush.msra.mxu0 %v409
        %723 = vmatpush.msra.mxu0 %v408
        %724 = vmatmul.f32.gmra.mxu0 %v226
        %v725 = vpop.f32.mrf.mxu0
        %v726 = vadd.f32 %v706, %v725
        %727 = vdwg.mxu0
        %728 = vmatpush.msra.mxu0 %v439
        %729 = vmatpush.msra.mxu0 %v438
        %730 = vmatpush.msra.mxu0 %v437
        %731 = vmatpush.msra.mxu0 %v436
        %732 = vmatpush.msra.mxu0 %v435
        %733 = vmatpush.msra.mxu0 %v434
        %734 = vmatpush.msra.mxu0 %v433
        %735 = vmatpush.msra.mxu0 %v432
        %736 = vmatpush.msra.mxu0 %v431
        %737 = vmatpush.msra.mxu0 %v430
        %738 = vmatpush.msra.mxu0 %v429
        %739 = vmatpush.msra.mxu0 %v428
        %740 = vmatpush.msra.mxu0 %v427
        %741 = vmatpush.msra.mxu0 %v426
        %742 = vmatpush.msra.mxu0 %v425
        %743 = vmatpush.msra.mxu0 %v424
        %744 = vmatmul.f32.gmra.mxu0 %v228
        %v745 = vpop.f32.mrf.mxu0
        %v746 = vadd.f32 %v726, %v745
        %747 = vdwg.mxu0
        %748 = vmatpush.msra.mxu0 %v455
        %749 = vmatpush.msra.mxu0 %v454
        %750 = vmatpush.msra.mxu0 %v453
        %751 = vmatpush.msra.mxu0 %v452
        %752 = vmatpush.msra.mxu0 %v451
        %753 = vmatpush.msra.mxu0 %v450
        %754 = vmatpush.msra.mxu0 %v449
        %755 = vmatpush.msra.mxu0 %v448
        %756 = vmatpush.msra.mxu0 %v447
        %757 = vmatpush.msra.mxu0 %v446
        %758 = vmatpush.msra.mxu0 %v445
        %759 = vmatpush.msra.mxu0 %v444
        %760 = vmatpush.msra.mxu0 %v443
        %761 = vmatpush.msra.mxu0 %v442
        %762 = vmatpush.msra.mxu0 %v441
        %763 = vmatpush.msra.mxu0 %v440
        %764 = vmatmul.f32.gmra.mxu0 %v229
        %v765 = vpop.f32.mrf.mxu0
        %v766 = vadd.f32 %v746, %v765
        %767 = vdwg.mxu0
        %768 = vmatpush.msra.mxu0 %v471
        %769 = vmatpush.msra.mxu0 %v470
        %770 = vmatpush.msra.mxu0 %v469
        %771 = vmatpush.msra.mxu0 %v468
        %772 = vmatpush.msra.mxu0 %v467
        %773 = vmatpush.msra.mxu0 %v466
        %774 = vmatpush.msra.mxu0 %v465
        %775 = vmatpush.msra.mxu0 %v464
        %776 = vmatpush.msra.mxu0 %v463
        %777 = vmatpush.msra.mxu0 %v462
        %778 = vmatpush.msra.mxu0 %v461
        %779 = vmatpush.msra.mxu0 %v460
        %780 = vmatpush.msra.mxu0 %v459
        %781 = vmatpush.msra.mxu0 %v458
        %782 = vmatpush.msra.mxu0 %v457
        %783 = vmatpush.msra.mxu0 %v456
        %784 = vmatmul.f32.gmra.mxu0 %v230
        %v785 = vpop.f32.mrf.mxu0
        %v786 = vadd.f32 %v766, %v785
        %787 = vdwg.mxu0
        %788 = vmatpush.msra.mxu0 %v487
        %789 = vmatpush.msra.mxu0 %v486
        %790 = vmatpush.msra.mxu0 %v485
        %791 = vmatpush.msra.mxu0 %v484
        %792 = vmatpush.msra.mxu0 %v483
        %793 = vmatpush.msra.mxu0 %v482
        %794 = vmatpush.msra.mxu0 %v481
        %795 = vmatpush.msra.mxu0 %v480
        %796 = vmatpush.msra.mxu0 %v479
        %797 = vmatpush.msra.mxu0 %v478
        %798 = vmatpush.msra.mxu0 %v477
        %799 = vmatpush.msra.mxu0 %v476
        %800 = vmatpush.msra.mxu0 %v475
        %801 = vmatpush.msra.mxu0 %v474
        %802 = vmatpush.msra.mxu0 %v473
        %803 = vmatpush.msra.mxu0 %v472
        %804 = vmatmul.f32.gmra.mxu0 %v231
        %v805 = vpop.f32.mrf.mxu0
        %v806 = vadd.f32 %v786, %v805
        %807 = vdwg.mxu0
        %808 = vst [vmem:[%s212] sm:$0x1] %v806
        %v809 = vadd.f32 %v806, 0.0
        %v810 = vadd.f32 %v809, 0.0
        %v811 = vmul.f32 %v806, %v806
        %v812 = vadd.f32 %v811, 0.0
        %v813 = vadd.f32 %v812, 0.0
        %814 = vst [vmem:[%s198] sm:$0x1] %v810
        %815 = vst [vmem:[%s204] sm:$0x1] %v813
        %p816 = scmp.lt.s32.totalorder %s22, 1
        %s817 = scalar_select %p816, %s22, 1
        %s818 = scalar_lea.vmem %s2, %s817
        %s819 = sand.u32 %s103, 1
        %s820 = scalar_lea.sflag [#allocation3], %s819
        %s821 = sand.u32 %s103, 1
        %s822 = scalar_lea.vmem [#allocation2], %s821
        %s823 = sand.u32 %s129, 1
        %s824 = scalar_lea.sflag [#allocation5], %s823
        %s825 = sand.u32 %s129, 1
        %s826 = scalar_lea.vmem [#allocation4], %s825
        // Predicated region
        $region29: #{discriminator_forward.9} parent=27 // pred_check
          %p827 = pneg %p87
        $region30: #{discriminator_forward.9} parent=27 // pred_check_branch
          %829 = sbr.rel (%p827) target = $region32
        $region31: #{discriminator_forward.9} parent=27 // pred_region
          _
        $region32: #{discriminator_forward.9} parent=27 // pred_fallthru
          _
        // Predicated region
        $region33: #{discriminator_forward.9} parent=27 // pred_check
          %p830 = pneg %p113
        $region34: #{discriminator_forward.9} parent=27 // pred_check_branch
          %832 = sbr.rel (%p830) target = $region36
        $region35: #{discriminator_forward.9} parent=27 // pred_region
          %834 = vsyncadd %s820, 0
          %s835 = scalar_lea.hbm %s3, %s22
          %s837 = sshll.u32 %s822, 4
          %s838 = int_to_ptr.vmem [resolvable:$true] %s837
          %s839 = sshll.u32 %s835, 4
          %s840 = int_to_ptr.hbm [resolvable:$true] %s839
          %842 = dma.vmem_to_hbm [thread:$0]  %s838, 16, %s840, %s820
        $region36: #{discriminator_forward.9} parent=27 // pred_fallthru
          _
        // Predicated region
        $region37: #{discriminator_forward.9} parent=27 // pred_check
          %p843 = pneg %p139
        $region38: #{discriminator_forward.9} parent=27 // pred_check_branch
          %845 = sbr.rel (%p843) target = $region40
        $region39: #{discriminator_forward.9} parent=27 // pred_region
          %847 = vsyncadd %s824, 0
          %s848 = scalar_lea.hbm %s4, %s22
          %s850 = sshll.u32 %s826, 4
          %s851 = int_to_ptr.vmem [resolvable:$true] %s850
          %s852 = sshll.u32 %s848, 4
          %s853 = int_to_ptr.hbm [resolvable:$true] %s852
          %855 = dma.vmem_to_hbm [thread:$0]  %s851, 16, %s853, %s824
        $region40: #{discriminator_forward.9} parent=27 // pred_fallthru
          _
      $region28: #{discriminator_forward.9} parent=5 // pred_fallthru
        _
      %p856 = scmp.le.s32.totalorder 2, %s17
      // Predicated region
      $region41: #{discriminator_forward.9} parent=5 // pred_check
        %p857 = pneg %p856
      $region42: #{discriminator_forward.9} parent=5 // pred_check_branch
        %859 = sbr.rel (%p857) target = $region44
      $region43: #{discriminator_forward.9} parent=5 // pred_region
        %s860 = ssub.s32 %s17, 2
        // Predicated region
        $region45: #{discriminator_forward.9} parent=43 // pred_check
          %p861 = pneg %p93
        $region46: #{discriminator_forward.9} parent=43 // pred_check_branch
          %863 = sbr.rel (%p861) target = $region48
        $region47: #{discriminator_forward.9} parent=43 // pred_region
          %p864 = scmp.lt.s32.totalorder %s23, 1
          %s865 = scalar_select %p864, %s23, 1
          %s866 = scalar_lea.vmem %s2, %s865
        $region48: #{discriminator_forward.9} parent=43 // pred_fallthru
          _
        // Predicated region
        $region49: #{discriminator_forward.9} parent=43 // pred_check
          %p867 = pneg %p119
        $region50: #{discriminator_forward.9} parent=43 // pred_check_branch
          %869 = sbr.rel (%p867) target = $region52
        $region51: #{discriminator_forward.9} parent=43 // pred_region
          %s870 = sand.u32 %s104, 1
          %s871 = scalar_lea.sflag [#allocation3], %s870
          %s872 = sand.u32 %s104, 1
          %s873 = scalar_lea.vmem [#allocation2], %s872
          %875 = dma.done %s871, 16
        $region52: #{discriminator_forward.9} parent=43 // pred_fallthru
          _
        // Predicated region
        $region53: #{discriminator_forward.9} parent=43 // pred_check
          %p876 = pneg %p145
        $region54: #{discriminator_forward.9} parent=43 // pred_check_branch
          %878 = sbr.rel (%p876) target = $region56
        $region55: #{discriminator_forward.9} parent=43 // pred_region
          %s879 = sand.u32 %s130, 1
          %s880 = scalar_lea.sflag [#allocation5], %s879
          %s881 = sand.u32 %s130, 1
          %s882 = scalar_lea.vmem [#allocation4], %s881
          %884 = dma.done %s880, 16
        $region56: #{discriminator_forward.9} parent=43 // pred_fallthru
          _
      $region44: #{discriminator_forward.9} parent=5 // pred_fallthru
        _
    $region6: #{discriminator_forward.9} parent=1 // loop_footer
      %s21 = sadd.s32 1, %s17
    $region7: #{discriminator_forward.9} parent=1 // loop_footer_branch
      %16 = sbr.rel target = $region3
    $region8: #{discriminator_forward.9} parent=1 // loop_exit
      _
    %885 = vsyncpa [#allocation3], 1
    %s886 = scalar_lea.sflag [#allocation3], 1
    %887 = vsyncpa %s886, 1
    %888 = vsyncpa [#allocation5], 1
    %s889 = scalar_lea.sflag [#allocation5], 1
    %890 = vsyncpa %s889, 1

</llo_original>
